<compile_context>
chip_gen: v6e
topology: v6e:2x2x1
jax: 0.10.0
libtpu: 0.0.40
codegen_flags: <defaults>
</compile_context>

<pallas_src>
import math
import functools

import jax
import jax.numpy as jnp
from jax.experimental import pallas as pl
from jax.experimental.pallas import tpu as pltpu

# ---------------- configuration ----------------
INPUT_DIM = 2
OUTPUT_DIM = 3
HIDDEN_DIM = 32
NUM_LAYERS = 4
POSITIONAL_DIM = 10
SKIP_LAYERS = (2,)
USE_POSITIONAL = True
ENC_DIM = 2 * INPUT_DIM * POSITIONAL_DIM  # 40
LANES = 128


# ---------------- Pallas kernel (feature-major) ----------------
def _imlp_kernel(x_ref, bmat_ref, phase_ref,
                 w02_ref, b0_ref, w1_ref, b1_ref,
                 w2a_ref, b2_ref, w3_ref, b3_ref, out_ref):
    # x_ref:     (INPUT_DIM, tile_n)   raw coordinates, feature-major
    # bmat_ref:  (ENC_DIM, INPUT_DIM)  per-enc-row frequency for each coord
    # phase_ref: (ENC_DIM, 1)          0 for sin rows, pi/2 for cos rows
    # wXX_ref:   transposed weights (out_features, in_features)
    # bX_ref:    (out_features, 1) biases
    # out_ref:   (OUTPUT_DIM, tile_n)

    # --- positional encoding on VPU + EUP: enc = sin(B @ x + phase) ---
    phi = phase_ref[...]                                       # (ENC_DIM, 1)
    for d in range(INPUT_DIM):                                 # static unroll
        phi = phi + bmat_ref[:, d:d + 1] * x_ref[d:d + 1, :]   # broadcast FMA
    enc = jnp.sin(phi)                                         # (ENC_DIM, tile_n)

    # --- fused layer-0 + layer-2-skip matmul: (2H, ENC) @ (ENC, tile_n) ---
    h02 = jnp.dot(w02_ref[...], enc, preferred_element_type=jnp.float32)
    h = h02[:HIDDEN_DIM, :] + b0_ref[...]      # sublane-aligned split (row 32)
    skip = h02[HIDDEN_DIM:, :]                 # W2b @ enc (layer-2 skip term)

    # --- layer 1 ---
    h = jnp.maximum(h, 0.0)
    h = jnp.dot(w1_ref[...], h, preferred_element_type=jnp.float32) + b1_ref[...]

    # --- layer 2 (skip: W2 @ cat([relu(h), enc]) == W2a@relu(h) + W2b@enc) ---
    h = jnp.maximum(h, 0.0)
    h = jnp.dot(w2a_ref[...], h, preferred_element_type=jnp.float32) + skip + b2_ref[...]

    # --- layer 3 (output) + tanh (softmax=False) ---
    h = jnp.maximum(h, 0.0)
    y = jnp.dot(w3_ref[...], h, preferred_element_type=jnp.float32) + b3_ref[...]
    out_ref[...] = jnp.tanh(y)


# ---------------- wrapper helpers ----------------
def _enc_perm():
    """kernel enc row -> reference enc column (reference layout interleaves
    sin/cos per frequency; kernel uses [sin block | cos block])."""
    D, P = INPUT_DIM, POSITIONAL_DIM
    perm = []
    for k in range(2 * D * P):
        half = k >= D * P
        kk = k - D * P if half else k
        p, d = kk // D, kk % D
        perm.append(p * 2 * D + (D if half else 0) + d)
    return jnp.asarray(perm, jnp.int32)


def _prep_weights(params):
    """Transpose weights to (out, in), permute enc-consuming weights into the
    kernel's [sin | cos] encoding layout, fuse w0 with the layer-2 skip."""
    (w0, b0), (w1, b1), (w2, b2), (w3, b3) = params
    w2a, w2b = w2[:HIDDEN_DIM], w2[HIDDEN_DIM:]
    perm = _enc_perm()
    w02 = jnp.concatenate([w0[perm], w2b[perm]], axis=1)   # (ENC_DIM, 2*HIDDEN)
    return (w02.T, b0.T, w1.T, b1.T, w2a.T, b2.T, w3.T, b3.T)


def _prep_encoding(b_freqs):
    """Per-enc-row frequency matrix and phase so enc = sin(bmat @ x + phase)."""
    D, P = INPUT_DIM, POSITIONAL_DIM
    b = jnp.asarray(b_freqs, jnp.float32)
    k = jnp.arange(ENC_DIM)
    kk = k % (D * P)
    d, p = kk % D, kk // D
    bmat = (b[p][:, None] * (d[:, None] == jnp.arange(D)[None, :])).astype(jnp.float32)
    phase = jnp.where(k >= D * P, jnp.float32(math.pi / 2), jnp.float32(0.0))
    return bmat, phase.reshape(ENC_DIM, 1)


def _choose_tiling(N, tile_n):
    """Lane-aligned (x128) tile; even grid-step count (v7x: 2 TCs) for N>128."""
    cdiv = lambda a, b: -(-a // b)
    tile_n = min(int(tile_n), LANES * cdiv(N, LANES))
    tile_n = LANES * max(1, tile_n // LANES)
    grid = cdiv(N, tile_n)
    if N > LANES and grid % 2 == 1:
        grid += 1
        tile_n = LANES * cdiv(cdiv(N, grid), LANES)
        grid = cdiv(N, tile_n)
        if grid % 2 == 1:
            grid += 1
    return tile_n, grid, tile_n * grid


@functools.partial(jax.jit, static_argnames=("tile_n",))
def imlp_forward(x, params, b_freqs, *, tile_n=2048):
    """x: (N, INPUT_DIM) float32. Returns (N, OUTPUT_DIM) float32."""
    N = x.shape[0]
    tile_n, grid, n_pad = _choose_tiling(N, tile_n)

    weights = _prep_weights(params)
    bmat, phase = _prep_encoding(b_freqs)
    small = (bmat, phase) + weights

    # feature-major input (INPUT_DIM, n_pad); padded columns sliced away below.
    x_t = jnp.pad(x.astype(jnp.float32).T, ((0, 0), (0, n_pad - N)))

    full = lambda a: pl.BlockSpec(a.shape, lambda i: (0, 0))
    out = pl.pallas_call(
        _imlp_kernel,
        out_shape=jax.ShapeDtypeStruct((OUTPUT_DIM, n_pad), jnp.float32),
        grid_spec=pltpu.PrefetchScalarGridSpec(
            num_scalar_prefetch=0,
            grid=(grid,),
            in_specs=[pl.BlockSpec((INPUT_DIM, tile_n), lambda i: (0, i))]
                     + [full(a) for a in small],
            out_specs=pl.BlockSpec((OUTPUT_DIM, tile_n), lambda i: (0, i)),
        ),
        compiler_params=pltpu.CompilerParams(dimension_semantics=("parallel",)),
    )(x_t, *small)

    # compact (OUTPUT_DIM, n_pad) -> (N, OUTPUT_DIM); only 12 B/row touched.
    return out[:, :N].T


# ---------------- deterministic parameter init (PyTorch Linear default) ----------------
def init_params(key):
    layer_dims = []
    for i in range(NUM_LAYERS):
        if i == 0:
            in_d = ENC_DIM
        elif i in SKIP_LAYERS:
            in_d = HIDDEN_DIM + ENC_DIM
        else:
            in_d = HIDDEN_DIM
        out_d = OUTPUT_DIM if i == NUM_LAYERS - 1 else HIDDEN_DIM
        layer_dims.append((in_d, out_d))

    params = []
    for (in_d, out_d) in layer_dims:
        key, kw, kb = jax.random.split(key, 3)
        bound = 1.0 / math.sqrt(in_d)
        # stored as (in, out) so the reference does x @ W  (== x @ W_pytorch.T)
        w = jax.random.uniform(kw, (in_d, out_d), jnp.float32, -bound, bound)
        b = jax.random.uniform(kb, (1, out_d), jnp.float32, -bound, bound)
        params.append((w, b))
    return params


# ---------------- pure-JAX reference for verification ----------------
def positional_encoding_vec(x, b):
    proj = jnp.einsum("ij,k->ijk", x, b)                               # (N, D, P)
    mapped = jnp.concatenate([jnp.sin(proj), jnp.cos(proj)], axis=1)   # (N, 2D, P)
    return jnp.transpose(mapped, (0, 2, 1)).reshape(x.shape[0], -1)    # (N, P*2D)


def imlp_reference(x, params, b_freqs):
    enc = positional_encoding_vec(x, b_freqs) if USE_POSITIONAL else x
    h = enc
    for i, (w, b) in enumerate(params):
        if i > 0:
            h = jnp.maximum(h, 0.0)
        if i in SKIP_LAYERS:
            h = jnp.concatenate([h, enc], axis=1)
        h = h @ w + b
    return jnp.tanh(h)


if __name__ == "__main__":
    key = jax.random.PRNGKey(0)
    kx, kp = jax.random.split(key)

    N = 2000  # ragged on purpose: exercises padding + an even multi-step grid
    x = jax.random.uniform(kx, (N, INPUT_DIM), jnp.float32)  # implicit-MLP coords in [0,1)

    b_freqs = jnp.asarray([2.0 ** i * math.pi for i in range(POSITIONAL_DIM)],
                          dtype=jnp.float32)
    params = init_params(kp)

    out = imlp_forward(x, params, b_freqs, tile_n=2048)
    out = jax.block_until_ready(out)

    ref = imlp_reference(x, params, b_freqs)
    assert out.shape == (N, OUTPUT_DIM)
    err = float(jnp.max(jnp.abs(out - ref)))
    assert err < 5e-3, err  # in-kernel sin(phi+pi/2) vs XLA cos(phi): few-ULP class diff

    print("KERNEL_OK")
</pallas_src>

<mosaic_0001>
module attributes {stable_mosaic.version = 11 : i64} {
  func.func @_imlp_kernel(%arg0: i32, %arg1: memref<2x1024xf32, #tpu.memory_space<vmem>>, %arg2: memref<40x2xf32, #tpu.memory_space<vmem>>, %arg3: memref<40x1xf32, #tpu.memory_space<vmem>>, %arg4: memref<64x40xf32, #tpu.memory_space<vmem>>, %arg5: memref<32x1xf32, #tpu.memory_space<vmem>>, %arg6: memref<32x32xf32, #tpu.memory_space<vmem>>, %arg7: memref<32x1xf32, #tpu.memory_space<vmem>>, %arg8: memref<32x32xf32, #tpu.memory_space<vmem>>, %arg9: memref<32x1xf32, #tpu.memory_space<vmem>>, %arg10: memref<3x32xf32, #tpu.memory_space<vmem>>, %arg11: memref<3x1xf32, #tpu.memory_space<vmem>>, %arg12: memref<3x1024xf32, #tpu.memory_space<vmem>>) attributes {dimension_semantics = [#tpu.dimension_semantics<parallel>], iteration_bounds = array<i64: 2>, scalar_prefetch = 0 : i64, scratch_operands = 0 : i64, tpu.core_type = #tpu.core_type<tc>, window_params = [{transform_indices = @transform_0, window_bounds = array<i64: 2, 1024>}, {pipeline_mode = #tpu.pipeline_mode<synchronous>, transform_indices = @transform_1, window_bounds = array<i64: 40, 2>}, {pipeline_mode = #tpu.pipeline_mode<synchronous>, transform_indices = @transform_2, window_bounds = array<i64: 40, 1>}, {pipeline_mode = #tpu.pipeline_mode<synchronous>, transform_indices = @transform_3, window_bounds = array<i64: 64, 40>}, {pipeline_mode = #tpu.pipeline_mode<synchronous>, transform_indices = @transform_4, window_bounds = array<i64: 32, 1>}, {pipeline_mode = #tpu.pipeline_mode<synchronous>, transform_indices = @transform_5, window_bounds = array<i64: 32, 32>}, {pipeline_mode = #tpu.pipeline_mode<synchronous>, transform_indices = @transform_6, window_bounds = array<i64: 32, 1>}, {pipeline_mode = #tpu.pipeline_mode<synchronous>, transform_indices = @transform_7, window_bounds = array<i64: 32, 32>}, {pipeline_mode = #tpu.pipeline_mode<synchronous>, transform_indices = @transform_8, window_bounds = array<i64: 32, 1>}, {pipeline_mode = #tpu.pipeline_mode<synchronous>, transform_indices = @transform_9, window_bounds = array<i64: 3, 32>}, {pipeline_mode = #tpu.pipeline_mode<synchronous>, transform_indices = @transform_10, window_bounds = array<i64: 3, 1>}, {transform_indices = @transform_11, window_bounds = array<i64: 3, 1024>}]} {
    %c0 = arith.constant 0 : index
    %c0_0 = arith.constant 0 : index
    %0 = vector.load %arg3[%c0, %c0_0] : memref<40x1xf32, #tpu.memory_space<vmem>>, vector<40x1xf32>
    %c0_1 = arith.constant 0 : index
    %c0_2 = arith.constant 0 : index
    %1 = vector.load %arg2[%c0_1, %c0_2] : memref<40x2xf32, #tpu.memory_space<vmem>>, vector<40x1xf32>
    %c0_3 = arith.constant 0 : index
    %c0_4 = arith.constant 0 : index
    %2 = vector.load %arg1[%c0_3, %c0_4] : memref<2x1024xf32, #tpu.memory_space<vmem>>, vector<1x1024xf32>
    %3 = vector.broadcast %1 : vector<40x1xf32> to vector<40x1024xf32>
    %4 = vector.broadcast %2 : vector<1x1024xf32> to vector<40x1024xf32>
    %5 = arith.mulf %3, %4 : vector<40x1024xf32>
    %6 = vector.broadcast %0 : vector<40x1xf32> to vector<40x1024xf32>
    %7 = arith.addf %6, %5 : vector<40x1024xf32>
    %c0_5 = arith.constant 0 : index
    %c1 = arith.constant 1 : index
    %8 = vector.load %arg2[%c0_5, %c1] : memref<40x2xf32, #tpu.memory_space<vmem>>, vector<40x1xf32>
    %c1_6 = arith.constant 1 : index
    %c0_7 = arith.constant 0 : index
    %9 = vector.load %arg1[%c1_6, %c0_7] : memref<2x1024xf32, #tpu.memory_space<vmem>>, vector<1x1024xf32>
    %10 = vector.broadcast %8 : vector<40x1xf32> to vector<40x1024xf32>
    %11 = vector.broadcast %9 : vector<1x1024xf32> to vector<40x1024xf32>
    %12 = arith.mulf %10, %11 : vector<40x1024xf32>
    %13 = arith.addf %7, %12 : vector<40x1024xf32>
    %14 = math.sin %13 : vector<40x1024xf32>
    %c0_8 = arith.constant 0 : index
    %c0_9 = arith.constant 0 : index
    %15 = vector.load %arg4[%c0_8, %c0_9] : memref<64x40xf32, #tpu.memory_space<vmem>>, vector<64x40xf32>
    %cst = arith.constant dense<0.000000e+00> : vector<64x1024xf32>
    %16 = tpu.matmul %15, %14, %cst {dimension_numbers = #tpu.dot_dimension_numbers<[1], [0], [0], [1], [0, 0, 1, 1], [], []>} : vector<64x40xf32>, vector<40x1024xf32>, vector<64x1024xf32> -> vector<64x1024xf32>
    %17 = vector.extract_strided_slice %16 {offsets = [0, 0], sizes = [32, 1024], strides = [1, 1]} : vector<64x1024xf32> to vector<32x1024xf32>
    %c0_10 = arith.constant 0 : index
    %c0_11 = arith.constant 0 : index
    %18 = vector.load %arg5[%c0_10, %c0_11] : memref<32x1xf32, #tpu.memory_space<vmem>>, vector<32x1xf32>
    %19 = vector.broadcast %18 : vector<32x1xf32> to vector<32x1024xf32>
    %20 = arith.addf %17, %19 : vector<32x1024xf32>
    %21 = vector.extract_strided_slice %16 {offsets = [32, 0], sizes = [32, 1024], strides = [1, 1]} : vector<64x1024xf32> to vector<32x1024xf32>
    %cst_12 = arith.constant 0.000000e+00 : f32
    %22 = vector.broadcast %cst_12 : f32 to vector<32x1024xf32>
    %23 = arith.maximumf %20, %22 : vector<32x1024xf32>
    %c0_13 = arith.constant 0 : index
    %c0_14 = arith.constant 0 : index
    %24 = vector.load %arg6[%c0_13, %c0_14] : memref<32x32xf32, #tpu.memory_space<vmem>>, vector<32x32xf32>
    %cst_15 = arith.constant dense<0.000000e+00> : vector<32x1024xf32>
    %25 = tpu.matmul %24, %23, %cst_15 {dimension_numbers = #tpu.dot_dimension_numbers<[1], [0], [0], [1], [0, 0, 1, 1], [], []>} : vector<32x32xf32>, vector<32x1024xf32>, vector<32x1024xf32> -> vector<32x1024xf32>
    %c0_16 = arith.constant 0 : index
    %c0_17 = arith.constant 0 : index
    %26 = vector.load %arg7[%c0_16, %c0_17] : memref<32x1xf32, #tpu.memory_space<vmem>>, vector<32x1xf32>
    %27 = vector.broadcast %26 : vector<32x1xf32> to vector<32x1024xf32>
    %28 = arith.addf %25, %27 : vector<32x1024xf32>
    %cst_18 = arith.constant 0.000000e+00 : f32
    %29 = vector.broadcast %cst_18 : f32 to vector<32x1024xf32>
    %30 = arith.maximumf %28, %29 : vector<32x1024xf32>
    %c0_19 = arith.constant 0 : index
    %c0_20 = arith.constant 0 : index
    %31 = vector.load %arg8[%c0_19, %c0_20] : memref<32x32xf32, #tpu.memory_space<vmem>>, vector<32x32xf32>
    %cst_21 = arith.constant dense<0.000000e+00> : vector<32x1024xf32>
    %32 = tpu.matmul %31, %30, %cst_21 {dimension_numbers = #tpu.dot_dimension_numbers<[1], [0], [0], [1], [0, 0, 1, 1], [], []>} : vector<32x32xf32>, vector<32x1024xf32>, vector<32x1024xf32> -> vector<32x1024xf32>
    %33 = arith.addf %32, %21 : vector<32x1024xf32>
    %c0_22 = arith.constant 0 : index
    %c0_23 = arith.constant 0 : index
    %34 = vector.load %arg9[%c0_22, %c0_23] : memref<32x1xf32, #tpu.memory_space<vmem>>, vector<32x1xf32>
    %35 = vector.broadcast %34 : vector<32x1xf32> to vector<32x1024xf32>
    %36 = arith.addf %33, %35 : vector<32x1024xf32>
    %cst_24 = arith.constant 0.000000e+00 : f32
    %37 = vector.broadcast %cst_24 : f32 to vector<32x1024xf32>
    %38 = arith.maximumf %36, %37 : vector<32x1024xf32>
    %c0_25 = arith.constant 0 : index
    %c0_26 = arith.constant 0 : index
    %39 = vector.load %arg10[%c0_25, %c0_26] : memref<3x32xf32, #tpu.memory_space<vmem>>, vector<3x32xf32>
    %cst_27 = arith.constant dense<0.000000e+00> : vector<3x1024xf32>
    %40 = tpu.matmul %39, %38, %cst_27 {dimension_numbers = #tpu.dot_dimension_numbers<[1], [0], [0], [1], [0, 0, 1, 1], [], []>} : vector<3x32xf32>, vector<32x1024xf32>, vector<3x1024xf32> -> vector<3x1024xf32>
    %c0_28 = arith.constant 0 : index
    %c0_29 = arith.constant 0 : index
    %41 = vector.load %arg11[%c0_28, %c0_29] : memref<3x1xf32, #tpu.memory_space<vmem>>, vector<3x1xf32>
    %42 = vector.broadcast %41 : vector<3x1xf32> to vector<3x1024xf32>
    %43 = arith.addf %40, %42 : vector<3x1024xf32>
    %44 = math.tanh %43 : vector<3x1024xf32>
    %c0_30 = arith.constant 0 : index
    %c0_31 = arith.constant 0 : index
    %45 = vector.load %arg12[%c0_30, %c0_31] : memref<3x1024xf32, #tpu.memory_space<vmem>>, vector<3x1024xf32>
    tpu.vector_store %arg12[%c0_30, %c0_31], %44 {strides = array<i32>} : memref<3x1024xf32, #tpu.memory_space<vmem>>, vector<3x1024xf32>,
    return
  }
  func.func @transform_0(%arg0: i32) -> (i32, i32) {
    %c0_i32 = arith.constant 0 : i32
    %c0_i32_0 = arith.constant 0 : i32
    return %c0_i32, %arg0 : i32, i32
  }
  func.func @transform_1(%arg0: i32) -> (i32, i32) {
    %c0_i32 = arith.constant 0 : i32
    %c0_i32_0 = arith.constant 0 : i32
    %c0_i32_1 = arith.constant 0 : i32
    return %c0_i32, %c0_i32_0 : i32, i32
  }
  func.func @transform_2(%arg0: i32) -> (i32, i32) {
    %c0_i32 = arith.constant 0 : i32
    %c0_i32_0 = arith.constant 0 : i32
    %c0_i32_1 = arith.constant 0 : i32
    return %c0_i32, %c0_i32_0 : i32, i32
  }
  func.func @transform_3(%arg0: i32) -> (i32, i32) {
    %c0_i32 = arith.constant 0 : i32
    %c0_i32_0 = arith.constant 0 : i32
    %c0_i32_1 = arith.constant 0 : i32
    return %c0_i32, %c0_i32_0 : i32, i32
  }
  func.func @transform_4(%arg0: i32) -> (i32, i32) {
    %c0_i32 = arith.constant 0 : i32
    %c0_i32_0 = arith.constant 0 : i32
    %c0_i32_1 = arith.constant 0 : i32
    return %c0_i32, %c0_i32_0 : i32, i32
  }
  func.func @transform_5(%arg0: i32) -> (i32, i32) {
    %c0_i32 = arith.constant 0 : i32
    %c0_i32_0 = arith.constant 0 : i32
    %c0_i32_1 = arith.constant 0 : i32
    return %c0_i32, %c0_i32_0 : i32, i32
  }
  func.func @transform_6(%arg0: i32) -> (i32, i32) {
    %c0_i32 = arith.constant 0 : i32
    %c0_i32_0 = arith.constant 0 : i32
    %c0_i32_1 = arith.constant 0 : i32
    return %c0_i32, %c0_i32_0 : i32, i32
  }
  func.func @transform_7(%arg0: i32) -> (i32, i32) {
    %c0_i32 = arith.constant 0 : i32
    %c0_i32_0 = arith.constant 0 : i32
    %c0_i32_1 = arith.constant 0 : i32
    return %c0_i32, %c0_i32_0 : i32, i32
  }
  func.func @transform_8(%arg0: i32) -> (i32, i32) {
    %c0_i32 = arith.constant 0 : i32
    %c0_i32_0 = arith.constant 0 : i32
    %c0_i32_1 = arith.constant 0 : i32
    return %c0_i32, %c0_i32_0 : i32, i32
  }
  func.func @transform_9(%arg0: i32) -> (i32, i32) {
    %c0_i32 = arith.constant 0 : i32
    %c0_i32_0 = arith.constant 0 : i32
    %c0_i32_1 = arith.constant 0 : i32
    return %c0_i32, %c0_i32_0 : i32, i32
  }
  func.func @transform_10(%arg0: i32) -> (i32, i32) {
    %c0_i32 = arith.constant 0 : i32
    %c0_i32_0 = arith.constant 0 : i32
    %c0_i32_1 = arith.constant 0 : i32
    return %c0_i32, %c0_i32_0 : i32, i32
  }
  func.func @transform_11(%arg0: i32) -> (i32, i32) {
    %c0_i32 = arith.constant 0 : i32
    %c0_i32_0 = arith.constant 0 : i32
    return %c0_i32, %arg0 : i32, i32
  }
}

</mosaic_0001>

<llo_original>
// kernel: imlp_forward.1
$region0: #{imlp_forward.1}
  #allocation0 [shape = 'u32[]', space=smem, size = 0x4, offset = 0x4, fixed_abs, tag = 'smem constant byte address 0x4 - core index']
  #allocation1 [shape = 'u32[144,128]{1,0:T(1,128)}', space=vmem, size = 0x12000, scoped, tag = 'internal scratch']
  %s0 = inlined_call_operand.vmem [shape: f32[2,2048], index: 0, kind: input, shape index: {}]
  %s1 = inlined_call_operand.vmem [shape: f32[40,2], index: 1, kind: input, shape index: {}]
  %s2 = inlined_call_operand.vmem [shape: f32[40,1], index: 2, kind: input, shape index: {}]
  %s3 = inlined_call_operand.vmem [shape: f32[64,40], index: 3, kind: input, shape index: {}]
  %s4 = inlined_call_operand.vmem [shape: f32[32,1], index: 4, kind: input, shape index: {}]
  %s5 = inlined_call_operand.vmem [shape: f32[32,32], index: 5, kind: input, shape index: {}]
  %s6 = inlined_call_operand.vmem [shape: f32[32,1], index: 6, kind: input, shape index: {}]
  %s7 = inlined_call_operand.vmem [shape: f32[32,32], index: 7, kind: input, shape index: {}]
  %s8 = inlined_call_operand.vmem [shape: f32[32,1], index: 8, kind: input, shape index: {}]
  %s9 = inlined_call_operand.vmem [shape: f32[3,32], index: 9, kind: input, shape index: {}]
  %s10 = inlined_call_operand.vmem [shape: f32[3,1], index: 10, kind: input, shape index: {}]
  %s11 = inlined_call_operand.vmem [shape: f32[3,2048], index: 11, kind: output, shape index: {}]
  %s12 = sld [smem:[#allocation0]]
  $region77: #{imlp_forward.1} parent=0
    _
  %s14 = ssub.s32 1, %s12
  %s15 = scalar_select 0, %s14, %s12
  loop: start=0, step=1, limit=4
  $region2: #{imlp_forward.1} parent=0 // loop_pre_header
    _
  $region3: #{imlp_forward.1} parent=0 // loop_header
    %s17 = sphi 0, %s21
    %p18 = scmp.ge.s32.totalorder %s17, 4
    %s27 = sphi 0, %s29
    %s30 = sphi 0, %s27
    %s31 = sphi 0, %s30
    %s47 = sphi 0, %s31
    %s51 = sphi 0, %s51
    %s53 = sphi 0, %s51
    %s54 = sphi 0, %s53
    %s68 = sphi 0, %s54
    %s72 = sphi 0, %s72
    %s74 = sphi 0, %s72
    %s75 = sphi 0, %s74
    %s89 = sphi 0, %s75
    %s93 = sphi 0, %s93
    %s95 = sphi 0, %s93
    %s96 = sphi 0, %s95
    %s110 = sphi 0, %s96
    %s114 = sphi 0, %s114
    %s116 = sphi 0, %s114
    %s117 = sphi 0, %s116
    %s131 = sphi 0, %s117
    %s135 = sphi 0, %s135
    %s137 = sphi 0, %s135
    %s138 = sphi 0, %s137
    %s152 = sphi 0, %s138
    %s156 = sphi 0, %s156
    %s158 = sphi 0, %s156
    %s159 = sphi 0, %s158
    %s173 = sphi 0, %s159
    %s177 = sphi 0, %s177
    %s179 = sphi 0, %s177
    %s180 = sphi 0, %s179
    %s194 = sphi 0, %s180
    %s198 = sphi 0, %s198
    %s200 = sphi 0, %s198
    %s201 = sphi 0, %s200
    %s215 = sphi 0, %s201
    %s219 = sphi 0, %s219
    %s221 = sphi 0, %s219
    %s222 = sphi 0, %s221
    %s236 = sphi 0, %s222
    %s240 = sphi 0, %s240
    %s242 = sphi 0, %s240
    %s243 = sphi 0, %s242
    %s257 = sphi 0, %s243
    %s263 = sphi 0, %s265
    %s266 = sphi 0, %s263
    %s267 = sphi 0, %s266
    %s283 = sphi 0, %s267
  $region4: #{imlp_forward.1} parent=0 // loop_header_branch
    %20 = sbr.rel (%p18) target = $region8
  $region5: #{imlp_forward.1} parent=0 // loop_body
    %s22 = ssub.s32 %s17, 1
    %s23 = ssub.s32 %s17, 2
    %s24 = sadd.s32 %s17, 1
    %s25 = ssub.s32 %s17, %s24
    %p26 = scmp.eq.s32.totalorder %s25, 0
    %s28 = sadd.s32 %s27, 1
    %s29 = scalar_select %p26, %s27, %s28
    %p32 = pneg %p26
    %p33 = scmp.eq.s32.totalorder %s17, 1
    %p34 = por %p32, %p33
    %p35 = scmp.ne.s32.totalorder %s27, %s30
    %p36 = scmp.eq.s32.totalorder %s17, 0
    %p37 = por %p35, %p36
    %p38 = scmp.ne.s32.totalorder %s27, %s30
    %p39 = scmp.eq.s32.totalorder %s22, 1
    %p40 = por %p38, %p39
    %p41 = scmp.ne.s32.totalorder %s30, %s31
    %p42 = scmp.eq.s32.totalorder %s22, 0
    %p43 = por %p41, %p42
    %p44 = scmp.ne.s32.totalorder %s30, %s31
    %p45 = scmp.eq.s32.totalorder %s23, 1
    %p46 = por %p44, %p45
    %p48 = scmp.ne.s32.totalorder %s31, %s47
    %p49 = scmp.eq.s32.totalorder %s23, 0
    %p50 = por %p48, %p49
    %s52 = sadd.s32 %s51, 1
    %p55 = scmp.eq.s32.totalorder %s17, 1
    %p56 = scmp.ne.s32.totalorder %s51, %s53
    %p57 = scmp.eq.s32.totalorder %s17, 0
    %p58 = por %p56, %p57
    %p59 = scmp.ne.s32.totalorder %s51, %s53
    %p60 = scmp.eq.s32.totalorder %s22, 1
    %p61 = por %p59, %p60
    %p62 = scmp.ne.s32.totalorder %s53, %s54
    %p63 = scmp.eq.s32.totalorder %s22, 0
    %p64 = por %p62, %p63
    %p65 = scmp.ne.s32.totalorder %s53, %s54
    %p66 = scmp.eq.s32.totalorder %s23, 1
    %p67 = por %p65, %p66
    %p69 = scmp.ne.s32.totalorder %s54, %s68
    %p70 = scmp.eq.s32.totalorder %s23, 0
    %p71 = por %p69, %p70
    %s73 = sadd.s32 %s72, 1
    %p76 = scmp.eq.s32.totalorder %s17, 1
    %p77 = scmp.ne.s32.totalorder %s72, %s74
    %p78 = scmp.eq.s32.totalorder %s17, 0
    %p79 = por %p77, %p78
    %p80 = scmp.ne.s32.totalorder %s72, %s74
    %p81 = scmp.eq.s32.totalorder %s22, 1
    %p82 = por %p80, %p81
    %p83 = scmp.ne.s32.totalorder %s74, %s75
    %p84 = scmp.eq.s32.totalorder %s22, 0
    %p85 = por %p83, %p84
    %p86 = scmp.ne.s32.totalorder %s74, %s75
    %p87 = scmp.eq.s32.totalorder %s23, 1
    %p88 = por %p86, %p87
    %p90 = scmp.ne.s32.totalorder %s75, %s89
    %p91 = scmp.eq.s32.totalorder %s23, 0
    %p92 = por %p90, %p91
    %s94 = sadd.s32 %s93, 1
    %p97 = scmp.eq.s32.totalorder %s17, 1
    %p98 = scmp.ne.s32.totalorder %s93, %s95
    %p99 = scmp.eq.s32.totalorder %s17, 0
    %p100 = por %p98, %p99
    %p101 = scmp.ne.s32.totalorder %s93, %s95
    %p102 = scmp.eq.s32.totalorder %s22, 1
    %p103 = por %p101, %p102
    %p104 = scmp.ne.s32.totalorder %s95, %s96
    %p105 = scmp.eq.s32.totalorder %s22, 0
    %p106 = por %p104, %p105
    %p107 = scmp.ne.s32.totalorder %s95, %s96
    %p108 = scmp.eq.s32.totalorder %s23, 1
    %p109 = por %p107, %p108
    %p111 = scmp.ne.s32.totalorder %s96, %s110
    %p112 = scmp.eq.s32.totalorder %s23, 0
    %p113 = por %p111, %p112
    %s115 = sadd.s32 %s114, 1
    %p118 = scmp.eq.s32.totalorder %s17, 1
    %p119 = scmp.ne.s32.totalorder %s114, %s116
    %p120 = scmp.eq.s32.totalorder %s17, 0
    %p121 = por %p119, %p120
    %p122 = scmp.ne.s32.totalorder %s114, %s116
    %p123 = scmp.eq.s32.totalorder %s22, 1
    %p124 = por %p122, %p123
    %p125 = scmp.ne.s32.totalorder %s116, %s117
    %p126 = scmp.eq.s32.totalorder %s22, 0
    %p127 = por %p125, %p126
    %p128 = scmp.ne.s32.totalorder %s116, %s117
    %p129 = scmp.eq.s32.totalorder %s23, 1
    %p130 = por %p128, %p129
    %p132 = scmp.ne.s32.totalorder %s117, %s131
    %p133 = scmp.eq.s32.totalorder %s23, 0
    %p134 = por %p132, %p133
    %s136 = sadd.s32 %s135, 1
    %p139 = scmp.eq.s32.totalorder %s17, 1
    %p140 = scmp.ne.s32.totalorder %s135, %s137
    %p141 = scmp.eq.s32.totalorder %s17, 0
    %p142 = por %p140, %p141
    %p143 = scmp.ne.s32.totalorder %s135, %s137
    %p144 = scmp.eq.s32.totalorder %s22, 1
    %p145 = por %p143, %p144
    %p146 = scmp.ne.s32.totalorder %s137, %s138
    %p147 = scmp.eq.s32.totalorder %s22, 0
    %p148 = por %p146, %p147
    %p149 = scmp.ne.s32.totalorder %s137, %s138
    %p150 = scmp.eq.s32.totalorder %s23, 1
    %p151 = por %p149, %p150
    %p153 = scmp.ne.s32.totalorder %s138, %s152
    %p154 = scmp.eq.s32.totalorder %s23, 0
    %p155 = por %p153, %p154
    %s157 = sadd.s32 %s156, 1
    %p160 = scmp.eq.s32.totalorder %s17, 1
    %p161 = scmp.ne.s32.totalorder %s156, %s158
    %p162 = scmp.eq.s32.totalorder %s17, 0
    %p163 = por %p161, %p162
    %p164 = scmp.ne.s32.totalorder %s156, %s158
    %p165 = scmp.eq.s32.totalorder %s22, 1
    %p166 = por %p164, %p165
    %p167 = scmp.ne.s32.totalorder %s158, %s159
    %p168 = scmp.eq.s32.totalorder %s22, 0
    %p169 = por %p167, %p168
    %p170 = scmp.ne.s32.totalorder %s158, %s159
    %p171 = scmp.eq.s32.totalorder %s23, 1
    %p172 = por %p170, %p171
    %p174 = scmp.ne.s32.totalorder %s159, %s173
    %p175 = scmp.eq.s32.totalorder %s23, 0
    %p176 = por %p174, %p175
    %s178 = sadd.s32 %s177, 1
    %p181 = scmp.eq.s32.totalorder %s17, 1
    %p182 = scmp.ne.s32.totalorder %s177, %s179
    %p183 = scmp.eq.s32.totalorder %s17, 0
    %p184 = por %p182, %p183
    %p185 = scmp.ne.s32.totalorder %s177, %s179
    %p186 = scmp.eq.s32.totalorder %s22, 1
    %p187 = por %p185, %p186
    %p188 = scmp.ne.s32.totalorder %s179, %s180
    %p189 = scmp.eq.s32.totalorder %s22, 0
    %p190 = por %p188, %p189
    %p191 = scmp.ne.s32.totalorder %s179, %s180
    %p192 = scmp.eq.s32.totalorder %s23, 1
    %p193 = por %p191, %p192
    %p195 = scmp.ne.s32.totalorder %s180, %s194
    %p196 = scmp.eq.s32.totalorder %s23, 0
    %p197 = por %p195, %p196
    %s199 = sadd.s32 %s198, 1
    %p202 = scmp.eq.s32.totalorder %s17, 1
    %p203 = scmp.ne.s32.totalorder %s198, %s200
    %p204 = scmp.eq.s32.totalorder %s17, 0
    %p205 = por %p203, %p204
    %p206 = scmp.ne.s32.totalorder %s198, %s200
    %p207 = scmp.eq.s32.totalorder %s22, 1
    %p208 = por %p206, %p207
    %p209 = scmp.ne.s32.totalorder %s200, %s201
    %p210 = scmp.eq.s32.totalorder %s22, 0
    %p211 = por %p209, %p210
    %p212 = scmp.ne.s32.totalorder %s200, %s201
    %p213 = scmp.eq.s32.totalorder %s23, 1
    %p214 = por %p212, %p213
    %p216 = scmp.ne.s32.totalorder %s201, %s215
    %p217 = scmp.eq.s32.totalorder %s23, 0
    %p218 = por %p216, %p217
    %s220 = sadd.s32 %s219, 1
    %p223 = scmp.eq.s32.totalorder %s17, 1
    %p224 = scmp.ne.s32.totalorder %s219, %s221
    %p225 = scmp.eq.s32.totalorder %s17, 0
    %p226 = por %p224, %p225
    %p227 = scmp.ne.s32.totalorder %s219, %s221
    %p228 = scmp.eq.s32.totalorder %s22, 1
    %p229 = por %p227, %p228
    %p230 = scmp.ne.s32.totalorder %s221, %s222
    %p231 = scmp.eq.s32.totalorder %s22, 0
    %p232 = por %p230, %p231
    %p233 = scmp.ne.s32.totalorder %s221, %s222
    %p234 = scmp.eq.s32.totalorder %s23, 1
    %p235 = por %p233, %p234
    %p237 = scmp.ne.s32.totalorder %s222, %s236
    %p238 = scmp.eq.s32.totalorder %s23, 0
    %p239 = por %p237, %p238
    %s241 = sadd.s32 %s240, 1
    %p244 = scmp.eq.s32.totalorder %s17, 1
    %p245 = scmp.ne.s32.totalorder %s240, %s242
    %p246 = scmp.eq.s32.totalorder %s17, 0
    %p247 = por %p245, %p246
    %p248 = scmp.ne.s32.totalorder %s240, %s242
    %p249 = scmp.eq.s32.totalorder %s22, 1
    %p250 = por %p248, %p249
    %p251 = scmp.ne.s32.totalorder %s242, %s243
    %p252 = scmp.eq.s32.totalorder %s22, 0
    %p253 = por %p251, %p252
    %p254 = scmp.ne.s32.totalorder %s242, %s243
    %p255 = scmp.eq.s32.totalorder %s23, 1
    %p256 = por %p254, %p255
    %p258 = scmp.ne.s32.totalorder %s243, %s257
    %p259 = scmp.eq.s32.totalorder %s23, 0
    %p260 = por %p258, %p259
    %s261 = ssub.s32 %s17, %s24
    %p262 = scmp.eq.s32.totalorder %s261, 0
    %s264 = sadd.s32 %s263, 1
    %s265 = scalar_select %p262, %s263, %s264
    %p268 = pneg %p262
    %p269 = scmp.eq.s32.totalorder %s17, 1
    %p270 = por %p268, %p269
    %p271 = scmp.ne.s32.totalorder %s263, %s266
    %p272 = scmp.eq.s32.totalorder %s17, 0
    %p273 = por %p271, %p272
    %p274 = scmp.ne.s32.totalorder %s263, %s266
    %p275 = scmp.eq.s32.totalorder %s22, 1
    %p276 = por %p274, %p275
    %p277 = scmp.ne.s32.totalorder %s266, %s267
    %p278 = scmp.eq.s32.totalorder %s22, 0
    %p279 = por %p277, %p278
    %p280 = scmp.ne.s32.totalorder %s266, %s267
    %p281 = scmp.eq.s32.totalorder %s23, 1
    %p282 = por %p280, %p281
    %p284 = scmp.ne.s32.totalorder %s267, %s283
    %p285 = scmp.eq.s32.totalorder %s23, 0
    %p286 = por %p284, %p285
    %p287 = scmp.le.s32.totalorder 1, %s17
    %p288 = scmp.lt.s32.totalorder %s17, 3
    %p289 = pnand %p287, %p288
    %p290 = pneg %p289
    // Predicated region
    $region9: #{imlp_forward.1} parent=5 // pred_check
      _
    $region10: #{imlp_forward.1} parent=5 // pred_check_branch
      %292 = sbr.rel (%p289) target = $region12
    $region11: #{imlp_forward.1} parent=5 // pred_region
      %s293 = ssub.s32 %s17, 1
      // Predicated region
      $region13: #{imlp_forward.1} parent=11 // pred_check
        %p294 = pneg %p64
      $region14: #{imlp_forward.1} parent=11 // pred_check_branch
        %296 = sbr.rel (%p294) target = $region16
      $region15: #{imlp_forward.1} parent=11 // pred_region
        _
      $region16: #{imlp_forward.1} parent=11 // pred_fallthru
        _
      // Predicated region
      $region17: #{imlp_forward.1} parent=11 // pred_check
        %p297 = pneg %p85
      $region18: #{imlp_forward.1} parent=11 // pred_check_branch
        %299 = sbr.rel (%p297) target = $region20
      $region19: #{imlp_forward.1} parent=11 // pred_region
        _
      $region20: #{imlp_forward.1} parent=11 // pred_fallthru
        _
      // Predicated region
      $region21: #{imlp_forward.1} parent=11 // pred_check
        %p300 = pneg %p106
      $region22: #{imlp_forward.1} parent=11 // pred_check_branch
        %302 = sbr.rel (%p300) target = $region24
      $region23: #{imlp_forward.1} parent=11 // pred_region
        _
      $region24: #{imlp_forward.1} parent=11 // pred_fallthru
        _
      // Predicated region
      $region25: #{imlp_forward.1} parent=11 // pred_check
        %p303 = pneg %p127
      $region26: #{imlp_forward.1} parent=11 // pred_check_branch
        %305 = sbr.rel (%p303) target = $region28
      $region27: #{imlp_forward.1} parent=11 // pred_region
        _
      $region28: #{imlp_forward.1} parent=11 // pred_fallthru
        _
      // Predicated region
      $region29: #{imlp_forward.1} parent=11 // pred_check
        %p306 = pneg %p148
      $region30: #{imlp_forward.1} parent=11 // pred_check_branch
        %308 = sbr.rel (%p306) target = $region32
      $region31: #{imlp_forward.1} parent=11 // pred_region
        _
      $region32: #{imlp_forward.1} parent=11 // pred_fallthru
        _
      // Predicated region
      $region33: #{imlp_forward.1} parent=11 // pred_check
        %p309 = pneg %p169
      $region34: #{imlp_forward.1} parent=11 // pred_check_branch
        %311 = sbr.rel (%p309) target = $region36
      $region35: #{imlp_forward.1} parent=11 // pred_region
        _
      $region36: #{imlp_forward.1} parent=11 // pred_fallthru
        _
      // Predicated region
      $region37: #{imlp_forward.1} parent=11 // pred_check
        %p312 = pneg %p190
      $region38: #{imlp_forward.1} parent=11 // pred_check_branch
        %314 = sbr.rel (%p312) target = $region40
      $region39: #{imlp_forward.1} parent=11 // pred_region
        _
      $region40: #{imlp_forward.1} parent=11 // pred_fallthru
        _
      // Predicated region
      $region41: #{imlp_forward.1} parent=11 // pred_check
        %p315 = pneg %p211
      $region42: #{imlp_forward.1} parent=11 // pred_check_branch
        %317 = sbr.rel (%p315) target = $region44
      $region43: #{imlp_forward.1} parent=11 // pred_region
        _
      $region44: #{imlp_forward.1} parent=11 // pred_fallthru
        _
      // Predicated region
      $region45: #{imlp_forward.1} parent=11 // pred_check
        %p318 = pneg %p232
      $region46: #{imlp_forward.1} parent=11 // pred_check_branch
        %320 = sbr.rel (%p318) target = $region48
      $region47: #{imlp_forward.1} parent=11 // pred_region
        _
      $region48: #{imlp_forward.1} parent=11 // pred_fallthru
        _
      // Predicated region
      $region49: #{imlp_forward.1} parent=11 // pred_check
        %p321 = pneg %p253
      $region50: #{imlp_forward.1} parent=11 // pred_check_branch
        %323 = sbr.rel (%p321) target = $region52
      $region51: #{imlp_forward.1} parent=11 // pred_region
        _
      $region52: #{imlp_forward.1} parent=11 // pred_fallthru
        _
    $region12: #{imlp_forward.1} parent=5 // pred_fallthru
      _
    %p324 = scmp.lt.s32.totalorder %s17, 2
    // Predicated region
    $region53: #{imlp_forward.1} parent=5 // pred_check
      %p325 = pneg %p324
    $region54: #{imlp_forward.1} parent=5 // pred_check_branch
      %327 = sbr.rel (%p325) target = $region56
    $region55: #{imlp_forward.1} parent=5 // pred_region
      // Predicated region
      $region57: #{imlp_forward.1} parent=55 // pred_check
        %p328 = pneg %p37
      $region58: #{imlp_forward.1} parent=55 // pred_check_branch
        %330 = sbr.rel (%p328) target = $region60
      $region59: #{imlp_forward.1} parent=55 // pred_region
        %s331 = smul.u32 8, %s17
        %p332 = scmp.lt.s32.totalorder %s331, 15
        %s333 = scalar_select %p332, %s331, 15
        %s334 = smul.addr %s333, 2
        %s335 = scalar_lea.vmem %s0, %s334
        %s336 = smul.u32 8, %s17
      $region60: #{imlp_forward.1} parent=55 // pred_fallthru
        _
    $region56: #{imlp_forward.1} parent=5 // pred_fallthru
      _
    %p337 = scmp.le.s32.totalorder 1, %s17
    %p338 = scmp.lt.s32.totalorder %s17, 3
    %p339 = pnand %p337, %p338
    %p340 = pneg %p339
    // Predicated region
    $region61: #{imlp_forward.1} parent=5 // pred_check
      _
    $region62: #{imlp_forward.1} parent=5 // pred_check_branch
      %342 = sbr.rel (%p339) target = $region64
    $region63: #{imlp_forward.1} parent=5 // pred_region
      %s343 = ssub.s32 %s17, 1
      %s344 = smul.u32 8, %s22
      %p345 = scmp.lt.s32.totalorder %s344, 15
      %s346 = scalar_select %p345, %s344, 15
      %s347 = smul.addr %s346, 2
      %s348 = scalar_lea.vmem %s0, %s347
      %p349 = pneg %p43
      %p350 = pneg %p40
      %p351 = pneg %p64
      %p352 = pneg %p61
      %p353 = pneg %p85
      %p354 = pneg %p82
      %p355 = pneg %p106
      %p356 = pneg %p103
      %p357 = pneg %p127
      %p358 = pneg %p124
      %p359 = pneg %p148
      %p360 = pneg %p145
      %p361 = pneg %p169
      %p362 = pneg %p166
      %p363 = pneg %p190
      %p364 = pneg %p187
      %p365 = pneg %p211
      %p366 = pneg %p208
      %p367 = pneg %p232
      %p368 = pneg %p229
      %p369 = pneg %p253
      %p370 = pneg %p250
      %p371 = pneg %p279
      %p372 = pneg %p276
      %s373 = smul.u32 8, %s22
      %p374 = scmp.lt.s32.totalorder %s373, 15
      %s375 = scalar_select %p374, %s373, 15
      %s376 = smul.addr %s375, 4
      %s377 = scalar_lea.vmem %s11, %s376
      %s378 = smul.u32 8, %s22
      %p379 = scmp.lt.s32.totalorder %s378, 15
      %s380 = scalar_select %p379, %s378, 15
      %s381 = smul.addr %s380, 2
      %s382 = scalar_lea.vmem %s0, %s381
      %s383 = smul.u32 8, %s22
      %s384 = smul.u32 8, %s22
      %p385 = scmp.lt.s32.totalorder %s384, 15
      %s386 = scalar_select %p385, %s384, 15
      %s387 = smul.addr %s386, 4
      %s388 = scalar_lea.vmem %s11, %s387
      %s389 = smul.u32 8, %s22
      %v390 = vld [vmem:[%s2] sm:$0xff]
      %v391 = vld [vmem:[%s2 + $0x8] sm:$0xff]
      %v392 = vld [vmem:[%s2 + $0x10] sm:$0xff]
      %v393 = vld [vmem:[%s2 + $0x18] sm:$0xff]
      %v394 = vld [vmem:[%s2 + $0x20] sm:$0xff]
      %v395 = vld [vmem:[%s1] sm:$0xff]
      %v396 = vld [vmem:[%s1 + $0x8] sm:$0xff]
      %v397 = vld [vmem:[%s1 + $0x10] sm:$0xff]
      %v398 = vld [vmem:[%s1 + $0x18] sm:$0xff]
      %v399 = vld [vmem:[%s1 + $0x20] sm:$0xff]
      %v400 = vld [vmem:[%s382] ss:$2 sm:$0xff]
      %402 = vset.pattern.permute.xlu0 0
      %403 = vperm.xlu0 %402, %v395
      %v404 = vpop.permute.xlu0 %403
      %407 = vset.pattern.permute.xlu0 0
      %408 = vperm.xlu0 %407, %v396
      %v409 = vpop.permute.xlu0 %408
      %412 = vset.pattern.permute.xlu0 0
      %413 = vperm.xlu0 %412, %v397
      %v414 = vpop.permute.xlu0 %413
      %417 = vset.pattern.permute.xlu0 0
      %418 = vperm.xlu0 %417, %v398
      %v419 = vpop.permute.xlu0 %418
      %422 = vset.pattern.permute.xlu0 0
      %423 = vperm.xlu0 %422, %v399
      %v424 = vpop.permute.xlu0 %423
      %v427 = vlaneseq
      %v428 = vshrl.u32 %v427, 7
      %v429 = vsub.s32 0, %v428
      %v430 = vrot.slane %v400, %v429
      %v431 = vlaneseq
      %v432 = vshrl.u32 %v431, 7
      %v433 = vsub.s32 1, %v432
      %v434 = vrot.slane %v400, %v433
      %v435 = vlaneseq
      %v436 = vshrl.u32 %v435, 7
      %v437 = vsub.s32 2, %v436
      %v438 = vrot.slane %v400, %v437
      %v439 = vlaneseq
      %v440 = vshrl.u32 %v439, 7
      %v441 = vsub.s32 3, %v440
      %v442 = vrot.slane %v400, %v441
      %v443 = vlaneseq
      %v444 = vshrl.u32 %v443, 7
      %v445 = vsub.s32 4, %v444
      %v446 = vrot.slane %v400, %v445
      %v447 = vlaneseq
      %v448 = vshrl.u32 %v447, 7
      %v449 = vsub.s32 5, %v448
      %v450 = vrot.slane %v400, %v449
      %v451 = vlaneseq
      %v452 = vshrl.u32 %v451, 7
      %v453 = vsub.s32 6, %v452
      %v454 = vrot.slane %v400, %v453
      %v455 = vlaneseq
      %v456 = vshrl.u32 %v455, 7
      %v457 = vsub.s32 7, %v456
      %v458 = vrot.slane %v400, %v457
      %v467 = vmul.f32 %v404, %v430
      %v468 = vmul.f32 %v404, %v434
      %v469 = vmul.f32 %v404, %v438
      %v470 = vmul.f32 %v404, %v442
      %v471 = vmul.f32 %v404, %v446
      %v472 = vmul.f32 %v404, %v450
      %v473 = vmul.f32 %v404, %v454
      %v474 = vmul.f32 %v404, %v458
      %v475 = vmul.f32 %v409, %v430
      %v476 = vmul.f32 %v409, %v434
      %v477 = vmul.f32 %v409, %v438
      %v478 = vmul.f32 %v409, %v442
      %v479 = vmul.f32 %v409, %v446
      %v480 = vmul.f32 %v409, %v450
      %v481 = vmul.f32 %v409, %v454
      %v482 = vmul.f32 %v409, %v458
      %v483 = vmul.f32 %v414, %v430
      %v484 = vmul.f32 %v414, %v434
      %v485 = vmul.f32 %v414, %v438
      %v486 = vmul.f32 %v414, %v442
      %v487 = vmul.f32 %v414, %v446
      %v488 = vmul.f32 %v414, %v450
      %v489 = vmul.f32 %v414, %v454
      %v490 = vmul.f32 %v414, %v458
      %v491 = vmul.f32 %v419, %v430
      %v492 = vmul.f32 %v419, %v434
      %v493 = vmul.f32 %v419, %v438
      %v494 = vmul.f32 %v419, %v442
      %v495 = vmul.f32 %v419, %v446
      %v496 = vmul.f32 %v419, %v450
      %v497 = vmul.f32 %v419, %v454
      %v498 = vmul.f32 %v419, %v458
      %v499 = vmul.f32 %v424, %v430
      %v500 = vmul.f32 %v424, %v434
      %v501 = vmul.f32 %v424, %v438
      %v502 = vmul.f32 %v424, %v442
      %v503 = vmul.f32 %v424, %v446
      %v504 = vmul.f32 %v424, %v450
      %v505 = vmul.f32 %v424, %v454
      %v506 = vmul.f32 %v424, %v458
      %508 = vset.pattern.permute.xlu0 0
      %509 = vperm.xlu0 %508, %v390
      %v510 = vpop.permute.xlu0 %509
      %513 = vset.pattern.permute.xlu0 0
      %514 = vperm.xlu0 %513, %v391
      %v515 = vpop.permute.xlu0 %514
      %518 = vset.pattern.permute.xlu0 0
      %519 = vperm.xlu0 %518, %v392
      %v520 = vpop.permute.xlu0 %519
      %523 = vset.pattern.permute.xlu0 0
      %524 = vperm.xlu0 %523, %v393
      %v525 = vpop.permute.xlu0 %524
      %528 = vset.pattern.permute.xlu0 0
      %529 = vperm.xlu0 %528, %v394
      %v530 = vpop.permute.xlu0 %529
      %v532 = vadd.f32 %v510, %v467
      %v533 = vadd.f32 %v510, %v468
      %v534 = vadd.f32 %v510, %v469
      %v535 = vadd.f32 %v510, %v470
      %v536 = vadd.f32 %v510, %v471
      %v537 = vadd.f32 %v510, %v472
      %v538 = vadd.f32 %v510, %v473
      %v539 = vadd.f32 %v510, %v474
      %v540 = vadd.f32 %v515, %v475
      %v541 = vadd.f32 %v515, %v476
      %v542 = vadd.f32 %v515, %v477
      %v543 = vadd.f32 %v515, %v478
      %v544 = vadd.f32 %v515, %v479
      %v545 = vadd.f32 %v515, %v480
      %v546 = vadd.f32 %v515, %v481
      %v547 = vadd.f32 %v515, %v482
      %v548 = vadd.f32 %v520, %v483
      %v549 = vadd.f32 %v520, %v484
      %v550 = vadd.f32 %v520, %v485
      %v551 = vadd.f32 %v520, %v486
      %v552 = vadd.f32 %v520, %v487
      %v553 = vadd.f32 %v520, %v488
      %v554 = vadd.f32 %v520, %v489
      %v555 = vadd.f32 %v520, %v490
      %v556 = vadd.f32 %v525, %v491
      %v557 = vadd.f32 %v525, %v492
      %v558 = vadd.f32 %v525, %v493
      %v559 = vadd.f32 %v525, %v494
      %v560 = vadd.f32 %v525, %v495
      %v561 = vadd.f32 %v525, %v496
      %v562 = vadd.f32 %v525, %v497
      %v563 = vadd.f32 %v525, %v498
      %v564 = vadd.f32 %v530, %v499
      %v565 = vadd.f32 %v530, %v500
      %v566 = vadd.f32 %v530, %v501
      %v567 = vadd.f32 %v530, %v502
      %v568 = vadd.f32 %v530, %v503
      %v569 = vadd.f32 %v530, %v504
      %v570 = vadd.f32 %v530, %v505
      %v571 = vadd.f32 %v530, %v506
      %s572 = scalar_lea.vmem %s382, 1
      %v573 = vld [vmem:[%s572] ss:$2 sm:$0xff]
      %574 = vset.pattern.permute.xlu0 1
      %575 = vperm.xlu0 %574, %v395
      %v576 = vpop.permute.xlu0 %575
      %578 = vset.pattern.permute.xlu0 1
      %579 = vperm.xlu0 %578, %v396
      %v580 = vpop.permute.xlu0 %579
      %582 = vset.pattern.permute.xlu0 1
      %583 = vperm.xlu0 %582, %v397
      %v584 = vpop.permute.xlu0 %583
      %586 = vset.pattern.permute.xlu0 1
      %587 = vperm.xlu0 %586, %v398
      %v588 = vpop.permute.xlu0 %587
      %590 = vset.pattern.permute.xlu0 1
      %591 = vperm.xlu0 %590, %v399
      %v592 = vpop.permute.xlu0 %591
      %v595 = vlaneseq
      %v596 = vshrl.u32 %v595, 7
      %v597 = vsub.s32 0, %v596
      %v598 = vrot.slane %v573, %v597
      %v599 = vlaneseq
      %v600 = vshrl.u32 %v599, 7
      %v601 = vsub.s32 1, %v600
      %v602 = vrot.slane %v573, %v601
      %v603 = vlaneseq
      %v604 = vshrl.u32 %v603, 7
      %v605 = vsub.s32 2, %v604
      %v606 = vrot.slane %v573, %v605
      %v607 = vlaneseq
      %v608 = vshrl.u32 %v607, 7
      %v609 = vsub.s32 3, %v608
      %v610 = vrot.slane %v573, %v609
      %v611 = vlaneseq
      %v612 = vshrl.u32 %v611, 7
      %v613 = vsub.s32 4, %v612
      %v614 = vrot.slane %v573, %v613
      %v615 = vlaneseq
      %v616 = vshrl.u32 %v615, 7
      %v617 = vsub.s32 5, %v616
      %v618 = vrot.slane %v573, %v617
      %v619 = vlaneseq
      %v620 = vshrl.u32 %v619, 7
      %v621 = vsub.s32 6, %v620
      %v622 = vrot.slane %v573, %v621
      %v623 = vlaneseq
      %v624 = vshrl.u32 %v623, 7
      %v625 = vsub.s32 7, %v624
      %v626 = vrot.slane %v573, %v625
      %v635 = vmul.f32 %v576, %v598
      %v636 = vmul.f32 %v576, %v602
      %v637 = vmul.f32 %v576, %v606
      %v638 = vmul.f32 %v576, %v610
      %v639 = vmul.f32 %v576, %v614
      %v640 = vmul.f32 %v576, %v618
      %v641 = vmul.f32 %v576, %v622
      %v642 = vmul.f32 %v576, %v626
      %v643 = vmul.f32 %v580, %v598
      %v644 = vmul.f32 %v580, %v602
      %v645 = vmul.f32 %v580, %v606
      %v646 = vmul.f32 %v580, %v610
      %v647 = vmul.f32 %v580, %v614
      %v648 = vmul.f32 %v580, %v618
      %v649 = vmul.f32 %v580, %v622
      %v650 = vmul.f32 %v580, %v626
      %v651 = vmul.f32 %v584, %v598
      %v652 = vmul.f32 %v584, %v602
      %v653 = vmul.f32 %v584, %v606
      %v654 = vmul.f32 %v584, %v610
      %v655 = vmul.f32 %v584, %v614
      %v656 = vmul.f32 %v584, %v618
      %v657 = vmul.f32 %v584, %v622
      %v658 = vmul.f32 %v584, %v626
      %v659 = vmul.f32 %v588, %v598
      %v660 = vmul.f32 %v588, %v602
      %v661 = vmul.f32 %v588, %v606
      %v662 = vmul.f32 %v588, %v610
      %v663 = vmul.f32 %v588, %v614
      %v664 = vmul.f32 %v588, %v618
      %v665 = vmul.f32 %v588, %v622
      %v666 = vmul.f32 %v588, %v626
      %v667 = vmul.f32 %v592, %v598
      %v668 = vmul.f32 %v592, %v602
      %v669 = vmul.f32 %v592, %v606
      %v670 = vmul.f32 %v592, %v610
      %v671 = vmul.f32 %v592, %v614
      %v672 = vmul.f32 %v592, %v618
      %v673 = vmul.f32 %v592, %v622
      %v674 = vmul.f32 %v592, %v626
      %v675 = vadd.f32 %v532, %v635
      %v676 = vadd.f32 %v533, %v636
      %v677 = vadd.f32 %v534, %v637
      %v678 = vadd.f32 %v535, %v638
      %v679 = vadd.f32 %v536, %v639
      %v680 = vadd.f32 %v537, %v640
      %v681 = vadd.f32 %v538, %v641
      %v682 = vadd.f32 %v539, %v642
      %v683 = vadd.f32 %v540, %v643
      %v684 = vadd.f32 %v541, %v644
      %v685 = vadd.f32 %v542, %v645
      %v686 = vadd.f32 %v543, %v646
      %v687 = vadd.f32 %v544, %v647
      %v688 = vadd.f32 %v545, %v648
      %v689 = vadd.f32 %v546, %v649
      %v690 = vadd.f32 %v547, %v650
      %v691 = vadd.f32 %v548, %v651
      %v692 = vadd.f32 %v549, %v652
      %v693 = vadd.f32 %v550, %v653
      %v694 = vadd.f32 %v551, %v654
      %v695 = vadd.f32 %v552, %v655
      %v696 = vadd.f32 %v553, %v656
      %v697 = vadd.f32 %v554, %v657
      %v698 = vadd.f32 %v555, %v658
      %v699 = vadd.f32 %v556, %v659
      %v700 = vadd.f32 %v557, %v660
      %v701 = vadd.f32 %v558, %v661
      %v702 = vadd.f32 %v559, %v662
      %v703 = vadd.f32 %v560, %v663
      %v704 = vadd.f32 %v561, %v664
      %v705 = vadd.f32 %v562, %v665
      %v706 = vadd.f32 %v563, %v666
      %v707 = vadd.f32 %v564, %v667
      %v708 = vadd.f32 %v565, %v668
      %v709 = vadd.f32 %v566, %v669
      %v710 = vadd.f32 %v567, %v670
      %v711 = vadd.f32 %v568, %v671
      %v712 = vadd.f32 %v569, %v672
      %v713 = vadd.f32 %v570, %v673
      %v714 = vadd.f32 %v571, %v674
      %v715 = vand.u32 2147483647, %v675
      %vm716 = vcmp.le.f32.partialorder %v715, 0.7853982
      %vm717 = vcmp.lt.s32.totalorder %v675, 0
      %v718 = vand.u32 %v675, 2139095040
      %v719 = vshrl.u32 %v718, 23
      %v720 = vsub.s32 %v719, 127
      %v721 = vand.u32 2147483647, %v675
      %v722 = vand.u32 %v721, 8388607
      %v723 = vor.u32 %v722, 8388608
      %v724 = vsub.s32 0, %v723
      %v725 = vadd.s32 %v720, 1
      %vm726 = vcmp.gt.s32.totalorder %v725, 0
      %v727 = vsel %vm726, %v725, 0
      %v728 = vshrl.u32 %v727, 5
      %v729 = vand.u32 %v727, 31
      %v730 = vsub.s32 32, %v729
      %v731 = vshrl.u32 683565275, %v730
      %v732 = vshll.u32 683565275, %v729
      %v733 = vshrl.u32 2475754826, %v730
      %v734 = vor.u32 %v732, %v733
      %v735 = vshll.u32 2475754826, %v729
      %v736 = vshrl.u32 2131351028, %v730
      %v737 = vor.u32 %v735, %v736
      %v738 = vshll.u32 2131351028, %v729
      %v739 = vshrl.u32 2102212464, %v730
      %v740 = vor.u32 %v738, %v739
      %v741 = vshll.u32 2102212464, %v729
      %v742 = vshrl.u32 920167782, %v730
      %v743 = vor.u32 %v741, %v742
      %v744 = vshll.u32 920167782, %v729
      %v745 = vshrl.u32 1326507024, %v730
      %v746 = vor.u32 %v744, %v745
      %vm747 = vcmp.lt.s32.totalorder %v728, 1
      %vm748 = vcmp.lt.s32.totalorder %v728, 2
      %vm749 = vcmp.lt.s32.totalorder %v728, 3
      %vm750 = vcmp.lt.s32.totalorder %v728, 4
      %v751 = vsel %vm747, %v731, %v734
      %v752 = vsel %vm750, %v740, 2102212464
      %v753 = vsel %vm749, %v737, %v752
      %v754 = vsel %vm748, %v751, %v753
      %v755 = vsel %vm747, %v734, %v737
      %v756 = vsel %vm750, %v743, 920167782
      %v757 = vsel %vm749, %v740, %v756
      %v758 = vsel %vm748, %v755, %v757
      %v759 = vsel %vm747, %v737, %v740
      %v760 = vsel %vm750, %v746, 1326507024
      %v761 = vsel %vm749, %v743, %v760
      %v762 = vsel %vm748, %v759, %v761
      %v763 = vshll.u32 %v723, 8
      %v764 = vmul.u32.u64.compose %v763, %v762
      %v765 = vextract.low.u32 %v764
      %v766 = vextract.high.u32 %v764
      %v767 = vmul.u32.u64.compose %v763, %v758
      %v768 = vextract.low.u32 %v767
      %v769 = vextract.high.u32 %v767
      %v770 = vmul.u32 %v763, %v754
      %v771 = vadd.s32 %v766, %v768
      %vm772 = vc.u32 %v766, %v768
      %v773 = vadd.s32 %v769, 1
      %v774 = vsel %vm772, %v773, %v769
      %v775 = vadd.s32 %v770, %v774
      %v776 = vadd.s32 %v775, 536870912
      %v777 = vshrl.u32 %v776, 30
      %v778 = vshll.u32 %v777, 30
      %v779 = vsub.s32 %v775, %v778
      %vm780 = vcmp.lt.s32.totalorder %v779, 0
      %v781 = vsub.s32 0, %v779
      %v782 = vsel %vm780, %v781, %v779
      %v783 = vclz %v782
      %v784 = vsub.s32 %v783, 2
      %vm785 = vcmp.gt.s32.totalorder 0, %v784
      %v786 = vsel %vm785, 0, %v784
      %v787 = vsub.s32 32, %v786
      %v788 = vshll.u32 %v779, %v786
      %v789 = vshrl.u32 %v771, %v787
      %v790 = vor.u32 %v788, %v789
      %v791 = vsub.s32 4294967266, %v786
      %v792 = vadd.s32 %v791, 127
      %v793 = vshll.u32 %v792, 23
      %v794 = vor.u32 4788187, %v793
      %v795 = vand.u32 2147483647, %v794
      %v797 = vcvt.s32.f32 %v790
      %v798 = vmul.f32 %v797, %v795
      %v799 = vxor.u32 %v798, 2147483648
      %v800 = vsel %vm717, %v799, %v798
      %v801 = vsub.s32 4, %v777
      %v802 = vsel %vm717, %v801, %v777
      %v803 = vsel %vm716, %v675, %v800
      %v804 = vsel %vm716, 0, %v802
      %v805 = vcosq.f32.pop %v803
      %v806 = vsinq.f32.pop %v803
      %vm807 = vweird.f32 %v675
      %v808 = vadd.s32 %v804, 3
      %v809 = vand.u32 %v808, 3
      %vm810 = vcmp.lt.s32.totalorder %v809, 2
      %vm811 = vcmp.eq.s32.totalorder %v809, 0
      %v812 = vxor.u32 %v806, 2147483648
      %v813 = vsel %vm811, %v805, %v812
      %vm814 = vcmp.eq.s32.totalorder %v809, 2
      %v815 = vxor.u32 %v805, 2147483648
      %v816 = vsel %vm814, %v815, %v806
      %v817 = vsel %vm810, %v813, %v816
      %v818 = vsel %vm807, nan, %v817
      %v819 = vand.u32 2147483647, %v676
      %vm820 = vcmp.le.f32.partialorder %v819, 0.7853982
      %vm821 = vcmp.lt.s32.totalorder %v676, 0
      %v822 = vand.u32 %v676, 2139095040
      %v823 = vshrl.u32 %v822, 23
      %v824 = vsub.s32 %v823, 127
      %v825 = vand.u32 2147483647, %v676
      %v826 = vand.u32 %v825, 8388607
      %v827 = vor.u32 %v826, 8388608
      %v828 = vsub.s32 0, %v827
      %v829 = vadd.s32 %v824, 1
      %vm830 = vcmp.gt.s32.totalorder %v829, 0
      %v831 = vsel %vm830, %v829, 0
      %v832 = vshrl.u32 %v831, 5
      %v833 = vand.u32 %v831, 31
      %v834 = vsub.s32 32, %v833
      %v835 = vshrl.u32 683565275, %v834
      %v836 = vshll.u32 683565275, %v833
      %v837 = vshrl.u32 2475754826, %v834
      %v838 = vor.u32 %v836, %v837
      %v839 = vshll.u32 2475754826, %v833
      %v840 = vshrl.u32 2131351028, %v834
      %v841 = vor.u32 %v839, %v840
      %v842 = vshll.u32 2131351028, %v833
      %v843 = vshrl.u32 2102212464, %v834
      %v844 = vor.u32 %v842, %v843
      %v845 = vshll.u32 2102212464, %v833
      %v846 = vshrl.u32 920167782, %v834
      %v847 = vor.u32 %v845, %v846
      %v848 = vshll.u32 920167782, %v833
      %v849 = vshrl.u32 1326507024, %v834
      %v850 = vor.u32 %v848, %v849
      %vm851 = vcmp.lt.s32.totalorder %v832, 1
      %vm852 = vcmp.lt.s32.totalorder %v832, 2
      %vm853 = vcmp.lt.s32.totalorder %v832, 3
      %vm854 = vcmp.lt.s32.totalorder %v832, 4
      %v855 = vsel %vm851, %v835, %v838
      %v856 = vsel %vm854, %v844, 2102212464
      %v857 = vsel %vm853, %v841, %v856
      %v858 = vsel %vm852, %v855, %v857
      %v859 = vsel %vm851, %v838, %v841
      %v860 = vsel %vm854, %v847, 920167782
      %v861 = vsel %vm853, %v844, %v860
      %v862 = vsel %vm852, %v859, %v861
      %v863 = vsel %vm851, %v841, %v844
      %v864 = vsel %vm854, %v850, 1326507024
      %v865 = vsel %vm853, %v847, %v864
      %v866 = vsel %vm852, %v863, %v865
      %v867 = vshll.u32 %v827, 8
      %v868 = vmul.u32.u64.compose %v867, %v866
      %v869 = vextract.low.u32 %v868
      %v870 = vextract.high.u32 %v868
      %v871 = vmul.u32.u64.compose %v867, %v862
      %v872 = vextract.low.u32 %v871
      %v873 = vextract.high.u32 %v871
      %v874 = vmul.u32 %v867, %v858
      %v875 = vadd.s32 %v870, %v872
      %vm876 = vc.u32 %v870, %v872
      %v877 = vadd.s32 %v873, 1
      %v878 = vsel %vm876, %v877, %v873
      %v879 = vadd.s32 %v874, %v878
      %v880 = vadd.s32 %v879, 536870912
      %v881 = vshrl.u32 %v880, 30
      %v882 = vshll.u32 %v881, 30
      %v883 = vsub.s32 %v879, %v882
      %vm884 = vcmp.lt.s32.totalorder %v883, 0
      %v885 = vsub.s32 0, %v883
      %v886 = vsel %vm884, %v885, %v883
      %v887 = vclz %v886
      %v888 = vsub.s32 %v887, 2
      %vm889 = vcmp.gt.s32.totalorder 0, %v888
      %v890 = vsel %vm889, 0, %v888
      %v891 = vsub.s32 32, %v890
      %v892 = vshll.u32 %v883, %v890
      %v893 = vshrl.u32 %v875, %v891
      %v894 = vor.u32 %v892, %v893
      %v895 = vsub.s32 4294967266, %v890
      %v896 = vadd.s32 %v895, 127
      %v897 = vshll.u32 %v896, 23
      %v898 = vor.u32 4788187, %v897
      %v899 = vand.u32 2147483647, %v898
      %v901 = vcvt.s32.f32 %v894
      %v902 = vmul.f32 %v901, %v899
      %v903 = vxor.u32 %v902, 2147483648
      %v904 = vsel %vm821, %v903, %v902
      %v905 = vsub.s32 4, %v881
      %v906 = vsel %vm821, %v905, %v881
      %v907 = vsel %vm820, %v676, %v904
      %v908 = vsel %vm820, 0, %v906
      %v909 = vcosq.f32.pop %v907
      %v910 = vsinq.f32.pop %v907
      %vm911 = vweird.f32 %v676
      %v912 = vadd.s32 %v908, 3
      %v913 = vand.u32 %v912, 3
      %vm914 = vcmp.lt.s32.totalorder %v913, 2
      %vm915 = vcmp.eq.s32.totalorder %v913, 0
      %v916 = vxor.u32 %v910, 2147483648
      %v917 = vsel %vm915, %v909, %v916
      %vm918 = vcmp.eq.s32.totalorder %v913, 2
      %v919 = vxor.u32 %v909, 2147483648
      %v920 = vsel %vm918, %v919, %v910
      %v921 = vsel %vm914, %v917, %v920
      %v922 = vsel %vm911, nan, %v921
      %v923 = vand.u32 2147483647, %v677
      %vm924 = vcmp.le.f32.partialorder %v923, 0.7853982
      %vm925 = vcmp.lt.s32.totalorder %v677, 0
      %v926 = vand.u32 %v677, 2139095040
      %v927 = vshrl.u32 %v926, 23
      %v928 = vsub.s32 %v927, 127
      %v929 = vand.u32 2147483647, %v677
      %v930 = vand.u32 %v929, 8388607
      %v931 = vor.u32 %v930, 8388608
      %v932 = vsub.s32 0, %v931
      %v933 = vadd.s32 %v928, 1
      %vm934 = vcmp.gt.s32.totalorder %v933, 0
      %v935 = vsel %vm934, %v933, 0
      %v936 = vshrl.u32 %v935, 5
      %v937 = vand.u32 %v935, 31
      %v938 = vsub.s32 32, %v937
      %v939 = vshrl.u32 683565275, %v938
      %v940 = vshll.u32 683565275, %v937
      %v941 = vshrl.u32 2475754826, %v938
      %v942 = vor.u32 %v940, %v941
      %v943 = vshll.u32 2475754826, %v937
      %v944 = vshrl.u32 2131351028, %v938
      %v945 = vor.u32 %v943, %v944
      %v946 = vshll.u32 2131351028, %v937
      %v947 = vshrl.u32 2102212464, %v938
      %v948 = vor.u32 %v946, %v947
      %v949 = vshll.u32 2102212464, %v937
      %v950 = vshrl.u32 920167782, %v938
      %v951 = vor.u32 %v949, %v950
      %v952 = vshll.u32 920167782, %v937
      %v953 = vshrl.u32 1326507024, %v938
      %v954 = vor.u32 %v952, %v953
      %vm955 = vcmp.lt.s32.totalorder %v936, 1
      %vm956 = vcmp.lt.s32.totalorder %v936, 2
      %vm957 = vcmp.lt.s32.totalorder %v936, 3
      %vm958 = vcmp.lt.s32.totalorder %v936, 4
      %v959 = vsel %vm955, %v939, %v942
      %v960 = vsel %vm958, %v948, 2102212464
      %v961 = vsel %vm957, %v945, %v960
      %v962 = vsel %vm956, %v959, %v961
      %v963 = vsel %vm955, %v942, %v945
      %v964 = vsel %vm958, %v951, 920167782
      %v965 = vsel %vm957, %v948, %v964
      %v966 = vsel %vm956, %v963, %v965
      %v967 = vsel %vm955, %v945, %v948
      %v968 = vsel %vm958, %v954, 1326507024
      %v969 = vsel %vm957, %v951, %v968
      %v970 = vsel %vm956, %v967, %v969
      %v971 = vshll.u32 %v931, 8
      %v972 = vmul.u32.u64.compose %v971, %v970
      %v973 = vextract.low.u32 %v972
      %v974 = vextract.high.u32 %v972
      %v975 = vmul.u32.u64.compose %v971, %v966
      %v976 = vextract.low.u32 %v975
      %v977 = vextract.high.u32 %v975
      %v978 = vmul.u32 %v971, %v962
      %v979 = vadd.s32 %v974, %v976
      %vm980 = vc.u32 %v974, %v976
      %v981 = vadd.s32 %v977, 1
      %v982 = vsel %vm980, %v981, %v977
      %v983 = vadd.s32 %v978, %v982
      %v984 = vadd.s32 %v983, 536870912
      %v985 = vshrl.u32 %v984, 30
      %v986 = vshll.u32 %v985, 30
      %v987 = vsub.s32 %v983, %v986
      %vm988 = vcmp.lt.s32.totalorder %v987, 0
      %v989 = vsub.s32 0, %v987
      %v990 = vsel %vm988, %v989, %v987
      %v991 = vclz %v990
      %v992 = vsub.s32 %v991, 2
      %vm993 = vcmp.gt.s32.totalorder 0, %v992
      %v994 = vsel %vm993, 0, %v992
      %v995 = vsub.s32 32, %v994
      %v996 = vshll.u32 %v987, %v994
      %v997 = vshrl.u32 %v979, %v995
      %v998 = vor.u32 %v996, %v997
      %v999 = vsub.s32 4294967266, %v994
      %v1000 = vadd.s32 %v999, 127
      %v1001 = vshll.u32 %v1000, 23
      %v1002 = vor.u32 4788187, %v1001
      %v1003 = vand.u32 2147483647, %v1002
      %v1005 = vcvt.s32.f32 %v998
      %v1006 = vmul.f32 %v1005, %v1003
      %v1007 = vxor.u32 %v1006, 2147483648
      %v1008 = vsel %vm925, %v1007, %v1006
      %v1009 = vsub.s32 4, %v985
      %v1010 = vsel %vm925, %v1009, %v985
      %v1011 = vsel %vm924, %v677, %v1008
      %v1012 = vsel %vm924, 0, %v1010
      %v1013 = vcosq.f32.pop %v1011
      %v1014 = vsinq.f32.pop %v1011
      %vm1015 = vweird.f32 %v677
      %v1016 = vadd.s32 %v1012, 3
      %v1017 = vand.u32 %v1016, 3
      %vm1018 = vcmp.lt.s32.totalorder %v1017, 2
      %vm1019 = vcmp.eq.s32.totalorder %v1017, 0
      %v1020 = vxor.u32 %v1014, 2147483648
      %v1021 = vsel %vm1019, %v1013, %v1020
      %vm1022 = vcmp.eq.s32.totalorder %v1017, 2
      %v1023 = vxor.u32 %v1013, 2147483648
      %v1024 = vsel %vm1022, %v1023, %v1014
      %v1025 = vsel %vm1018, %v1021, %v1024
      %v1026 = vsel %vm1015, nan, %v1025
      %v1027 = vand.u32 2147483647, %v678
      %vm1028 = vcmp.le.f32.partialorder %v1027, 0.7853982
      %vm1029 = vcmp.lt.s32.totalorder %v678, 0
      %v1030 = vand.u32 %v678, 2139095040
      %v1031 = vshrl.u32 %v1030, 23
      %v1032 = vsub.s32 %v1031, 127
      %v1033 = vand.u32 2147483647, %v678
      %v1034 = vand.u32 %v1033, 8388607
      %v1035 = vor.u32 %v1034, 8388608
      %v1036 = vsub.s32 0, %v1035
      %v1037 = vadd.s32 %v1032, 1
      %vm1038 = vcmp.gt.s32.totalorder %v1037, 0
      %v1039 = vsel %vm1038, %v1037, 0
      %v1040 = vshrl.u32 %v1039, 5
      %v1041 = vand.u32 %v1039, 31
      %v1042 = vsub.s32 32, %v1041
      %v1043 = vshrl.u32 683565275, %v1042
      %v1044 = vshll.u32 683565275, %v1041
      %v1045 = vshrl.u32 2475754826, %v1042
      %v1046 = vor.u32 %v1044, %v1045
      %v1047 = vshll.u32 2475754826, %v1041
      %v1048 = vshrl.u32 2131351028, %v1042
      %v1049 = vor.u32 %v1047, %v1048
      %v1050 = vshll.u32 2131351028, %v1041
      %v1051 = vshrl.u32 2102212464, %v1042
      %v1052 = vor.u32 %v1050, %v1051
      %v1053 = vshll.u32 2102212464, %v1041
      %v1054 = vshrl.u32 920167782, %v1042
      %v1055 = vor.u32 %v1053, %v1054
      %v1056 = vshll.u32 920167782, %v1041
      %v1057 = vshrl.u32 1326507024, %v1042
      %v1058 = vor.u32 %v1056, %v1057
      %vm1059 = vcmp.lt.s32.totalorder %v1040, 1
      %vm1060 = vcmp.lt.s32.totalorder %v1040, 2
      %vm1061 = vcmp.lt.s32.totalorder %v1040, 3
      %vm1062 = vcmp.lt.s32.totalorder %v1040, 4
      %v1063 = vsel %vm1059, %v1043, %v1046
      %v1064 = vsel %vm1062, %v1052, 2102212464
      %v1065 = vsel %vm1061, %v1049, %v1064
      %v1066 = vsel %vm1060, %v1063, %v1065
      %v1067 = vsel %vm1059, %v1046, %v1049
      %v1068 = vsel %vm1062, %v1055, 920167782
      %v1069 = vsel %vm1061, %v1052, %v1068
      %v1070 = vsel %vm1060, %v1067, %v1069
      %v1071 = vsel %vm1059, %v1049, %v1052
      %v1072 = vsel %vm1062, %v1058, 1326507024
      %v1073 = vsel %vm1061, %v1055, %v1072
      %v1074 = vsel %vm1060, %v1071, %v1073
      %v1075 = vshll.u32 %v1035, 8
      %v1076 = vmul.u32.u64.compose %v1075, %v1074
      %v1077 = vextract.low.u32 %v1076
      %v1078 = vextract.high.u32 %v1076
      %v1079 = vmul.u32.u64.compose %v1075, %v1070
      %v1080 = vextract.low.u32 %v1079
      %v1081 = vextract.high.u32 %v1079
      %v1082 = vmul.u32 %v1075, %v1066
      %v1083 = vadd.s32 %v1078, %v1080
      %vm1084 = vc.u32 %v1078, %v1080
      %v1085 = vadd.s32 %v1081, 1
      %v1086 = vsel %vm1084, %v1085, %v1081
      %v1087 = vadd.s32 %v1082, %v1086
      %v1088 = vadd.s32 %v1087, 536870912
      %v1089 = vshrl.u32 %v1088, 30
      %v1090 = vshll.u32 %v1089, 30
      %v1091 = vsub.s32 %v1087, %v1090
      %vm1092 = vcmp.lt.s32.totalorder %v1091, 0
      %v1093 = vsub.s32 0, %v1091
      %v1094 = vsel %vm1092, %v1093, %v1091
      %v1095 = vclz %v1094
      %v1096 = vsub.s32 %v1095, 2
      %vm1097 = vcmp.gt.s32.totalorder 0, %v1096
      %v1098 = vsel %vm1097, 0, %v1096
      %v1099 = vsub.s32 32, %v1098
      %v1100 = vshll.u32 %v1091, %v1098
      %v1101 = vshrl.u32 %v1083, %v1099
      %v1102 = vor.u32 %v1100, %v1101
      %v1103 = vsub.s32 4294967266, %v1098
      %v1104 = vadd.s32 %v1103, 127
      %v1105 = vshll.u32 %v1104, 23
      %v1106 = vor.u32 4788187, %v1105
      %v1107 = vand.u32 2147483647, %v1106
      %v1109 = vcvt.s32.f32 %v1102
      %v1110 = vmul.f32 %v1109, %v1107
      %v1111 = vxor.u32 %v1110, 2147483648
      %v1112 = vsel %vm1029, %v1111, %v1110
      %v1113 = vsub.s32 4, %v1089
      %v1114 = vsel %vm1029, %v1113, %v1089
      %v1115 = vsel %vm1028, %v678, %v1112
      %v1116 = vsel %vm1028, 0, %v1114
      %v1117 = vcosq.f32.pop %v1115
      %v1118 = vsinq.f32.pop %v1115
      %vm1119 = vweird.f32 %v678
      %v1120 = vadd.s32 %v1116, 3
      %v1121 = vand.u32 %v1120, 3
      %vm1122 = vcmp.lt.s32.totalorder %v1121, 2
      %vm1123 = vcmp.eq.s32.totalorder %v1121, 0
      %v1124 = vxor.u32 %v1118, 2147483648
      %v1125 = vsel %vm1123, %v1117, %v1124
      %vm1126 = vcmp.eq.s32.totalorder %v1121, 2
      %v1127 = vxor.u32 %v1117, 2147483648
      %v1128 = vsel %vm1126, %v1127, %v1118
      %v1129 = vsel %vm1122, %v1125, %v1128
      %v1130 = vsel %vm1119, nan, %v1129
      %v1131 = vand.u32 2147483647, %v679
      %vm1132 = vcmp.le.f32.partialorder %v1131, 0.7853982
      %vm1133 = vcmp.lt.s32.totalorder %v679, 0
      %v1134 = vand.u32 %v679, 2139095040
      %v1135 = vshrl.u32 %v1134, 23
      %v1136 = vsub.s32 %v1135, 127
      %v1137 = vand.u32 2147483647, %v679
      %v1138 = vand.u32 %v1137, 8388607
      %v1139 = vor.u32 %v1138, 8388608
      %v1140 = vsub.s32 0, %v1139
      %v1141 = vadd.s32 %v1136, 1
      %vm1142 = vcmp.gt.s32.totalorder %v1141, 0
      %v1143 = vsel %vm1142, %v1141, 0
      %v1144 = vshrl.u32 %v1143, 5
      %v1145 = vand.u32 %v1143, 31
      %v1146 = vsub.s32 32, %v1145
      %v1147 = vshrl.u32 683565275, %v1146
      %v1148 = vshll.u32 683565275, %v1145
      %v1149 = vshrl.u32 2475754826, %v1146
      %v1150 = vor.u32 %v1148, %v1149
      %v1151 = vshll.u32 2475754826, %v1145
      %v1152 = vshrl.u32 2131351028, %v1146
      %v1153 = vor.u32 %v1151, %v1152
      %v1154 = vshll.u32 2131351028, %v1145
      %v1155 = vshrl.u32 2102212464, %v1146
      %v1156 = vor.u32 %v1154, %v1155
      %v1157 = vshll.u32 2102212464, %v1145
      %v1158 = vshrl.u32 920167782, %v1146
      %v1159 = vor.u32 %v1157, %v1158
      %v1160 = vshll.u32 920167782, %v1145
      %v1161 = vshrl.u32 1326507024, %v1146
      %v1162 = vor.u32 %v1160, %v1161
      %vm1163 = vcmp.lt.s32.totalorder %v1144, 1
      %vm1164 = vcmp.lt.s32.totalorder %v1144, 2
      %vm1165 = vcmp.lt.s32.totalorder %v1144, 3
      %vm1166 = vcmp.lt.s32.totalorder %v1144, 4
      %v1167 = vsel %vm1163, %v1147, %v1150
      %v1168 = vsel %vm1166, %v1156, 2102212464
      %v1169 = vsel %vm1165, %v1153, %v1168
      %v1170 = vsel %vm1164, %v1167, %v1169
      %v1171 = vsel %vm1163, %v1150, %v1153
      %v1172 = vsel %vm1166, %v1159, 920167782
      %v1173 = vsel %vm1165, %v1156, %v1172
      %v1174 = vsel %vm1164, %v1171, %v1173
      %v1175 = vsel %vm1163, %v1153, %v1156
      %v1176 = vsel %vm1166, %v1162, 1326507024
      %v1177 = vsel %vm1165, %v1159, %v1176
      %v1178 = vsel %vm1164, %v1175, %v1177
      %v1179 = vshll.u32 %v1139, 8
      %v1180 = vmul.u32.u64.compose %v1179, %v1178
      %v1181 = vextract.low.u32 %v1180
      %v1182 = vextract.high.u32 %v1180
      %v1183 = vmul.u32.u64.compose %v1179, %v1174
      %v1184 = vextract.low.u32 %v1183
      %v1185 = vextract.high.u32 %v1183
      %v1186 = vmul.u32 %v1179, %v1170
      %v1187 = vadd.s32 %v1182, %v1184
      %vm1188 = vc.u32 %v1182, %v1184
      %v1189 = vadd.s32 %v1185, 1
      %v1190 = vsel %vm1188, %v1189, %v1185
      %v1191 = vadd.s32 %v1186, %v1190
      %v1192 = vadd.s32 %v1191, 536870912
      %v1193 = vshrl.u32 %v1192, 30
      %v1194 = vshll.u32 %v1193, 30
      %v1195 = vsub.s32 %v1191, %v1194
      %vm1196 = vcmp.lt.s32.totalorder %v1195, 0
      %v1197 = vsub.s32 0, %v1195
      %v1198 = vsel %vm1196, %v1197, %v1195
      %v1199 = vclz %v1198
      %v1200 = vsub.s32 %v1199, 2
      %vm1201 = vcmp.gt.s32.totalorder 0, %v1200
      %v1202 = vsel %vm1201, 0, %v1200
      %v1203 = vsub.s32 32, %v1202
      %v1204 = vshll.u32 %v1195, %v1202
      %v1205 = vshrl.u32 %v1187, %v1203
      %v1206 = vor.u32 %v1204, %v1205
      %v1207 = vsub.s32 4294967266, %v1202
      %v1208 = vadd.s32 %v1207, 127
      %v1209 = vshll.u32 %v1208, 23
      %v1210 = vor.u32 4788187, %v1209
      %v1211 = vand.u32 2147483647, %v1210
      %v1213 = vcvt.s32.f32 %v1206
      %v1214 = vmul.f32 %v1213, %v1211
      %v1215 = vxor.u32 %v1214, 2147483648
      %v1216 = vsel %vm1133, %v1215, %v1214
      %v1217 = vsub.s32 4, %v1193
      %v1218 = vsel %vm1133, %v1217, %v1193
      %v1219 = vsel %vm1132, %v679, %v1216
      %v1220 = vsel %vm1132, 0, %v1218
      %v1221 = vcosq.f32.pop %v1219
      %v1222 = vsinq.f32.pop %v1219
      %vm1223 = vweird.f32 %v679
      %v1224 = vadd.s32 %v1220, 3
      %v1225 = vand.u32 %v1224, 3
      %vm1226 = vcmp.lt.s32.totalorder %v1225, 2
      %vm1227 = vcmp.eq.s32.totalorder %v1225, 0
      %v1228 = vxor.u32 %v1222, 2147483648
      %v1229 = vsel %vm1227, %v1221, %v1228
      %vm1230 = vcmp.eq.s32.totalorder %v1225, 2
      %v1231 = vxor.u32 %v1221, 2147483648
      %v1232 = vsel %vm1230, %v1231, %v1222
      %v1233 = vsel %vm1226, %v1229, %v1232
      %v1234 = vsel %vm1223, nan, %v1233
      %v1235 = vand.u32 2147483647, %v680
      %vm1236 = vcmp.le.f32.partialorder %v1235, 0.7853982
      %vm1237 = vcmp.lt.s32.totalorder %v680, 0
      %v1238 = vand.u32 %v680, 2139095040
      %v1239 = vshrl.u32 %v1238, 23
      %v1240 = vsub.s32 %v1239, 127
      %v1241 = vand.u32 2147483647, %v680
      %v1242 = vand.u32 %v1241, 8388607
      %v1243 = vor.u32 %v1242, 8388608
      %v1244 = vsub.s32 0, %v1243
      %v1245 = vadd.s32 %v1240, 1
      %vm1246 = vcmp.gt.s32.totalorder %v1245, 0
      %v1247 = vsel %vm1246, %v1245, 0
      %v1248 = vshrl.u32 %v1247, 5
      %v1249 = vand.u32 %v1247, 31
      %v1250 = vsub.s32 32, %v1249
      %v1251 = vshrl.u32 683565275, %v1250
      %v1252 = vshll.u32 683565275, %v1249
      %v1253 = vshrl.u32 2475754826, %v1250
      %v1254 = vor.u32 %v1252, %v1253
      %v1255 = vshll.u32 2475754826, %v1249
      %v1256 = vshrl.u32 2131351028, %v1250
      %v1257 = vor.u32 %v1255, %v1256
      %v1258 = vshll.u32 2131351028, %v1249
      %v1259 = vshrl.u32 2102212464, %v1250
      %v1260 = vor.u32 %v1258, %v1259
      %v1261 = vshll.u32 2102212464, %v1249
      %v1262 = vshrl.u32 920167782, %v1250
      %v1263 = vor.u32 %v1261, %v1262
      %v1264 = vshll.u32 920167782, %v1249
      %v1265 = vshrl.u32 1326507024, %v1250
      %v1266 = vor.u32 %v1264, %v1265
      %vm1267 = vcmp.lt.s32.totalorder %v1248, 1
      %vm1268 = vcmp.lt.s32.totalorder %v1248, 2
      %vm1269 = vcmp.lt.s32.totalorder %v1248, 3
      %vm1270 = vcmp.lt.s32.totalorder %v1248, 4
      %v1271 = vsel %vm1267, %v1251, %v1254
      %v1272 = vsel %vm1270, %v1260, 2102212464
      %v1273 = vsel %vm1269, %v1257, %v1272
      %v1274 = vsel %vm1268, %v1271, %v1273
      %v1275 = vsel %vm1267, %v1254, %v1257
      %v1276 = vsel %vm1270, %v1263, 920167782
      %v1277 = vsel %vm1269, %v1260, %v1276
      %v1278 = vsel %vm1268, %v1275, %v1277
      %v1279 = vsel %vm1267, %v1257, %v1260
      %v1280 = vsel %vm1270, %v1266, 1326507024
      %v1281 = vsel %vm1269, %v1263, %v1280
      %v1282 = vsel %vm1268, %v1279, %v1281
      %v1283 = vshll.u32 %v1243, 8
      %v1284 = vmul.u32.u64.compose %v1283, %v1282
      %v1285 = vextract.low.u32 %v1284
      %v1286 = vextract.high.u32 %v1284
      %v1287 = vmul.u32.u64.compose %v1283, %v1278
      %v1288 = vextract.low.u32 %v1287
      %v1289 = vextract.high.u32 %v1287
      %v1290 = vmul.u32 %v1283, %v1274
      %v1291 = vadd.s32 %v1286, %v1288
      %vm1292 = vc.u32 %v1286, %v1288
      %v1293 = vadd.s32 %v1289, 1
      %v1294 = vsel %vm1292, %v1293, %v1289
      %v1295 = vadd.s32 %v1290, %v1294
      %v1296 = vadd.s32 %v1295, 536870912
      %v1297 = vshrl.u32 %v1296, 30
      %v1298 = vshll.u32 %v1297, 30
      %v1299 = vsub.s32 %v1295, %v1298
      %vm1300 = vcmp.lt.s32.totalorder %v1299, 0
      %v1301 = vsub.s32 0, %v1299
      %v1302 = vsel %vm1300, %v1301, %v1299
      %v1303 = vclz %v1302
      %v1304 = vsub.s32 %v1303, 2
      %vm1305 = vcmp.gt.s32.totalorder 0, %v1304
      %v1306 = vsel %vm1305, 0, %v1304
      %v1307 = vsub.s32 32, %v1306
      %v1308 = vshll.u32 %v1299, %v1306
      %v1309 = vshrl.u32 %v1291, %v1307
      %v1310 = vor.u32 %v1308, %v1309
      %v1311 = vsub.s32 4294967266, %v1306
      %v1312 = vadd.s32 %v1311, 127
      %v1313 = vshll.u32 %v1312, 23
      %v1314 = vor.u32 4788187, %v1313
      %v1315 = vand.u32 2147483647, %v1314
      %v1317 = vcvt.s32.f32 %v1310
      %v1318 = vmul.f32 %v1317, %v1315
      %v1319 = vxor.u32 %v1318, 2147483648
      %v1320 = vsel %vm1237, %v1319, %v1318
      %v1321 = vsub.s32 4, %v1297
      %v1322 = vsel %vm1237, %v1321, %v1297
      %v1323 = vsel %vm1236, %v680, %v1320
      %v1324 = vsel %vm1236, 0, %v1322
      %v1325 = vcosq.f32.pop %v1323
      %v1326 = vsinq.f32.pop %v1323
      %vm1327 = vweird.f32 %v680
      %v1328 = vadd.s32 %v1324, 3
      %v1329 = vand.u32 %v1328, 3
      %vm1330 = vcmp.lt.s32.totalorder %v1329, 2
      %vm1331 = vcmp.eq.s32.totalorder %v1329, 0
      %v1332 = vxor.u32 %v1326, 2147483648
      %v1333 = vsel %vm1331, %v1325, %v1332
      %vm1334 = vcmp.eq.s32.totalorder %v1329, 2
      %v1335 = vxor.u32 %v1325, 2147483648
      %v1336 = vsel %vm1334, %v1335, %v1326
      %v1337 = vsel %vm1330, %v1333, %v1336
      %v1338 = vsel %vm1327, nan, %v1337
      %v1339 = vand.u32 2147483647, %v681
      %vm1340 = vcmp.le.f32.partialorder %v1339, 0.7853982
      %vm1341 = vcmp.lt.s32.totalorder %v681, 0
      %v1342 = vand.u32 %v681, 2139095040
      %v1343 = vshrl.u32 %v1342, 23
      %v1344 = vsub.s32 %v1343, 127
      %v1345 = vand.u32 2147483647, %v681
      %v1346 = vand.u32 %v1345, 8388607
      %v1347 = vor.u32 %v1346, 8388608
      %v1348 = vsub.s32 0, %v1347
      %v1349 = vadd.s32 %v1344, 1
      %vm1350 = vcmp.gt.s32.totalorder %v1349, 0
      %v1351 = vsel %vm1350, %v1349, 0
      %v1352 = vshrl.u32 %v1351, 5
      %v1353 = vand.u32 %v1351, 31
      %v1354 = vsub.s32 32, %v1353
      %v1355 = vshrl.u32 683565275, %v1354
      %v1356 = vshll.u32 683565275, %v1353
      %v1357 = vshrl.u32 2475754826, %v1354
      %v1358 = vor.u32 %v1356, %v1357
      %v1359 = vshll.u32 2475754826, %v1353
      %v1360 = vshrl.u32 2131351028, %v1354
      %v1361 = vor.u32 %v1359, %v1360
      %v1362 = vshll.u32 2131351028, %v1353
      %v1363 = vshrl.u32 2102212464, %v1354
      %v1364 = vor.u32 %v1362, %v1363
      %v1365 = vshll.u32 2102212464, %v1353
      %v1366 = vshrl.u32 920167782, %v1354
      %v1367 = vor.u32 %v1365, %v1366
      %v1368 = vshll.u32 920167782, %v1353
      %v1369 = vshrl.u32 1326507024, %v1354
      %v1370 = vor.u32 %v1368, %v1369
      %vm1371 = vcmp.lt.s32.totalorder %v1352, 1
      %vm1372 = vcmp.lt.s32.totalorder %v1352, 2
      %vm1373 = vcmp.lt.s32.totalorder %v1352, 3
      %vm1374 = vcmp.lt.s32.totalorder %v1352, 4
      %v1375 = vsel %vm1371, %v1355, %v1358
      %v1376 = vsel %vm1374, %v1364, 2102212464
      %v1377 = vsel %vm1373, %v1361, %v1376
      %v1378 = vsel %vm1372, %v1375, %v1377
      %v1379 = vsel %vm1371, %v1358, %v1361
      %v1380 = vsel %vm1374, %v1367, 920167782
      %v1381 = vsel %vm1373, %v1364, %v1380
      %v1382 = vsel %vm1372, %v1379, %v1381
      %v1383 = vsel %vm1371, %v1361, %v1364
      %v1384 = vsel %vm1374, %v1370, 1326507024
      %v1385 = vsel %vm1373, %v1367, %v1384
      %v1386 = vsel %vm1372, %v1383, %v1385
      %v1387 = vshll.u32 %v1347, 8
      %v1388 = vmul.u32.u64.compose %v1387, %v1386
      %v1389 = vextract.low.u32 %v1388
      %v1390 = vextract.high.u32 %v1388
      %v1391 = vmul.u32.u64.compose %v1387, %v1382
      %v1392 = vextract.low.u32 %v1391
      %v1393 = vextract.high.u32 %v1391
      %v1394 = vmul.u32 %v1387, %v1378
      %v1395 = vadd.s32 %v1390, %v1392
      %vm1396 = vc.u32 %v1390, %v1392
      %v1397 = vadd.s32 %v1393, 1
      %v1398 = vsel %vm1396, %v1397, %v1393
      %v1399 = vadd.s32 %v1394, %v1398
      %v1400 = vadd.s32 %v1399, 536870912
      %v1401 = vshrl.u32 %v1400, 30
      %v1402 = vshll.u32 %v1401, 30
      %v1403 = vsub.s32 %v1399, %v1402
      %vm1404 = vcmp.lt.s32.totalorder %v1403, 0
      %v1405 = vsub.s32 0, %v1403
      %v1406 = vsel %vm1404, %v1405, %v1403
      %v1407 = vclz %v1406
      %v1408 = vsub.s32 %v1407, 2
      %vm1409 = vcmp.gt.s32.totalorder 0, %v1408
      %v1410 = vsel %vm1409, 0, %v1408
      %v1411 = vsub.s32 32, %v1410
      %v1412 = vshll.u32 %v1403, %v1410
      %v1413 = vshrl.u32 %v1395, %v1411
      %v1414 = vor.u32 %v1412, %v1413
      %v1415 = vsub.s32 4294967266, %v1410
      %v1416 = vadd.s32 %v1415, 127
      %v1417 = vshll.u32 %v1416, 23
      %v1418 = vor.u32 4788187, %v1417
      %v1419 = vand.u32 2147483647, %v1418
      %v1421 = vcvt.s32.f32 %v1414
      %v1422 = vmul.f32 %v1421, %v1419
      %v1423 = vxor.u32 %v1422, 2147483648
      %v1424 = vsel %vm1341, %v1423, %v1422
      %v1425 = vsub.s32 4, %v1401
      %v1426 = vsel %vm1341, %v1425, %v1401
      %v1427 = vsel %vm1340, %v681, %v1424
      %v1428 = vsel %vm1340, 0, %v1426
      %v1429 = vcosq.f32.pop %v1427
      %v1430 = vsinq.f32.pop %v1427
      %vm1431 = vweird.f32 %v681
      %v1432 = vadd.s32 %v1428, 3
      %v1433 = vand.u32 %v1432, 3
      %vm1434 = vcmp.lt.s32.totalorder %v1433, 2
      %vm1435 = vcmp.eq.s32.totalorder %v1433, 0
      %v1436 = vxor.u32 %v1430, 2147483648
      %v1437 = vsel %vm1435, %v1429, %v1436
      %vm1438 = vcmp.eq.s32.totalorder %v1433, 2
      %v1439 = vxor.u32 %v1429, 2147483648
      %v1440 = vsel %vm1438, %v1439, %v1430
      %v1441 = vsel %vm1434, %v1437, %v1440
      %v1442 = vsel %vm1431, nan, %v1441
      %v1443 = vand.u32 2147483647, %v682
      %vm1444 = vcmp.le.f32.partialorder %v1443, 0.7853982
      %vm1445 = vcmp.lt.s32.totalorder %v682, 0
      %v1446 = vand.u32 %v682, 2139095040
      %v1447 = vshrl.u32 %v1446, 23
      %v1448 = vsub.s32 %v1447, 127
      %v1449 = vand.u32 2147483647, %v682
      %v1450 = vand.u32 %v1449, 8388607
      %v1451 = vor.u32 %v1450, 8388608
      %v1452 = vsub.s32 0, %v1451
      %v1453 = vadd.s32 %v1448, 1
      %vm1454 = vcmp.gt.s32.totalorder %v1453, 0
      %v1455 = vsel %vm1454, %v1453, 0
      %v1456 = vshrl.u32 %v1455, 5
      %v1457 = vand.u32 %v1455, 31
      %v1458 = vsub.s32 32, %v1457
      %v1459 = vshrl.u32 683565275, %v1458
      %v1460 = vshll.u32 683565275, %v1457
      %v1461 = vshrl.u32 2475754826, %v1458
      %v1462 = vor.u32 %v1460, %v1461
      %v1463 = vshll.u32 2475754826, %v1457
      %v1464 = vshrl.u32 2131351028, %v1458
      %v1465 = vor.u32 %v1463, %v1464
      %v1466 = vshll.u32 2131351028, %v1457
      %v1467 = vshrl.u32 2102212464, %v1458
      %v1468 = vor.u32 %v1466, %v1467
      %v1469 = vshll.u32 2102212464, %v1457
      %v1470 = vshrl.u32 920167782, %v1458
      %v1471 = vor.u32 %v1469, %v1470
      %v1472 = vshll.u32 920167782, %v1457
      %v1473 = vshrl.u32 1326507024, %v1458
      %v1474 = vor.u32 %v1472, %v1473
      %vm1475 = vcmp.lt.s32.totalorder %v1456, 1
      %vm1476 = vcmp.lt.s32.totalorder %v1456, 2
      %vm1477 = vcmp.lt.s32.totalorder %v1456, 3
      %vm1478 = vcmp.lt.s32.totalorder %v1456, 4
      %v1479 = vsel %vm1475, %v1459, %v1462
      %v1480 = vsel %vm1478, %v1468, 2102212464
      %v1481 = vsel %vm1477, %v1465, %v1480
      %v1482 = vsel %vm1476, %v1479, %v1481
      %v1483 = vsel %vm1475, %v1462, %v1465
      %v1484 = vsel %vm1478, %v1471, 920167782
      %v1485 = vsel %vm1477, %v1468, %v1484
      %v1486 = vsel %vm1476, %v1483, %v1485
      %v1487 = vsel %vm1475, %v1465, %v1468
      %v1488 = vsel %vm1478, %v1474, 1326507024
      %v1489 = vsel %vm1477, %v1471, %v1488
      %v1490 = vsel %vm1476, %v1487, %v1489
      %v1491 = vshll.u32 %v1451, 8
      %v1492 = vmul.u32.u64.compose %v1491, %v1490
      %v1493 = vextract.low.u32 %v1492
      %v1494 = vextract.high.u32 %v1492
      %v1495 = vmul.u32.u64.compose %v1491, %v1486
      %v1496 = vextract.low.u32 %v1495
      %v1497 = vextract.high.u32 %v1495
      %v1498 = vmul.u32 %v1491, %v1482
      %v1499 = vadd.s32 %v1494, %v1496
      %vm1500 = vc.u32 %v1494, %v1496
      %v1501 = vadd.s32 %v1497, 1
      %v1502 = vsel %vm1500, %v1501, %v1497
      %v1503 = vadd.s32 %v1498, %v1502
      %v1504 = vadd.s32 %v1503, 536870912
      %v1505 = vshrl.u32 %v1504, 30
      %v1506 = vshll.u32 %v1505, 30
      %v1507 = vsub.s32 %v1503, %v1506
      %vm1508 = vcmp.lt.s32.totalorder %v1507, 0
      %v1509 = vsub.s32 0, %v1507
      %v1510 = vsel %vm1508, %v1509, %v1507
      %v1511 = vclz %v1510
      %v1512 = vsub.s32 %v1511, 2
      %vm1513 = vcmp.gt.s32.totalorder 0, %v1512
      %v1514 = vsel %vm1513, 0, %v1512
      %v1515 = vsub.s32 32, %v1514
      %v1516 = vshll.u32 %v1507, %v1514
      %v1517 = vshrl.u32 %v1499, %v1515
      %v1518 = vor.u32 %v1516, %v1517
      %v1519 = vsub.s32 4294967266, %v1514
      %v1520 = vadd.s32 %v1519, 127
      %v1521 = vshll.u32 %v1520, 23
      %v1522 = vor.u32 4788187, %v1521
      %v1523 = vand.u32 2147483647, %v1522
      %v1525 = vcvt.s32.f32 %v1518
      %v1526 = vmul.f32 %v1525, %v1523
      %v1527 = vxor.u32 %v1526, 2147483648
      %v1528 = vsel %vm1445, %v1527, %v1526
      %v1529 = vsub.s32 4, %v1505
      %v1530 = vsel %vm1445, %v1529, %v1505
      %v1531 = vsel %vm1444, %v682, %v1528
      %v1532 = vsel %vm1444, 0, %v1530
      %v1533 = vcosq.f32.pop %v1531
      %v1534 = vsinq.f32.pop %v1531
      %vm1535 = vweird.f32 %v682
      %v1536 = vadd.s32 %v1532, 3
      %v1537 = vand.u32 %v1536, 3
      %vm1538 = vcmp.lt.s32.totalorder %v1537, 2
      %vm1539 = vcmp.eq.s32.totalorder %v1537, 0
      %v1540 = vxor.u32 %v1534, 2147483648
      %v1541 = vsel %vm1539, %v1533, %v1540
      %vm1542 = vcmp.eq.s32.totalorder %v1537, 2
      %v1543 = vxor.u32 %v1533, 2147483648
      %v1544 = vsel %vm1542, %v1543, %v1534
      %v1545 = vsel %vm1538, %v1541, %v1544
      %v1546 = vsel %vm1535, nan, %v1545
      %v1547 = vand.u32 2147483647, %v683
      %vm1548 = vcmp.le.f32.partialorder %v1547, 0.7853982
      %vm1549 = vcmp.lt.s32.totalorder %v683, 0
      %v1550 = vand.u32 %v683, 2139095040
      %v1551 = vshrl.u32 %v1550, 23
      %v1552 = vsub.s32 %v1551, 127
      %v1553 = vand.u32 2147483647, %v683
      %v1554 = vand.u32 %v1553, 8388607
      %v1555 = vor.u32 %v1554, 8388608
      %v1556 = vsub.s32 0, %v1555
      %v1557 = vadd.s32 %v1552, 1
      %vm1558 = vcmp.gt.s32.totalorder %v1557, 0
      %v1559 = vsel %vm1558, %v1557, 0
      %v1560 = vshrl.u32 %v1559, 5
      %v1561 = vand.u32 %v1559, 31
      %v1562 = vsub.s32 32, %v1561
      %v1563 = vshrl.u32 683565275, %v1562
      %v1564 = vshll.u32 683565275, %v1561
      %v1565 = vshrl.u32 2475754826, %v1562
      %v1566 = vor.u32 %v1564, %v1565
      %v1567 = vshll.u32 2475754826, %v1561
      %v1568 = vshrl.u32 2131351028, %v1562
      %v1569 = vor.u32 %v1567, %v1568
      %v1570 = vshll.u32 2131351028, %v1561
      %v1571 = vshrl.u32 2102212464, %v1562
      %v1572 = vor.u32 %v1570, %v1571
      %v1573 = vshll.u32 2102212464, %v1561
      %v1574 = vshrl.u32 920167782, %v1562
      %v1575 = vor.u32 %v1573, %v1574
      %v1576 = vshll.u32 920167782, %v1561
      %v1577 = vshrl.u32 1326507024, %v1562
      %v1578 = vor.u32 %v1576, %v1577
      %vm1579 = vcmp.lt.s32.totalorder %v1560, 1
      %vm1580 = vcmp.lt.s32.totalorder %v1560, 2
      %vm1581 = vcmp.lt.s32.totalorder %v1560, 3
      %vm1582 = vcmp.lt.s32.totalorder %v1560, 4
      %v1583 = vsel %vm1579, %v1563, %v1566
      %v1584 = vsel %vm1582, %v1572, 2102212464
      %v1585 = vsel %vm1581, %v1569, %v1584
      %v1586 = vsel %vm1580, %v1583, %v1585
      %v1587 = vsel %vm1579, %v1566, %v1569
      %v1588 = vsel %vm1582, %v1575, 920167782
      %v1589 = vsel %vm1581, %v1572, %v1588
      %v1590 = vsel %vm1580, %v1587, %v1589
      %v1591 = vsel %vm1579, %v1569, %v1572
      %v1592 = vsel %vm1582, %v1578, 1326507024
      %v1593 = vsel %vm1581, %v1575, %v1592
      %v1594 = vsel %vm1580, %v1591, %v1593
      %v1595 = vshll.u32 %v1555, 8
      %v1596 = vmul.u32.u64.compose %v1595, %v1594
      %v1597 = vextract.low.u32 %v1596
      %v1598 = vextract.high.u32 %v1596
      %v1599 = vmul.u32.u64.compose %v1595, %v1590
      %v1600 = vextract.low.u32 %v1599
      %v1601 = vextract.high.u32 %v1599
      %v1602 = vmul.u32 %v1595, %v1586
      %v1603 = vadd.s32 %v1598, %v1600
      %vm1604 = vc.u32 %v1598, %v1600
      %v1605 = vadd.s32 %v1601, 1
      %v1606 = vsel %vm1604, %v1605, %v1601
      %v1607 = vadd.s32 %v1602, %v1606
      %v1608 = vadd.s32 %v1607, 536870912
      %v1609 = vshrl.u32 %v1608, 30
      %v1610 = vshll.u32 %v1609, 30
      %v1611 = vsub.s32 %v1607, %v1610
      %vm1612 = vcmp.lt.s32.totalorder %v1611, 0
      %v1613 = vsub.s32 0, %v1611
      %v1614 = vsel %vm1612, %v1613, %v1611
      %v1615 = vclz %v1614
      %v1616 = vsub.s32 %v1615, 2
      %vm1617 = vcmp.gt.s32.totalorder 0, %v1616
      %v1618 = vsel %vm1617, 0, %v1616
      %v1619 = vsub.s32 32, %v1618
      %v1620 = vshll.u32 %v1611, %v1618
      %v1621 = vshrl.u32 %v1603, %v1619
      %v1622 = vor.u32 %v1620, %v1621
      %v1623 = vsub.s32 4294967266, %v1618
      %v1624 = vadd.s32 %v1623, 127
      %v1625 = vshll.u32 %v1624, 23
      %v1626 = vor.u32 4788187, %v1625
      %v1627 = vand.u32 2147483647, %v1626
      %v1629 = vcvt.s32.f32 %v1622
      %v1630 = vmul.f32 %v1629, %v1627
      %v1631 = vxor.u32 %v1630, 2147483648
      %v1632 = vsel %vm1549, %v1631, %v1630
      %v1633 = vsub.s32 4, %v1609
      %v1634 = vsel %vm1549, %v1633, %v1609
      %v1635 = vsel %vm1548, %v683, %v1632
      %v1636 = vsel %vm1548, 0, %v1634
      %v1637 = vcosq.f32.pop %v1635
      %v1638 = vsinq.f32.pop %v1635
      %vm1639 = vweird.f32 %v683
      %v1640 = vadd.s32 %v1636, 3
      %v1641 = vand.u32 %v1640, 3
      %vm1642 = vcmp.lt.s32.totalorder %v1641, 2
      %vm1643 = vcmp.eq.s32.totalorder %v1641, 0
      %v1644 = vxor.u32 %v1638, 2147483648
      %v1645 = vsel %vm1643, %v1637, %v1644
      %vm1646 = vcmp.eq.s32.totalorder %v1641, 2
      %v1647 = vxor.u32 %v1637, 2147483648
      %v1648 = vsel %vm1646, %v1647, %v1638
      %v1649 = vsel %vm1642, %v1645, %v1648
      %v1650 = vsel %vm1639, nan, %v1649
      %v1651 = vand.u32 2147483647, %v684
      %vm1652 = vcmp.le.f32.partialorder %v1651, 0.7853982
      %vm1653 = vcmp.lt.s32.totalorder %v684, 0
      %v1654 = vand.u32 %v684, 2139095040
      %v1655 = vshrl.u32 %v1654, 23
      %v1656 = vsub.s32 %v1655, 127
      %v1657 = vand.u32 2147483647, %v684
      %v1658 = vand.u32 %v1657, 8388607
      %v1659 = vor.u32 %v1658, 8388608
      %v1660 = vsub.s32 0, %v1659
      %v1661 = vadd.s32 %v1656, 1
      %vm1662 = vcmp.gt.s32.totalorder %v1661, 0
      %v1663 = vsel %vm1662, %v1661, 0
      %v1664 = vshrl.u32 %v1663, 5
      %v1665 = vand.u32 %v1663, 31
      %v1666 = vsub.s32 32, %v1665
      %v1667 = vshrl.u32 683565275, %v1666
      %v1668 = vshll.u32 683565275, %v1665
      %v1669 = vshrl.u32 2475754826, %v1666
      %v1670 = vor.u32 %v1668, %v1669
      %v1671 = vshll.u32 2475754826, %v1665
      %v1672 = vshrl.u32 2131351028, %v1666
      %v1673 = vor.u32 %v1671, %v1672
      %v1674 = vshll.u32 2131351028, %v1665
      %v1675 = vshrl.u32 2102212464, %v1666
      %v1676 = vor.u32 %v1674, %v1675
      %v1677 = vshll.u32 2102212464, %v1665
      %v1678 = vshrl.u32 920167782, %v1666
      %v1679 = vor.u32 %v1677, %v1678
      %v1680 = vshll.u32 920167782, %v1665
      %v1681 = vshrl.u32 1326507024, %v1666
      %v1682 = vor.u32 %v1680, %v1681
      %vm1683 = vcmp.lt.s32.totalorder %v1664, 1
      %vm1684 = vcmp.lt.s32.totalorder %v1664, 2
      %vm1685 = vcmp.lt.s32.totalorder %v1664, 3
      %vm1686 = vcmp.lt.s32.totalorder %v1664, 4
      %v1687 = vsel %vm1683, %v1667, %v1670
      %v1688 = vsel %vm1686, %v1676, 2102212464
      %v1689 = vsel %vm1685, %v1673, %v1688
      %v1690 = vsel %vm1684, %v1687, %v1689
      %v1691 = vsel %vm1683, %v1670, %v1673
      %v1692 = vsel %vm1686, %v1679, 920167782
      %v1693 = vsel %vm1685, %v1676, %v1692
      %v1694 = vsel %vm1684, %v1691, %v1693
      %v1695 = vsel %vm1683, %v1673, %v1676
      %v1696 = vsel %vm1686, %v1682, 1326507024
      %v1697 = vsel %vm1685, %v1679, %v1696
      %v1698 = vsel %vm1684, %v1695, %v1697
      %v1699 = vshll.u32 %v1659, 8
      %v1700 = vmul.u32.u64.compose %v1699, %v1698
      %v1701 = vextract.low.u32 %v1700
      %v1702 = vextract.high.u32 %v1700
      %v1703 = vmul.u32.u64.compose %v1699, %v1694
      %v1704 = vextract.low.u32 %v1703
      %v1705 = vextract.high.u32 %v1703
      %v1706 = vmul.u32 %v1699, %v1690
      %v1707 = vadd.s32 %v1702, %v1704
      %vm1708 = vc.u32 %v1702, %v1704
      %v1709 = vadd.s32 %v1705, 1
      %v1710 = vsel %vm1708, %v1709, %v1705
      %v1711 = vadd.s32 %v1706, %v1710
      %v1712 = vadd.s32 %v1711, 536870912
      %v1713 = vshrl.u32 %v1712, 30
      %v1714 = vshll.u32 %v1713, 30
      %v1715 = vsub.s32 %v1711, %v1714
      %vm1716 = vcmp.lt.s32.totalorder %v1715, 0
      %v1717 = vsub.s32 0, %v1715
      %v1718 = vsel %vm1716, %v1717, %v1715
      %v1719 = vclz %v1718
      %v1720 = vsub.s32 %v1719, 2
      %vm1721 = vcmp.gt.s32.totalorder 0, %v1720
      %v1722 = vsel %vm1721, 0, %v1720
      %v1723 = vsub.s32 32, %v1722
      %v1724 = vshll.u32 %v1715, %v1722
      %v1725 = vshrl.u32 %v1707, %v1723
      %v1726 = vor.u32 %v1724, %v1725
      %v1727 = vsub.s32 4294967266, %v1722
      %v1728 = vadd.s32 %v1727, 127
      %v1729 = vshll.u32 %v1728, 23
      %v1730 = vor.u32 4788187, %v1729
      %v1731 = vand.u32 2147483647, %v1730
      %v1733 = vcvt.s32.f32 %v1726
      %v1734 = vmul.f32 %v1733, %v1731
      %v1735 = vxor.u32 %v1734, 2147483648
      %v1736 = vsel %vm1653, %v1735, %v1734
      %v1737 = vsub.s32 4, %v1713
      %v1738 = vsel %vm1653, %v1737, %v1713
      %v1739 = vsel %vm1652, %v684, %v1736
      %v1740 = vsel %vm1652, 0, %v1738
      %v1741 = vcosq.f32.pop %v1739
      %v1742 = vsinq.f32.pop %v1739
      %vm1743 = vweird.f32 %v684
      %v1744 = vadd.s32 %v1740, 3
      %v1745 = vand.u32 %v1744, 3
      %vm1746 = vcmp.lt.s32.totalorder %v1745, 2
      %vm1747 = vcmp.eq.s32.totalorder %v1745, 0
      %v1748 = vxor.u32 %v1742, 2147483648
      %v1749 = vsel %vm1747, %v1741, %v1748
      %vm1750 = vcmp.eq.s32.totalorder %v1745, 2
      %v1751 = vxor.u32 %v1741, 2147483648
      %v1752 = vsel %vm1750, %v1751, %v1742
      %v1753 = vsel %vm1746, %v1749, %v1752
      %v1754 = vsel %vm1743, nan, %v1753
      %v1755 = vand.u32 2147483647, %v685
      %vm1756 = vcmp.le.f32.partialorder %v1755, 0.7853982
      %vm1757 = vcmp.lt.s32.totalorder %v685, 0
      %v1758 = vand.u32 %v685, 2139095040
      %v1759 = vshrl.u32 %v1758, 23
      %v1760 = vsub.s32 %v1759, 127
      %v1761 = vand.u32 2147483647, %v685
      %v1762 = vand.u32 %v1761, 8388607
      %v1763 = vor.u32 %v1762, 8388608
      %v1764 = vsub.s32 0, %v1763
      %v1765 = vadd.s32 %v1760, 1
      %vm1766 = vcmp.gt.s32.totalorder %v1765, 0
      %v1767 = vsel %vm1766, %v1765, 0
      %v1768 = vshrl.u32 %v1767, 5
      %v1769 = vand.u32 %v1767, 31
      %v1770 = vsub.s32 32, %v1769
      %v1771 = vshrl.u32 683565275, %v1770
      %v1772 = vshll.u32 683565275, %v1769
      %v1773 = vshrl.u32 2475754826, %v1770
      %v1774 = vor.u32 %v1772, %v1773
      %v1775 = vshll.u32 2475754826, %v1769
      %v1776 = vshrl.u32 2131351028, %v1770
      %v1777 = vor.u32 %v1775, %v1776
      %v1778 = vshll.u32 2131351028, %v1769
      %v1779 = vshrl.u32 2102212464, %v1770
      %v1780 = vor.u32 %v1778, %v1779
      %v1781 = vshll.u32 2102212464, %v1769
      %v1782 = vshrl.u32 920167782, %v1770
      %v1783 = vor.u32 %v1781, %v1782
      %v1784 = vshll.u32 920167782, %v1769
      %v1785 = vshrl.u32 1326507024, %v1770
      %v1786 = vor.u32 %v1784, %v1785
      %vm1787 = vcmp.lt.s32.totalorder %v1768, 1
      %vm1788 = vcmp.lt.s32.totalorder %v1768, 2
      %vm1789 = vcmp.lt.s32.totalorder %v1768, 3
      %vm1790 = vcmp.lt.s32.totalorder %v1768, 4
      %v1791 = vsel %vm1787, %v1771, %v1774
      %v1792 = vsel %vm1790, %v1780, 2102212464
      %v1793 = vsel %vm1789, %v1777, %v1792
      %v1794 = vsel %vm1788, %v1791, %v1793
      %v1795 = vsel %vm1787, %v1774, %v1777
      %v1796 = vsel %vm1790, %v1783, 920167782
      %v1797 = vsel %vm1789, %v1780, %v1796
      %v1798 = vsel %vm1788, %v1795, %v1797
      %v1799 = vsel %vm1787, %v1777, %v1780
      %v1800 = vsel %vm1790, %v1786, 1326507024
      %v1801 = vsel %vm1789, %v1783, %v1800
      %v1802 = vsel %vm1788, %v1799, %v1801
      %v1803 = vshll.u32 %v1763, 8
      %v1804 = vmul.u32.u64.compose %v1803, %v1802
      %v1805 = vextract.low.u32 %v1804
      %v1806 = vextract.high.u32 %v1804
      %v1807 = vmul.u32.u64.compose %v1803, %v1798
      %v1808 = vextract.low.u32 %v1807
      %v1809 = vextract.high.u32 %v1807
      %v1810 = vmul.u32 %v1803, %v1794
      %v1811 = vadd.s32 %v1806, %v1808
      %vm1812 = vc.u32 %v1806, %v1808
      %v1813 = vadd.s32 %v1809, 1
      %v1814 = vsel %vm1812, %v1813, %v1809
      %v1815 = vadd.s32 %v1810, %v1814
      %v1816 = vadd.s32 %v1815, 536870912
      %v1817 = vshrl.u32 %v1816, 30
      %v1818 = vshll.u32 %v1817, 30
      %v1819 = vsub.s32 %v1815, %v1818
      %vm1820 = vcmp.lt.s32.totalorder %v1819, 0
      %v1821 = vsub.s32 0, %v1819
      %v1822 = vsel %vm1820, %v1821, %v1819
      %v1823 = vclz %v1822
      %v1824 = vsub.s32 %v1823, 2
      %vm1825 = vcmp.gt.s32.totalorder 0, %v1824
      %v1826 = vsel %vm1825, 0, %v1824
      %v1827 = vsub.s32 32, %v1826
      %v1828 = vshll.u32 %v1819, %v1826
      %v1829 = vshrl.u32 %v1811, %v1827
      %v1830 = vor.u32 %v1828, %v1829
      %v1831 = vsub.s32 4294967266, %v1826
      %v1832 = vadd.s32 %v1831, 127
      %v1833 = vshll.u32 %v1832, 23
      %v1834 = vor.u32 4788187, %v1833
      %v1835 = vand.u32 2147483647, %v1834
      %v1837 = vcvt.s32.f32 %v1830
      %v1838 = vmul.f32 %v1837, %v1835
      %v1839 = vxor.u32 %v1838, 2147483648
      %v1840 = vsel %vm1757, %v1839, %v1838
      %v1841 = vsub.s32 4, %v1817
      %v1842 = vsel %vm1757, %v1841, %v1817
      %v1843 = vsel %vm1756, %v685, %v1840
      %v1844 = vsel %vm1756, 0, %v1842
      %v1845 = vcosq.f32.pop %v1843
      %v1846 = vsinq.f32.pop %v1843
      %vm1847 = vweird.f32 %v685
      %v1848 = vadd.s32 %v1844, 3
      %v1849 = vand.u32 %v1848, 3
      %vm1850 = vcmp.lt.s32.totalorder %v1849, 2
      %vm1851 = vcmp.eq.s32.totalorder %v1849, 0
      %v1852 = vxor.u32 %v1846, 2147483648
      %v1853 = vsel %vm1851, %v1845, %v1852
      %vm1854 = vcmp.eq.s32.totalorder %v1849, 2
      %v1855 = vxor.u32 %v1845, 2147483648
      %v1856 = vsel %vm1854, %v1855, %v1846
      %v1857 = vsel %vm1850, %v1853, %v1856
      %v1858 = vsel %vm1847, nan, %v1857
      %v1859 = vand.u32 2147483647, %v686
      %vm1860 = vcmp.le.f32.partialorder %v1859, 0.7853982
      %vm1861 = vcmp.lt.s32.totalorder %v686, 0
      %v1862 = vand.u32 %v686, 2139095040
      %v1863 = vshrl.u32 %v1862, 23
      %v1864 = vsub.s32 %v1863, 127
      %v1865 = vand.u32 2147483647, %v686
      %v1866 = vand.u32 %v1865, 8388607
      %v1867 = vor.u32 %v1866, 8388608
      %v1868 = vsub.s32 0, %v1867
      %v1869 = vadd.s32 %v1864, 1
      %vm1870 = vcmp.gt.s32.totalorder %v1869, 0
      %v1871 = vsel %vm1870, %v1869, 0
      %v1872 = vshrl.u32 %v1871, 5
      %v1873 = vand.u32 %v1871, 31
      %v1874 = vsub.s32 32, %v1873
      %v1875 = vshrl.u32 683565275, %v1874
      %v1876 = vshll.u32 683565275, %v1873
      %v1877 = vshrl.u32 2475754826, %v1874
      %v1878 = vor.u32 %v1876, %v1877
      %v1879 = vshll.u32 2475754826, %v1873
      %v1880 = vshrl.u32 2131351028, %v1874
      %v1881 = vor.u32 %v1879, %v1880
      %v1882 = vshll.u32 2131351028, %v1873
      %v1883 = vshrl.u32 2102212464, %v1874
      %v1884 = vor.u32 %v1882, %v1883
      %v1885 = vshll.u32 2102212464, %v1873
      %v1886 = vshrl.u32 920167782, %v1874
      %v1887 = vor.u32 %v1885, %v1886
      %v1888 = vshll.u32 920167782, %v1873
      %v1889 = vshrl.u32 1326507024, %v1874
      %v1890 = vor.u32 %v1888, %v1889
      %vm1891 = vcmp.lt.s32.totalorder %v1872, 1
      %vm1892 = vcmp.lt.s32.totalorder %v1872, 2
      %vm1893 = vcmp.lt.s32.totalorder %v1872, 3
      %vm1894 = vcmp.lt.s32.totalorder %v1872, 4
      %v1895 = vsel %vm1891, %v1875, %v1878
      %v1896 = vsel %vm1894, %v1884, 2102212464
      %v1897 = vsel %vm1893, %v1881, %v1896
      %v1898 = vsel %vm1892, %v1895, %v1897
      %v1899 = vsel %vm1891, %v1878, %v1881
      %v1900 = vsel %vm1894, %v1887, 920167782
      %v1901 = vsel %vm1893, %v1884, %v1900
      %v1902 = vsel %vm1892, %v1899, %v1901
      %v1903 = vsel %vm1891, %v1881, %v1884
      %v1904 = vsel %vm1894, %v1890, 1326507024
      %v1905 = vsel %vm1893, %v1887, %v1904
      %v1906 = vsel %vm1892, %v1903, %v1905
      %v1907 = vshll.u32 %v1867, 8
      %v1908 = vmul.u32.u64.compose %v1907, %v1906
      %v1909 = vextract.low.u32 %v1908
      %v1910 = vextract.high.u32 %v1908
      %v1911 = vmul.u32.u64.compose %v1907, %v1902
      %v1912 = vextract.low.u32 %v1911
      %v1913 = vextract.high.u32 %v1911
      %v1914 = vmul.u32 %v1907, %v1898
      %v1915 = vadd.s32 %v1910, %v1912
      %vm1916 = vc.u32 %v1910, %v1912
      %v1917 = vadd.s32 %v1913, 1
      %v1918 = vsel %vm1916, %v1917, %v1913
      %v1919 = vadd.s32 %v1914, %v1918
      %v1920 = vadd.s32 %v1919, 536870912
      %v1921 = vshrl.u32 %v1920, 30
      %v1922 = vshll.u32 %v1921, 30
      %v1923 = vsub.s32 %v1919, %v1922
      %vm1924 = vcmp.lt.s32.totalorder %v1923, 0
      %v1925 = vsub.s32 0, %v1923
      %v1926 = vsel %vm1924, %v1925, %v1923
      %v1927 = vclz %v1926
      %v1928 = vsub.s32 %v1927, 2
      %vm1929 = vcmp.gt.s32.totalorder 0, %v1928
      %v1930 = vsel %vm1929, 0, %v1928
      %v1931 = vsub.s32 32, %v1930
      %v1932 = vshll.u32 %v1923, %v1930
      %v1933 = vshrl.u32 %v1915, %v1931
      %v1934 = vor.u32 %v1932, %v1933
      %v1935 = vsub.s32 4294967266, %v1930
      %v1936 = vadd.s32 %v1935, 127
      %v1937 = vshll.u32 %v1936, 23
      %v1938 = vor.u32 4788187, %v1937
      %v1939 = vand.u32 2147483647, %v1938
      %v1941 = vcvt.s32.f32 %v1934
      %v1942 = vmul.f32 %v1941, %v1939
      %v1943 = vxor.u32 %v1942, 2147483648
      %v1944 = vsel %vm1861, %v1943, %v1942
      %v1945 = vsub.s32 4, %v1921
      %v1946 = vsel %vm1861, %v1945, %v1921
      %v1947 = vsel %vm1860, %v686, %v1944
      %v1948 = vsel %vm1860, 0, %v1946
      %v1949 = vcosq.f32.pop %v1947
      %v1950 = vsinq.f32.pop %v1947
      %vm1951 = vweird.f32 %v686
      %v1952 = vadd.s32 %v1948, 3
      %v1953 = vand.u32 %v1952, 3
      %vm1954 = vcmp.lt.s32.totalorder %v1953, 2
      %vm1955 = vcmp.eq.s32.totalorder %v1953, 0
      %v1956 = vxor.u32 %v1950, 2147483648
      %v1957 = vsel %vm1955, %v1949, %v1956
      %vm1958 = vcmp.eq.s32.totalorder %v1953, 2
      %v1959 = vxor.u32 %v1949, 2147483648
      %v1960 = vsel %vm1958, %v1959, %v1950
      %v1961 = vsel %vm1954, %v1957, %v1960
      %v1962 = vsel %vm1951, nan, %v1961
      %v1963 = vand.u32 2147483647, %v687
      %vm1964 = vcmp.le.f32.partialorder %v1963, 0.7853982
      %vm1965 = vcmp.lt.s32.totalorder %v687, 0
      %v1966 = vand.u32 %v687, 2139095040
      %v1967 = vshrl.u32 %v1966, 23
      %v1968 = vsub.s32 %v1967, 127
      %v1969 = vand.u32 2147483647, %v687
      %v1970 = vand.u32 %v1969, 8388607
      %v1971 = vor.u32 %v1970, 8388608
      %v1972 = vsub.s32 0, %v1971
      %v1973 = vadd.s32 %v1968, 1
      %vm1974 = vcmp.gt.s32.totalorder %v1973, 0
      %v1975 = vsel %vm1974, %v1973, 0
      %v1976 = vshrl.u32 %v1975, 5
      %v1977 = vand.u32 %v1975, 31
      %v1978 = vsub.s32 32, %v1977
      %v1979 = vshrl.u32 683565275, %v1978
      %v1980 = vshll.u32 683565275, %v1977
      %v1981 = vshrl.u32 2475754826, %v1978
      %v1982 = vor.u32 %v1980, %v1981
      %v1983 = vshll.u32 2475754826, %v1977
      %v1984 = vshrl.u32 2131351028, %v1978
      %v1985 = vor.u32 %v1983, %v1984
      %v1986 = vshll.u32 2131351028, %v1977
      %v1987 = vshrl.u32 2102212464, %v1978
      %v1988 = vor.u32 %v1986, %v1987
      %v1989 = vshll.u32 2102212464, %v1977
      %v1990 = vshrl.u32 920167782, %v1978
      %v1991 = vor.u32 %v1989, %v1990
      %v1992 = vshll.u32 920167782, %v1977
      %v1993 = vshrl.u32 1326507024, %v1978
      %v1994 = vor.u32 %v1992, %v1993
      %vm1995 = vcmp.lt.s32.totalorder %v1976, 1
      %vm1996 = vcmp.lt.s32.totalorder %v1976, 2
      %vm1997 = vcmp.lt.s32.totalorder %v1976, 3
      %vm1998 = vcmp.lt.s32.totalorder %v1976, 4
      %v1999 = vsel %vm1995, %v1979, %v1982
      %v2000 = vsel %vm1998, %v1988, 2102212464
      %v2001 = vsel %vm1997, %v1985, %v2000
      %v2002 = vsel %vm1996, %v1999, %v2001
      %v2003 = vsel %vm1995, %v1982, %v1985
      %v2004 = vsel %vm1998, %v1991, 920167782
      %v2005 = vsel %vm1997, %v1988, %v2004
      %v2006 = vsel %vm1996, %v2003, %v2005
      %v2007 = vsel %vm1995, %v1985, %v1988
      %v2008 = vsel %vm1998, %v1994, 1326507024
      %v2009 = vsel %vm1997, %v1991, %v2008
      %v2010 = vsel %vm1996, %v2007, %v2009
      %v2011 = vshll.u32 %v1971, 8
      %v2012 = vmul.u32.u64.compose %v2011, %v2010
      %v2013 = vextract.low.u32 %v2012
      %v2014 = vextract.high.u32 %v2012
      %v2015 = vmul.u32.u64.compose %v2011, %v2006
      %v2016 = vextract.low.u32 %v2015
      %v2017 = vextract.high.u32 %v2015
      %v2018 = vmul.u32 %v2011, %v2002
      %v2019 = vadd.s32 %v2014, %v2016
      %vm2020 = vc.u32 %v2014, %v2016
      %v2021 = vadd.s32 %v2017, 1
      %v2022 = vsel %vm2020, %v2021, %v2017
      %v2023 = vadd.s32 %v2018, %v2022
      %v2024 = vadd.s32 %v2023, 536870912
      %v2025 = vshrl.u32 %v2024, 30
      %v2026 = vshll.u32 %v2025, 30
      %v2027 = vsub.s32 %v2023, %v2026
      %vm2028 = vcmp.lt.s32.totalorder %v2027, 0
      %v2029 = vsub.s32 0, %v2027
      %v2030 = vsel %vm2028, %v2029, %v2027
      %v2031 = vclz %v2030
      %v2032 = vsub.s32 %v2031, 2
      %vm2033 = vcmp.gt.s32.totalorder 0, %v2032
      %v2034 = vsel %vm2033, 0, %v2032
      %v2035 = vsub.s32 32, %v2034
      %v2036 = vshll.u32 %v2027, %v2034
      %v2037 = vshrl.u32 %v2019, %v2035
      %v2038 = vor.u32 %v2036, %v2037
      %v2039 = vsub.s32 4294967266, %v2034
      %v2040 = vadd.s32 %v2039, 127
      %v2041 = vshll.u32 %v2040, 23
      %v2042 = vor.u32 4788187, %v2041
      %v2043 = vand.u32 2147483647, %v2042
      %v2045 = vcvt.s32.f32 %v2038
      %v2046 = vmul.f32 %v2045, %v2043
      %v2047 = vxor.u32 %v2046, 2147483648
      %v2048 = vsel %vm1965, %v2047, %v2046
      %v2049 = vsub.s32 4, %v2025
      %v2050 = vsel %vm1965, %v2049, %v2025
      %v2051 = vsel %vm1964, %v687, %v2048
      %v2052 = vsel %vm1964, 0, %v2050
      %v2053 = vcosq.f32.pop %v2051
      %v2054 = vsinq.f32.pop %v2051
      %vm2055 = vweird.f32 %v687
      %v2056 = vadd.s32 %v2052, 3
      %v2057 = vand.u32 %v2056, 3
      %vm2058 = vcmp.lt.s32.totalorder %v2057, 2
      %vm2059 = vcmp.eq.s32.totalorder %v2057, 0
      %v2060 = vxor.u32 %v2054, 2147483648
      %v2061 = vsel %vm2059, %v2053, %v2060
      %vm2062 = vcmp.eq.s32.totalorder %v2057, 2
      %v2063 = vxor.u32 %v2053, 2147483648
      %v2064 = vsel %vm2062, %v2063, %v2054
      %v2065 = vsel %vm2058, %v2061, %v2064
      %v2066 = vsel %vm2055, nan, %v2065
      %v2067 = vand.u32 2147483647, %v688
      %vm2068 = vcmp.le.f32.partialorder %v2067, 0.7853982
      %vm2069 = vcmp.lt.s32.totalorder %v688, 0
      %v2070 = vand.u32 %v688, 2139095040
      %v2071 = vshrl.u32 %v2070, 23
      %v2072 = vsub.s32 %v2071, 127
      %v2073 = vand.u32 2147483647, %v688
      %v2074 = vand.u32 %v2073, 8388607
      %v2075 = vor.u32 %v2074, 8388608
      %v2076 = vsub.s32 0, %v2075
      %v2077 = vadd.s32 %v2072, 1
      %vm2078 = vcmp.gt.s32.totalorder %v2077, 0
      %v2079 = vsel %vm2078, %v2077, 0
      %v2080 = vshrl.u32 %v2079, 5
      %v2081 = vand.u32 %v2079, 31
      %v2082 = vsub.s32 32, %v2081
      %v2083 = vshrl.u32 683565275, %v2082
      %v2084 = vshll.u32 683565275, %v2081
      %v2085 = vshrl.u32 2475754826, %v2082
      %v2086 = vor.u32 %v2084, %v2085
      %v2087 = vshll.u32 2475754826, %v2081
      %v2088 = vshrl.u32 2131351028, %v2082
      %v2089 = vor.u32 %v2087, %v2088
      %v2090 = vshll.u32 2131351028, %v2081
      %v2091 = vshrl.u32 2102212464, %v2082
      %v2092 = vor.u32 %v2090, %v2091
      %v2093 = vshll.u32 2102212464, %v2081
      %v2094 = vshrl.u32 920167782, %v2082
      %v2095 = vor.u32 %v2093, %v2094
      %v2096 = vshll.u32 920167782, %v2081
      %v2097 = vshrl.u32 1326507024, %v2082
      %v2098 = vor.u32 %v2096, %v2097
      %vm2099 = vcmp.lt.s32.totalorder %v2080, 1
      %vm2100 = vcmp.lt.s32.totalorder %v2080, 2
      %vm2101 = vcmp.lt.s32.totalorder %v2080, 3
      %vm2102 = vcmp.lt.s32.totalorder %v2080, 4
      %v2103 = vsel %vm2099, %v2083, %v2086
      %v2104 = vsel %vm2102, %v2092, 2102212464
      %v2105 = vsel %vm2101, %v2089, %v2104
      %v2106 = vsel %vm2100, %v2103, %v2105
      %v2107 = vsel %vm2099, %v2086, %v2089
      %v2108 = vsel %vm2102, %v2095, 920167782
      %v2109 = vsel %vm2101, %v2092, %v2108
      %v2110 = vsel %vm2100, %v2107, %v2109
      %v2111 = vsel %vm2099, %v2089, %v2092
      %v2112 = vsel %vm2102, %v2098, 1326507024
      %v2113 = vsel %vm2101, %v2095, %v2112
      %v2114 = vsel %vm2100, %v2111, %v2113
      %v2115 = vshll.u32 %v2075, 8
      %v2116 = vmul.u32.u64.compose %v2115, %v2114
      %v2117 = vextract.low.u32 %v2116
      %v2118 = vextract.high.u32 %v2116
      %v2119 = vmul.u32.u64.compose %v2115, %v2110
      %v2120 = vextract.low.u32 %v2119
      %v2121 = vextract.high.u32 %v2119
      %v2122 = vmul.u32 %v2115, %v2106
      %v2123 = vadd.s32 %v2118, %v2120
      %vm2124 = vc.u32 %v2118, %v2120
      %v2125 = vadd.s32 %v2121, 1
      %v2126 = vsel %vm2124, %v2125, %v2121
      %v2127 = vadd.s32 %v2122, %v2126
      %v2128 = vadd.s32 %v2127, 536870912
      %v2129 = vshrl.u32 %v2128, 30
      %v2130 = vshll.u32 %v2129, 30
      %v2131 = vsub.s32 %v2127, %v2130
      %vm2132 = vcmp.lt.s32.totalorder %v2131, 0
      %v2133 = vsub.s32 0, %v2131
      %v2134 = vsel %vm2132, %v2133, %v2131
      %v2135 = vclz %v2134
      %v2136 = vsub.s32 %v2135, 2
      %vm2137 = vcmp.gt.s32.totalorder 0, %v2136
      %v2138 = vsel %vm2137, 0, %v2136
      %v2139 = vsub.s32 32, %v2138
      %v2140 = vshll.u32 %v2131, %v2138
      %v2141 = vshrl.u32 %v2123, %v2139
      %v2142 = vor.u32 %v2140, %v2141
      %v2143 = vsub.s32 4294967266, %v2138
      %v2144 = vadd.s32 %v2143, 127
      %v2145 = vshll.u32 %v2144, 23
      %v2146 = vor.u32 4788187, %v2145
      %v2147 = vand.u32 2147483647, %v2146
      %v2149 = vcvt.s32.f32 %v2142
      %v2150 = vmul.f32 %v2149, %v2147
      %v2151 = vxor.u32 %v2150, 2147483648
      %v2152 = vsel %vm2069, %v2151, %v2150
      %v2153 = vsub.s32 4, %v2129
      %v2154 = vsel %vm2069, %v2153, %v2129
      %v2155 = vsel %vm2068, %v688, %v2152
      %v2156 = vsel %vm2068, 0, %v2154
      %v2157 = vcosq.f32.pop %v2155
      %v2158 = vsinq.f32.pop %v2155
      %vm2159 = vweird.f32 %v688
      %v2160 = vadd.s32 %v2156, 3
      %v2161 = vand.u32 %v2160, 3
      %vm2162 = vcmp.lt.s32.totalorder %v2161, 2
      %vm2163 = vcmp.eq.s32.totalorder %v2161, 0
      %v2164 = vxor.u32 %v2158, 2147483648
      %v2165 = vsel %vm2163, %v2157, %v2164
      %vm2166 = vcmp.eq.s32.totalorder %v2161, 2
      %v2167 = vxor.u32 %v2157, 2147483648
      %v2168 = vsel %vm2166, %v2167, %v2158
      %v2169 = vsel %vm2162, %v2165, %v2168
      %v2170 = vsel %vm2159, nan, %v2169
      %v2171 = vand.u32 2147483647, %v689
      %vm2172 = vcmp.le.f32.partialorder %v2171, 0.7853982
      %vm2173 = vcmp.lt.s32.totalorder %v689, 0
      %v2174 = vand.u32 %v689, 2139095040
      %v2175 = vshrl.u32 %v2174, 23
      %v2176 = vsub.s32 %v2175, 127
      %v2177 = vand.u32 2147483647, %v689
      %v2178 = vand.u32 %v2177, 8388607
      %v2179 = vor.u32 %v2178, 8388608
      %v2180 = vsub.s32 0, %v2179
      %v2181 = vadd.s32 %v2176, 1
      %vm2182 = vcmp.gt.s32.totalorder %v2181, 0
      %v2183 = vsel %vm2182, %v2181, 0
      %v2184 = vshrl.u32 %v2183, 5
      %v2185 = vand.u32 %v2183, 31
      %v2186 = vsub.s32 32, %v2185
      %v2187 = vshrl.u32 683565275, %v2186
      %v2188 = vshll.u32 683565275, %v2185
      %v2189 = vshrl.u32 2475754826, %v2186
      %v2190 = vor.u32 %v2188, %v2189
      %v2191 = vshll.u32 2475754826, %v2185
      %v2192 = vshrl.u32 2131351028, %v2186
      %v2193 = vor.u32 %v2191, %v2192
      %v2194 = vshll.u32 2131351028, %v2185
      %v2195 = vshrl.u32 2102212464, %v2186
      %v2196 = vor.u32 %v2194, %v2195
      %v2197 = vshll.u32 2102212464, %v2185
      %v2198 = vshrl.u32 920167782, %v2186
      %v2199 = vor.u32 %v2197, %v2198
      %v2200 = vshll.u32 920167782, %v2185
      %v2201 = vshrl.u32 1326507024, %v2186
      %v2202 = vor.u32 %v2200, %v2201
      %vm2203 = vcmp.lt.s32.totalorder %v2184, 1
      %vm2204 = vcmp.lt.s32.totalorder %v2184, 2
      %vm2205 = vcmp.lt.s32.totalorder %v2184, 3
      %vm2206 = vcmp.lt.s32.totalorder %v2184, 4
      %v2207 = vsel %vm2203, %v2187, %v2190
      %v2208 = vsel %vm2206, %v2196, 2102212464
      %v2209 = vsel %vm2205, %v2193, %v2208
      %v2210 = vsel %vm2204, %v2207, %v2209
      %v2211 = vsel %vm2203, %v2190, %v2193
      %v2212 = vsel %vm2206, %v2199, 920167782
      %v2213 = vsel %vm2205, %v2196, %v2212
      %v2214 = vsel %vm2204, %v2211, %v2213
      %v2215 = vsel %vm2203, %v2193, %v2196
      %v2216 = vsel %vm2206, %v2202, 1326507024
      %v2217 = vsel %vm2205, %v2199, %v2216
      %v2218 = vsel %vm2204, %v2215, %v2217
      %v2219 = vshll.u32 %v2179, 8
      %v2220 = vmul.u32.u64.compose %v2219, %v2218
      %v2221 = vextract.low.u32 %v2220
      %v2222 = vextract.high.u32 %v2220
      %v2223 = vmul.u32.u64.compose %v2219, %v2214
      %v2224 = vextract.low.u32 %v2223
      %v2225 = vextract.high.u32 %v2223
      %v2226 = vmul.u32 %v2219, %v2210
      %v2227 = vadd.s32 %v2222, %v2224
      %vm2228 = vc.u32 %v2222, %v2224
      %v2229 = vadd.s32 %v2225, 1
      %v2230 = vsel %vm2228, %v2229, %v2225
      %v2231 = vadd.s32 %v2226, %v2230
      %v2232 = vadd.s32 %v2231, 536870912
      %v2233 = vshrl.u32 %v2232, 30
      %v2234 = vshll.u32 %v2233, 30
      %v2235 = vsub.s32 %v2231, %v2234
      %vm2236 = vcmp.lt.s32.totalorder %v2235, 0
      %v2237 = vsub.s32 0, %v2235
      %v2238 = vsel %vm2236, %v2237, %v2235
      %v2239 = vclz %v2238
      %v2240 = vsub.s32 %v2239, 2
      %vm2241 = vcmp.gt.s32.totalorder 0, %v2240
      %v2242 = vsel %vm2241, 0, %v2240
      %v2243 = vsub.s32 32, %v2242
      %v2244 = vshll.u32 %v2235, %v2242
      %v2245 = vshrl.u32 %v2227, %v2243
      %v2246 = vor.u32 %v2244, %v2245
      %v2247 = vsub.s32 4294967266, %v2242
      %v2248 = vadd.s32 %v2247, 127
      %v2249 = vshll.u32 %v2248, 23
      %v2250 = vor.u32 4788187, %v2249
      %v2251 = vand.u32 2147483647, %v2250
      %v2253 = vcvt.s32.f32 %v2246
      %v2254 = vmul.f32 %v2253, %v2251
      %v2255 = vxor.u32 %v2254, 2147483648
      %v2256 = vsel %vm2173, %v2255, %v2254
      %v2257 = vsub.s32 4, %v2233
      %v2258 = vsel %vm2173, %v2257, %v2233
      %v2259 = vsel %vm2172, %v689, %v2256
      %v2260 = vsel %vm2172, 0, %v2258
      %v2261 = vcosq.f32.pop %v2259
      %v2262 = vsinq.f32.pop %v2259
      %vm2263 = vweird.f32 %v689
      %v2264 = vadd.s32 %v2260, 3
      %v2265 = vand.u32 %v2264, 3
      %vm2266 = vcmp.lt.s32.totalorder %v2265, 2
      %vm2267 = vcmp.eq.s32.totalorder %v2265, 0
      %v2268 = vxor.u32 %v2262, 2147483648
      %v2269 = vsel %vm2267, %v2261, %v2268
      %vm2270 = vcmp.eq.s32.totalorder %v2265, 2
      %v2271 = vxor.u32 %v2261, 2147483648
      %v2272 = vsel %vm2270, %v2271, %v2262
      %v2273 = vsel %vm2266, %v2269, %v2272
      %v2274 = vsel %vm2263, nan, %v2273
      %v2275 = vand.u32 2147483647, %v690
      %vm2276 = vcmp.le.f32.partialorder %v2275, 0.7853982
      %vm2277 = vcmp.lt.s32.totalorder %v690, 0
      %v2278 = vand.u32 %v690, 2139095040
      %v2279 = vshrl.u32 %v2278, 23
      %v2280 = vsub.s32 %v2279, 127
      %v2281 = vand.u32 2147483647, %v690
      %v2282 = vand.u32 %v2281, 8388607
      %v2283 = vor.u32 %v2282, 8388608
      %v2284 = vsub.s32 0, %v2283
      %v2285 = vadd.s32 %v2280, 1
      %vm2286 = vcmp.gt.s32.totalorder %v2285, 0
      %v2287 = vsel %vm2286, %v2285, 0
      %v2288 = vshrl.u32 %v2287, 5
      %v2289 = vand.u32 %v2287, 31
      %v2290 = vsub.s32 32, %v2289
      %v2291 = vshrl.u32 683565275, %v2290
      %v2292 = vshll.u32 683565275, %v2289
      %v2293 = vshrl.u32 2475754826, %v2290
      %v2294 = vor.u32 %v2292, %v2293
      %v2295 = vshll.u32 2475754826, %v2289
      %v2296 = vshrl.u32 2131351028, %v2290
      %v2297 = vor.u32 %v2295, %v2296
      %v2298 = vshll.u32 2131351028, %v2289
      %v2299 = vshrl.u32 2102212464, %v2290
      %v2300 = vor.u32 %v2298, %v2299
      %v2301 = vshll.u32 2102212464, %v2289
      %v2302 = vshrl.u32 920167782, %v2290
      %v2303 = vor.u32 %v2301, %v2302
      %v2304 = vshll.u32 920167782, %v2289
      %v2305 = vshrl.u32 1326507024, %v2290
      %v2306 = vor.u32 %v2304, %v2305
      %vm2307 = vcmp.lt.s32.totalorder %v2288, 1
      %vm2308 = vcmp.lt.s32.totalorder %v2288, 2
      %vm2309 = vcmp.lt.s32.totalorder %v2288, 3
      %vm2310 = vcmp.lt.s32.totalorder %v2288, 4
      %v2311 = vsel %vm2307, %v2291, %v2294
      %v2312 = vsel %vm2310, %v2300, 2102212464
      %v2313 = vsel %vm2309, %v2297, %v2312
      %v2314 = vsel %vm2308, %v2311, %v2313
      %v2315 = vsel %vm2307, %v2294, %v2297
      %v2316 = vsel %vm2310, %v2303, 920167782
      %v2317 = vsel %vm2309, %v2300, %v2316
      %v2318 = vsel %vm2308, %v2315, %v2317
      %v2319 = vsel %vm2307, %v2297, %v2300
      %v2320 = vsel %vm2310, %v2306, 1326507024
      %v2321 = vsel %vm2309, %v2303, %v2320
      %v2322 = vsel %vm2308, %v2319, %v2321
      %v2323 = vshll.u32 %v2283, 8
      %v2324 = vmul.u32.u64.compose %v2323, %v2322
      %v2325 = vextract.low.u32 %v2324
      %v2326 = vextract.high.u32 %v2324
      %v2327 = vmul.u32.u64.compose %v2323, %v2318
      %v2328 = vextract.low.u32 %v2327
      %v2329 = vextract.high.u32 %v2327
      %v2330 = vmul.u32 %v2323, %v2314
      %v2331 = vadd.s32 %v2326, %v2328
      %vm2332 = vc.u32 %v2326, %v2328
      %v2333 = vadd.s32 %v2329, 1
      %v2334 = vsel %vm2332, %v2333, %v2329
      %v2335 = vadd.s32 %v2330, %v2334
      %v2336 = vadd.s32 %v2335, 536870912
      %v2337 = vshrl.u32 %v2336, 30
      %v2338 = vshll.u32 %v2337, 30
      %v2339 = vsub.s32 %v2335, %v2338
      %vm2340 = vcmp.lt.s32.totalorder %v2339, 0
      %v2341 = vsub.s32 0, %v2339
      %v2342 = vsel %vm2340, %v2341, %v2339
      %v2343 = vclz %v2342
      %v2344 = vsub.s32 %v2343, 2
      %vm2345 = vcmp.gt.s32.totalorder 0, %v2344
      %v2346 = vsel %vm2345, 0, %v2344
      %v2347 = vsub.s32 32, %v2346
      %v2348 = vshll.u32 %v2339, %v2346
      %v2349 = vshrl.u32 %v2331, %v2347
      %v2350 = vor.u32 %v2348, %v2349
      %v2351 = vsub.s32 4294967266, %v2346
      %v2352 = vadd.s32 %v2351, 127
      %v2353 = vshll.u32 %v2352, 23
      %v2354 = vor.u32 4788187, %v2353
      %v2355 = vand.u32 2147483647, %v2354
      %v2357 = vcvt.s32.f32 %v2350
      %v2358 = vmul.f32 %v2357, %v2355
      %v2359 = vxor.u32 %v2358, 2147483648
      %v2360 = vsel %vm2277, %v2359, %v2358
      %v2361 = vsub.s32 4, %v2337
      %v2362 = vsel %vm2277, %v2361, %v2337
      %v2363 = vsel %vm2276, %v690, %v2360
      %v2364 = vsel %vm2276, 0, %v2362
      %v2365 = vcosq.f32.pop %v2363
      %v2366 = vsinq.f32.pop %v2363
      %vm2367 = vweird.f32 %v690
      %v2368 = vadd.s32 %v2364, 3
      %v2369 = vand.u32 %v2368, 3
      %vm2370 = vcmp.lt.s32.totalorder %v2369, 2
      %vm2371 = vcmp.eq.s32.totalorder %v2369, 0
      %v2372 = vxor.u32 %v2366, 2147483648
      %v2373 = vsel %vm2371, %v2365, %v2372
      %vm2374 = vcmp.eq.s32.totalorder %v2369, 2
      %v2375 = vxor.u32 %v2365, 2147483648
      %v2376 = vsel %vm2374, %v2375, %v2366
      %v2377 = vsel %vm2370, %v2373, %v2376
      %v2378 = vsel %vm2367, nan, %v2377
      %v2379 = vand.u32 2147483647, %v691
      %vm2380 = vcmp.le.f32.partialorder %v2379, 0.7853982
      %vm2381 = vcmp.lt.s32.totalorder %v691, 0
      %v2382 = vand.u32 %v691, 2139095040
      %v2383 = vshrl.u32 %v2382, 23
      %v2384 = vsub.s32 %v2383, 127
      %v2385 = vand.u32 2147483647, %v691
      %v2386 = vand.u32 %v2385, 8388607
      %v2387 = vor.u32 %v2386, 8388608
      %v2388 = vsub.s32 0, %v2387
      %v2389 = vadd.s32 %v2384, 1
      %vm2390 = vcmp.gt.s32.totalorder %v2389, 0
      %v2391 = vsel %vm2390, %v2389, 0
      %v2392 = vshrl.u32 %v2391, 5
      %v2393 = vand.u32 %v2391, 31
      %v2394 = vsub.s32 32, %v2393
      %v2395 = vshrl.u32 683565275, %v2394
      %v2396 = vshll.u32 683565275, %v2393
      %v2397 = vshrl.u32 2475754826, %v2394
      %v2398 = vor.u32 %v2396, %v2397
      %v2399 = vshll.u32 2475754826, %v2393
      %v2400 = vshrl.u32 2131351028, %v2394
      %v2401 = vor.u32 %v2399, %v2400
      %v2402 = vshll.u32 2131351028, %v2393
      %v2403 = vshrl.u32 2102212464, %v2394
      %v2404 = vor.u32 %v2402, %v2403
      %v2405 = vshll.u32 2102212464, %v2393
      %v2406 = vshrl.u32 920167782, %v2394
      %v2407 = vor.u32 %v2405, %v2406
      %v2408 = vshll.u32 920167782, %v2393
      %v2409 = vshrl.u32 1326507024, %v2394
      %v2410 = vor.u32 %v2408, %v2409
      %vm2411 = vcmp.lt.s32.totalorder %v2392, 1
      %vm2412 = vcmp.lt.s32.totalorder %v2392, 2
      %vm2413 = vcmp.lt.s32.totalorder %v2392, 3
      %vm2414 = vcmp.lt.s32.totalorder %v2392, 4
      %v2415 = vsel %vm2411, %v2395, %v2398
      %v2416 = vsel %vm2414, %v2404, 2102212464
      %v2417 = vsel %vm2413, %v2401, %v2416
      %v2418 = vsel %vm2412, %v2415, %v2417
      %v2419 = vsel %vm2411, %v2398, %v2401
      %v2420 = vsel %vm2414, %v2407, 920167782
      %v2421 = vsel %vm2413, %v2404, %v2420
      %v2422 = vsel %vm2412, %v2419, %v2421
      %v2423 = vsel %vm2411, %v2401, %v2404
      %v2424 = vsel %vm2414, %v2410, 1326507024
      %v2425 = vsel %vm2413, %v2407, %v2424
      %v2426 = vsel %vm2412, %v2423, %v2425
      %v2427 = vshll.u32 %v2387, 8
      %v2428 = vmul.u32.u64.compose %v2427, %v2426
      %v2429 = vextract.low.u32 %v2428
      %v2430 = vextract.high.u32 %v2428
      %v2431 = vmul.u32.u64.compose %v2427, %v2422
      %v2432 = vextract.low.u32 %v2431
      %v2433 = vextract.high.u32 %v2431
      %v2434 = vmul.u32 %v2427, %v2418
      %v2435 = vadd.s32 %v2430, %v2432
      %vm2436 = vc.u32 %v2430, %v2432
      %v2437 = vadd.s32 %v2433, 1
      %v2438 = vsel %vm2436, %v2437, %v2433
      %v2439 = vadd.s32 %v2434, %v2438
      %v2440 = vadd.s32 %v2439, 536870912
      %v2441 = vshrl.u32 %v2440, 30
      %v2442 = vshll.u32 %v2441, 30
      %v2443 = vsub.s32 %v2439, %v2442
      %vm2444 = vcmp.lt.s32.totalorder %v2443, 0
      %v2445 = vsub.s32 0, %v2443
      %v2446 = vsel %vm2444, %v2445, %v2443
      %v2447 = vclz %v2446
      %v2448 = vsub.s32 %v2447, 2
      %vm2449 = vcmp.gt.s32.totalorder 0, %v2448
      %v2450 = vsel %vm2449, 0, %v2448
      %v2451 = vsub.s32 32, %v2450
      %v2452 = vshll.u32 %v2443, %v2450
      %v2453 = vshrl.u32 %v2435, %v2451
      %v2454 = vor.u32 %v2452, %v2453
      %v2455 = vsub.s32 4294967266, %v2450
      %v2456 = vadd.s32 %v2455, 127
      %v2457 = vshll.u32 %v2456, 23
      %v2458 = vor.u32 4788187, %v2457
      %v2459 = vand.u32 2147483647, %v2458
      %v2461 = vcvt.s32.f32 %v2454
      %v2462 = vmul.f32 %v2461, %v2459
      %v2463 = vxor.u32 %v2462, 2147483648
      %v2464 = vsel %vm2381, %v2463, %v2462
      %v2465 = vsub.s32 4, %v2441
      %v2466 = vsel %vm2381, %v2465, %v2441
      %v2467 = vsel %vm2380, %v691, %v2464
      %v2468 = vsel %vm2380, 0, %v2466
      %v2469 = vcosq.f32.pop %v2467
      %v2470 = vsinq.f32.pop %v2467
      %vm2471 = vweird.f32 %v691
      %v2472 = vadd.s32 %v2468, 3
      %v2473 = vand.u32 %v2472, 3
      %vm2474 = vcmp.lt.s32.totalorder %v2473, 2
      %vm2475 = vcmp.eq.s32.totalorder %v2473, 0
      %v2476 = vxor.u32 %v2470, 2147483648
      %v2477 = vsel %vm2475, %v2469, %v2476
      %vm2478 = vcmp.eq.s32.totalorder %v2473, 2
      %v2479 = vxor.u32 %v2469, 2147483648
      %v2480 = vsel %vm2478, %v2479, %v2470
      %v2481 = vsel %vm2474, %v2477, %v2480
      %v2482 = vsel %vm2471, nan, %v2481
      %v2483 = vand.u32 2147483647, %v692
      %vm2484 = vcmp.le.f32.partialorder %v2483, 0.7853982
      %vm2485 = vcmp.lt.s32.totalorder %v692, 0
      %v2486 = vand.u32 %v692, 2139095040
      %v2487 = vshrl.u32 %v2486, 23
      %v2488 = vsub.s32 %v2487, 127
      %v2489 = vand.u32 2147483647, %v692
      %v2490 = vand.u32 %v2489, 8388607
      %v2491 = vor.u32 %v2490, 8388608
      %v2492 = vsub.s32 0, %v2491
      %v2493 = vadd.s32 %v2488, 1
      %vm2494 = vcmp.gt.s32.totalorder %v2493, 0
      %v2495 = vsel %vm2494, %v2493, 0
      %v2496 = vshrl.u32 %v2495, 5
      %v2497 = vand.u32 %v2495, 31
      %v2498 = vsub.s32 32, %v2497
      %v2499 = vshrl.u32 683565275, %v2498
      %v2500 = vshll.u32 683565275, %v2497
      %v2501 = vshrl.u32 2475754826, %v2498
      %v2502 = vor.u32 %v2500, %v2501
      %v2503 = vshll.u32 2475754826, %v2497
      %v2504 = vshrl.u32 2131351028, %v2498
      %v2505 = vor.u32 %v2503, %v2504
      %v2506 = vshll.u32 2131351028, %v2497
      %v2507 = vshrl.u32 2102212464, %v2498
      %v2508 = vor.u32 %v2506, %v2507
      %v2509 = vshll.u32 2102212464, %v2497
      %v2510 = vshrl.u32 920167782, %v2498
      %v2511 = vor.u32 %v2509, %v2510
      %v2512 = vshll.u32 920167782, %v2497
      %v2513 = vshrl.u32 1326507024, %v2498
      %v2514 = vor.u32 %v2512, %v2513
      %vm2515 = vcmp.lt.s32.totalorder %v2496, 1
      %vm2516 = vcmp.lt.s32.totalorder %v2496, 2
      %vm2517 = vcmp.lt.s32.totalorder %v2496, 3
      %vm2518 = vcmp.lt.s32.totalorder %v2496, 4
      %v2519 = vsel %vm2515, %v2499, %v2502
      %v2520 = vsel %vm2518, %v2508, 2102212464
      %v2521 = vsel %vm2517, %v2505, %v2520
      %v2522 = vsel %vm2516, %v2519, %v2521
      %v2523 = vsel %vm2515, %v2502, %v2505
      %v2524 = vsel %vm2518, %v2511, 920167782
      %v2525 = vsel %vm2517, %v2508, %v2524
      %v2526 = vsel %vm2516, %v2523, %v2525
      %v2527 = vsel %vm2515, %v2505, %v2508
      %v2528 = vsel %vm2518, %v2514, 1326507024
      %v2529 = vsel %vm2517, %v2511, %v2528
      %v2530 = vsel %vm2516, %v2527, %v2529
      %v2531 = vshll.u32 %v2491, 8
      %v2532 = vmul.u32.u64.compose %v2531, %v2530
      %v2533 = vextract.low.u32 %v2532
      %v2534 = vextract.high.u32 %v2532
      %v2535 = vmul.u32.u64.compose %v2531, %v2526
      %v2536 = vextract.low.u32 %v2535
      %v2537 = vextract.high.u32 %v2535
      %v2538 = vmul.u32 %v2531, %v2522
      %v2539 = vadd.s32 %v2534, %v2536
      %vm2540 = vc.u32 %v2534, %v2536
      %v2541 = vadd.s32 %v2537, 1
      %v2542 = vsel %vm2540, %v2541, %v2537
      %v2543 = vadd.s32 %v2538, %v2542
      %v2544 = vadd.s32 %v2543, 536870912
      %v2545 = vshrl.u32 %v2544, 30
      %v2546 = vshll.u32 %v2545, 30
      %v2547 = vsub.s32 %v2543, %v2546
      %vm2548 = vcmp.lt.s32.totalorder %v2547, 0
      %v2549 = vsub.s32 0, %v2547
      %v2550 = vsel %vm2548, %v2549, %v2547
      %v2551 = vclz %v2550
      %v2552 = vsub.s32 %v2551, 2
      %vm2553 = vcmp.gt.s32.totalorder 0, %v2552
      %v2554 = vsel %vm2553, 0, %v2552
      %v2555 = vsub.s32 32, %v2554
      %v2556 = vshll.u32 %v2547, %v2554
      %v2557 = vshrl.u32 %v2539, %v2555
      %v2558 = vor.u32 %v2556, %v2557
      %v2559 = vsub.s32 4294967266, %v2554
      %v2560 = vadd.s32 %v2559, 127
      %v2561 = vshll.u32 %v2560, 23
      %v2562 = vor.u32 4788187, %v2561
      %v2563 = vand.u32 2147483647, %v2562
      %v2565 = vcvt.s32.f32 %v2558
      %v2566 = vmul.f32 %v2565, %v2563
      %v2567 = vxor.u32 %v2566, 2147483648
      %v2568 = vsel %vm2485, %v2567, %v2566
      %v2569 = vsub.s32 4, %v2545
      %v2570 = vsel %vm2485, %v2569, %v2545
      %v2571 = vsel %vm2484, %v692, %v2568
      %v2572 = vsel %vm2484, 0, %v2570
      %v2573 = vcosq.f32.pop %v2571
      %v2574 = vsinq.f32.pop %v2571
      %vm2575 = vweird.f32 %v692
      %v2576 = vadd.s32 %v2572, 3
      %v2577 = vand.u32 %v2576, 3
      %vm2578 = vcmp.lt.s32.totalorder %v2577, 2
      %vm2579 = vcmp.eq.s32.totalorder %v2577, 0
      %v2580 = vxor.u32 %v2574, 2147483648
      %v2581 = vsel %vm2579, %v2573, %v2580
      %vm2582 = vcmp.eq.s32.totalorder %v2577, 2
      %v2583 = vxor.u32 %v2573, 2147483648
      %v2584 = vsel %vm2582, %v2583, %v2574
      %v2585 = vsel %vm2578, %v2581, %v2584
      %v2586 = vsel %vm2575, nan, %v2585
      %v2587 = vand.u32 2147483647, %v693
      %vm2588 = vcmp.le.f32.partialorder %v2587, 0.7853982
      %vm2589 = vcmp.lt.s32.totalorder %v693, 0
      %v2590 = vand.u32 %v693, 2139095040
      %v2591 = vshrl.u32 %v2590, 23
      %v2592 = vsub.s32 %v2591, 127
      %v2593 = vand.u32 2147483647, %v693
      %v2594 = vand.u32 %v2593, 8388607
      %v2595 = vor.u32 %v2594, 8388608
      %v2596 = vsub.s32 0, %v2595
      %v2597 = vadd.s32 %v2592, 1
      %vm2598 = vcmp.gt.s32.totalorder %v2597, 0
      %v2599 = vsel %vm2598, %v2597, 0
      %v2600 = vshrl.u32 %v2599, 5
      %v2601 = vand.u32 %v2599, 31
      %v2602 = vsub.s32 32, %v2601
      %v2603 = vshrl.u32 683565275, %v2602
      %v2604 = vshll.u32 683565275, %v2601
      %v2605 = vshrl.u32 2475754826, %v2602
      %v2606 = vor.u32 %v2604, %v2605
      %v2607 = vshll.u32 2475754826, %v2601
      %v2608 = vshrl.u32 2131351028, %v2602
      %v2609 = vor.u32 %v2607, %v2608
      %v2610 = vshll.u32 2131351028, %v2601
      %v2611 = vshrl.u32 2102212464, %v2602
      %v2612 = vor.u32 %v2610, %v2611
      %v2613 = vshll.u32 2102212464, %v2601
      %v2614 = vshrl.u32 920167782, %v2602
      %v2615 = vor.u32 %v2613, %v2614
      %v2616 = vshll.u32 920167782, %v2601
      %v2617 = vshrl.u32 1326507024, %v2602
      %v2618 = vor.u32 %v2616, %v2617
      %vm2619 = vcmp.lt.s32.totalorder %v2600, 1
      %vm2620 = vcmp.lt.s32.totalorder %v2600, 2
      %vm2621 = vcmp.lt.s32.totalorder %v2600, 3
      %vm2622 = vcmp.lt.s32.totalorder %v2600, 4
      %v2623 = vsel %vm2619, %v2603, %v2606
      %v2624 = vsel %vm2622, %v2612, 2102212464
      %v2625 = vsel %vm2621, %v2609, %v2624
      %v2626 = vsel %vm2620, %v2623, %v2625
      %v2627 = vsel %vm2619, %v2606, %v2609
      %v2628 = vsel %vm2622, %v2615, 920167782
      %v2629 = vsel %vm2621, %v2612, %v2628
      %v2630 = vsel %vm2620, %v2627, %v2629
      %v2631 = vsel %vm2619, %v2609, %v2612
      %v2632 = vsel %vm2622, %v2618, 1326507024
      %v2633 = vsel %vm2621, %v2615, %v2632
      %v2634 = vsel %vm2620, %v2631, %v2633
      %v2635 = vshll.u32 %v2595, 8
      %v2636 = vmul.u32.u64.compose %v2635, %v2634
      %v2637 = vextract.low.u32 %v2636
      %v2638 = vextract.high.u32 %v2636
      %v2639 = vmul.u32.u64.compose %v2635, %v2630
      %v2640 = vextract.low.u32 %v2639
      %v2641 = vextract.high.u32 %v2639
      %v2642 = vmul.u32 %v2635, %v2626
      %v2643 = vadd.s32 %v2638, %v2640
      %vm2644 = vc.u32 %v2638, %v2640
      %v2645 = vadd.s32 %v2641, 1
      %v2646 = vsel %vm2644, %v2645, %v2641
      %v2647 = vadd.s32 %v2642, %v2646
      %v2648 = vadd.s32 %v2647, 536870912
      %v2649 = vshrl.u32 %v2648, 30
      %v2650 = vshll.u32 %v2649, 30
      %v2651 = vsub.s32 %v2647, %v2650
      %vm2652 = vcmp.lt.s32.totalorder %v2651, 0
      %v2653 = vsub.s32 0, %v2651
      %v2654 = vsel %vm2652, %v2653, %v2651
      %v2655 = vclz %v2654
      %v2656 = vsub.s32 %v2655, 2
      %vm2657 = vcmp.gt.s32.totalorder 0, %v2656
      %v2658 = vsel %vm2657, 0, %v2656
      %v2659 = vsub.s32 32, %v2658
      %v2660 = vshll.u32 %v2651, %v2658
      %v2661 = vshrl.u32 %v2643, %v2659
      %v2662 = vor.u32 %v2660, %v2661
      %v2663 = vsub.s32 4294967266, %v2658
      %v2664 = vadd.s32 %v2663, 127
      %v2665 = vshll.u32 %v2664, 23
      %v2666 = vor.u32 4788187, %v2665
      %v2667 = vand.u32 2147483647, %v2666
      %v2669 = vcvt.s32.f32 %v2662
      %v2670 = vmul.f32 %v2669, %v2667
      %v2671 = vxor.u32 %v2670, 2147483648
      %v2672 = vsel %vm2589, %v2671, %v2670
      %v2673 = vsub.s32 4, %v2649
      %v2674 = vsel %vm2589, %v2673, %v2649
      %v2675 = vsel %vm2588, %v693, %v2672
      %v2676 = vsel %vm2588, 0, %v2674
      %v2677 = vcosq.f32.pop %v2675
      %v2678 = vsinq.f32.pop %v2675
      %vm2679 = vweird.f32 %v693
      %v2680 = vadd.s32 %v2676, 3
      %v2681 = vand.u32 %v2680, 3
      %vm2682 = vcmp.lt.s32.totalorder %v2681, 2
      %vm2683 = vcmp.eq.s32.totalorder %v2681, 0
      %v2684 = vxor.u32 %v2678, 2147483648
      %v2685 = vsel %vm2683, %v2677, %v2684
      %vm2686 = vcmp.eq.s32.totalorder %v2681, 2
      %v2687 = vxor.u32 %v2677, 2147483648
      %v2688 = vsel %vm2686, %v2687, %v2678
      %v2689 = vsel %vm2682, %v2685, %v2688
      %v2690 = vsel %vm2679, nan, %v2689
      %v2691 = vand.u32 2147483647, %v694
      %vm2692 = vcmp.le.f32.partialorder %v2691, 0.7853982
      %vm2693 = vcmp.lt.s32.totalorder %v694, 0
      %v2694 = vand.u32 %v694, 2139095040
      %v2695 = vshrl.u32 %v2694, 23
      %v2696 = vsub.s32 %v2695, 127
      %v2697 = vand.u32 2147483647, %v694
      %v2698 = vand.u32 %v2697, 8388607
      %v2699 = vor.u32 %v2698, 8388608
      %v2700 = vsub.s32 0, %v2699
      %v2701 = vadd.s32 %v2696, 1
      %vm2702 = vcmp.gt.s32.totalorder %v2701, 0
      %v2703 = vsel %vm2702, %v2701, 0
      %v2704 = vshrl.u32 %v2703, 5
      %v2705 = vand.u32 %v2703, 31
      %v2706 = vsub.s32 32, %v2705
      %v2707 = vshrl.u32 683565275, %v2706
      %v2708 = vshll.u32 683565275, %v2705
      %v2709 = vshrl.u32 2475754826, %v2706
      %v2710 = vor.u32 %v2708, %v2709
      %v2711 = vshll.u32 2475754826, %v2705
      %v2712 = vshrl.u32 2131351028, %v2706
      %v2713 = vor.u32 %v2711, %v2712
      %v2714 = vshll.u32 2131351028, %v2705
      %v2715 = vshrl.u32 2102212464, %v2706
      %v2716 = vor.u32 %v2714, %v2715
      %v2717 = vshll.u32 2102212464, %v2705
      %v2718 = vshrl.u32 920167782, %v2706
      %v2719 = vor.u32 %v2717, %v2718
      %v2720 = vshll.u32 920167782, %v2705
      %v2721 = vshrl.u32 1326507024, %v2706
      %v2722 = vor.u32 %v2720, %v2721
      %vm2723 = vcmp.lt.s32.totalorder %v2704, 1
      %vm2724 = vcmp.lt.s32.totalorder %v2704, 2
      %vm2725 = vcmp.lt.s32.totalorder %v2704, 3
      %vm2726 = vcmp.lt.s32.totalorder %v2704, 4
      %v2727 = vsel %vm2723, %v2707, %v2710
      %v2728 = vsel %vm2726, %v2716, 2102212464
      %v2729 = vsel %vm2725, %v2713, %v2728
      %v2730 = vsel %vm2724, %v2727, %v2729
      %v2731 = vsel %vm2723, %v2710, %v2713
      %v2732 = vsel %vm2726, %v2719, 920167782
      %v2733 = vsel %vm2725, %v2716, %v2732
      %v2734 = vsel %vm2724, %v2731, %v2733
      %v2735 = vsel %vm2723, %v2713, %v2716
      %v2736 = vsel %vm2726, %v2722, 1326507024
      %v2737 = vsel %vm2725, %v2719, %v2736
      %v2738 = vsel %vm2724, %v2735, %v2737
      %v2739 = vshll.u32 %v2699, 8
      %v2740 = vmul.u32.u64.compose %v2739, %v2738
      %v2741 = vextract.low.u32 %v2740
      %v2742 = vextract.high.u32 %v2740
      %v2743 = vmul.u32.u64.compose %v2739, %v2734
      %v2744 = vextract.low.u32 %v2743
      %v2745 = vextract.high.u32 %v2743
      %v2746 = vmul.u32 %v2739, %v2730
      %v2747 = vadd.s32 %v2742, %v2744
      %vm2748 = vc.u32 %v2742, %v2744
      %v2749 = vadd.s32 %v2745, 1
      %v2750 = vsel %vm2748, %v2749, %v2745
      %v2751 = vadd.s32 %v2746, %v2750
      %v2752 = vadd.s32 %v2751, 536870912
      %v2753 = vshrl.u32 %v2752, 30
      %v2754 = vshll.u32 %v2753, 30
      %v2755 = vsub.s32 %v2751, %v2754
      %vm2756 = vcmp.lt.s32.totalorder %v2755, 0
      %v2757 = vsub.s32 0, %v2755
      %v2758 = vsel %vm2756, %v2757, %v2755
      %v2759 = vclz %v2758
      %v2760 = vsub.s32 %v2759, 2
      %vm2761 = vcmp.gt.s32.totalorder 0, %v2760
      %v2762 = vsel %vm2761, 0, %v2760
      %v2763 = vsub.s32 32, %v2762
      %v2764 = vshll.u32 %v2755, %v2762
      %v2765 = vshrl.u32 %v2747, %v2763
      %v2766 = vor.u32 %v2764, %v2765
      %v2767 = vsub.s32 4294967266, %v2762
      %v2768 = vadd.s32 %v2767, 127
      %v2769 = vshll.u32 %v2768, 23
      %v2770 = vor.u32 4788187, %v2769
      %v2771 = vand.u32 2147483647, %v2770
      %v2773 = vcvt.s32.f32 %v2766
      %v2774 = vmul.f32 %v2773, %v2771
      %v2775 = vxor.u32 %v2774, 2147483648
      %v2776 = vsel %vm2693, %v2775, %v2774
      %v2777 = vsub.s32 4, %v2753
      %v2778 = vsel %vm2693, %v2777, %v2753
      %v2779 = vsel %vm2692, %v694, %v2776
      %v2780 = vsel %vm2692, 0, %v2778
      %v2781 = vcosq.f32.pop %v2779
      %v2782 = vsinq.f32.pop %v2779
      %vm2783 = vweird.f32 %v694
      %v2784 = vadd.s32 %v2780, 3
      %v2785 = vand.u32 %v2784, 3
      %vm2786 = vcmp.lt.s32.totalorder %v2785, 2
      %vm2787 = vcmp.eq.s32.totalorder %v2785, 0
      %v2788 = vxor.u32 %v2782, 2147483648
      %v2789 = vsel %vm2787, %v2781, %v2788
      %vm2790 = vcmp.eq.s32.totalorder %v2785, 2
      %v2791 = vxor.u32 %v2781, 2147483648
      %v2792 = vsel %vm2790, %v2791, %v2782
      %v2793 = vsel %vm2786, %v2789, %v2792
      %v2794 = vsel %vm2783, nan, %v2793
      %v2795 = vand.u32 2147483647, %v695
      %vm2796 = vcmp.le.f32.partialorder %v2795, 0.7853982
      %vm2797 = vcmp.lt.s32.totalorder %v695, 0
      %v2798 = vand.u32 %v695, 2139095040
      %v2799 = vshrl.u32 %v2798, 23
      %v2800 = vsub.s32 %v2799, 127
      %v2801 = vand.u32 2147483647, %v695
      %v2802 = vand.u32 %v2801, 8388607
      %v2803 = vor.u32 %v2802, 8388608
      %v2804 = vsub.s32 0, %v2803
      %v2805 = vadd.s32 %v2800, 1
      %vm2806 = vcmp.gt.s32.totalorder %v2805, 0
      %v2807 = vsel %vm2806, %v2805, 0
      %v2808 = vshrl.u32 %v2807, 5
      %v2809 = vand.u32 %v2807, 31
      %v2810 = vsub.s32 32, %v2809
      %v2811 = vshrl.u32 683565275, %v2810
      %v2812 = vshll.u32 683565275, %v2809
      %v2813 = vshrl.u32 2475754826, %v2810
      %v2814 = vor.u32 %v2812, %v2813
      %v2815 = vshll.u32 2475754826, %v2809
      %v2816 = vshrl.u32 2131351028, %v2810
      %v2817 = vor.u32 %v2815, %v2816
      %v2818 = vshll.u32 2131351028, %v2809
      %v2819 = vshrl.u32 2102212464, %v2810
      %v2820 = vor.u32 %v2818, %v2819
      %v2821 = vshll.u32 2102212464, %v2809
      %v2822 = vshrl.u32 920167782, %v2810
      %v2823 = vor.u32 %v2821, %v2822
      %v2824 = vshll.u32 920167782, %v2809
      %v2825 = vshrl.u32 1326507024, %v2810
      %v2826 = vor.u32 %v2824, %v2825
      %vm2827 = vcmp.lt.s32.totalorder %v2808, 1
      %vm2828 = vcmp.lt.s32.totalorder %v2808, 2
      %vm2829 = vcmp.lt.s32.totalorder %v2808, 3
      %vm2830 = vcmp.lt.s32.totalorder %v2808, 4
      %v2831 = vsel %vm2827, %v2811, %v2814
      %v2832 = vsel %vm2830, %v2820, 2102212464
      %v2833 = vsel %vm2829, %v2817, %v2832
      %v2834 = vsel %vm2828, %v2831, %v2833
      %v2835 = vsel %vm2827, %v2814, %v2817
      %v2836 = vsel %vm2830, %v2823, 920167782
      %v2837 = vsel %vm2829, %v2820, %v2836
      %v2838 = vsel %vm2828, %v2835, %v2837
      %v2839 = vsel %vm2827, %v2817, %v2820
      %v2840 = vsel %vm2830, %v2826, 1326507024
      %v2841 = vsel %vm2829, %v2823, %v2840
      %v2842 = vsel %vm2828, %v2839, %v2841
      %v2843 = vshll.u32 %v2803, 8
      %v2844 = vmul.u32.u64.compose %v2843, %v2842
      %v2845 = vextract.low.u32 %v2844
      %v2846 = vextract.high.u32 %v2844
      %v2847 = vmul.u32.u64.compose %v2843, %v2838
      %v2848 = vextract.low.u32 %v2847
      %v2849 = vextract.high.u32 %v2847
      %v2850 = vmul.u32 %v2843, %v2834
      %v2851 = vadd.s32 %v2846, %v2848
      %vm2852 = vc.u32 %v2846, %v2848
      %v2853 = vadd.s32 %v2849, 1
      %v2854 = vsel %vm2852, %v2853, %v2849
      %v2855 = vadd.s32 %v2850, %v2854
      %v2856 = vadd.s32 %v2855, 536870912
      %v2857 = vshrl.u32 %v2856, 30
      %v2858 = vshll.u32 %v2857, 30
      %v2859 = vsub.s32 %v2855, %v2858
      %vm2860 = vcmp.lt.s32.totalorder %v2859, 0
      %v2861 = vsub.s32 0, %v2859
      %v2862 = vsel %vm2860, %v2861, %v2859
      %v2863 = vclz %v2862
      %v2864 = vsub.s32 %v2863, 2
      %vm2865 = vcmp.gt.s32.totalorder 0, %v2864
      %v2866 = vsel %vm2865, 0, %v2864
      %v2867 = vsub.s32 32, %v2866
      %v2868 = vshll.u32 %v2859, %v2866
      %v2869 = vshrl.u32 %v2851, %v2867
      %v2870 = vor.u32 %v2868, %v2869
      %v2871 = vsub.s32 4294967266, %v2866
      %v2872 = vadd.s32 %v2871, 127
      %v2873 = vshll.u32 %v2872, 23
      %v2874 = vor.u32 4788187, %v2873
      %v2875 = vand.u32 2147483647, %v2874
      %v2877 = vcvt.s32.f32 %v2870
      %v2878 = vmul.f32 %v2877, %v2875
      %v2879 = vxor.u32 %v2878, 2147483648
      %v2880 = vsel %vm2797, %v2879, %v2878
      %v2881 = vsub.s32 4, %v2857
      %v2882 = vsel %vm2797, %v2881, %v2857
      %v2883 = vsel %vm2796, %v695, %v2880
      %v2884 = vsel %vm2796, 0, %v2882
      %v2885 = vcosq.f32.pop %v2883
      %v2886 = vsinq.f32.pop %v2883
      %vm2887 = vweird.f32 %v695
      %v2888 = vadd.s32 %v2884, 3
      %v2889 = vand.u32 %v2888, 3
      %vm2890 = vcmp.lt.s32.totalorder %v2889, 2
      %vm2891 = vcmp.eq.s32.totalorder %v2889, 0
      %v2892 = vxor.u32 %v2886, 2147483648
      %v2893 = vsel %vm2891, %v2885, %v2892
      %vm2894 = vcmp.eq.s32.totalorder %v2889, 2
      %v2895 = vxor.u32 %v2885, 2147483648
      %v2896 = vsel %vm2894, %v2895, %v2886
      %v2897 = vsel %vm2890, %v2893, %v2896
      %v2898 = vsel %vm2887, nan, %v2897
      %v2899 = vand.u32 2147483647, %v696
      %vm2900 = vcmp.le.f32.partialorder %v2899, 0.7853982
      %vm2901 = vcmp.lt.s32.totalorder %v696, 0
      %v2902 = vand.u32 %v696, 2139095040
      %v2903 = vshrl.u32 %v2902, 23
      %v2904 = vsub.s32 %v2903, 127
      %v2905 = vand.u32 2147483647, %v696
      %v2906 = vand.u32 %v2905, 8388607
      %v2907 = vor.u32 %v2906, 8388608
      %v2908 = vsub.s32 0, %v2907
      %v2909 = vadd.s32 %v2904, 1
      %vm2910 = vcmp.gt.s32.totalorder %v2909, 0
      %v2911 = vsel %vm2910, %v2909, 0
      %v2912 = vshrl.u32 %v2911, 5
      %v2913 = vand.u32 %v2911, 31
      %v2914 = vsub.s32 32, %v2913
      %v2915 = vshrl.u32 683565275, %v2914
      %v2916 = vshll.u32 683565275, %v2913
      %v2917 = vshrl.u32 2475754826, %v2914
      %v2918 = vor.u32 %v2916, %v2917
      %v2919 = vshll.u32 2475754826, %v2913
      %v2920 = vshrl.u32 2131351028, %v2914
      %v2921 = vor.u32 %v2919, %v2920
      %v2922 = vshll.u32 2131351028, %v2913
      %v2923 = vshrl.u32 2102212464, %v2914
      %v2924 = vor.u32 %v2922, %v2923
      %v2925 = vshll.u32 2102212464, %v2913
      %v2926 = vshrl.u32 920167782, %v2914
      %v2927 = vor.u32 %v2925, %v2926
      %v2928 = vshll.u32 920167782, %v2913
      %v2929 = vshrl.u32 1326507024, %v2914
      %v2930 = vor.u32 %v2928, %v2929
      %vm2931 = vcmp.lt.s32.totalorder %v2912, 1
      %vm2932 = vcmp.lt.s32.totalorder %v2912, 2
      %vm2933 = vcmp.lt.s32.totalorder %v2912, 3
      %vm2934 = vcmp.lt.s32.totalorder %v2912, 4
      %v2935 = vsel %vm2931, %v2915, %v2918
      %v2936 = vsel %vm2934, %v2924, 2102212464
      %v2937 = vsel %vm2933, %v2921, %v2936
      %v2938 = vsel %vm2932, %v2935, %v2937
      %v2939 = vsel %vm2931, %v2918, %v2921
      %v2940 = vsel %vm2934, %v2927, 920167782
      %v2941 = vsel %vm2933, %v2924, %v2940
      %v2942 = vsel %vm2932, %v2939, %v2941
      %v2943 = vsel %vm2931, %v2921, %v2924
      %v2944 = vsel %vm2934, %v2930, 1326507024
      %v2945 = vsel %vm2933, %v2927, %v2944
      %v2946 = vsel %vm2932, %v2943, %v2945
      %v2947 = vshll.u32 %v2907, 8
      %v2948 = vmul.u32.u64.compose %v2947, %v2946
      %v2949 = vextract.low.u32 %v2948
      %v2950 = vextract.high.u32 %v2948
      %v2951 = vmul.u32.u64.compose %v2947, %v2942
      %v2952 = vextract.low.u32 %v2951
      %v2953 = vextract.high.u32 %v2951
      %v2954 = vmul.u32 %v2947, %v2938
      %v2955 = vadd.s32 %v2950, %v2952
      %vm2956 = vc.u32 %v2950, %v2952
      %v2957 = vadd.s32 %v2953, 1
      %v2958 = vsel %vm2956, %v2957, %v2953
      %v2959 = vadd.s32 %v2954, %v2958
      %v2960 = vadd.s32 %v2959, 536870912
      %v2961 = vshrl.u32 %v2960, 30
      %v2962 = vshll.u32 %v2961, 30
      %v2963 = vsub.s32 %v2959, %v2962
      %vm2964 = vcmp.lt.s32.totalorder %v2963, 0
      %v2965 = vsub.s32 0, %v2963
      %v2966 = vsel %vm2964, %v2965, %v2963
      %v2967 = vclz %v2966
      %v2968 = vsub.s32 %v2967, 2
      %vm2969 = vcmp.gt.s32.totalorder 0, %v2968
      %v2970 = vsel %vm2969, 0, %v2968
      %v2971 = vsub.s32 32, %v2970
      %v2972 = vshll.u32 %v2963, %v2970
      %v2973 = vshrl.u32 %v2955, %v2971
      %v2974 = vor.u32 %v2972, %v2973
      %v2975 = vsub.s32 4294967266, %v2970
      %v2976 = vadd.s32 %v2975, 127
      %v2977 = vshll.u32 %v2976, 23
      %v2978 = vor.u32 4788187, %v2977
      %v2979 = vand.u32 2147483647, %v2978
      %v2981 = vcvt.s32.f32 %v2974
      %v2982 = vmul.f32 %v2981, %v2979
      %v2983 = vxor.u32 %v2982, 2147483648
      %v2984 = vsel %vm2901, %v2983, %v2982
      %v2985 = vsub.s32 4, %v2961
      %v2986 = vsel %vm2901, %v2985, %v2961
      %v2987 = vsel %vm2900, %v696, %v2984
      %v2988 = vsel %vm2900, 0, %v2986
      %v2989 = vcosq.f32.pop %v2987
      %v2990 = vsinq.f32.pop %v2987
      %vm2991 = vweird.f32 %v696
      %v2992 = vadd.s32 %v2988, 3
      %v2993 = vand.u32 %v2992, 3
      %vm2994 = vcmp.lt.s32.totalorder %v2993, 2
      %vm2995 = vcmp.eq.s32.totalorder %v2993, 0
      %v2996 = vxor.u32 %v2990, 2147483648
      %v2997 = vsel %vm2995, %v2989, %v2996
      %vm2998 = vcmp.eq.s32.totalorder %v2993, 2
      %v2999 = vxor.u32 %v2989, 2147483648
      %v3000 = vsel %vm2998, %v2999, %v2990
      %v3001 = vsel %vm2994, %v2997, %v3000
      %v3002 = vsel %vm2991, nan, %v3001
      %v3003 = vand.u32 2147483647, %v697
      %vm3004 = vcmp.le.f32.partialorder %v3003, 0.7853982
      %vm3005 = vcmp.lt.s32.totalorder %v697, 0
      %v3006 = vand.u32 %v697, 2139095040
      %v3007 = vshrl.u32 %v3006, 23
      %v3008 = vsub.s32 %v3007, 127
      %v3009 = vand.u32 2147483647, %v697
      %v3010 = vand.u32 %v3009, 8388607
      %v3011 = vor.u32 %v3010, 8388608
      %v3012 = vsub.s32 0, %v3011
      %v3013 = vadd.s32 %v3008, 1
      %vm3014 = vcmp.gt.s32.totalorder %v3013, 0
      %v3015 = vsel %vm3014, %v3013, 0
      %v3016 = vshrl.u32 %v3015, 5
      %v3017 = vand.u32 %v3015, 31
      %v3018 = vsub.s32 32, %v3017
      %v3019 = vshrl.u32 683565275, %v3018
      %v3020 = vshll.u32 683565275, %v3017
      %v3021 = vshrl.u32 2475754826, %v3018
      %v3022 = vor.u32 %v3020, %v3021
      %v3023 = vshll.u32 2475754826, %v3017
      %v3024 = vshrl.u32 2131351028, %v3018
      %v3025 = vor.u32 %v3023, %v3024
      %v3026 = vshll.u32 2131351028, %v3017
      %v3027 = vshrl.u32 2102212464, %v3018
      %v3028 = vor.u32 %v3026, %v3027
      %v3029 = vshll.u32 2102212464, %v3017
      %v3030 = vshrl.u32 920167782, %v3018
      %v3031 = vor.u32 %v3029, %v3030
      %v3032 = vshll.u32 920167782, %v3017
      %v3033 = vshrl.u32 1326507024, %v3018
      %v3034 = vor.u32 %v3032, %v3033
      %vm3035 = vcmp.lt.s32.totalorder %v3016, 1
      %vm3036 = vcmp.lt.s32.totalorder %v3016, 2
      %vm3037 = vcmp.lt.s32.totalorder %v3016, 3
      %vm3038 = vcmp.lt.s32.totalorder %v3016, 4
      %v3039 = vsel %vm3035, %v3019, %v3022
      %v3040 = vsel %vm3038, %v3028, 2102212464
      %v3041 = vsel %vm3037, %v3025, %v3040
      %v3042 = vsel %vm3036, %v3039, %v3041
      %v3043 = vsel %vm3035, %v3022, %v3025
      %v3044 = vsel %vm3038, %v3031, 920167782
      %v3045 = vsel %vm3037, %v3028, %v3044
      %v3046 = vsel %vm3036, %v3043, %v3045
      %v3047 = vsel %vm3035, %v3025, %v3028
      %v3048 = vsel %vm3038, %v3034, 1326507024
      %v3049 = vsel %vm3037, %v3031, %v3048
      %v3050 = vsel %vm3036, %v3047, %v3049
      %v3051 = vshll.u32 %v3011, 8
      %v3052 = vmul.u32.u64.compose %v3051, %v3050
      %v3053 = vextract.low.u32 %v3052
      %v3054 = vextract.high.u32 %v3052
      %v3055 = vmul.u32.u64.compose %v3051, %v3046
      %v3056 = vextract.low.u32 %v3055
      %v3057 = vextract.high.u32 %v3055
      %v3058 = vmul.u32 %v3051, %v3042
      %v3059 = vadd.s32 %v3054, %v3056
      %vm3060 = vc.u32 %v3054, %v3056
      %v3061 = vadd.s32 %v3057, 1
      %v3062 = vsel %vm3060, %v3061, %v3057
      %v3063 = vadd.s32 %v3058, %v3062
      %v3064 = vadd.s32 %v3063, 536870912
      %v3065 = vshrl.u32 %v3064, 30
      %v3066 = vshll.u32 %v3065, 30
      %v3067 = vsub.s32 %v3063, %v3066
      %vm3068 = vcmp.lt.s32.totalorder %v3067, 0
      %v3069 = vsub.s32 0, %v3067
      %v3070 = vsel %vm3068, %v3069, %v3067
      %v3071 = vclz %v3070
      %v3072 = vsub.s32 %v3071, 2
      %vm3073 = vcmp.gt.s32.totalorder 0, %v3072
      %v3074 = vsel %vm3073, 0, %v3072
      %v3075 = vsub.s32 32, %v3074
      %v3076 = vshll.u32 %v3067, %v3074
      %v3077 = vshrl.u32 %v3059, %v3075
      %v3078 = vor.u32 %v3076, %v3077
      %v3079 = vsub.s32 4294967266, %v3074
      %v3080 = vadd.s32 %v3079, 127
      %v3081 = vshll.u32 %v3080, 23
      %v3082 = vor.u32 4788187, %v3081
      %v3083 = vand.u32 2147483647, %v3082
      %v3085 = vcvt.s32.f32 %v3078
      %v3086 = vmul.f32 %v3085, %v3083
      %v3087 = vxor.u32 %v3086, 2147483648
      %v3088 = vsel %vm3005, %v3087, %v3086
      %v3089 = vsub.s32 4, %v3065
      %v3090 = vsel %vm3005, %v3089, %v3065
      %v3091 = vsel %vm3004, %v697, %v3088
      %v3092 = vsel %vm3004, 0, %v3090
      %v3093 = vcosq.f32.pop %v3091
      %v3094 = vsinq.f32.pop %v3091
      %vm3095 = vweird.f32 %v697
      %v3096 = vadd.s32 %v3092, 3
      %v3097 = vand.u32 %v3096, 3
      %vm3098 = vcmp.lt.s32.totalorder %v3097, 2
      %vm3099 = vcmp.eq.s32.totalorder %v3097, 0
      %v3100 = vxor.u32 %v3094, 2147483648
      %v3101 = vsel %vm3099, %v3093, %v3100
      %vm3102 = vcmp.eq.s32.totalorder %v3097, 2
      %v3103 = vxor.u32 %v3093, 2147483648
      %v3104 = vsel %vm3102, %v3103, %v3094
      %v3105 = vsel %vm3098, %v3101, %v3104
      %v3106 = vsel %vm3095, nan, %v3105
      %v3107 = vand.u32 2147483647, %v698
      %vm3108 = vcmp.le.f32.partialorder %v3107, 0.7853982
      %vm3109 = vcmp.lt.s32.totalorder %v698, 0
      %v3110 = vand.u32 %v698, 2139095040
      %v3111 = vshrl.u32 %v3110, 23
      %v3112 = vsub.s32 %v3111, 127
      %v3113 = vand.u32 2147483647, %v698
      %v3114 = vand.u32 %v3113, 8388607
      %v3115 = vor.u32 %v3114, 8388608
      %v3116 = vsub.s32 0, %v3115
      %v3117 = vadd.s32 %v3112, 1
      %vm3118 = vcmp.gt.s32.totalorder %v3117, 0
      %v3119 = vsel %vm3118, %v3117, 0
      %v3120 = vshrl.u32 %v3119, 5
      %v3121 = vand.u32 %v3119, 31
      %v3122 = vsub.s32 32, %v3121
      %v3123 = vshrl.u32 683565275, %v3122
      %v3124 = vshll.u32 683565275, %v3121
      %v3125 = vshrl.u32 2475754826, %v3122
      %v3126 = vor.u32 %v3124, %v3125
      %v3127 = vshll.u32 2475754826, %v3121
      %v3128 = vshrl.u32 2131351028, %v3122
      %v3129 = vor.u32 %v3127, %v3128
      %v3130 = vshll.u32 2131351028, %v3121
      %v3131 = vshrl.u32 2102212464, %v3122
      %v3132 = vor.u32 %v3130, %v3131
      %v3133 = vshll.u32 2102212464, %v3121
      %v3134 = vshrl.u32 920167782, %v3122
      %v3135 = vor.u32 %v3133, %v3134
      %v3136 = vshll.u32 920167782, %v3121
      %v3137 = vshrl.u32 1326507024, %v3122
      %v3138 = vor.u32 %v3136, %v3137
      %vm3139 = vcmp.lt.s32.totalorder %v3120, 1
      %vm3140 = vcmp.lt.s32.totalorder %v3120, 2
      %vm3141 = vcmp.lt.s32.totalorder %v3120, 3
      %vm3142 = vcmp.lt.s32.totalorder %v3120, 4
      %v3143 = vsel %vm3139, %v3123, %v3126
      %v3144 = vsel %vm3142, %v3132, 2102212464
      %v3145 = vsel %vm3141, %v3129, %v3144
      %v3146 = vsel %vm3140, %v3143, %v3145
      %v3147 = vsel %vm3139, %v3126, %v3129
      %v3148 = vsel %vm3142, %v3135, 920167782
      %v3149 = vsel %vm3141, %v3132, %v3148
      %v3150 = vsel %vm3140, %v3147, %v3149
      %v3151 = vsel %vm3139, %v3129, %v3132
      %v3152 = vsel %vm3142, %v3138, 1326507024
      %v3153 = vsel %vm3141, %v3135, %v3152
      %v3154 = vsel %vm3140, %v3151, %v3153
      %v3155 = vshll.u32 %v3115, 8
      %v3156 = vmul.u32.u64.compose %v3155, %v3154
      %v3157 = vextract.low.u32 %v3156
      %v3158 = vextract.high.u32 %v3156
      %v3159 = vmul.u32.u64.compose %v3155, %v3150
      %v3160 = vextract.low.u32 %v3159
      %v3161 = vextract.high.u32 %v3159
      %v3162 = vmul.u32 %v3155, %v3146
      %v3163 = vadd.s32 %v3158, %v3160
      %vm3164 = vc.u32 %v3158, %v3160
      %v3165 = vadd.s32 %v3161, 1
      %v3166 = vsel %vm3164, %v3165, %v3161
      %v3167 = vadd.s32 %v3162, %v3166
      %v3168 = vadd.s32 %v3167, 536870912
      %v3169 = vshrl.u32 %v3168, 30
      %v3170 = vshll.u32 %v3169, 30
      %v3171 = vsub.s32 %v3167, %v3170
      %vm3172 = vcmp.lt.s32.totalorder %v3171, 0
      %v3173 = vsub.s32 0, %v3171
      %v3174 = vsel %vm3172, %v3173, %v3171
      %v3175 = vclz %v3174
      %v3176 = vsub.s32 %v3175, 2
      %vm3177 = vcmp.gt.s32.totalorder 0, %v3176
      %v3178 = vsel %vm3177, 0, %v3176
      %v3179 = vsub.s32 32, %v3178
      %v3180 = vshll.u32 %v3171, %v3178
      %v3181 = vshrl.u32 %v3163, %v3179
      %v3182 = vor.u32 %v3180, %v3181
      %v3183 = vsub.s32 4294967266, %v3178
      %v3184 = vadd.s32 %v3183, 127
      %v3185 = vshll.u32 %v3184, 23
      %v3186 = vor.u32 4788187, %v3185
      %v3187 = vand.u32 2147483647, %v3186
      %v3189 = vcvt.s32.f32 %v3182
      %v3190 = vmul.f32 %v3189, %v3187
      %v3191 = vxor.u32 %v3190, 2147483648
      %v3192 = vsel %vm3109, %v3191, %v3190
      %v3193 = vsub.s32 4, %v3169
      %v3194 = vsel %vm3109, %v3193, %v3169
      %v3195 = vsel %vm3108, %v698, %v3192
      %v3196 = vsel %vm3108, 0, %v3194
      %v3197 = vcosq.f32.pop %v3195
      %v3198 = vsinq.f32.pop %v3195
      %vm3199 = vweird.f32 %v698
      %v3200 = vadd.s32 %v3196, 3
      %v3201 = vand.u32 %v3200, 3
      %vm3202 = vcmp.lt.s32.totalorder %v3201, 2
      %vm3203 = vcmp.eq.s32.totalorder %v3201, 0
      %v3204 = vxor.u32 %v3198, 2147483648
      %v3205 = vsel %vm3203, %v3197, %v3204
      %vm3206 = vcmp.eq.s32.totalorder %v3201, 2
      %v3207 = vxor.u32 %v3197, 2147483648
      %v3208 = vsel %vm3206, %v3207, %v3198
      %v3209 = vsel %vm3202, %v3205, %v3208
      %v3210 = vsel %vm3199, nan, %v3209
      %v3211 = vand.u32 2147483647, %v699
      %vm3212 = vcmp.le.f32.partialorder %v3211, 0.7853982
      %vm3213 = vcmp.lt.s32.totalorder %v699, 0
      %v3214 = vand.u32 %v699, 2139095040
      %v3215 = vshrl.u32 %v3214, 23
      %v3216 = vsub.s32 %v3215, 127
      %v3217 = vand.u32 2147483647, %v699
      %v3218 = vand.u32 %v3217, 8388607
      %v3219 = vor.u32 %v3218, 8388608
      %v3220 = vsub.s32 0, %v3219
      %v3221 = vadd.s32 %v3216, 1
      %vm3222 = vcmp.gt.s32.totalorder %v3221, 0
      %v3223 = vsel %vm3222, %v3221, 0
      %v3224 = vshrl.u32 %v3223, 5
      %v3225 = vand.u32 %v3223, 31
      %v3226 = vsub.s32 32, %v3225
      %v3227 = vshrl.u32 683565275, %v3226
      %v3228 = vshll.u32 683565275, %v3225
      %v3229 = vshrl.u32 2475754826, %v3226
      %v3230 = vor.u32 %v3228, %v3229
      %v3231 = vshll.u32 2475754826, %v3225
      %v3232 = vshrl.u32 2131351028, %v3226
      %v3233 = vor.u32 %v3231, %v3232
      %v3234 = vshll.u32 2131351028, %v3225
      %v3235 = vshrl.u32 2102212464, %v3226
      %v3236 = vor.u32 %v3234, %v3235
      %v3237 = vshll.u32 2102212464, %v3225
      %v3238 = vshrl.u32 920167782, %v3226
      %v3239 = vor.u32 %v3237, %v3238
      %v3240 = vshll.u32 920167782, %v3225
      %v3241 = vshrl.u32 1326507024, %v3226
      %v3242 = vor.u32 %v3240, %v3241
      %vm3243 = vcmp.lt.s32.totalorder %v3224, 1
      %vm3244 = vcmp.lt.s32.totalorder %v3224, 2
      %vm3245 = vcmp.lt.s32.totalorder %v3224, 3
      %vm3246 = vcmp.lt.s32.totalorder %v3224, 4
      %v3247 = vsel %vm3243, %v3227, %v3230
      %v3248 = vsel %vm3246, %v3236, 2102212464
      %v3249 = vsel %vm3245, %v3233, %v3248
      %v3250 = vsel %vm3244, %v3247, %v3249
      %v3251 = vsel %vm3243, %v3230, %v3233
      %v3252 = vsel %vm3246, %v3239, 920167782
      %v3253 = vsel %vm3245, %v3236, %v3252
      %v3254 = vsel %vm3244, %v3251, %v3253
      %v3255 = vsel %vm3243, %v3233, %v3236
      %v3256 = vsel %vm3246, %v3242, 1326507024
      %v3257 = vsel %vm3245, %v3239, %v3256
      %v3258 = vsel %vm3244, %v3255, %v3257
      %v3259 = vshll.u32 %v3219, 8
      %v3260 = vmul.u32.u64.compose %v3259, %v3258
      %v3261 = vextract.low.u32 %v3260
      %v3262 = vextract.high.u32 %v3260
      %v3263 = vmul.u32.u64.compose %v3259, %v3254
      %v3264 = vextract.low.u32 %v3263
      %v3265 = vextract.high.u32 %v3263
      %v3266 = vmul.u32 %v3259, %v3250
      %v3267 = vadd.s32 %v3262, %v3264
      %vm3268 = vc.u32 %v3262, %v3264
      %v3269 = vadd.s32 %v3265, 1
      %v3270 = vsel %vm3268, %v3269, %v3265
      %v3271 = vadd.s32 %v3266, %v3270
      %v3272 = vadd.s32 %v3271, 536870912
      %v3273 = vshrl.u32 %v3272, 30
      %v3274 = vshll.u32 %v3273, 30
      %v3275 = vsub.s32 %v3271, %v3274
      %vm3276 = vcmp.lt.s32.totalorder %v3275, 0
      %v3277 = vsub.s32 0, %v3275
      %v3278 = vsel %vm3276, %v3277, %v3275
      %v3279 = vclz %v3278
      %v3280 = vsub.s32 %v3279, 2
      %vm3281 = vcmp.gt.s32.totalorder 0, %v3280
      %v3282 = vsel %vm3281, 0, %v3280
      %v3283 = vsub.s32 32, %v3282
      %v3284 = vshll.u32 %v3275, %v3282
      %v3285 = vshrl.u32 %v3267, %v3283
      %v3286 = vor.u32 %v3284, %v3285
      %v3287 = vsub.s32 4294967266, %v3282
      %v3288 = vadd.s32 %v3287, 127
      %v3289 = vshll.u32 %v3288, 23
      %v3290 = vor.u32 4788187, %v3289
      %v3291 = vand.u32 2147483647, %v3290
      %v3293 = vcvt.s32.f32 %v3286
      %v3294 = vmul.f32 %v3293, %v3291
      %v3295 = vxor.u32 %v3294, 2147483648
      %v3296 = vsel %vm3213, %v3295, %v3294
      %v3297 = vsub.s32 4, %v3273
      %v3298 = vsel %vm3213, %v3297, %v3273
      %v3299 = vsel %vm3212, %v699, %v3296
      %v3300 = vsel %vm3212, 0, %v3298
      %v3301 = vcosq.f32.pop %v3299
      %v3302 = vsinq.f32.pop %v3299
      %vm3303 = vweird.f32 %v699
      %v3304 = vadd.s32 %v3300, 3
      %v3305 = vand.u32 %v3304, 3
      %vm3306 = vcmp.lt.s32.totalorder %v3305, 2
      %vm3307 = vcmp.eq.s32.totalorder %v3305, 0
      %v3308 = vxor.u32 %v3302, 2147483648
      %v3309 = vsel %vm3307, %v3301, %v3308
      %vm3310 = vcmp.eq.s32.totalorder %v3305, 2
      %v3311 = vxor.u32 %v3301, 2147483648
      %v3312 = vsel %vm3310, %v3311, %v3302
      %v3313 = vsel %vm3306, %v3309, %v3312
      %v3314 = vsel %vm3303, nan, %v3313
      %v3315 = vand.u32 2147483647, %v700
      %vm3316 = vcmp.le.f32.partialorder %v3315, 0.7853982
      %vm3317 = vcmp.lt.s32.totalorder %v700, 0
      %v3318 = vand.u32 %v700, 2139095040
      %v3319 = vshrl.u32 %v3318, 23
      %v3320 = vsub.s32 %v3319, 127
      %v3321 = vand.u32 2147483647, %v700
      %v3322 = vand.u32 %v3321, 8388607
      %v3323 = vor.u32 %v3322, 8388608
      %v3324 = vsub.s32 0, %v3323
      %v3325 = vadd.s32 %v3320, 1
      %vm3326 = vcmp.gt.s32.totalorder %v3325, 0
      %v3327 = vsel %vm3326, %v3325, 0
      %v3328 = vshrl.u32 %v3327, 5
      %v3329 = vand.u32 %v3327, 31
      %v3330 = vsub.s32 32, %v3329
      %v3331 = vshrl.u32 683565275, %v3330
      %v3332 = vshll.u32 683565275, %v3329
      %v3333 = vshrl.u32 2475754826, %v3330
      %v3334 = vor.u32 %v3332, %v3333
      %v3335 = vshll.u32 2475754826, %v3329
      %v3336 = vshrl.u32 2131351028, %v3330
      %v3337 = vor.u32 %v3335, %v3336
      %v3338 = vshll.u32 2131351028, %v3329
      %v3339 = vshrl.u32 2102212464, %v3330
      %v3340 = vor.u32 %v3338, %v3339
      %v3341 = vshll.u32 2102212464, %v3329
      %v3342 = vshrl.u32 920167782, %v3330
      %v3343 = vor.u32 %v3341, %v3342
      %v3344 = vshll.u32 920167782, %v3329
      %v3345 = vshrl.u32 1326507024, %v3330
      %v3346 = vor.u32 %v3344, %v3345
      %vm3347 = vcmp.lt.s32.totalorder %v3328, 1
      %vm3348 = vcmp.lt.s32.totalorder %v3328, 2
      %vm3349 = vcmp.lt.s32.totalorder %v3328, 3
      %vm3350 = vcmp.lt.s32.totalorder %v3328, 4
      %v3351 = vsel %vm3347, %v3331, %v3334
      %v3352 = vsel %vm3350, %v3340, 2102212464
      %v3353 = vsel %vm3349, %v3337, %v3352
      %v3354 = vsel %vm3348, %v3351, %v3353
      %v3355 = vsel %vm3347, %v3334, %v3337
      %v3356 = vsel %vm3350, %v3343, 920167782
      %v3357 = vsel %vm3349, %v3340, %v3356
      %v3358 = vsel %vm3348, %v3355, %v3357
      %v3359 = vsel %vm3347, %v3337, %v3340
      %v3360 = vsel %vm3350, %v3346, 1326507024
      %v3361 = vsel %vm3349, %v3343, %v3360
      %v3362 = vsel %vm3348, %v3359, %v3361
      %v3363 = vshll.u32 %v3323, 8
      %v3364 = vmul.u32.u64.compose %v3363, %v3362
      %v3365 = vextract.low.u32 %v3364
      %v3366 = vextract.high.u32 %v3364
      %v3367 = vmul.u32.u64.compose %v3363, %v3358
      %v3368 = vextract.low.u32 %v3367
      %v3369 = vextract.high.u32 %v3367
      %v3370 = vmul.u32 %v3363, %v3354
      %v3371 = vadd.s32 %v3366, %v3368
      %vm3372 = vc.u32 %v3366, %v3368
      %v3373 = vadd.s32 %v3369, 1
      %v3374 = vsel %vm3372, %v3373, %v3369
      %v3375 = vadd.s32 %v3370, %v3374
      %v3376 = vadd.s32 %v3375, 536870912
      %v3377 = vshrl.u32 %v3376, 30
      %v3378 = vshll.u32 %v3377, 30
      %v3379 = vsub.s32 %v3375, %v3378
      %vm3380 = vcmp.lt.s32.totalorder %v3379, 0
      %v3381 = vsub.s32 0, %v3379
      %v3382 = vsel %vm3380, %v3381, %v3379
      %v3383 = vclz %v3382
      %v3384 = vsub.s32 %v3383, 2
      %vm3385 = vcmp.gt.s32.totalorder 0, %v3384
      %v3386 = vsel %vm3385, 0, %v3384
      %v3387 = vsub.s32 32, %v3386
      %v3388 = vshll.u32 %v3379, %v3386
      %v3389 = vshrl.u32 %v3371, %v3387
      %v3390 = vor.u32 %v3388, %v3389
      %v3391 = vsub.s32 4294967266, %v3386
      %v3392 = vadd.s32 %v3391, 127
      %v3393 = vshll.u32 %v3392, 23
      %v3394 = vor.u32 4788187, %v3393
      %v3395 = vand.u32 2147483647, %v3394
      %v3397 = vcvt.s32.f32 %v3390
      %v3398 = vmul.f32 %v3397, %v3395
      %v3399 = vxor.u32 %v3398, 2147483648
      %v3400 = vsel %vm3317, %v3399, %v3398
      %v3401 = vsub.s32 4, %v3377
      %v3402 = vsel %vm3317, %v3401, %v3377
      %v3403 = vsel %vm3316, %v700, %v3400
      %v3404 = vsel %vm3316, 0, %v3402
      %v3405 = vcosq.f32.pop %v3403
      %v3406 = vsinq.f32.pop %v3403
      %vm3407 = vweird.f32 %v700
      %v3408 = vadd.s32 %v3404, 3
      %v3409 = vand.u32 %v3408, 3
      %vm3410 = vcmp.lt.s32.totalorder %v3409, 2
      %vm3411 = vcmp.eq.s32.totalorder %v3409, 0
      %v3412 = vxor.u32 %v3406, 2147483648
      %v3413 = vsel %vm3411, %v3405, %v3412
      %vm3414 = vcmp.eq.s32.totalorder %v3409, 2
      %v3415 = vxor.u32 %v3405, 2147483648
      %v3416 = vsel %vm3414, %v3415, %v3406
      %v3417 = vsel %vm3410, %v3413, %v3416
      %v3418 = vsel %vm3407, nan, %v3417
      %v3419 = vand.u32 2147483647, %v701
      %vm3420 = vcmp.le.f32.partialorder %v3419, 0.7853982
      %vm3421 = vcmp.lt.s32.totalorder %v701, 0
      %v3422 = vand.u32 %v701, 2139095040
      %v3423 = vshrl.u32 %v3422, 23
      %v3424 = vsub.s32 %v3423, 127
      %v3425 = vand.u32 2147483647, %v701
      %v3426 = vand.u32 %v3425, 8388607
      %v3427 = vor.u32 %v3426, 8388608
      %v3428 = vsub.s32 0, %v3427
      %v3429 = vadd.s32 %v3424, 1
      %vm3430 = vcmp.gt.s32.totalorder %v3429, 0
      %v3431 = vsel %vm3430, %v3429, 0
      %v3432 = vshrl.u32 %v3431, 5
      %v3433 = vand.u32 %v3431, 31
      %v3434 = vsub.s32 32, %v3433
      %v3435 = vshrl.u32 683565275, %v3434
      %v3436 = vshll.u32 683565275, %v3433
      %v3437 = vshrl.u32 2475754826, %v3434
      %v3438 = vor.u32 %v3436, %v3437
      %v3439 = vshll.u32 2475754826, %v3433
      %v3440 = vshrl.u32 2131351028, %v3434
      %v3441 = vor.u32 %v3439, %v3440
      %v3442 = vshll.u32 2131351028, %v3433
      %v3443 = vshrl.u32 2102212464, %v3434
      %v3444 = vor.u32 %v3442, %v3443
      %v3445 = vshll.u32 2102212464, %v3433
      %v3446 = vshrl.u32 920167782, %v3434
      %v3447 = vor.u32 %v3445, %v3446
      %v3448 = vshll.u32 920167782, %v3433
      %v3449 = vshrl.u32 1326507024, %v3434
      %v3450 = vor.u32 %v3448, %v3449
      %vm3451 = vcmp.lt.s32.totalorder %v3432, 1
      %vm3452 = vcmp.lt.s32.totalorder %v3432, 2
      %vm3453 = vcmp.lt.s32.totalorder %v3432, 3
      %vm3454 = vcmp.lt.s32.totalorder %v3432, 4
      %v3455 = vsel %vm3451, %v3435, %v3438
      %v3456 = vsel %vm3454, %v3444, 2102212464
      %v3457 = vsel %vm3453, %v3441, %v3456
      %v3458 = vsel %vm3452, %v3455, %v3457
      %v3459 = vsel %vm3451, %v3438, %v3441
      %v3460 = vsel %vm3454, %v3447, 920167782
      %v3461 = vsel %vm3453, %v3444, %v3460
      %v3462 = vsel %vm3452, %v3459, %v3461
      %v3463 = vsel %vm3451, %v3441, %v3444
      %v3464 = vsel %vm3454, %v3450, 1326507024
      %v3465 = vsel %vm3453, %v3447, %v3464
      %v3466 = vsel %vm3452, %v3463, %v3465
      %v3467 = vshll.u32 %v3427, 8
      %v3468 = vmul.u32.u64.compose %v3467, %v3466
      %v3469 = vextract.low.u32 %v3468
      %v3470 = vextract.high.u32 %v3468
      %v3471 = vmul.u32.u64.compose %v3467, %v3462
      %v3472 = vextract.low.u32 %v3471
      %v3473 = vextract.high.u32 %v3471
      %v3474 = vmul.u32 %v3467, %v3458
      %v3475 = vadd.s32 %v3470, %v3472
      %vm3476 = vc.u32 %v3470, %v3472
      %v3477 = vadd.s32 %v3473, 1
      %v3478 = vsel %vm3476, %v3477, %v3473
      %v3479 = vadd.s32 %v3474, %v3478
      %v3480 = vadd.s32 %v3479, 536870912
      %v3481 = vshrl.u32 %v3480, 30
      %v3482 = vshll.u32 %v3481, 30
      %v3483 = vsub.s32 %v3479, %v3482
      %vm3484 = vcmp.lt.s32.totalorder %v3483, 0
      %v3485 = vsub.s32 0, %v3483
      %v3486 = vsel %vm3484, %v3485, %v3483
      %v3487 = vclz %v3486
      %v3488 = vsub.s32 %v3487, 2
      %vm3489 = vcmp.gt.s32.totalorder 0, %v3488
      %v3490 = vsel %vm3489, 0, %v3488
      %v3491 = vsub.s32 32, %v3490
      %v3492 = vshll.u32 %v3483, %v3490
      %v3493 = vshrl.u32 %v3475, %v3491
      %v3494 = vor.u32 %v3492, %v3493
      %v3495 = vsub.s32 4294967266, %v3490
      %v3496 = vadd.s32 %v3495, 127
      %v3497 = vshll.u32 %v3496, 23
      %v3498 = vor.u32 4788187, %v3497
      %v3499 = vand.u32 2147483647, %v3498
      %v3501 = vcvt.s32.f32 %v3494
      %v3502 = vmul.f32 %v3501, %v3499
      %v3503 = vxor.u32 %v3502, 2147483648
      %v3504 = vsel %vm3421, %v3503, %v3502
      %v3505 = vsub.s32 4, %v3481
      %v3506 = vsel %vm3421, %v3505, %v3481
      %v3507 = vsel %vm3420, %v701, %v3504
      %v3508 = vsel %vm3420, 0, %v3506
      %v3509 = vcosq.f32.pop %v3507
      %v3510 = vsinq.f32.pop %v3507
      %vm3511 = vweird.f32 %v701
      %v3512 = vadd.s32 %v3508, 3
      %v3513 = vand.u32 %v3512, 3
      %vm3514 = vcmp.lt.s32.totalorder %v3513, 2
      %vm3515 = vcmp.eq.s32.totalorder %v3513, 0
      %v3516 = vxor.u32 %v3510, 2147483648
      %v3517 = vsel %vm3515, %v3509, %v3516
      %vm3518 = vcmp.eq.s32.totalorder %v3513, 2
      %v3519 = vxor.u32 %v3509, 2147483648
      %v3520 = vsel %vm3518, %v3519, %v3510
      %v3521 = vsel %vm3514, %v3517, %v3520
      %v3522 = vsel %vm3511, nan, %v3521
      %v3523 = vand.u32 2147483647, %v702
      %vm3524 = vcmp.le.f32.partialorder %v3523, 0.7853982
      %vm3525 = vcmp.lt.s32.totalorder %v702, 0
      %v3526 = vand.u32 %v702, 2139095040
      %v3527 = vshrl.u32 %v3526, 23
      %v3528 = vsub.s32 %v3527, 127
      %v3529 = vand.u32 2147483647, %v702
      %v3530 = vand.u32 %v3529, 8388607
      %v3531 = vor.u32 %v3530, 8388608
      %v3532 = vsub.s32 0, %v3531
      %v3533 = vadd.s32 %v3528, 1
      %vm3534 = vcmp.gt.s32.totalorder %v3533, 0
      %v3535 = vsel %vm3534, %v3533, 0
      %v3536 = vshrl.u32 %v3535, 5
      %v3537 = vand.u32 %v3535, 31
      %v3538 = vsub.s32 32, %v3537
      %v3539 = vshrl.u32 683565275, %v3538
      %v3540 = vshll.u32 683565275, %v3537
      %v3541 = vshrl.u32 2475754826, %v3538
      %v3542 = vor.u32 %v3540, %v3541
      %v3543 = vshll.u32 2475754826, %v3537
      %v3544 = vshrl.u32 2131351028, %v3538
      %v3545 = vor.u32 %v3543, %v3544
      %v3546 = vshll.u32 2131351028, %v3537
      %v3547 = vshrl.u32 2102212464, %v3538
      %v3548 = vor.u32 %v3546, %v3547
      %v3549 = vshll.u32 2102212464, %v3537
      %v3550 = vshrl.u32 920167782, %v3538
      %v3551 = vor.u32 %v3549, %v3550
      %v3552 = vshll.u32 920167782, %v3537
      %v3553 = vshrl.u32 1326507024, %v3538
      %v3554 = vor.u32 %v3552, %v3553
      %vm3555 = vcmp.lt.s32.totalorder %v3536, 1
      %vm3556 = vcmp.lt.s32.totalorder %v3536, 2
      %vm3557 = vcmp.lt.s32.totalorder %v3536, 3
      %vm3558 = vcmp.lt.s32.totalorder %v3536, 4
      %v3559 = vsel %vm3555, %v3539, %v3542
      %v3560 = vsel %vm3558, %v3548, 2102212464
      %v3561 = vsel %vm3557, %v3545, %v3560
      %v3562 = vsel %vm3556, %v3559, %v3561
      %v3563 = vsel %vm3555, %v3542, %v3545
      %v3564 = vsel %vm3558, %v3551, 920167782
      %v3565 = vsel %vm3557, %v3548, %v3564
      %v3566 = vsel %vm3556, %v3563, %v3565
      %v3567 = vsel %vm3555, %v3545, %v3548
      %v3568 = vsel %vm3558, %v3554, 1326507024
      %v3569 = vsel %vm3557, %v3551, %v3568
      %v3570 = vsel %vm3556, %v3567, %v3569
      %v3571 = vshll.u32 %v3531, 8
      %v3572 = vmul.u32.u64.compose %v3571, %v3570
      %v3573 = vextract.low.u32 %v3572
      %v3574 = vextract.high.u32 %v3572
      %v3575 = vmul.u32.u64.compose %v3571, %v3566
      %v3576 = vextract.low.u32 %v3575
      %v3577 = vextract.high.u32 %v3575
      %v3578 = vmul.u32 %v3571, %v3562
      %v3579 = vadd.s32 %v3574, %v3576
      %vm3580 = vc.u32 %v3574, %v3576
      %v3581 = vadd.s32 %v3577, 1
      %v3582 = vsel %vm3580, %v3581, %v3577
      %v3583 = vadd.s32 %v3578, %v3582
      %v3584 = vadd.s32 %v3583, 536870912
      %v3585 = vshrl.u32 %v3584, 30
      %v3586 = vshll.u32 %v3585, 30
      %v3587 = vsub.s32 %v3583, %v3586
      %vm3588 = vcmp.lt.s32.totalorder %v3587, 0
      %v3589 = vsub.s32 0, %v3587
      %v3590 = vsel %vm3588, %v3589, %v3587
      %v3591 = vclz %v3590
      %v3592 = vsub.s32 %v3591, 2
      %vm3593 = vcmp.gt.s32.totalorder 0, %v3592
      %v3594 = vsel %vm3593, 0, %v3592
      %v3595 = vsub.s32 32, %v3594
      %v3596 = vshll.u32 %v3587, %v3594
      %v3597 = vshrl.u32 %v3579, %v3595
      %v3598 = vor.u32 %v3596, %v3597
      %v3599 = vsub.s32 4294967266, %v3594
      %v3600 = vadd.s32 %v3599, 127
      %v3601 = vshll.u32 %v3600, 23
      %v3602 = vor.u32 4788187, %v3601
      %v3603 = vand.u32 2147483647, %v3602
      %v3605 = vcvt.s32.f32 %v3598
      %v3606 = vmul.f32 %v3605, %v3603
      %v3607 = vxor.u32 %v3606, 2147483648
      %v3608 = vsel %vm3525, %v3607, %v3606
      %v3609 = vsub.s32 4, %v3585
      %v3610 = vsel %vm3525, %v3609, %v3585
      %v3611 = vsel %vm3524, %v702, %v3608
      %v3612 = vsel %vm3524, 0, %v3610
      %v3613 = vcosq.f32.pop %v3611
      %v3614 = vsinq.f32.pop %v3611
      %vm3615 = vweird.f32 %v702
      %v3616 = vadd.s32 %v3612, 3
      %v3617 = vand.u32 %v3616, 3
      %vm3618 = vcmp.lt.s32.totalorder %v3617, 2
      %vm3619 = vcmp.eq.s32.totalorder %v3617, 0
      %v3620 = vxor.u32 %v3614, 2147483648
      %v3621 = vsel %vm3619, %v3613, %v3620
      %vm3622 = vcmp.eq.s32.totalorder %v3617, 2
      %v3623 = vxor.u32 %v3613, 2147483648
      %v3624 = vsel %vm3622, %v3623, %v3614
      %v3625 = vsel %vm3618, %v3621, %v3624
      %v3626 = vsel %vm3615, nan, %v3625
      %v3627 = vand.u32 2147483647, %v703
      %vm3628 = vcmp.le.f32.partialorder %v3627, 0.7853982
      %vm3629 = vcmp.lt.s32.totalorder %v703, 0
      %v3630 = vand.u32 %v703, 2139095040
      %v3631 = vshrl.u32 %v3630, 23
      %v3632 = vsub.s32 %v3631, 127
      %v3633 = vand.u32 2147483647, %v703
      %v3634 = vand.u32 %v3633, 8388607
      %v3635 = vor.u32 %v3634, 8388608
      %v3636 = vsub.s32 0, %v3635
      %v3637 = vadd.s32 %v3632, 1
      %vm3638 = vcmp.gt.s32.totalorder %v3637, 0
      %v3639 = vsel %vm3638, %v3637, 0
      %v3640 = vshrl.u32 %v3639, 5
      %v3641 = vand.u32 %v3639, 31
      %v3642 = vsub.s32 32, %v3641
      %v3643 = vshrl.u32 683565275, %v3642
      %v3644 = vshll.u32 683565275, %v3641
      %v3645 = vshrl.u32 2475754826, %v3642
      %v3646 = vor.u32 %v3644, %v3645
      %v3647 = vshll.u32 2475754826, %v3641
      %v3648 = vshrl.u32 2131351028, %v3642
      %v3649 = vor.u32 %v3647, %v3648
      %v3650 = vshll.u32 2131351028, %v3641
      %v3651 = vshrl.u32 2102212464, %v3642
      %v3652 = vor.u32 %v3650, %v3651
      %v3653 = vshll.u32 2102212464, %v3641
      %v3654 = vshrl.u32 920167782, %v3642
      %v3655 = vor.u32 %v3653, %v3654
      %v3656 = vshll.u32 920167782, %v3641
      %v3657 = vshrl.u32 1326507024, %v3642
      %v3658 = vor.u32 %v3656, %v3657
      %vm3659 = vcmp.lt.s32.totalorder %v3640, 1
      %vm3660 = vcmp.lt.s32.totalorder %v3640, 2
      %vm3661 = vcmp.lt.s32.totalorder %v3640, 3
      %vm3662 = vcmp.lt.s32.totalorder %v3640, 4
      %v3663 = vsel %vm3659, %v3643, %v3646
      %v3664 = vsel %vm3662, %v3652, 2102212464
      %v3665 = vsel %vm3661, %v3649, %v3664
      %v3666 = vsel %vm3660, %v3663, %v3665
      %v3667 = vsel %vm3659, %v3646, %v3649
      %v3668 = vsel %vm3662, %v3655, 920167782
      %v3669 = vsel %vm3661, %v3652, %v3668
      %v3670 = vsel %vm3660, %v3667, %v3669
      %v3671 = vsel %vm3659, %v3649, %v3652
      %v3672 = vsel %vm3662, %v3658, 1326507024
      %v3673 = vsel %vm3661, %v3655, %v3672
      %v3674 = vsel %vm3660, %v3671, %v3673
      %v3675 = vshll.u32 %v3635, 8
      %v3676 = vmul.u32.u64.compose %v3675, %v3674
      %v3677 = vextract.low.u32 %v3676
      %v3678 = vextract.high.u32 %v3676
      %v3679 = vmul.u32.u64.compose %v3675, %v3670
      %v3680 = vextract.low.u32 %v3679
      %v3681 = vextract.high.u32 %v3679
      %v3682 = vmul.u32 %v3675, %v3666
      %v3683 = vadd.s32 %v3678, %v3680
      %vm3684 = vc.u32 %v3678, %v3680
      %v3685 = vadd.s32 %v3681, 1
      %v3686 = vsel %vm3684, %v3685, %v3681
      %v3687 = vadd.s32 %v3682, %v3686
      %v3688 = vadd.s32 %v3687, 536870912
      %v3689 = vshrl.u32 %v3688, 30
      %v3690 = vshll.u32 %v3689, 30
      %v3691 = vsub.s32 %v3687, %v3690
      %vm3692 = vcmp.lt.s32.totalorder %v3691, 0
      %v3693 = vsub.s32 0, %v3691
      %v3694 = vsel %vm3692, %v3693, %v3691
      %v3695 = vclz %v3694
      %v3696 = vsub.s32 %v3695, 2
      %vm3697 = vcmp.gt.s32.totalorder 0, %v3696
      %v3698 = vsel %vm3697, 0, %v3696
      %v3699 = vsub.s32 32, %v3698
      %v3700 = vshll.u32 %v3691, %v3698
      %v3701 = vshrl.u32 %v3683, %v3699
      %v3702 = vor.u32 %v3700, %v3701
      %v3703 = vsub.s32 4294967266, %v3698
      %v3704 = vadd.s32 %v3703, 127
      %v3705 = vshll.u32 %v3704, 23
      %v3706 = vor.u32 4788187, %v3705
      %v3707 = vand.u32 2147483647, %v3706
      %v3709 = vcvt.s32.f32 %v3702
      %v3710 = vmul.f32 %v3709, %v3707
      %v3711 = vxor.u32 %v3710, 2147483648
      %v3712 = vsel %vm3629, %v3711, %v3710
      %v3713 = vsub.s32 4, %v3689
      %v3714 = vsel %vm3629, %v3713, %v3689
      %v3715 = vsel %vm3628, %v703, %v3712
      %v3716 = vsel %vm3628, 0, %v3714
      %v3717 = vcosq.f32.pop %v3715
      %v3718 = vsinq.f32.pop %v3715
      %vm3719 = vweird.f32 %v703
      %v3720 = vadd.s32 %v3716, 3
      %v3721 = vand.u32 %v3720, 3
      %vm3722 = vcmp.lt.s32.totalorder %v3721, 2
      %vm3723 = vcmp.eq.s32.totalorder %v3721, 0
      %v3724 = vxor.u32 %v3718, 2147483648
      %v3725 = vsel %vm3723, %v3717, %v3724
      %vm3726 = vcmp.eq.s32.totalorder %v3721, 2
      %v3727 = vxor.u32 %v3717, 2147483648
      %v3728 = vsel %vm3726, %v3727, %v3718
      %v3729 = vsel %vm3722, %v3725, %v3728
      %v3730 = vsel %vm3719, nan, %v3729
      %v3731 = vand.u32 2147483647, %v704
      %vm3732 = vcmp.le.f32.partialorder %v3731, 0.7853982
      %vm3733 = vcmp.lt.s32.totalorder %v704, 0
      %v3734 = vand.u32 %v704, 2139095040
      %v3735 = vshrl.u32 %v3734, 23
      %v3736 = vsub.s32 %v3735, 127
      %v3737 = vand.u32 2147483647, %v704
      %v3738 = vand.u32 %v3737, 8388607
      %v3739 = vor.u32 %v3738, 8388608
      %v3740 = vsub.s32 0, %v3739
      %v3741 = vadd.s32 %v3736, 1
      %vm3742 = vcmp.gt.s32.totalorder %v3741, 0
      %v3743 = vsel %vm3742, %v3741, 0
      %v3744 = vshrl.u32 %v3743, 5
      %v3745 = vand.u32 %v3743, 31
      %v3746 = vsub.s32 32, %v3745
      %v3747 = vshrl.u32 683565275, %v3746
      %v3748 = vshll.u32 683565275, %v3745
      %v3749 = vshrl.u32 2475754826, %v3746
      %v3750 = vor.u32 %v3748, %v3749
      %v3751 = vshll.u32 2475754826, %v3745
      %v3752 = vshrl.u32 2131351028, %v3746
      %v3753 = vor.u32 %v3751, %v3752
      %v3754 = vshll.u32 2131351028, %v3745
      %v3755 = vshrl.u32 2102212464, %v3746
      %v3756 = vor.u32 %v3754, %v3755
      %v3757 = vshll.u32 2102212464, %v3745
      %v3758 = vshrl.u32 920167782, %v3746
      %v3759 = vor.u32 %v3757, %v3758
      %v3760 = vshll.u32 920167782, %v3745
      %v3761 = vshrl.u32 1326507024, %v3746
      %v3762 = vor.u32 %v3760, %v3761
      %vm3763 = vcmp.lt.s32.totalorder %v3744, 1
      %vm3764 = vcmp.lt.s32.totalorder %v3744, 2
      %vm3765 = vcmp.lt.s32.totalorder %v3744, 3
      %vm3766 = vcmp.lt.s32.totalorder %v3744, 4
      %v3767 = vsel %vm3763, %v3747, %v3750
      %v3768 = vsel %vm3766, %v3756, 2102212464
      %v3769 = vsel %vm3765, %v3753, %v3768
      %v3770 = vsel %vm3764, %v3767, %v3769
      %v3771 = vsel %vm3763, %v3750, %v3753
      %v3772 = vsel %vm3766, %v3759, 920167782
      %v3773 = vsel %vm3765, %v3756, %v3772
      %v3774 = vsel %vm3764, %v3771, %v3773
      %v3775 = vsel %vm3763, %v3753, %v3756
      %v3776 = vsel %vm3766, %v3762, 1326507024
      %v3777 = vsel %vm3765, %v3759, %v3776
      %v3778 = vsel %vm3764, %v3775, %v3777
      %v3779 = vshll.u32 %v3739, 8
      %v3780 = vmul.u32.u64.compose %v3779, %v3778
      %v3781 = vextract.low.u32 %v3780
      %v3782 = vextract.high.u32 %v3780
      %v3783 = vmul.u32.u64.compose %v3779, %v3774
      %v3784 = vextract.low.u32 %v3783
      %v3785 = vextract.high.u32 %v3783
      %v3786 = vmul.u32 %v3779, %v3770
      %v3787 = vadd.s32 %v3782, %v3784
      %vm3788 = vc.u32 %v3782, %v3784
      %v3789 = vadd.s32 %v3785, 1
      %v3790 = vsel %vm3788, %v3789, %v3785
      %v3791 = vadd.s32 %v3786, %v3790
      %v3792 = vadd.s32 %v3791, 536870912
      %v3793 = vshrl.u32 %v3792, 30
      %v3794 = vshll.u32 %v3793, 30
      %v3795 = vsub.s32 %v3791, %v3794
      %vm3796 = vcmp.lt.s32.totalorder %v3795, 0
      %v3797 = vsub.s32 0, %v3795
      %v3798 = vsel %vm3796, %v3797, %v3795
      %v3799 = vclz %v3798
      %v3800 = vsub.s32 %v3799, 2
      %vm3801 = vcmp.gt.s32.totalorder 0, %v3800
      %v3802 = vsel %vm3801, 0, %v3800
      %v3803 = vsub.s32 32, %v3802
      %v3804 = vshll.u32 %v3795, %v3802
      %v3805 = vshrl.u32 %v3787, %v3803
      %v3806 = vor.u32 %v3804, %v3805
      %v3807 = vsub.s32 4294967266, %v3802
      %v3808 = vadd.s32 %v3807, 127
      %v3809 = vshll.u32 %v3808, 23
      %v3810 = vor.u32 4788187, %v3809
      %v3811 = vand.u32 2147483647, %v3810
      %v3813 = vcvt.s32.f32 %v3806
      %v3814 = vmul.f32 %v3813, %v3811
      %v3815 = vxor.u32 %v3814, 2147483648
      %v3816 = vsel %vm3733, %v3815, %v3814
      %v3817 = vsub.s32 4, %v3793
      %v3818 = vsel %vm3733, %v3817, %v3793
      %v3819 = vsel %vm3732, %v704, %v3816
      %v3820 = vsel %vm3732, 0, %v3818
      %v3821 = vcosq.f32.pop %v3819
      %v3822 = vsinq.f32.pop %v3819
      %vm3823 = vweird.f32 %v704
      %v3824 = vadd.s32 %v3820, 3
      %v3825 = vand.u32 %v3824, 3
      %vm3826 = vcmp.lt.s32.totalorder %v3825, 2
      %vm3827 = vcmp.eq.s32.totalorder %v3825, 0
      %v3828 = vxor.u32 %v3822, 2147483648
      %v3829 = vsel %vm3827, %v3821, %v3828
      %vm3830 = vcmp.eq.s32.totalorder %v3825, 2
      %v3831 = vxor.u32 %v3821, 2147483648
      %v3832 = vsel %vm3830, %v3831, %v3822
      %v3833 = vsel %vm3826, %v3829, %v3832
      %v3834 = vsel %vm3823, nan, %v3833
      %v3835 = vand.u32 2147483647, %v705
      %vm3836 = vcmp.le.f32.partialorder %v3835, 0.7853982
      %vm3837 = vcmp.lt.s32.totalorder %v705, 0
      %v3838 = vand.u32 %v705, 2139095040
      %v3839 = vshrl.u32 %v3838, 23
      %v3840 = vsub.s32 %v3839, 127
      %v3841 = vand.u32 2147483647, %v705
      %v3842 = vand.u32 %v3841, 8388607
      %v3843 = vor.u32 %v3842, 8388608
      %v3844 = vsub.s32 0, %v3843
      %v3845 = vadd.s32 %v3840, 1
      %vm3846 = vcmp.gt.s32.totalorder %v3845, 0
      %v3847 = vsel %vm3846, %v3845, 0
      %v3848 = vshrl.u32 %v3847, 5
      %v3849 = vand.u32 %v3847, 31
      %v3850 = vsub.s32 32, %v3849
      %v3851 = vshrl.u32 683565275, %v3850
      %v3852 = vshll.u32 683565275, %v3849
      %v3853 = vshrl.u32 2475754826, %v3850
      %v3854 = vor.u32 %v3852, %v3853
      %v3855 = vshll.u32 2475754826, %v3849
      %v3856 = vshrl.u32 2131351028, %v3850
      %v3857 = vor.u32 %v3855, %v3856
      %v3858 = vshll.u32 2131351028, %v3849
      %v3859 = vshrl.u32 2102212464, %v3850
      %v3860 = vor.u32 %v3858, %v3859
      %v3861 = vshll.u32 2102212464, %v3849
      %v3862 = vshrl.u32 920167782, %v3850
      %v3863 = vor.u32 %v3861, %v3862
      %v3864 = vshll.u32 920167782, %v3849
      %v3865 = vshrl.u32 1326507024, %v3850
      %v3866 = vor.u32 %v3864, %v3865
      %vm3867 = vcmp.lt.s32.totalorder %v3848, 1
      %vm3868 = vcmp.lt.s32.totalorder %v3848, 2
      %vm3869 = vcmp.lt.s32.totalorder %v3848, 3
      %vm3870 = vcmp.lt.s32.totalorder %v3848, 4
      %v3871 = vsel %vm3867, %v3851, %v3854
      %v3872 = vsel %vm3870, %v3860, 2102212464
      %v3873 = vsel %vm3869, %v3857, %v3872
      %v3874 = vsel %vm3868, %v3871, %v3873
      %v3875 = vsel %vm3867, %v3854, %v3857
      %v3876 = vsel %vm3870, %v3863, 920167782
      %v3877 = vsel %vm3869, %v3860, %v3876
      %v3878 = vsel %vm3868, %v3875, %v3877
      %v3879 = vsel %vm3867, %v3857, %v3860
      %v3880 = vsel %vm3870, %v3866, 1326507024
      %v3881 = vsel %vm3869, %v3863, %v3880
      %v3882 = vsel %vm3868, %v3879, %v3881
      %v3883 = vshll.u32 %v3843, 8
      %v3884 = vmul.u32.u64.compose %v3883, %v3882
      %v3885 = vextract.low.u32 %v3884
      %v3886 = vextract.high.u32 %v3884
      %v3887 = vmul.u32.u64.compose %v3883, %v3878
      %v3888 = vextract.low.u32 %v3887
      %v3889 = vextract.high.u32 %v3887
      %v3890 = vmul.u32 %v3883, %v3874
      %v3891 = vadd.s32 %v3886, %v3888
      %vm3892 = vc.u32 %v3886, %v3888
      %v3893 = vadd.s32 %v3889, 1
      %v3894 = vsel %vm3892, %v3893, %v3889
      %v3895 = vadd.s32 %v3890, %v3894
      %v3896 = vadd.s32 %v3895, 536870912
      %v3897 = vshrl.u32 %v3896, 30
      %v3898 = vshll.u32 %v3897, 30
      %v3899 = vsub.s32 %v3895, %v3898
      %vm3900 = vcmp.lt.s32.totalorder %v3899, 0
      %v3901 = vsub.s32 0, %v3899
      %v3902 = vsel %vm3900, %v3901, %v3899
      %v3903 = vclz %v3902
      %v3904 = vsub.s32 %v3903, 2
      %vm3905 = vcmp.gt.s32.totalorder 0, %v3904
      %v3906 = vsel %vm3905, 0, %v3904
      %v3907 = vsub.s32 32, %v3906
      %v3908 = vshll.u32 %v3899, %v3906
      %v3909 = vshrl.u32 %v3891, %v3907
      %v3910 = vor.u32 %v3908, %v3909
      %v3911 = vsub.s32 4294967266, %v3906
      %v3912 = vadd.s32 %v3911, 127
      %v3913 = vshll.u32 %v3912, 23
      %v3914 = vor.u32 4788187, %v3913
      %v3915 = vand.u32 2147483647, %v3914
      %v3917 = vcvt.s32.f32 %v3910
      %v3918 = vmul.f32 %v3917, %v3915
      %v3919 = vxor.u32 %v3918, 2147483648
      %v3920 = vsel %vm3837, %v3919, %v3918
      %v3921 = vsub.s32 4, %v3897
      %v3922 = vsel %vm3837, %v3921, %v3897
      %v3923 = vsel %vm3836, %v705, %v3920
      %v3924 = vsel %vm3836, 0, %v3922
      %v3925 = vcosq.f32.pop %v3923
      %v3926 = vsinq.f32.pop %v3923
      %vm3927 = vweird.f32 %v705
      %v3928 = vadd.s32 %v3924, 3
      %v3929 = vand.u32 %v3928, 3
      %vm3930 = vcmp.lt.s32.totalorder %v3929, 2
      %vm3931 = vcmp.eq.s32.totalorder %v3929, 0
      %v3932 = vxor.u32 %v3926, 2147483648
      %v3933 = vsel %vm3931, %v3925, %v3932
      %vm3934 = vcmp.eq.s32.totalorder %v3929, 2
      %v3935 = vxor.u32 %v3925, 2147483648
      %v3936 = vsel %vm3934, %v3935, %v3926
      %v3937 = vsel %vm3930, %v3933, %v3936
      %v3938 = vsel %vm3927, nan, %v3937
      %v3939 = vand.u32 2147483647, %v706
      %vm3940 = vcmp.le.f32.partialorder %v3939, 0.7853982
      %vm3941 = vcmp.lt.s32.totalorder %v706, 0
      %v3942 = vand.u32 %v706, 2139095040
      %v3943 = vshrl.u32 %v3942, 23
      %v3944 = vsub.s32 %v3943, 127
      %v3945 = vand.u32 2147483647, %v706
      %v3946 = vand.u32 %v3945, 8388607
      %v3947 = vor.u32 %v3946, 8388608
      %v3948 = vsub.s32 0, %v3947
      %v3949 = vadd.s32 %v3944, 1
      %vm3950 = vcmp.gt.s32.totalorder %v3949, 0
      %v3951 = vsel %vm3950, %v3949, 0
      %v3952 = vshrl.u32 %v3951, 5
      %v3953 = vand.u32 %v3951, 31
      %v3954 = vsub.s32 32, %v3953
      %v3955 = vshrl.u32 683565275, %v3954
      %v3956 = vshll.u32 683565275, %v3953
      %v3957 = vshrl.u32 2475754826, %v3954
      %v3958 = vor.u32 %v3956, %v3957
      %v3959 = vshll.u32 2475754826, %v3953
      %v3960 = vshrl.u32 2131351028, %v3954
      %v3961 = vor.u32 %v3959, %v3960
      %v3962 = vshll.u32 2131351028, %v3953
      %v3963 = vshrl.u32 2102212464, %v3954
      %v3964 = vor.u32 %v3962, %v3963
      %v3965 = vshll.u32 2102212464, %v3953
      %v3966 = vshrl.u32 920167782, %v3954
      %v3967 = vor.u32 %v3965, %v3966
      %v3968 = vshll.u32 920167782, %v3953
      %v3969 = vshrl.u32 1326507024, %v3954
      %v3970 = vor.u32 %v3968, %v3969
      %vm3971 = vcmp.lt.s32.totalorder %v3952, 1
      %vm3972 = vcmp.lt.s32.totalorder %v3952, 2
      %vm3973 = vcmp.lt.s32.totalorder %v3952, 3
      %vm3974 = vcmp.lt.s32.totalorder %v3952, 4
      %v3975 = vsel %vm3971, %v3955, %v3958
      %v3976 = vsel %vm3974, %v3964, 2102212464
      %v3977 = vsel %vm3973, %v3961, %v3976
      %v3978 = vsel %vm3972, %v3975, %v3977
      %v3979 = vsel %vm3971, %v3958, %v3961
      %v3980 = vsel %vm3974, %v3967, 920167782
      %v3981 = vsel %vm3973, %v3964, %v3980
      %v3982 = vsel %vm3972, %v3979, %v3981
      %v3983 = vsel %vm3971, %v3961, %v3964
      %v3984 = vsel %vm3974, %v3970, 1326507024
      %v3985 = vsel %vm3973, %v3967, %v3984
      %v3986 = vsel %vm3972, %v3983, %v3985
      %v3987 = vshll.u32 %v3947, 8
      %v3988 = vmul.u32.u64.compose %v3987, %v3986
      %v3989 = vextract.low.u32 %v3988
      %v3990 = vextract.high.u32 %v3988
      %v3991 = vmul.u32.u64.compose %v3987, %v3982
      %v3992 = vextract.low.u32 %v3991
      %v3993 = vextract.high.u32 %v3991
      %v3994 = vmul.u32 %v3987, %v3978
      %v3995 = vadd.s32 %v3990, %v3992
      %vm3996 = vc.u32 %v3990, %v3992
      %v3997 = vadd.s32 %v3993, 1
      %v3998 = vsel %vm3996, %v3997, %v3993
      %v3999 = vadd.s32 %v3994, %v3998
      %v4000 = vadd.s32 %v3999, 536870912
      %v4001 = vshrl.u32 %v4000, 30
      %v4002 = vshll.u32 %v4001, 30
      %v4003 = vsub.s32 %v3999, %v4002
      %vm4004 = vcmp.lt.s32.totalorder %v4003, 0
      %v4005 = vsub.s32 0, %v4003
      %v4006 = vsel %vm4004, %v4005, %v4003
      %v4007 = vclz %v4006
      %v4008 = vsub.s32 %v4007, 2
      %vm4009 = vcmp.gt.s32.totalorder 0, %v4008
      %v4010 = vsel %vm4009, 0, %v4008
      %v4011 = vsub.s32 32, %v4010
      %v4012 = vshll.u32 %v4003, %v4010
      %v4013 = vshrl.u32 %v3995, %v4011
      %v4014 = vor.u32 %v4012, %v4013
      %v4015 = vsub.s32 4294967266, %v4010
      %v4016 = vadd.s32 %v4015, 127
      %v4017 = vshll.u32 %v4016, 23
      %v4018 = vor.u32 4788187, %v4017
      %v4019 = vand.u32 2147483647, %v4018
      %v4021 = vcvt.s32.f32 %v4014
      %v4022 = vmul.f32 %v4021, %v4019
      %v4023 = vxor.u32 %v4022, 2147483648
      %v4024 = vsel %vm3941, %v4023, %v4022
      %v4025 = vsub.s32 4, %v4001
      %v4026 = vsel %vm3941, %v4025, %v4001
      %v4027 = vsel %vm3940, %v706, %v4024
      %v4028 = vsel %vm3940, 0, %v4026
      %v4029 = vcosq.f32.pop %v4027
      %v4030 = vsinq.f32.pop %v4027
      %vm4031 = vweird.f32 %v706
      %v4032 = vadd.s32 %v4028, 3
      %v4033 = vand.u32 %v4032, 3
      %vm4034 = vcmp.lt.s32.totalorder %v4033, 2
      %vm4035 = vcmp.eq.s32.totalorder %v4033, 0
      %v4036 = vxor.u32 %v4030, 2147483648
      %v4037 = vsel %vm4035, %v4029, %v4036
      %vm4038 = vcmp.eq.s32.totalorder %v4033, 2
      %v4039 = vxor.u32 %v4029, 2147483648
      %v4040 = vsel %vm4038, %v4039, %v4030
      %v4041 = vsel %vm4034, %v4037, %v4040
      %v4042 = vsel %vm4031, nan, %v4041
      %v4043 = vand.u32 2147483647, %v707
      %vm4044 = vcmp.le.f32.partialorder %v4043, 0.7853982
      %vm4045 = vcmp.lt.s32.totalorder %v707, 0
      %v4046 = vand.u32 %v707, 2139095040
      %v4047 = vshrl.u32 %v4046, 23
      %v4048 = vsub.s32 %v4047, 127
      %v4049 = vand.u32 2147483647, %v707
      %v4050 = vand.u32 %v4049, 8388607
      %v4051 = vor.u32 %v4050, 8388608
      %v4052 = vsub.s32 0, %v4051
      %v4053 = vadd.s32 %v4048, 1
      %vm4054 = vcmp.gt.s32.totalorder %v4053, 0
      %v4055 = vsel %vm4054, %v4053, 0
      %v4056 = vshrl.u32 %v4055, 5
      %v4057 = vand.u32 %v4055, 31
      %v4058 = vsub.s32 32, %v4057
      %v4059 = vshrl.u32 683565275, %v4058
      %v4060 = vshll.u32 683565275, %v4057
      %v4061 = vshrl.u32 2475754826, %v4058
      %v4062 = vor.u32 %v4060, %v4061
      %v4063 = vshll.u32 2475754826, %v4057
      %v4064 = vshrl.u32 2131351028, %v4058
      %v4065 = vor.u32 %v4063, %v4064
      %v4066 = vshll.u32 2131351028, %v4057
      %v4067 = vshrl.u32 2102212464, %v4058
      %v4068 = vor.u32 %v4066, %v4067
      %v4069 = vshll.u32 2102212464, %v4057
      %v4070 = vshrl.u32 920167782, %v4058
      %v4071 = vor.u32 %v4069, %v4070
      %v4072 = vshll.u32 920167782, %v4057
      %v4073 = vshrl.u32 1326507024, %v4058
      %v4074 = vor.u32 %v4072, %v4073
      %vm4075 = vcmp.lt.s32.totalorder %v4056, 1
      %vm4076 = vcmp.lt.s32.totalorder %v4056, 2
      %vm4077 = vcmp.lt.s32.totalorder %v4056, 3
      %vm4078 = vcmp.lt.s32.totalorder %v4056, 4
      %v4079 = vsel %vm4075, %v4059, %v4062
      %v4080 = vsel %vm4078, %v4068, 2102212464
      %v4081 = vsel %vm4077, %v4065, %v4080
      %v4082 = vsel %vm4076, %v4079, %v4081
      %v4083 = vsel %vm4075, %v4062, %v4065
      %v4084 = vsel %vm4078, %v4071, 920167782
      %v4085 = vsel %vm4077, %v4068, %v4084
      %v4086 = vsel %vm4076, %v4083, %v4085
      %v4087 = vsel %vm4075, %v4065, %v4068
      %v4088 = vsel %vm4078, %v4074, 1326507024
      %v4089 = vsel %vm4077, %v4071, %v4088
      %v4090 = vsel %vm4076, %v4087, %v4089
      %v4091 = vshll.u32 %v4051, 8
      %v4092 = vmul.u32.u64.compose %v4091, %v4090
      %v4093 = vextract.low.u32 %v4092
      %v4094 = vextract.high.u32 %v4092
      %v4095 = vmul.u32.u64.compose %v4091, %v4086
      %v4096 = vextract.low.u32 %v4095
      %v4097 = vextract.high.u32 %v4095
      %v4098 = vmul.u32 %v4091, %v4082
      %v4099 = vadd.s32 %v4094, %v4096
      %vm4100 = vc.u32 %v4094, %v4096
      %v4101 = vadd.s32 %v4097, 1
      %v4102 = vsel %vm4100, %v4101, %v4097
      %v4103 = vadd.s32 %v4098, %v4102
      %v4104 = vadd.s32 %v4103, 536870912
      %v4105 = vshrl.u32 %v4104, 30
      %v4106 = vshll.u32 %v4105, 30
      %v4107 = vsub.s32 %v4103, %v4106
      %vm4108 = vcmp.lt.s32.totalorder %v4107, 0
      %v4109 = vsub.s32 0, %v4107
      %v4110 = vsel %vm4108, %v4109, %v4107
      %v4111 = vclz %v4110
      %v4112 = vsub.s32 %v4111, 2
      %vm4113 = vcmp.gt.s32.totalorder 0, %v4112
      %v4114 = vsel %vm4113, 0, %v4112
      %v4115 = vsub.s32 32, %v4114
      %v4116 = vshll.u32 %v4107, %v4114
      %v4117 = vshrl.u32 %v4099, %v4115
      %v4118 = vor.u32 %v4116, %v4117
      %v4119 = vsub.s32 4294967266, %v4114
      %v4120 = vadd.s32 %v4119, 127
      %v4121 = vshll.u32 %v4120, 23
      %v4122 = vor.u32 4788187, %v4121
      %v4123 = vand.u32 2147483647, %v4122
      %v4125 = vcvt.s32.f32 %v4118
      %v4126 = vmul.f32 %v4125, %v4123
      %v4127 = vxor.u32 %v4126, 2147483648
      %v4128 = vsel %vm4045, %v4127, %v4126
      %v4129 = vsub.s32 4, %v4105
      %v4130 = vsel %vm4045, %v4129, %v4105
      %v4131 = vsel %vm4044, %v707, %v4128
      %v4132 = vsel %vm4044, 0, %v4130
      %v4133 = vcosq.f32.pop %v4131
      %v4134 = vsinq.f32.pop %v4131
      %vm4135 = vweird.f32 %v707
      %v4136 = vadd.s32 %v4132, 3
      %v4137 = vand.u32 %v4136, 3
      %vm4138 = vcmp.lt.s32.totalorder %v4137, 2
      %vm4139 = vcmp.eq.s32.totalorder %v4137, 0
      %v4140 = vxor.u32 %v4134, 2147483648
      %v4141 = vsel %vm4139, %v4133, %v4140
      %vm4142 = vcmp.eq.s32.totalorder %v4137, 2
      %v4143 = vxor.u32 %v4133, 2147483648
      %v4144 = vsel %vm4142, %v4143, %v4134
      %v4145 = vsel %vm4138, %v4141, %v4144
      %v4146 = vsel %vm4135, nan, %v4145
      %v4147 = vand.u32 2147483647, %v708
      %vm4148 = vcmp.le.f32.partialorder %v4147, 0.7853982
      %vm4149 = vcmp.lt.s32.totalorder %v708, 0
      %v4150 = vand.u32 %v708, 2139095040
      %v4151 = vshrl.u32 %v4150, 23
      %v4152 = vsub.s32 %v4151, 127
      %v4153 = vand.u32 2147483647, %v708
      %v4154 = vand.u32 %v4153, 8388607
      %v4155 = vor.u32 %v4154, 8388608
      %v4156 = vsub.s32 0, %v4155
      %v4157 = vadd.s32 %v4152, 1
      %vm4158 = vcmp.gt.s32.totalorder %v4157, 0
      %v4159 = vsel %vm4158, %v4157, 0
      %v4160 = vshrl.u32 %v4159, 5
      %v4161 = vand.u32 %v4159, 31
      %v4162 = vsub.s32 32, %v4161
      %v4163 = vshrl.u32 683565275, %v4162
      %v4164 = vshll.u32 683565275, %v4161
      %v4165 = vshrl.u32 2475754826, %v4162
      %v4166 = vor.u32 %v4164, %v4165
      %v4167 = vshll.u32 2475754826, %v4161
      %v4168 = vshrl.u32 2131351028, %v4162
      %v4169 = vor.u32 %v4167, %v4168
      %v4170 = vshll.u32 2131351028, %v4161
      %v4171 = vshrl.u32 2102212464, %v4162
      %v4172 = vor.u32 %v4170, %v4171
      %v4173 = vshll.u32 2102212464, %v4161
      %v4174 = vshrl.u32 920167782, %v4162
      %v4175 = vor.u32 %v4173, %v4174
      %v4176 = vshll.u32 920167782, %v4161
      %v4177 = vshrl.u32 1326507024, %v4162
      %v4178 = vor.u32 %v4176, %v4177
      %vm4179 = vcmp.lt.s32.totalorder %v4160, 1
      %vm4180 = vcmp.lt.s32.totalorder %v4160, 2
      %vm4181 = vcmp.lt.s32.totalorder %v4160, 3
      %vm4182 = vcmp.lt.s32.totalorder %v4160, 4
      %v4183 = vsel %vm4179, %v4163, %v4166
      %v4184 = vsel %vm4182, %v4172, 2102212464
      %v4185 = vsel %vm4181, %v4169, %v4184
      %v4186 = vsel %vm4180, %v4183, %v4185
      %v4187 = vsel %vm4179, %v4166, %v4169
      %v4188 = vsel %vm4182, %v4175, 920167782
      %v4189 = vsel %vm4181, %v4172, %v4188
      %v4190 = vsel %vm4180, %v4187, %v4189
      %v4191 = vsel %vm4179, %v4169, %v4172
      %v4192 = vsel %vm4182, %v4178, 1326507024
      %v4193 = vsel %vm4181, %v4175, %v4192
      %v4194 = vsel %vm4180, %v4191, %v4193
      %v4195 = vshll.u32 %v4155, 8
      %v4196 = vmul.u32.u64.compose %v4195, %v4194
      %v4197 = vextract.low.u32 %v4196
      %v4198 = vextract.high.u32 %v4196
      %v4199 = vmul.u32.u64.compose %v4195, %v4190
      %v4200 = vextract.low.u32 %v4199
      %v4201 = vextract.high.u32 %v4199
      %v4202 = vmul.u32 %v4195, %v4186
      %v4203 = vadd.s32 %v4198, %v4200
      %vm4204 = vc.u32 %v4198, %v4200
      %v4205 = vadd.s32 %v4201, 1
      %v4206 = vsel %vm4204, %v4205, %v4201
      %v4207 = vadd.s32 %v4202, %v4206
      %v4208 = vadd.s32 %v4207, 536870912
      %v4209 = vshrl.u32 %v4208, 30
      %v4210 = vshll.u32 %v4209, 30
      %v4211 = vsub.s32 %v4207, %v4210
      %vm4212 = vcmp.lt.s32.totalorder %v4211, 0
      %v4213 = vsub.s32 0, %v4211
      %v4214 = vsel %vm4212, %v4213, %v4211
      %v4215 = vclz %v4214
      %v4216 = vsub.s32 %v4215, 2
      %vm4217 = vcmp.gt.s32.totalorder 0, %v4216
      %v4218 = vsel %vm4217, 0, %v4216
      %v4219 = vsub.s32 32, %v4218
      %v4220 = vshll.u32 %v4211, %v4218
      %v4221 = vshrl.u32 %v4203, %v4219
      %v4222 = vor.u32 %v4220, %v4221
      %v4223 = vsub.s32 4294967266, %v4218
      %v4224 = vadd.s32 %v4223, 127
      %v4225 = vshll.u32 %v4224, 23
      %v4226 = vor.u32 4788187, %v4225
      %v4227 = vand.u32 2147483647, %v4226
      %v4229 = vcvt.s32.f32 %v4222
      %v4230 = vmul.f32 %v4229, %v4227
      %v4231 = vxor.u32 %v4230, 2147483648
      %v4232 = vsel %vm4149, %v4231, %v4230
      %v4233 = vsub.s32 4, %v4209
      %v4234 = vsel %vm4149, %v4233, %v4209
      %v4235 = vsel %vm4148, %v708, %v4232
      %v4236 = vsel %vm4148, 0, %v4234
      %v4237 = vcosq.f32.pop %v4235
      %v4238 = vsinq.f32.pop %v4235
      %vm4239 = vweird.f32 %v708
      %v4240 = vadd.s32 %v4236, 3
      %v4241 = vand.u32 %v4240, 3
      %vm4242 = vcmp.lt.s32.totalorder %v4241, 2
      %vm4243 = vcmp.eq.s32.totalorder %v4241, 0
      %v4244 = vxor.u32 %v4238, 2147483648
      %v4245 = vsel %vm4243, %v4237, %v4244
      %vm4246 = vcmp.eq.s32.totalorder %v4241, 2
      %v4247 = vxor.u32 %v4237, 2147483648
      %v4248 = vsel %vm4246, %v4247, %v4238
      %v4249 = vsel %vm4242, %v4245, %v4248
      %v4250 = vsel %vm4239, nan, %v4249
      %v4251 = vand.u32 2147483647, %v709
      %vm4252 = vcmp.le.f32.partialorder %v4251, 0.7853982
      %vm4253 = vcmp.lt.s32.totalorder %v709, 0
      %v4254 = vand.u32 %v709, 2139095040
      %v4255 = vshrl.u32 %v4254, 23
      %v4256 = vsub.s32 %v4255, 127
      %v4257 = vand.u32 2147483647, %v709
      %v4258 = vand.u32 %v4257, 8388607
      %v4259 = vor.u32 %v4258, 8388608
      %v4260 = vsub.s32 0, %v4259
      %v4261 = vadd.s32 %v4256, 1
      %vm4262 = vcmp.gt.s32.totalorder %v4261, 0
      %v4263 = vsel %vm4262, %v4261, 0
      %v4264 = vshrl.u32 %v4263, 5
      %v4265 = vand.u32 %v4263, 31
      %v4266 = vsub.s32 32, %v4265
      %v4267 = vshrl.u32 683565275, %v4266
      %v4268 = vshll.u32 683565275, %v4265
      %v4269 = vshrl.u32 2475754826, %v4266
      %v4270 = vor.u32 %v4268, %v4269
      %v4271 = vshll.u32 2475754826, %v4265
      %v4272 = vshrl.u32 2131351028, %v4266
      %v4273 = vor.u32 %v4271, %v4272
      %v4274 = vshll.u32 2131351028, %v4265
      %v4275 = vshrl.u32 2102212464, %v4266
      %v4276 = vor.u32 %v4274, %v4275
      %v4277 = vshll.u32 2102212464, %v4265
      %v4278 = vshrl.u32 920167782, %v4266
      %v4279 = vor.u32 %v4277, %v4278
      %v4280 = vshll.u32 920167782, %v4265
      %v4281 = vshrl.u32 1326507024, %v4266
      %v4282 = vor.u32 %v4280, %v4281
      %vm4283 = vcmp.lt.s32.totalorder %v4264, 1
      %vm4284 = vcmp.lt.s32.totalorder %v4264, 2
      %vm4285 = vcmp.lt.s32.totalorder %v4264, 3
      %vm4286 = vcmp.lt.s32.totalorder %v4264, 4
      %v4287 = vsel %vm4283, %v4267, %v4270
      %v4288 = vsel %vm4286, %v4276, 2102212464
      %v4289 = vsel %vm4285, %v4273, %v4288
      %v4290 = vsel %vm4284, %v4287, %v4289
      %v4291 = vsel %vm4283, %v4270, %v4273
      %v4292 = vsel %vm4286, %v4279, 920167782
      %v4293 = vsel %vm4285, %v4276, %v4292
      %v4294 = vsel %vm4284, %v4291, %v4293
      %v4295 = vsel %vm4283, %v4273, %v4276
      %v4296 = vsel %vm4286, %v4282, 1326507024
      %v4297 = vsel %vm4285, %v4279, %v4296
      %v4298 = vsel %vm4284, %v4295, %v4297
      %v4299 = vshll.u32 %v4259, 8
      %v4300 = vmul.u32.u64.compose %v4299, %v4298
      %v4301 = vextract.low.u32 %v4300
      %v4302 = vextract.high.u32 %v4300
      %v4303 = vmul.u32.u64.compose %v4299, %v4294
      %v4304 = vextract.low.u32 %v4303
      %v4305 = vextract.high.u32 %v4303
      %v4306 = vmul.u32 %v4299, %v4290
      %v4307 = vadd.s32 %v4302, %v4304
      %vm4308 = vc.u32 %v4302, %v4304
      %v4309 = vadd.s32 %v4305, 1
      %v4310 = vsel %vm4308, %v4309, %v4305
      %v4311 = vadd.s32 %v4306, %v4310
      %v4312 = vadd.s32 %v4311, 536870912
      %v4313 = vshrl.u32 %v4312, 30
      %v4314 = vshll.u32 %v4313, 30
      %v4315 = vsub.s32 %v4311, %v4314
      %vm4316 = vcmp.lt.s32.totalorder %v4315, 0
      %v4317 = vsub.s32 0, %v4315
      %v4318 = vsel %vm4316, %v4317, %v4315
      %v4319 = vclz %v4318
      %v4320 = vsub.s32 %v4319, 2
      %vm4321 = vcmp.gt.s32.totalorder 0, %v4320
      %v4322 = vsel %vm4321, 0, %v4320
      %v4323 = vsub.s32 32, %v4322
      %v4324 = vshll.u32 %v4315, %v4322
      %v4325 = vshrl.u32 %v4307, %v4323
      %v4326 = vor.u32 %v4324, %v4325
      %v4327 = vsub.s32 4294967266, %v4322
      %v4328 = vadd.s32 %v4327, 127
      %v4329 = vshll.u32 %v4328, 23
      %v4330 = vor.u32 4788187, %v4329
      %v4331 = vand.u32 2147483647, %v4330
      %v4333 = vcvt.s32.f32 %v4326
      %v4334 = vmul.f32 %v4333, %v4331
      %v4335 = vxor.u32 %v4334, 2147483648
      %v4336 = vsel %vm4253, %v4335, %v4334
      %v4337 = vsub.s32 4, %v4313
      %v4338 = vsel %vm4253, %v4337, %v4313
      %v4339 = vsel %vm4252, %v709, %v4336
      %v4340 = vsel %vm4252, 0, %v4338
      %v4341 = vcosq.f32.pop %v4339
      %v4342 = vsinq.f32.pop %v4339
      %vm4343 = vweird.f32 %v709
      %v4344 = vadd.s32 %v4340, 3
      %v4345 = vand.u32 %v4344, 3
      %vm4346 = vcmp.lt.s32.totalorder %v4345, 2
      %vm4347 = vcmp.eq.s32.totalorder %v4345, 0
      %v4348 = vxor.u32 %v4342, 2147483648
      %v4349 = vsel %vm4347, %v4341, %v4348
      %vm4350 = vcmp.eq.s32.totalorder %v4345, 2
      %v4351 = vxor.u32 %v4341, 2147483648
      %v4352 = vsel %vm4350, %v4351, %v4342
      %v4353 = vsel %vm4346, %v4349, %v4352
      %v4354 = vsel %vm4343, nan, %v4353
      %v4355 = vand.u32 2147483647, %v710
      %vm4356 = vcmp.le.f32.partialorder %v4355, 0.7853982
      %vm4357 = vcmp.lt.s32.totalorder %v710, 0
      %v4358 = vand.u32 %v710, 2139095040
      %v4359 = vshrl.u32 %v4358, 23
      %v4360 = vsub.s32 %v4359, 127
      %v4361 = vand.u32 2147483647, %v710
      %v4362 = vand.u32 %v4361, 8388607
      %v4363 = vor.u32 %v4362, 8388608
      %v4364 = vsub.s32 0, %v4363
      %v4365 = vadd.s32 %v4360, 1
      %vm4366 = vcmp.gt.s32.totalorder %v4365, 0
      %v4367 = vsel %vm4366, %v4365, 0
      %v4368 = vshrl.u32 %v4367, 5
      %v4369 = vand.u32 %v4367, 31
      %v4370 = vsub.s32 32, %v4369
      %v4371 = vshrl.u32 683565275, %v4370
      %v4372 = vshll.u32 683565275, %v4369
      %v4373 = vshrl.u32 2475754826, %v4370
      %v4374 = vor.u32 %v4372, %v4373
      %v4375 = vshll.u32 2475754826, %v4369
      %v4376 = vshrl.u32 2131351028, %v4370
      %v4377 = vor.u32 %v4375, %v4376
      %v4378 = vshll.u32 2131351028, %v4369
      %v4379 = vshrl.u32 2102212464, %v4370
      %v4380 = vor.u32 %v4378, %v4379
      %v4381 = vshll.u32 2102212464, %v4369
      %v4382 = vshrl.u32 920167782, %v4370
      %v4383 = vor.u32 %v4381, %v4382
      %v4384 = vshll.u32 920167782, %v4369
      %v4385 = vshrl.u32 1326507024, %v4370
      %v4386 = vor.u32 %v4384, %v4385
      %vm4387 = vcmp.lt.s32.totalorder %v4368, 1
      %vm4388 = vcmp.lt.s32.totalorder %v4368, 2
      %vm4389 = vcmp.lt.s32.totalorder %v4368, 3
      %vm4390 = vcmp.lt.s32.totalorder %v4368, 4
      %v4391 = vsel %vm4387, %v4371, %v4374
      %v4392 = vsel %vm4390, %v4380, 2102212464
      %v4393 = vsel %vm4389, %v4377, %v4392
      %v4394 = vsel %vm4388, %v4391, %v4393
      %v4395 = vsel %vm4387, %v4374, %v4377
      %v4396 = vsel %vm4390, %v4383, 920167782
      %v4397 = vsel %vm4389, %v4380, %v4396
      %v4398 = vsel %vm4388, %v4395, %v4397
      %v4399 = vsel %vm4387, %v4377, %v4380
      %v4400 = vsel %vm4390, %v4386, 1326507024
      %v4401 = vsel %vm4389, %v4383, %v4400
      %v4402 = vsel %vm4388, %v4399, %v4401
      %v4403 = vshll.u32 %v4363, 8
      %v4404 = vmul.u32.u64.compose %v4403, %v4402
      %v4405 = vextract.low.u32 %v4404
      %v4406 = vextract.high.u32 %v4404
      %v4407 = vmul.u32.u64.compose %v4403, %v4398
      %v4408 = vextract.low.u32 %v4407
      %v4409 = vextract.high.u32 %v4407
      %v4410 = vmul.u32 %v4403, %v4394
      %v4411 = vadd.s32 %v4406, %v4408
      %vm4412 = vc.u32 %v4406, %v4408
      %v4413 = vadd.s32 %v4409, 1
      %v4414 = vsel %vm4412, %v4413, %v4409
      %v4415 = vadd.s32 %v4410, %v4414
      %v4416 = vadd.s32 %v4415, 536870912
      %v4417 = vshrl.u32 %v4416, 30
      %v4418 = vshll.u32 %v4417, 30
      %v4419 = vsub.s32 %v4415, %v4418
      %vm4420 = vcmp.lt.s32.totalorder %v4419, 0
      %v4421 = vsub.s32 0, %v4419
      %v4422 = vsel %vm4420, %v4421, %v4419
      %v4423 = vclz %v4422
      %v4424 = vsub.s32 %v4423, 2
      %vm4425 = vcmp.gt.s32.totalorder 0, %v4424
      %v4426 = vsel %vm4425, 0, %v4424
      %v4427 = vsub.s32 32, %v4426
      %v4428 = vshll.u32 %v4419, %v4426
      %v4429 = vshrl.u32 %v4411, %v4427
      %v4430 = vor.u32 %v4428, %v4429
      %v4431 = vsub.s32 4294967266, %v4426
      %v4432 = vadd.s32 %v4431, 127
      %v4433 = vshll.u32 %v4432, 23
      %v4434 = vor.u32 4788187, %v4433
      %v4435 = vand.u32 2147483647, %v4434
      %v4437 = vcvt.s32.f32 %v4430
      %v4438 = vmul.f32 %v4437, %v4435
      %v4439 = vxor.u32 %v4438, 2147483648
      %v4440 = vsel %vm4357, %v4439, %v4438
      %v4441 = vsub.s32 4, %v4417
      %v4442 = vsel %vm4357, %v4441, %v4417
      %v4443 = vsel %vm4356, %v710, %v4440
      %v4444 = vsel %vm4356, 0, %v4442
      %v4445 = vcosq.f32.pop %v4443
      %v4446 = vsinq.f32.pop %v4443
      %vm4447 = vweird.f32 %v710
      %v4448 = vadd.s32 %v4444, 3
      %v4449 = vand.u32 %v4448, 3
      %vm4450 = vcmp.lt.s32.totalorder %v4449, 2
      %vm4451 = vcmp.eq.s32.totalorder %v4449, 0
      %v4452 = vxor.u32 %v4446, 2147483648
      %v4453 = vsel %vm4451, %v4445, %v4452
      %vm4454 = vcmp.eq.s32.totalorder %v4449, 2
      %v4455 = vxor.u32 %v4445, 2147483648
      %v4456 = vsel %vm4454, %v4455, %v4446
      %v4457 = vsel %vm4450, %v4453, %v4456
      %v4458 = vsel %vm4447, nan, %v4457
      %v4459 = vand.u32 2147483647, %v711
      %vm4460 = vcmp.le.f32.partialorder %v4459, 0.7853982
      %vm4461 = vcmp.lt.s32.totalorder %v711, 0
      %v4462 = vand.u32 %v711, 2139095040
      %v4463 = vshrl.u32 %v4462, 23
      %v4464 = vsub.s32 %v4463, 127
      %v4465 = vand.u32 2147483647, %v711
      %v4466 = vand.u32 %v4465, 8388607
      %v4467 = vor.u32 %v4466, 8388608
      %v4468 = vsub.s32 0, %v4467
      %v4469 = vadd.s32 %v4464, 1
      %vm4470 = vcmp.gt.s32.totalorder %v4469, 0
      %v4471 = vsel %vm4470, %v4469, 0
      %v4472 = vshrl.u32 %v4471, 5
      %v4473 = vand.u32 %v4471, 31
      %v4474 = vsub.s32 32, %v4473
      %v4475 = vshrl.u32 683565275, %v4474
      %v4476 = vshll.u32 683565275, %v4473
      %v4477 = vshrl.u32 2475754826, %v4474
      %v4478 = vor.u32 %v4476, %v4477
      %v4479 = vshll.u32 2475754826, %v4473
      %v4480 = vshrl.u32 2131351028, %v4474
      %v4481 = vor.u32 %v4479, %v4480
      %v4482 = vshll.u32 2131351028, %v4473
      %v4483 = vshrl.u32 2102212464, %v4474
      %v4484 = vor.u32 %v4482, %v4483
      %v4485 = vshll.u32 2102212464, %v4473
      %v4486 = vshrl.u32 920167782, %v4474
      %v4487 = vor.u32 %v4485, %v4486
      %v4488 = vshll.u32 920167782, %v4473
      %v4489 = vshrl.u32 1326507024, %v4474
      %v4490 = vor.u32 %v4488, %v4489
      %vm4491 = vcmp.lt.s32.totalorder %v4472, 1
      %vm4492 = vcmp.lt.s32.totalorder %v4472, 2
      %vm4493 = vcmp.lt.s32.totalorder %v4472, 3
      %vm4494 = vcmp.lt.s32.totalorder %v4472, 4
      %v4495 = vsel %vm4491, %v4475, %v4478
      %v4496 = vsel %vm4494, %v4484, 2102212464
      %v4497 = vsel %vm4493, %v4481, %v4496
      %v4498 = vsel %vm4492, %v4495, %v4497
      %v4499 = vsel %vm4491, %v4478, %v4481
      %v4500 = vsel %vm4494, %v4487, 920167782
      %v4501 = vsel %vm4493, %v4484, %v4500
      %v4502 = vsel %vm4492, %v4499, %v4501
      %v4503 = vsel %vm4491, %v4481, %v4484
      %v4504 = vsel %vm4494, %v4490, 1326507024
      %v4505 = vsel %vm4493, %v4487, %v4504
      %v4506 = vsel %vm4492, %v4503, %v4505
      %v4507 = vshll.u32 %v4467, 8
      %v4508 = vmul.u32.u64.compose %v4507, %v4506
      %v4509 = vextract.low.u32 %v4508
      %v4510 = vextract.high.u32 %v4508
      %v4511 = vmul.u32.u64.compose %v4507, %v4502
      %v4512 = vextract.low.u32 %v4511
      %v4513 = vextract.high.u32 %v4511
      %v4514 = vmul.u32 %v4507, %v4498
      %v4515 = vadd.s32 %v4510, %v4512
      %vm4516 = vc.u32 %v4510, %v4512
      %v4517 = vadd.s32 %v4513, 1
      %v4518 = vsel %vm4516, %v4517, %v4513
      %v4519 = vadd.s32 %v4514, %v4518
      %v4520 = vadd.s32 %v4519, 536870912
      %v4521 = vshrl.u32 %v4520, 30
      %v4522 = vshll.u32 %v4521, 30
      %v4523 = vsub.s32 %v4519, %v4522
      %vm4524 = vcmp.lt.s32.totalorder %v4523, 0
      %v4525 = vsub.s32 0, %v4523
      %v4526 = vsel %vm4524, %v4525, %v4523
      %v4527 = vclz %v4526
      %v4528 = vsub.s32 %v4527, 2
      %vm4529 = vcmp.gt.s32.totalorder 0, %v4528
      %v4530 = vsel %vm4529, 0, %v4528
      %v4531 = vsub.s32 32, %v4530
      %v4532 = vshll.u32 %v4523, %v4530
      %v4533 = vshrl.u32 %v4515, %v4531
      %v4534 = vor.u32 %v4532, %v4533
      %v4535 = vsub.s32 4294967266, %v4530
      %v4536 = vadd.s32 %v4535, 127
      %v4537 = vshll.u32 %v4536, 23
      %v4538 = vor.u32 4788187, %v4537
      %v4539 = vand.u32 2147483647, %v4538
      %v4541 = vcvt.s32.f32 %v4534
      %v4542 = vmul.f32 %v4541, %v4539
      %v4543 = vxor.u32 %v4542, 2147483648
      %v4544 = vsel %vm4461, %v4543, %v4542
      %v4545 = vsub.s32 4, %v4521
      %v4546 = vsel %vm4461, %v4545, %v4521
      %v4547 = vsel %vm4460, %v711, %v4544
      %v4548 = vsel %vm4460, 0, %v4546
      %v4549 = vcosq.f32.pop %v4547
      %v4550 = vsinq.f32.pop %v4547
      %vm4551 = vweird.f32 %v711
      %v4552 = vadd.s32 %v4548, 3
      %v4553 = vand.u32 %v4552, 3
      %vm4554 = vcmp.lt.s32.totalorder %v4553, 2
      %vm4555 = vcmp.eq.s32.totalorder %v4553, 0
      %v4556 = vxor.u32 %v4550, 2147483648
      %v4557 = vsel %vm4555, %v4549, %v4556
      %vm4558 = vcmp.eq.s32.totalorder %v4553, 2
      %v4559 = vxor.u32 %v4549, 2147483648
      %v4560 = vsel %vm4558, %v4559, %v4550
      %v4561 = vsel %vm4554, %v4557, %v4560
      %v4562 = vsel %vm4551, nan, %v4561
      %v4563 = vand.u32 2147483647, %v712
      %vm4564 = vcmp.le.f32.partialorder %v4563, 0.7853982
      %vm4565 = vcmp.lt.s32.totalorder %v712, 0
      %v4566 = vand.u32 %v712, 2139095040
      %v4567 = vshrl.u32 %v4566, 23
      %v4568 = vsub.s32 %v4567, 127
      %v4569 = vand.u32 2147483647, %v712
      %v4570 = vand.u32 %v4569, 8388607
      %v4571 = vor.u32 %v4570, 8388608
      %v4572 = vsub.s32 0, %v4571
      %v4573 = vadd.s32 %v4568, 1
      %vm4574 = vcmp.gt.s32.totalorder %v4573, 0
      %v4575 = vsel %vm4574, %v4573, 0
      %v4576 = vshrl.u32 %v4575, 5
      %v4577 = vand.u32 %v4575, 31
      %v4578 = vsub.s32 32, %v4577
      %v4579 = vshrl.u32 683565275, %v4578
      %v4580 = vshll.u32 683565275, %v4577
      %v4581 = vshrl.u32 2475754826, %v4578
      %v4582 = vor.u32 %v4580, %v4581
      %v4583 = vshll.u32 2475754826, %v4577
      %v4584 = vshrl.u32 2131351028, %v4578
      %v4585 = vor.u32 %v4583, %v4584
      %v4586 = vshll.u32 2131351028, %v4577
      %v4587 = vshrl.u32 2102212464, %v4578
      %v4588 = vor.u32 %v4586, %v4587
      %v4589 = vshll.u32 2102212464, %v4577
      %v4590 = vshrl.u32 920167782, %v4578
      %v4591 = vor.u32 %v4589, %v4590
      %v4592 = vshll.u32 920167782, %v4577
      %v4593 = vshrl.u32 1326507024, %v4578
      %v4594 = vor.u32 %v4592, %v4593
      %vm4595 = vcmp.lt.s32.totalorder %v4576, 1
      %vm4596 = vcmp.lt.s32.totalorder %v4576, 2
      %vm4597 = vcmp.lt.s32.totalorder %v4576, 3
      %vm4598 = vcmp.lt.s32.totalorder %v4576, 4
      %v4599 = vsel %vm4595, %v4579, %v4582
      %v4600 = vsel %vm4598, %v4588, 2102212464
      %v4601 = vsel %vm4597, %v4585, %v4600
      %v4602 = vsel %vm4596, %v4599, %v4601
      %v4603 = vsel %vm4595, %v4582, %v4585
      %v4604 = vsel %vm4598, %v4591, 920167782
      %v4605 = vsel %vm4597, %v4588, %v4604
      %v4606 = vsel %vm4596, %v4603, %v4605
      %v4607 = vsel %vm4595, %v4585, %v4588
      %v4608 = vsel %vm4598, %v4594, 1326507024
      %v4609 = vsel %vm4597, %v4591, %v4608
      %v4610 = vsel %vm4596, %v4607, %v4609
      %v4611 = vshll.u32 %v4571, 8
      %v4612 = vmul.u32.u64.compose %v4611, %v4610
      %v4613 = vextract.low.u32 %v4612
      %v4614 = vextract.high.u32 %v4612
      %v4615 = vmul.u32.u64.compose %v4611, %v4606
      %v4616 = vextract.low.u32 %v4615
      %v4617 = vextract.high.u32 %v4615
      %v4618 = vmul.u32 %v4611, %v4602
      %v4619 = vadd.s32 %v4614, %v4616
      %vm4620 = vc.u32 %v4614, %v4616
      %v4621 = vadd.s32 %v4617, 1
      %v4622 = vsel %vm4620, %v4621, %v4617
      %v4623 = vadd.s32 %v4618, %v4622
      %v4624 = vadd.s32 %v4623, 536870912
      %v4625 = vshrl.u32 %v4624, 30
      %v4626 = vshll.u32 %v4625, 30
      %v4627 = vsub.s32 %v4623, %v4626
      %vm4628 = vcmp.lt.s32.totalorder %v4627, 0
      %v4629 = vsub.s32 0, %v4627
      %v4630 = vsel %vm4628, %v4629, %v4627
      %v4631 = vclz %v4630
      %v4632 = vsub.s32 %v4631, 2
      %vm4633 = vcmp.gt.s32.totalorder 0, %v4632
      %v4634 = vsel %vm4633, 0, %v4632
      %v4635 = vsub.s32 32, %v4634
      %v4636 = vshll.u32 %v4627, %v4634
      %v4637 = vshrl.u32 %v4619, %v4635
      %v4638 = vor.u32 %v4636, %v4637
      %v4639 = vsub.s32 4294967266, %v4634
      %v4640 = vadd.s32 %v4639, 127
      %v4641 = vshll.u32 %v4640, 23
      %v4642 = vor.u32 4788187, %v4641
      %v4643 = vand.u32 2147483647, %v4642
      %v4645 = vcvt.s32.f32 %v4638
      %v4646 = vmul.f32 %v4645, %v4643
      %v4647 = vxor.u32 %v4646, 2147483648
      %v4648 = vsel %vm4565, %v4647, %v4646
      %v4649 = vsub.s32 4, %v4625
      %v4650 = vsel %vm4565, %v4649, %v4625
      %v4651 = vsel %vm4564, %v712, %v4648
      %v4652 = vsel %vm4564, 0, %v4650
      %v4653 = vcosq.f32.pop %v4651
      %v4654 = vsinq.f32.pop %v4651
      %vm4655 = vweird.f32 %v712
      %v4656 = vadd.s32 %v4652, 3
      %v4657 = vand.u32 %v4656, 3
      %vm4658 = vcmp.lt.s32.totalorder %v4657, 2
      %vm4659 = vcmp.eq.s32.totalorder %v4657, 0
      %v4660 = vxor.u32 %v4654, 2147483648
      %v4661 = vsel %vm4659, %v4653, %v4660
      %vm4662 = vcmp.eq.s32.totalorder %v4657, 2
      %v4663 = vxor.u32 %v4653, 2147483648
      %v4664 = vsel %vm4662, %v4663, %v4654
      %v4665 = vsel %vm4658, %v4661, %v4664
      %v4666 = vsel %vm4655, nan, %v4665
      %v4667 = vand.u32 2147483647, %v713
      %vm4668 = vcmp.le.f32.partialorder %v4667, 0.7853982
      %vm4669 = vcmp.lt.s32.totalorder %v713, 0
      %v4670 = vand.u32 %v713, 2139095040
      %v4671 = vshrl.u32 %v4670, 23
      %v4672 = vsub.s32 %v4671, 127
      %v4673 = vand.u32 2147483647, %v713
      %v4674 = vand.u32 %v4673, 8388607
      %v4675 = vor.u32 %v4674, 8388608
      %v4676 = vsub.s32 0, %v4675
      %v4677 = vadd.s32 %v4672, 1
      %vm4678 = vcmp.gt.s32.totalorder %v4677, 0
      %v4679 = vsel %vm4678, %v4677, 0
      %v4680 = vshrl.u32 %v4679, 5
      %v4681 = vand.u32 %v4679, 31
      %v4682 = vsub.s32 32, %v4681
      %v4683 = vshrl.u32 683565275, %v4682
      %v4684 = vshll.u32 683565275, %v4681
      %v4685 = vshrl.u32 2475754826, %v4682
      %v4686 = vor.u32 %v4684, %v4685
      %v4687 = vshll.u32 2475754826, %v4681
      %v4688 = vshrl.u32 2131351028, %v4682
      %v4689 = vor.u32 %v4687, %v4688
      %v4690 = vshll.u32 2131351028, %v4681
      %v4691 = vshrl.u32 2102212464, %v4682
      %v4692 = vor.u32 %v4690, %v4691
      %v4693 = vshll.u32 2102212464, %v4681
      %v4694 = vshrl.u32 920167782, %v4682
      %v4695 = vor.u32 %v4693, %v4694
      %v4696 = vshll.u32 920167782, %v4681
      %v4697 = vshrl.u32 1326507024, %v4682
      %v4698 = vor.u32 %v4696, %v4697
      %vm4699 = vcmp.lt.s32.totalorder %v4680, 1
      %vm4700 = vcmp.lt.s32.totalorder %v4680, 2
      %vm4701 = vcmp.lt.s32.totalorder %v4680, 3
      %vm4702 = vcmp.lt.s32.totalorder %v4680, 4
      %v4703 = vsel %vm4699, %v4683, %v4686
      %v4704 = vsel %vm4702, %v4692, 2102212464
      %v4705 = vsel %vm4701, %v4689, %v4704
      %v4706 = vsel %vm4700, %v4703, %v4705
      %v4707 = vsel %vm4699, %v4686, %v4689
      %v4708 = vsel %vm4702, %v4695, 920167782
      %v4709 = vsel %vm4701, %v4692, %v4708
      %v4710 = vsel %vm4700, %v4707, %v4709
      %v4711 = vsel %vm4699, %v4689, %v4692
      %v4712 = vsel %vm4702, %v4698, 1326507024
      %v4713 = vsel %vm4701, %v4695, %v4712
      %v4714 = vsel %vm4700, %v4711, %v4713
      %v4715 = vshll.u32 %v4675, 8
      %v4716 = vmul.u32.u64.compose %v4715, %v4714
      %v4717 = vextract.low.u32 %v4716
      %v4718 = vextract.high.u32 %v4716
      %v4719 = vmul.u32.u64.compose %v4715, %v4710
      %v4720 = vextract.low.u32 %v4719
      %v4721 = vextract.high.u32 %v4719
      %v4722 = vmul.u32 %v4715, %v4706
      %v4723 = vadd.s32 %v4718, %v4720
      %vm4724 = vc.u32 %v4718, %v4720
      %v4725 = vadd.s32 %v4721, 1
      %v4726 = vsel %vm4724, %v4725, %v4721
      %v4727 = vadd.s32 %v4722, %v4726
      %v4728 = vadd.s32 %v4727, 536870912
      %v4729 = vshrl.u32 %v4728, 30
      %v4730 = vshll.u32 %v4729, 30
      %v4731 = vsub.s32 %v4727, %v4730
      %vm4732 = vcmp.lt.s32.totalorder %v4731, 0
      %v4733 = vsub.s32 0, %v4731
      %v4734 = vsel %vm4732, %v4733, %v4731
      %v4735 = vclz %v4734
      %v4736 = vsub.s32 %v4735, 2
      %vm4737 = vcmp.gt.s32.totalorder 0, %v4736
      %v4738 = vsel %vm4737, 0, %v4736
      %v4739 = vsub.s32 32, %v4738
      %v4740 = vshll.u32 %v4731, %v4738
      %v4741 = vshrl.u32 %v4723, %v4739
      %v4742 = vor.u32 %v4740, %v4741
      %v4743 = vsub.s32 4294967266, %v4738
      %v4744 = vadd.s32 %v4743, 127
      %v4745 = vshll.u32 %v4744, 23
      %v4746 = vor.u32 4788187, %v4745
      %v4747 = vand.u32 2147483647, %v4746
      %v4749 = vcvt.s32.f32 %v4742
      %v4750 = vmul.f32 %v4749, %v4747
      %v4751 = vxor.u32 %v4750, 2147483648
      %v4752 = vsel %vm4669, %v4751, %v4750
      %v4753 = vsub.s32 4, %v4729
      %v4754 = vsel %vm4669, %v4753, %v4729
      %v4755 = vsel %vm4668, %v713, %v4752
      %v4756 = vsel %vm4668, 0, %v4754
      %v4757 = vcosq.f32.pop %v4755
      %v4758 = vsinq.f32.pop %v4755
      %vm4759 = vweird.f32 %v713
      %v4760 = vadd.s32 %v4756, 3
      %v4761 = vand.u32 %v4760, 3
      %vm4762 = vcmp.lt.s32.totalorder %v4761, 2
      %vm4763 = vcmp.eq.s32.totalorder %v4761, 0
      %v4764 = vxor.u32 %v4758, 2147483648
      %v4765 = vsel %vm4763, %v4757, %v4764
      %vm4766 = vcmp.eq.s32.totalorder %v4761, 2
      %v4767 = vxor.u32 %v4757, 2147483648
      %v4768 = vsel %vm4766, %v4767, %v4758
      %v4769 = vsel %vm4762, %v4765, %v4768
      %v4770 = vsel %vm4759, nan, %v4769
      %v4771 = vand.u32 2147483647, %v714
      %vm4772 = vcmp.le.f32.partialorder %v4771, 0.7853982
      %vm4773 = vcmp.lt.s32.totalorder %v714, 0
      %v4774 = vand.u32 %v714, 2139095040
      %v4775 = vshrl.u32 %v4774, 23
      %v4776 = vsub.s32 %v4775, 127
      %v4777 = vand.u32 2147483647, %v714
      %v4778 = vand.u32 %v4777, 8388607
      %v4779 = vor.u32 %v4778, 8388608
      %v4780 = vsub.s32 0, %v4779
      %v4781 = vadd.s32 %v4776, 1
      %vm4782 = vcmp.gt.s32.totalorder %v4781, 0
      %v4783 = vsel %vm4782, %v4781, 0
      %v4784 = vshrl.u32 %v4783, 5
      %v4785 = vand.u32 %v4783, 31
      %v4786 = vsub.s32 32, %v4785
      %v4787 = vshrl.u32 683565275, %v4786
      %v4788 = vshll.u32 683565275, %v4785
      %v4789 = vshrl.u32 2475754826, %v4786
      %v4790 = vor.u32 %v4788, %v4789
      %v4791 = vshll.u32 2475754826, %v4785
      %v4792 = vshrl.u32 2131351028, %v4786
      %v4793 = vor.u32 %v4791, %v4792
      %v4794 = vshll.u32 2131351028, %v4785
      %v4795 = vshrl.u32 2102212464, %v4786
      %v4796 = vor.u32 %v4794, %v4795
      %v4797 = vshll.u32 2102212464, %v4785
      %v4798 = vshrl.u32 920167782, %v4786
      %v4799 = vor.u32 %v4797, %v4798
      %v4800 = vshll.u32 920167782, %v4785
      %v4801 = vshrl.u32 1326507024, %v4786
      %v4802 = vor.u32 %v4800, %v4801
      %vm4803 = vcmp.lt.s32.totalorder %v4784, 1
      %vm4804 = vcmp.lt.s32.totalorder %v4784, 2
      %vm4805 = vcmp.lt.s32.totalorder %v4784, 3
      %vm4806 = vcmp.lt.s32.totalorder %v4784, 4
      %v4807 = vsel %vm4803, %v4787, %v4790
      %v4808 = vsel %vm4806, %v4796, 2102212464
      %v4809 = vsel %vm4805, %v4793, %v4808
      %v4810 = vsel %vm4804, %v4807, %v4809
      %v4811 = vsel %vm4803, %v4790, %v4793
      %v4812 = vsel %vm4806, %v4799, 920167782
      %v4813 = vsel %vm4805, %v4796, %v4812
      %v4814 = vsel %vm4804, %v4811, %v4813
      %v4815 = vsel %vm4803, %v4793, %v4796
      %v4816 = vsel %vm4806, %v4802, 1326507024
      %v4817 = vsel %vm4805, %v4799, %v4816
      %v4818 = vsel %vm4804, %v4815, %v4817
      %v4819 = vshll.u32 %v4779, 8
      %v4820 = vmul.u32.u64.compose %v4819, %v4818
      %v4821 = vextract.low.u32 %v4820
      %v4822 = vextract.high.u32 %v4820
      %v4823 = vmul.u32.u64.compose %v4819, %v4814
      %v4824 = vextract.low.u32 %v4823
      %v4825 = vextract.high.u32 %v4823
      %v4826 = vmul.u32 %v4819, %v4810
      %v4827 = vadd.s32 %v4822, %v4824
      %vm4828 = vc.u32 %v4822, %v4824
      %v4829 = vadd.s32 %v4825, 1
      %v4830 = vsel %vm4828, %v4829, %v4825
      %v4831 = vadd.s32 %v4826, %v4830
      %v4832 = vadd.s32 %v4831, 536870912
      %v4833 = vshrl.u32 %v4832, 30
      %v4834 = vshll.u32 %v4833, 30
      %v4835 = vsub.s32 %v4831, %v4834
      %vm4836 = vcmp.lt.s32.totalorder %v4835, 0
      %v4837 = vsub.s32 0, %v4835
      %v4838 = vsel %vm4836, %v4837, %v4835
      %v4839 = vclz %v4838
      %v4840 = vsub.s32 %v4839, 2
      %vm4841 = vcmp.gt.s32.totalorder 0, %v4840
      %v4842 = vsel %vm4841, 0, %v4840
      %v4843 = vsub.s32 32, %v4842
      %v4844 = vshll.u32 %v4835, %v4842
      %v4845 = vshrl.u32 %v4827, %v4843
      %v4846 = vor.u32 %v4844, %v4845
      %v4847 = vsub.s32 4294967266, %v4842
      %v4848 = vadd.s32 %v4847, 127
      %v4849 = vshll.u32 %v4848, 23
      %v4850 = vor.u32 4788187, %v4849
      %v4851 = vand.u32 2147483647, %v4850
      %v4853 = vcvt.s32.f32 %v4846
      %v4854 = vmul.f32 %v4853, %v4851
      %v4855 = vxor.u32 %v4854, 2147483648
      %v4856 = vsel %vm4773, %v4855, %v4854
      %v4857 = vsub.s32 4, %v4833
      %v4858 = vsel %vm4773, %v4857, %v4833
      %v4859 = vsel %vm4772, %v714, %v4856
      %v4860 = vsel %vm4772, 0, %v4858
      %v4861 = vcosq.f32.pop %v4859
      %v4862 = vsinq.f32.pop %v4859
      %vm4863 = vweird.f32 %v714
      %v4864 = vadd.s32 %v4860, 3
      %v4865 = vand.u32 %v4864, 3
      %vm4866 = vcmp.lt.s32.totalorder %v4865, 2
      %vm4867 = vcmp.eq.s32.totalorder %v4865, 0
      %v4868 = vxor.u32 %v4862, 2147483648
      %v4869 = vsel %vm4867, %v4861, %v4868
      %vm4870 = vcmp.eq.s32.totalorder %v4865, 2
      %v4871 = vxor.u32 %v4861, 2147483648
      %v4872 = vsel %vm4870, %v4871, %v4862
      %v4873 = vsel %vm4866, %v4869, %v4872
      %v4874 = vsel %vm4863, nan, %v4873
      %v4875 = vld [vmem:[%s3] sm:$0xff]
      %v4876 = vld [vmem:[%s3 + $0x8] sm:$0xff]
      %v4877 = vld [vmem:[%s3 + $0x10] sm:$0xff]
      %v4878 = vld [vmem:[%s3 + $0x18] sm:$0xff]
      %v4879 = vld [vmem:[%s3 + $0x20] sm:$0xff]
      %v4880 = vld [vmem:[%s3 + $0x28] sm:$0xff]
      %v4881 = vld [vmem:[%s3 + $0x30] sm:$0xff]
      %v4882 = vld [vmem:[%s3 + $0x38] sm:$0xff]
      %vm4883 = vcmask 326656
      %v4885 = vsel %vm4883, %v4875, 0
      %v4888 = vsel %vm4883, %v4876, 0
      %v4891 = vsel %vm4883, %v4877, 0
      %v4894 = vsel %vm4883, %v4878, 0
      %v4897 = vsel %vm4883, %v4879, 0
      %v4900 = vsel %vm4883, %v4880, 0
      %v4903 = vsel %vm4883, %v4881, 0
      %v4906 = vsel %vm4883, %v4882, 0
      %4908 = vmatprep.subr.mxu0 0.0
      %4909 = vmatpush1.msra.mxu0 0.0
      %4910 = vmatprep.subr.mxu0 0.0
      %4911 = vmatpush1.msra.mxu0 0.0
      %4912 = vmatprep.subr.mxu0 0.0
      %4913 = vmatpush1.msra.mxu0 0.0
      %4914 = vmatprep.subr.mxu0 0.0
      %4915 = vmatpush1.msra.mxu0 0.0
      %4916 = vmatprep.subr.mxu0 0.0
      %4917 = vmatpush1.msra.mxu0 0.0
      %4918 = vmatprep.subr.mxu0 0.0
      %4919 = vmatpush1.msra.mxu0 0.0
      %4920 = vmatprep.subr.mxu0 0.0
      %4921 = vmatpush1.msra.mxu0 0.0
      %4922 = vmatprep.subr.mxu0 0.0
      %4923 = vmatpush1.msra.mxu0 0.0
      %4924 = vmatprep.subr.mxu0 0.0
      %4925 = vmatpush1.msra.mxu0 0.0
      %4926 = vmatprep.subr.mxu0 0.0
      %4927 = vmatpush1.msra.mxu0 0.0
      %4928 = vmatprep.subr.mxu0 0.0
      %4929 = vmatpush1.msra.mxu0 0.0
      %4930 = vmatprep.subr.mxu0 %v4250
      %4931 = vmatpush1.msra.mxu0 %v4146
      %4932 = vmatprep.subr.mxu0 %v3418
      %4933 = vmatpush1.msra.mxu0 %v3314
      %4934 = vmatprep.subr.mxu0 %v2586
      %4935 = vmatpush1.msra.mxu0 %v2482
      %4936 = vmatprep.subr.mxu0 %v1754
      %4937 = vmatpush1.msra.mxu0 %v1650
      %4938 = vmatprep.subr.mxu0 %v922
      %4939 = vmatpush1.msra.mxu0 %v818
      %4940 = vmatprep.subr.mxu0 0.0
      %4941 = vmatpush2.msra.mxu0 0.0
      %4942 = vmatprep.subr.mxu0 0.0
      %4943 = vmatpush2.msra.mxu0 0.0
      %4944 = vmatprep.subr.mxu0 0.0
      %4945 = vmatpush2.msra.mxu0 0.0
      %4946 = vmatprep.subr.mxu0 0.0
      %4947 = vmatpush2.msra.mxu0 0.0
      %4948 = vmatprep.subr.mxu0 0.0
      %4949 = vmatpush2.msra.mxu0 0.0
      %4950 = vmatprep.subr.mxu0 0.0
      %4951 = vmatpush2.msra.mxu0 0.0
      %4952 = vmatprep.subr.mxu0 0.0
      %4953 = vmatpush2.msra.mxu0 0.0
      %4954 = vmatprep.subr.mxu0 0.0
      %4955 = vmatpush2.msra.mxu0 0.0
      %4956 = vmatprep.subr.mxu0 0.0
      %4957 = vmatpush2.msra.mxu0 0.0
      %4958 = vmatprep.subr.mxu0 0.0
      %4959 = vmatpush2.msra.mxu0 0.0
      %4960 = vmatprep.subr.mxu0 0.0
      %4961 = vmatpush2.msra.mxu0 0.0
      %4962 = vmatprep.subr.mxu0 0.0
      %4963 = vmatpush2.msra.mxu0 0.0
      %4964 = vmatprep.subr.mxu0 0.0
      %4965 = vmatpush2.msra.mxu0 0.0
      %4966 = vmatprep.subr.mxu0 0.0
      %4967 = vmatpush2.msra.mxu0 0.0
      %4968 = vmatprep.subr.mxu0 0.0
      %4969 = vmatpush2.msra.mxu0 0.0
      %4970 = vmatprep.subr.mxu0 0.0
      %4971 = vmatpush2.msra.mxu0 0.0
      %4972 = vmatprep.mubr.f32.mxu0 0.0
      %4973 = vmatmul.mubr.f32.gmra.mxu0 %v4885
      %v4974 = vpop.f32.mrf.mxu0
      %v4975 = vadd.f32 0.0, %v4974
      %v4976 = vpop.f32.mrf.mxu0
      %v4977 = vadd.f32 0.0, %v4976
      %4978 = vmatprep.mubr.f32.mxu0 0.0
      %4979 = vmatmul.mubr.f32.gmra.mxu0 %v4888
      %v4980 = vpop.f32.mrf.mxu0
      %v4981 = vadd.f32 0.0, %v4980
      %v4982 = vpop.f32.mrf.mxu0
      %v4983 = vadd.f32 0.0, %v4982
      %4984 = vmatprep.mubr.f32.mxu0 0.0
      %4985 = vmatmul.mubr.f32.gmra.mxu0 %v4891
      %v4986 = vpop.f32.mrf.mxu0
      %v4987 = vadd.f32 0.0, %v4986
      %v4988 = vpop.f32.mrf.mxu0
      %v4989 = vadd.f32 0.0, %v4988
      %4990 = vmatprep.mubr.f32.mxu0 0.0
      %4991 = vmatmul.mubr.f32.gmra.mxu0 %v4894
      %v4992 = vpop.f32.mrf.mxu0
      %v4993 = vadd.f32 0.0, %v4992
      %v4994 = vpop.f32.mrf.mxu0
      %v4995 = vadd.f32 0.0, %v4994
      %4996 = vmatprep.mubr.f32.mxu0 0.0
      %4997 = vmatmul.mubr.f32.gmra.mxu0 %v4897
      %v4998 = vpop.f32.mrf.mxu0
      %v4999 = vadd.f32 0.0, %v4998
      %v5000 = vpop.f32.mrf.mxu0
      %v5001 = vadd.f32 0.0, %v5000
      %5002 = vmatprep.mubr.f32.mxu0 0.0
      %5003 = vmatmul.mubr.f32.gmra.mxu0 %v4900
      %v5004 = vpop.f32.mrf.mxu0
      %v5005 = vadd.f32 0.0, %v5004
      %v5006 = vpop.f32.mrf.mxu0
      %v5007 = vadd.f32 0.0, %v5006
      %5008 = vmatprep.mubr.f32.mxu0 0.0
      %5009 = vmatmul.mubr.f32.gmra.mxu0 %v4903
      %v5010 = vpop.f32.mrf.mxu0
      %v5011 = vadd.f32 0.0, %v5010
      %v5012 = vpop.f32.mrf.mxu0
      %v5013 = vadd.f32 0.0, %v5012
      %5014 = vmatprep.mubr.f32.mxu0 0.0
      %5015 = vmatmul.mubr.f32.gmra.mxu0 %v4906
      %v5016 = vpop.f32.mrf.mxu0
      %v5017 = vadd.f32 0.0, %v5016
      %v5018 = vpop.f32.mrf.mxu0
      %v5019 = vadd.f32 0.0, %v5018
      %5020 = vdwg.mxu0
      %5021 = vmatprep.subr.mxu0 0.0
      %5022 = vmatpush1.msra.mxu0 0.0
      %5023 = vmatprep.subr.mxu0 0.0
      %5024 = vmatpush1.msra.mxu0 0.0
      %5025 = vmatprep.subr.mxu0 0.0
      %5026 = vmatpush1.msra.mxu0 0.0
      %5027 = vmatprep.subr.mxu0 0.0
      %5028 = vmatpush1.msra.mxu0 0.0
      %5029 = vmatprep.subr.mxu0 0.0
      %5030 = vmatpush1.msra.mxu0 0.0
      %5031 = vmatprep.subr.mxu0 0.0
      %5032 = vmatpush1.msra.mxu0 0.0
      %5033 = vmatprep.subr.mxu0 0.0
      %5034 = vmatpush1.msra.mxu0 0.0
      %5035 = vmatprep.subr.mxu0 0.0
      %5036 = vmatpush1.msra.mxu0 0.0
      %5037 = vmatprep.subr.mxu0 0.0
      %5038 = vmatpush1.msra.mxu0 0.0
      %5039 = vmatprep.subr.mxu0 0.0
      %5040 = vmatpush1.msra.mxu0 0.0
      %5041 = vmatprep.subr.mxu0 0.0
      %5042 = vmatpush1.msra.mxu0 0.0
      %5043 = vmatprep.subr.mxu0 %v4458
      %5044 = vmatpush1.msra.mxu0 %v4354
      %5045 = vmatprep.subr.mxu0 %v3626
      %5046 = vmatpush1.msra.mxu0 %v3522
      %5047 = vmatprep.subr.mxu0 %v2794
      %5048 = vmatpush1.msra.mxu0 %v2690
      %5049 = vmatprep.subr.mxu0 %v1962
      %5050 = vmatpush1.msra.mxu0 %v1858
      %5051 = vmatprep.subr.mxu0 %v1130
      %5052 = vmatpush1.msra.mxu0 %v1026
      %5053 = vmatprep.subr.mxu0 0.0
      %5054 = vmatpush2.msra.mxu0 0.0
      %5055 = vmatprep.subr.mxu0 0.0
      %5056 = vmatpush2.msra.mxu0 0.0
      %5057 = vmatprep.subr.mxu0 0.0
      %5058 = vmatpush2.msra.mxu0 0.0
      %5059 = vmatprep.subr.mxu0 0.0
      %5060 = vmatpush2.msra.mxu0 0.0
      %5061 = vmatprep.subr.mxu0 0.0
      %5062 = vmatpush2.msra.mxu0 0.0
      %5063 = vmatprep.subr.mxu0 0.0
      %5064 = vmatpush2.msra.mxu0 0.0
      %5065 = vmatprep.subr.mxu0 0.0
      %5066 = vmatpush2.msra.mxu0 0.0
      %5067 = vmatprep.subr.mxu0 0.0
      %5068 = vmatpush2.msra.mxu0 0.0
      %5069 = vmatprep.subr.mxu0 0.0
      %5070 = vmatpush2.msra.mxu0 0.0
      %5071 = vmatprep.subr.mxu0 0.0
      %5072 = vmatpush2.msra.mxu0 0.0
      %5073 = vmatprep.subr.mxu0 0.0
      %5074 = vmatpush2.msra.mxu0 0.0
      %5075 = vmatprep.subr.mxu0 0.0
      %5076 = vmatpush2.msra.mxu0 0.0
      %5077 = vmatprep.subr.mxu0 0.0
      %5078 = vmatpush2.msra.mxu0 0.0
      %5079 = vmatprep.subr.mxu0 0.0
      %5080 = vmatpush2.msra.mxu0 0.0
      %5081 = vmatprep.subr.mxu0 0.0
      %5082 = vmatpush2.msra.mxu0 0.0
      %5083 = vmatprep.subr.mxu0 0.0
      %5084 = vmatpush2.msra.mxu0 0.0
      %5085 = vmatprep.mubr.f32.mxu0 0.0
      %5086 = vmatmul.mubr.f32.gmra.mxu0 %v4885
      %v5087 = vpop.f32.mrf.mxu0
      %v5088 = vadd.f32 0.0, %v5087
      %v5089 = vpop.f32.mrf.mxu0
      %v5090 = vadd.f32 0.0, %v5089
      %5091 = vmatprep.mubr.f32.mxu0 0.0
      %5092 = vmatmul.mubr.f32.gmra.mxu0 %v4888
      %v5093 = vpop.f32.mrf.mxu0
      %v5094 = vadd.f32 0.0, %v5093
      %v5095 = vpop.f32.mrf.mxu0
      %v5096 = vadd.f32 0.0, %v5095
      %5097 = vmatprep.mubr.f32.mxu0 0.0
      %5098 = vmatmul.mubr.f32.gmra.mxu0 %v4891
      %v5099 = vpop.f32.mrf.mxu0
      %v5100 = vadd.f32 0.0, %v5099
      %v5101 = vpop.f32.mrf.mxu0
      %v5102 = vadd.f32 0.0, %v5101
      %5103 = vmatprep.mubr.f32.mxu0 0.0
      %5104 = vmatmul.mubr.f32.gmra.mxu0 %v4894
      %v5105 = vpop.f32.mrf.mxu0
      %v5106 = vadd.f32 0.0, %v5105
      %v5107 = vpop.f32.mrf.mxu0
      %v5108 = vadd.f32 0.0, %v5107
      %5109 = vmatprep.mubr.f32.mxu0 0.0
      %5110 = vmatmul.mubr.f32.gmra.mxu0 %v4897
      %v5111 = vpop.f32.mrf.mxu0
      %v5112 = vadd.f32 0.0, %v5111
      %v5113 = vpop.f32.mrf.mxu0
      %v5114 = vadd.f32 0.0, %v5113
      %5115 = vmatprep.mubr.f32.mxu0 0.0
      %5116 = vmatmul.mubr.f32.gmra.mxu0 %v4900
      %v5117 = vpop.f32.mrf.mxu0
      %v5118 = vadd.f32 0.0, %v5117
      %v5119 = vpop.f32.mrf.mxu0
      %v5120 = vadd.f32 0.0, %v5119
      %5121 = vmatprep.mubr.f32.mxu0 0.0
      %5122 = vmatmul.mubr.f32.gmra.mxu0 %v4903
      %v5123 = vpop.f32.mrf.mxu0
      %v5124 = vadd.f32 0.0, %v5123
      %v5125 = vpop.f32.mrf.mxu0
      %v5126 = vadd.f32 0.0, %v5125
      %5127 = vmatprep.mubr.f32.mxu0 0.0
      %5128 = vmatmul.mubr.f32.gmra.mxu0 %v4906
      %v5129 = vpop.f32.mrf.mxu0
      %v5130 = vadd.f32 0.0, %v5129
      %v5131 = vpop.f32.mrf.mxu0
      %v5132 = vadd.f32 0.0, %v5131
      %5133 = vdwg.mxu0
      %5134 = vmatprep.subr.mxu0 0.0
      %5135 = vmatpush1.msra.mxu0 0.0
      %5136 = vmatprep.subr.mxu0 0.0
      %5137 = vmatpush1.msra.mxu0 0.0
      %5138 = vmatprep.subr.mxu0 0.0
      %5139 = vmatpush1.msra.mxu0 0.0
      %5140 = vmatprep.subr.mxu0 0.0
      %5141 = vmatpush1.msra.mxu0 0.0
      %5142 = vmatprep.subr.mxu0 0.0
      %5143 = vmatpush1.msra.mxu0 0.0
      %5144 = vmatprep.subr.mxu0 0.0
      %5145 = vmatpush1.msra.mxu0 0.0
      %5146 = vmatprep.subr.mxu0 0.0
      %5147 = vmatpush1.msra.mxu0 0.0
      %5148 = vmatprep.subr.mxu0 0.0
      %5149 = vmatpush1.msra.mxu0 0.0
      %5150 = vmatprep.subr.mxu0 0.0
      %5151 = vmatpush1.msra.mxu0 0.0
      %5152 = vmatprep.subr.mxu0 0.0
      %5153 = vmatpush1.msra.mxu0 0.0
      %5154 = vmatprep.subr.mxu0 0.0
      %5155 = vmatpush1.msra.mxu0 0.0
      %5156 = vmatprep.subr.mxu0 %v4666
      %5157 = vmatpush1.msra.mxu0 %v4562
      %5158 = vmatprep.subr.mxu0 %v3834
      %5159 = vmatpush1.msra.mxu0 %v3730
      %5160 = vmatprep.subr.mxu0 %v3002
      %5161 = vmatpush1.msra.mxu0 %v2898
      %5162 = vmatprep.subr.mxu0 %v2170
      %5163 = vmatpush1.msra.mxu0 %v2066
      %5164 = vmatprep.subr.mxu0 %v1338
      %5165 = vmatpush1.msra.mxu0 %v1234
      %5166 = vmatprep.subr.mxu0 0.0
      %5167 = vmatpush2.msra.mxu0 0.0
      %5168 = vmatprep.subr.mxu0 0.0
      %5169 = vmatpush2.msra.mxu0 0.0
      %5170 = vmatprep.subr.mxu0 0.0
      %5171 = vmatpush2.msra.mxu0 0.0
      %5172 = vmatprep.subr.mxu0 0.0
      %5173 = vmatpush2.msra.mxu0 0.0
      %5174 = vmatprep.subr.mxu0 0.0
      %5175 = vmatpush2.msra.mxu0 0.0
      %5176 = vmatprep.subr.mxu0 0.0
      %5177 = vmatpush2.msra.mxu0 0.0
      %5178 = vmatprep.subr.mxu0 0.0
      %5179 = vmatpush2.msra.mxu0 0.0
      %5180 = vmatprep.subr.mxu0 0.0
      %5181 = vmatpush2.msra.mxu0 0.0
      %5182 = vmatprep.subr.mxu0 0.0
      %5183 = vmatpush2.msra.mxu0 0.0
      %5184 = vmatprep.subr.mxu0 0.0
      %5185 = vmatpush2.msra.mxu0 0.0
      %5186 = vmatprep.subr.mxu0 0.0
      %5187 = vmatpush2.msra.mxu0 0.0
      %5188 = vmatprep.subr.mxu0 0.0
      %5189 = vmatpush2.msra.mxu0 0.0
      %5190 = vmatprep.subr.mxu0 0.0
      %5191 = vmatpush2.msra.mxu0 0.0
      %5192 = vmatprep.subr.mxu0 0.0
      %5193 = vmatpush2.msra.mxu0 0.0
      %5194 = vmatprep.subr.mxu0 0.0
      %5195 = vmatpush2.msra.mxu0 0.0
      %5196 = vmatprep.subr.mxu0 0.0
      %5197 = vmatpush2.msra.mxu0 0.0
      %5198 = vmatprep.mubr.f32.mxu0 0.0
      %5199 = vmatmul.mubr.f32.gmra.mxu0 %v4885
      %v5200 = vpop.f32.mrf.mxu0
      %v5201 = vadd.f32 0.0, %v5200
      %v5202 = vpop.f32.mrf.mxu0
      %v5203 = vadd.f32 0.0, %v5202
      %5204 = vmatprep.mubr.f32.mxu0 0.0
      %5205 = vmatmul.mubr.f32.gmra.mxu0 %v4888
      %v5206 = vpop.f32.mrf.mxu0
      %v5207 = vadd.f32 0.0, %v5206
      %v5208 = vpop.f32.mrf.mxu0
      %v5209 = vadd.f32 0.0, %v5208
      %5210 = vmatprep.mubr.f32.mxu0 0.0
      %5211 = vmatmul.mubr.f32.gmra.mxu0 %v4891
      %v5212 = vpop.f32.mrf.mxu0
      %v5213 = vadd.f32 0.0, %v5212
      %v5214 = vpop.f32.mrf.mxu0
      %v5215 = vadd.f32 0.0, %v5214
      %5216 = vmatprep.mubr.f32.mxu0 0.0
      %5217 = vmatmul.mubr.f32.gmra.mxu0 %v4894
      %v5218 = vpop.f32.mrf.mxu0
      %v5219 = vadd.f32 0.0, %v5218
      %v5220 = vpop.f32.mrf.mxu0
      %v5221 = vadd.f32 0.0, %v5220
      %5222 = vmatprep.mubr.f32.mxu0 0.0
      %5223 = vmatmul.mubr.f32.gmra.mxu0 %v4897
      %v5224 = vpop.f32.mrf.mxu0
      %v5225 = vadd.f32 0.0, %v5224
      %v5226 = vpop.f32.mrf.mxu0
      %v5227 = vadd.f32 0.0, %v5226
      %5228 = vmatprep.mubr.f32.mxu0 0.0
      %5229 = vmatmul.mubr.f32.gmra.mxu0 %v4900
      %v5230 = vpop.f32.mrf.mxu0
      %v5231 = vadd.f32 0.0, %v5230
      %v5232 = vpop.f32.mrf.mxu0
      %v5233 = vadd.f32 0.0, %v5232
      %5234 = vmatprep.mubr.f32.mxu0 0.0
      %5235 = vmatmul.mubr.f32.gmra.mxu0 %v4903
      %v5236 = vpop.f32.mrf.mxu0
      %v5237 = vadd.f32 0.0, %v5236
      %v5238 = vpop.f32.mrf.mxu0
      %v5239 = vadd.f32 0.0, %v5238
      %5240 = vmatprep.mubr.f32.mxu0 0.0
      %5241 = vmatmul.mubr.f32.gmra.mxu0 %v4906
      %v5242 = vpop.f32.mrf.mxu0
      %v5243 = vadd.f32 0.0, %v5242
      %v5244 = vpop.f32.mrf.mxu0
      %v5245 = vadd.f32 0.0, %v5244
      %5246 = vdwg.mxu0
      %5247 = vmatprep.subr.mxu0 0.0
      %5248 = vmatpush1.msra.mxu0 0.0
      %5249 = vmatprep.subr.mxu0 0.0
      %5250 = vmatpush1.msra.mxu0 0.0
      %5251 = vmatprep.subr.mxu0 0.0
      %5252 = vmatpush1.msra.mxu0 0.0
      %5253 = vmatprep.subr.mxu0 0.0
      %5254 = vmatpush1.msra.mxu0 0.0
      %5255 = vmatprep.subr.mxu0 0.0
      %5256 = vmatpush1.msra.mxu0 0.0
      %5257 = vmatprep.subr.mxu0 0.0
      %5258 = vmatpush1.msra.mxu0 0.0
      %5259 = vmatprep.subr.mxu0 0.0
      %5260 = vmatpush1.msra.mxu0 0.0
      %5261 = vmatprep.subr.mxu0 0.0
      %5262 = vmatpush1.msra.mxu0 0.0
      %5263 = vmatprep.subr.mxu0 0.0
      %5264 = vmatpush1.msra.mxu0 0.0
      %5265 = vmatprep.subr.mxu0 0.0
      %5266 = vmatpush1.msra.mxu0 0.0
      %5267 = vmatprep.subr.mxu0 0.0
      %5268 = vmatpush1.msra.mxu0 0.0
      %5269 = vmatprep.subr.mxu0 %v4874
      %5270 = vmatpush1.msra.mxu0 %v4770
      %5271 = vmatprep.subr.mxu0 %v4042
      %5272 = vmatpush1.msra.mxu0 %v3938
      %5273 = vmatprep.subr.mxu0 %v3210
      %5274 = vmatpush1.msra.mxu0 %v3106
      %5275 = vmatprep.subr.mxu0 %v2378
      %5276 = vmatpush1.msra.mxu0 %v2274
      %5277 = vmatprep.subr.mxu0 %v1546
      %5278 = vmatpush1.msra.mxu0 %v1442
      %5279 = vmatprep.subr.mxu0 0.0
      %5280 = vmatpush2.msra.mxu0 0.0
      %5281 = vmatprep.subr.mxu0 0.0
      %5282 = vmatpush2.msra.mxu0 0.0
      %5283 = vmatprep.subr.mxu0 0.0
      %5284 = vmatpush2.msra.mxu0 0.0
      %5285 = vmatprep.subr.mxu0 0.0
      %5286 = vmatpush2.msra.mxu0 0.0
      %5287 = vmatprep.subr.mxu0 0.0
      %5288 = vmatpush2.msra.mxu0 0.0
      %5289 = vmatprep.subr.mxu0 0.0
      %5290 = vmatpush2.msra.mxu0 0.0
      %5291 = vmatprep.subr.mxu0 0.0
      %5292 = vmatpush2.msra.mxu0 0.0
      %5293 = vmatprep.subr.mxu0 0.0
      %5294 = vmatpush2.msra.mxu0 0.0
      %5295 = vmatprep.subr.mxu0 0.0
      %5296 = vmatpush2.msra.mxu0 0.0
      %5297 = vmatprep.subr.mxu0 0.0
      %5298 = vmatpush2.msra.mxu0 0.0
      %5299 = vmatprep.subr.mxu0 0.0
      %5300 = vmatpush2.msra.mxu0 0.0
      %5301 = vmatprep.subr.mxu0 0.0
      %5302 = vmatpush2.msra.mxu0 0.0
      %5303 = vmatprep.subr.mxu0 0.0
      %5304 = vmatpush2.msra.mxu0 0.0
      %5305 = vmatprep.subr.mxu0 0.0
      %5306 = vmatpush2.msra.mxu0 0.0
      %5307 = vmatprep.subr.mxu0 0.0
      %5308 = vmatpush2.msra.mxu0 0.0
      %5309 = vmatprep.subr.mxu0 0.0
      %5310 = vmatpush2.msra.mxu0 0.0
      %5311 = vmatprep.mubr.f32.mxu0 0.0
      %5312 = vmatmul.mubr.f32.gmra.mxu0 %v4885
      %v5313 = vpop.f32.mrf.mxu0
      %v5314 = vadd.f32 0.0, %v5313
      %v5315 = vpop.f32.mrf.mxu0
      %v5316 = vadd.f32 0.0, %v5315
      %5317 = vmatprep.mubr.f32.mxu0 0.0
      %5318 = vmatmul.mubr.f32.gmra.mxu0 %v4888
      %v5319 = vpop.f32.mrf.mxu0
      %v5320 = vadd.f32 0.0, %v5319
      %v5321 = vpop.f32.mrf.mxu0
      %v5322 = vadd.f32 0.0, %v5321
      %5323 = vmatprep.mubr.f32.mxu0 0.0
      %5324 = vmatmul.mubr.f32.gmra.mxu0 %v4891
      %v5325 = vpop.f32.mrf.mxu0
      %v5326 = vadd.f32 0.0, %v5325
      %v5327 = vpop.f32.mrf.mxu0
      %v5328 = vadd.f32 0.0, %v5327
      %5329 = vmatprep.mubr.f32.mxu0 0.0
      %5330 = vmatmul.mubr.f32.gmra.mxu0 %v4894
      %v5331 = vpop.f32.mrf.mxu0
      %v5332 = vadd.f32 0.0, %v5331
      %v5333 = vpop.f32.mrf.mxu0
      %v5334 = vadd.f32 0.0, %v5333
      %5335 = vmatprep.mubr.f32.mxu0 0.0
      %5336 = vmatmul.mubr.f32.gmra.mxu0 %v4897
      %v5337 = vpop.f32.mrf.mxu0
      %v5338 = vadd.f32 0.0, %v5337
      %v5339 = vpop.f32.mrf.mxu0
      %v5340 = vadd.f32 0.0, %v5339
      %5341 = vmatprep.mubr.f32.mxu0 0.0
      %5342 = vmatmul.mubr.f32.gmra.mxu0 %v4900
      %v5343 = vpop.f32.mrf.mxu0
      %v5344 = vadd.f32 0.0, %v5343
      %v5345 = vpop.f32.mrf.mxu0
      %v5346 = vadd.f32 0.0, %v5345
      %5347 = vmatprep.mubr.f32.mxu0 0.0
      %5348 = vmatmul.mubr.f32.gmra.mxu0 %v4903
      %v5349 = vpop.f32.mrf.mxu0
      %v5350 = vadd.f32 0.0, %v5349
      %v5351 = vpop.f32.mrf.mxu0
      %v5352 = vadd.f32 0.0, %v5351
      %5353 = vmatprep.mubr.f32.mxu0 0.0
      %5354 = vmatmul.mubr.f32.gmra.mxu0 %v4906
      %v5355 = vpop.f32.mrf.mxu0
      %v5356 = vadd.f32 0.0, %v5355
      %v5357 = vpop.f32.mrf.mxu0
      %v5358 = vadd.f32 0.0, %v5357
      %5359 = vdwg.mxu0
      %v5360 = vld [vmem:[%s4] sm:$0xff]
      %v5361 = vld [vmem:[%s4 + $0x8] sm:$0xff]
      %v5362 = vld [vmem:[%s4 + $0x10] sm:$0xff]
      %v5363 = vld [vmem:[%s4 + $0x18] sm:$0xff]
      %5365 = vset.pattern.permute.xlu0 0
      %5366 = vperm.xlu0 %5365, %v5360
      %v5367 = vpop.permute.xlu0 %5366
      %5370 = vset.pattern.permute.xlu0 0
      %5371 = vperm.xlu0 %5370, %v5361
      %v5372 = vpop.permute.xlu0 %5371
      %5375 = vset.pattern.permute.xlu0 0
      %5376 = vperm.xlu0 %5375, %v5362
      %v5377 = vpop.permute.xlu0 %5376
      %5380 = vset.pattern.permute.xlu0 0
      %5381 = vperm.xlu0 %5380, %v5363
      %v5382 = vpop.permute.xlu0 %5381
      %v5384 = vadd.f32 %v4975, %v5367
      %v5385 = vadd.f32 %v4977, %v5367
      %v5386 = vadd.f32 %v5088, %v5367
      %v5387 = vadd.f32 %v5090, %v5367
      %v5388 = vadd.f32 %v5201, %v5367
      %v5389 = vadd.f32 %v5203, %v5367
      %v5390 = vadd.f32 %v5314, %v5367
      %v5391 = vadd.f32 %v5316, %v5367
      %v5392 = vadd.f32 %v4981, %v5372
      %v5393 = vadd.f32 %v4983, %v5372
      %v5394 = vadd.f32 %v5094, %v5372
      %v5395 = vadd.f32 %v5096, %v5372
      %v5396 = vadd.f32 %v5207, %v5372
      %v5397 = vadd.f32 %v5209, %v5372
      %v5398 = vadd.f32 %v5320, %v5372
      %v5399 = vadd.f32 %v5322, %v5372
      %v5400 = vadd.f32 %v4987, %v5377
      %v5401 = vadd.f32 %v4989, %v5377
      %v5402 = vadd.f32 %v5100, %v5377
      %v5403 = vadd.f32 %v5102, %v5377
      %v5404 = vadd.f32 %v5213, %v5377
      %v5405 = vadd.f32 %v5215, %v5377
      %v5406 = vadd.f32 %v5326, %v5377
      %v5407 = vadd.f32 %v5328, %v5377
      %v5408 = vadd.f32 %v4993, %v5382
      %v5409 = vadd.f32 %v4995, %v5382
      %v5410 = vadd.f32 %v5106, %v5382
      %v5411 = vadd.f32 %v5108, %v5382
      %v5412 = vadd.f32 %v5219, %v5382
      %v5413 = vadd.f32 %v5221, %v5382
      %v5414 = vadd.f32 %v5332, %v5382
      %v5415 = vadd.f32 %v5334, %v5382
      %v5416 = vmax.f32 %v5384, 0.0
      %v5417 = vmax.f32 %v5385, 0.0
      %v5418 = vmax.f32 %v5386, 0.0
      %v5419 = vmax.f32 %v5387, 0.0
      %v5420 = vmax.f32 %v5388, 0.0
      %v5421 = vmax.f32 %v5389, 0.0
      %v5422 = vmax.f32 %v5390, 0.0
      %v5423 = vmax.f32 %v5391, 0.0
      %v5424 = vmax.f32 %v5392, 0.0
      %v5425 = vmax.f32 %v5393, 0.0
      %v5426 = vmax.f32 %v5394, 0.0
      %v5427 = vmax.f32 %v5395, 0.0
      %v5428 = vmax.f32 %v5396, 0.0
      %v5429 = vmax.f32 %v5397, 0.0
      %v5430 = vmax.f32 %v5398, 0.0
      %v5431 = vmax.f32 %v5399, 0.0
      %v5432 = vmax.f32 %v5400, 0.0
      %v5433 = vmax.f32 %v5401, 0.0
      %v5434 = vmax.f32 %v5402, 0.0
      %v5435 = vmax.f32 %v5403, 0.0
      %v5436 = vmax.f32 %v5404, 0.0
      %v5437 = vmax.f32 %v5405, 0.0
      %v5438 = vmax.f32 %v5406, 0.0
      %v5439 = vmax.f32 %v5407, 0.0
      %v5440 = vmax.f32 %v5408, 0.0
      %v5441 = vmax.f32 %v5409, 0.0
      %v5442 = vmax.f32 %v5410, 0.0
      %v5443 = vmax.f32 %v5411, 0.0
      %v5444 = vmax.f32 %v5412, 0.0
      %v5445 = vmax.f32 %v5413, 0.0
      %v5446 = vmax.f32 %v5414, 0.0
      %v5447 = vmax.f32 %v5415, 0.0
      %v5448 = vld [vmem:[%s5] sm:$0xff]
      %v5449 = vld [vmem:[%s5 + $0x8] sm:$0xff]
      %v5450 = vld [vmem:[%s5 + $0x10] sm:$0xff]
      %v5451 = vld [vmem:[%s5 + $0x18] sm:$0xff]
      %v5452 = vld [vmem:[%s6] sm:$0xff]
      %v5453 = vld [vmem:[%s6 + $0x8] sm:$0xff]
      %v5454 = vld [vmem:[%s6 + $0x10] sm:$0xff]
      %v5455 = vld [vmem:[%s6 + $0x18] sm:$0xff]
      %5457 = vset.pattern.permute.xlu0 0
      %5458 = vperm.xlu0 %5457, %v5452
      %v5459 = vpop.permute.xlu0 %5458
      %5462 = vset.pattern.permute.xlu0 0
      %5463 = vperm.xlu0 %5462, %v5453
      %v5464 = vpop.permute.xlu0 %5463
      %5467 = vset.pattern.permute.xlu0 0
      %5468 = vperm.xlu0 %5467, %v5454
      %v5469 = vpop.permute.xlu0 %5468
      %5472 = vset.pattern.permute.xlu0 0
      %5473 = vperm.xlu0 %5472, %v5455
      %v5474 = vpop.permute.xlu0 %5473
      %vm5476 = vcmask 261120
      %v5478 = vsel %vm5476, %v5448, 0
      %v5481 = vsel %vm5476, %v5449, 0
      %v5484 = vsel %vm5476, %v5450, 0
      %v5487 = vsel %vm5476, %v5451, 0
      %5489 = vmatprep.subr.mxu0 0.0
      %5490 = vmatpush1.msra.mxu0 0.0
      %5491 = vmatprep.subr.mxu0 0.0
      %5492 = vmatpush1.msra.mxu0 0.0
      %5493 = vmatprep.subr.mxu0 0.0
      %5494 = vmatpush1.msra.mxu0 0.0
      %5495 = vmatprep.subr.mxu0 0.0
      %5496 = vmatpush1.msra.mxu0 0.0
      %5497 = vmatprep.subr.mxu0 0.0
      %5498 = vmatpush1.msra.mxu0 0.0
      %5499 = vmatprep.subr.mxu0 0.0
      %5500 = vmatpush1.msra.mxu0 0.0
      %5501 = vmatprep.subr.mxu0 0.0
      %5502 = vmatpush1.msra.mxu0 0.0
      %5503 = vmatprep.subr.mxu0 0.0
      %5504 = vmatpush1.msra.mxu0 0.0
      %5505 = vmatprep.subr.mxu0 0.0
      %5506 = vmatpush1.msra.mxu0 0.0
      %5507 = vmatprep.subr.mxu0 0.0
      %5508 = vmatpush1.msra.mxu0 0.0
      %5509 = vmatprep.subr.mxu0 0.0
      %5510 = vmatpush1.msra.mxu0 0.0
      %5511 = vmatprep.subr.mxu0 0.0
      %5512 = vmatpush1.msra.mxu0 0.0
      %5513 = vmatprep.subr.mxu0 %v5441
      %5514 = vmatpush1.msra.mxu0 %v5440
      %5515 = vmatprep.subr.mxu0 %v5433
      %5516 = vmatpush1.msra.mxu0 %v5432
      %5517 = vmatprep.subr.mxu0 %v5425
      %5518 = vmatpush1.msra.mxu0 %v5424
      %5519 = vmatprep.subr.mxu0 %v5417
      %5520 = vmatpush1.msra.mxu0 %v5416
      %5521 = vmatprep.subr.mxu0 0.0
      %5522 = vmatpush2.msra.mxu0 0.0
      %5523 = vmatprep.subr.mxu0 0.0
      %5524 = vmatpush2.msra.mxu0 0.0
      %5525 = vmatprep.subr.mxu0 0.0
      %5526 = vmatpush2.msra.mxu0 0.0
      %5527 = vmatprep.subr.mxu0 0.0
      %5528 = vmatpush2.msra.mxu0 0.0
      %5529 = vmatprep.subr.mxu0 0.0
      %5530 = vmatpush2.msra.mxu0 0.0
      %5531 = vmatprep.subr.mxu0 0.0
      %5532 = vmatpush2.msra.mxu0 0.0
      %5533 = vmatprep.subr.mxu0 0.0
      %5534 = vmatpush2.msra.mxu0 0.0
      %5535 = vmatprep.subr.mxu0 0.0
      %5536 = vmatpush2.msra.mxu0 0.0
      %5537 = vmatprep.subr.mxu0 0.0
      %5538 = vmatpush2.msra.mxu0 0.0
      %5539 = vmatprep.subr.mxu0 0.0
      %5540 = vmatpush2.msra.mxu0 0.0
      %5541 = vmatprep.subr.mxu0 0.0
      %5542 = vmatpush2.msra.mxu0 0.0
      %5543 = vmatprep.subr.mxu0 0.0
      %5544 = vmatpush2.msra.mxu0 0.0
      %5545 = vmatprep.subr.mxu0 0.0
      %5546 = vmatpush2.msra.mxu0 0.0
      %5547 = vmatprep.subr.mxu0 0.0
      %5548 = vmatpush2.msra.mxu0 0.0
      %5549 = vmatprep.subr.mxu0 0.0
      %5550 = vmatpush2.msra.mxu0 0.0
      %5551 = vmatprep.subr.mxu0 0.0
      %5552 = vmatpush2.msra.mxu0 0.0
      %5553 = vmatprep.mubr.f32.mxu0 0.0
      %5554 = vmatmul.mubr.f32.gmra.mxu0 %v5478
      %v5555 = vpop.f32.mrf.mxu0
      %v5556 = vadd.f32 %v5459, %v5555
      %v5557 = vpop.f32.mrf.mxu0
      %v5558 = vadd.f32 %v5459, %v5557
      %5559 = vmatprep.mubr.f32.mxu0 0.0
      %5560 = vmatmul.mubr.f32.gmra.mxu0 %v5481
      %v5561 = vpop.f32.mrf.mxu0
      %v5562 = vadd.f32 %v5464, %v5561
      %v5563 = vpop.f32.mrf.mxu0
      %v5564 = vadd.f32 %v5464, %v5563
      %5565 = vmatprep.mubr.f32.mxu0 0.0
      %5566 = vmatmul.mubr.f32.gmra.mxu0 %v5484
      %v5567 = vpop.f32.mrf.mxu0
      %v5568 = vadd.f32 %v5469, %v5567
      %v5569 = vpop.f32.mrf.mxu0
      %v5570 = vadd.f32 %v5469, %v5569
      %5571 = vmatprep.mubr.f32.mxu0 0.0
      %5572 = vmatmul.mubr.f32.gmra.mxu0 %v5487
      %v5573 = vpop.f32.mrf.mxu0
      %v5574 = vadd.f32 %v5474, %v5573
      %v5575 = vpop.f32.mrf.mxu0
      %v5576 = vadd.f32 %v5474, %v5575
      %5577 = vdwg.mxu0
      %5578 = vmatprep.subr.mxu0 0.0
      %5579 = vmatpush1.msra.mxu0 0.0
      %5580 = vmatprep.subr.mxu0 0.0
      %5581 = vmatpush1.msra.mxu0 0.0
      %5582 = vmatprep.subr.mxu0 0.0
      %5583 = vmatpush1.msra.mxu0 0.0
      %5584 = vmatprep.subr.mxu0 0.0
      %5585 = vmatpush1.msra.mxu0 0.0
      %5586 = vmatprep.subr.mxu0 0.0
      %5587 = vmatpush1.msra.mxu0 0.0
      %5588 = vmatprep.subr.mxu0 0.0
      %5589 = vmatpush1.msra.mxu0 0.0
      %5590 = vmatprep.subr.mxu0 0.0
      %5591 = vmatpush1.msra.mxu0 0.0
      %5592 = vmatprep.subr.mxu0 0.0
      %5593 = vmatpush1.msra.mxu0 0.0
      %5594 = vmatprep.subr.mxu0 0.0
      %5595 = vmatpush1.msra.mxu0 0.0
      %5596 = vmatprep.subr.mxu0 0.0
      %5597 = vmatpush1.msra.mxu0 0.0
      %5598 = vmatprep.subr.mxu0 0.0
      %5599 = vmatpush1.msra.mxu0 0.0
      %5600 = vmatprep.subr.mxu0 0.0
      %5601 = vmatpush1.msra.mxu0 0.0
      %5602 = vmatprep.subr.mxu0 %v5443
      %5603 = vmatpush1.msra.mxu0 %v5442
      %5604 = vmatprep.subr.mxu0 %v5435
      %5605 = vmatpush1.msra.mxu0 %v5434
      %5606 = vmatprep.subr.mxu0 %v5427
      %5607 = vmatpush1.msra.mxu0 %v5426
      %5608 = vmatprep.subr.mxu0 %v5419
      %5609 = vmatpush1.msra.mxu0 %v5418
      %5610 = vmatprep.subr.mxu0 0.0
      %5611 = vmatpush2.msra.mxu0 0.0
      %5612 = vmatprep.subr.mxu0 0.0
      %5613 = vmatpush2.msra.mxu0 0.0
      %5614 = vmatprep.subr.mxu0 0.0
      %5615 = vmatpush2.msra.mxu0 0.0
      %5616 = vmatprep.subr.mxu0 0.0
      %5617 = vmatpush2.msra.mxu0 0.0
      %5618 = vmatprep.subr.mxu0 0.0
      %5619 = vmatpush2.msra.mxu0 0.0
      %5620 = vmatprep.subr.mxu0 0.0
      %5621 = vmatpush2.msra.mxu0 0.0
      %5622 = vmatprep.subr.mxu0 0.0
      %5623 = vmatpush2.msra.mxu0 0.0
      %5624 = vmatprep.subr.mxu0 0.0
      %5625 = vmatpush2.msra.mxu0 0.0
      %5626 = vmatprep.subr.mxu0 0.0
      %5627 = vmatpush2.msra.mxu0 0.0
      %5628 = vmatprep.subr.mxu0 0.0
      %5629 = vmatpush2.msra.mxu0 0.0
      %5630 = vmatprep.subr.mxu0 0.0
      %5631 = vmatpush2.msra.mxu0 0.0
      %5632 = vmatprep.subr.mxu0 0.0
      %5633 = vmatpush2.msra.mxu0 0.0
      %5634 = vmatprep.subr.mxu0 0.0
      %5635 = vmatpush2.msra.mxu0 0.0
      %5636 = vmatprep.subr.mxu0 0.0
      %5637 = vmatpush2.msra.mxu0 0.0
      %5638 = vmatprep.subr.mxu0 0.0
      %5639 = vmatpush2.msra.mxu0 0.0
      %5640 = vmatprep.subr.mxu0 0.0
      %5641 = vmatpush2.msra.mxu0 0.0
      %5642 = vmatprep.mubr.f32.mxu0 0.0
      %5643 = vmatmul.mubr.f32.gmra.mxu0 %v5478
      %v5644 = vpop.f32.mrf.mxu0
      %v5645 = vadd.f32 %v5459, %v5644
      %v5646 = vpop.f32.mrf.mxu0
      %v5647 = vadd.f32 %v5459, %v5646
      %5648 = vmatprep.mubr.f32.mxu0 0.0
      %5649 = vmatmul.mubr.f32.gmra.mxu0 %v5481
      %v5650 = vpop.f32.mrf.mxu0
      %v5651 = vadd.f32 %v5464, %v5650
      %v5652 = vpop.f32.mrf.mxu0
      %v5653 = vadd.f32 %v5464, %v5652
      %5654 = vmatprep.mubr.f32.mxu0 0.0
      %5655 = vmatmul.mubr.f32.gmra.mxu0 %v5484
      %v5656 = vpop.f32.mrf.mxu0
      %v5657 = vadd.f32 %v5469, %v5656
      %v5658 = vpop.f32.mrf.mxu0
      %v5659 = vadd.f32 %v5469, %v5658
      %5660 = vmatprep.mubr.f32.mxu0 0.0
      %5661 = vmatmul.mubr.f32.gmra.mxu0 %v5487
      %v5662 = vpop.f32.mrf.mxu0
      %v5663 = vadd.f32 %v5474, %v5662
      %v5664 = vpop.f32.mrf.mxu0
      %v5665 = vadd.f32 %v5474, %v5664
      %5666 = vdwg.mxu0
      %5667 = vmatprep.subr.mxu0 0.0
      %5668 = vmatpush1.msra.mxu0 0.0
      %5669 = vmatprep.subr.mxu0 0.0
      %5670 = vmatpush1.msra.mxu0 0.0
      %5671 = vmatprep.subr.mxu0 0.0
      %5672 = vmatpush1.msra.mxu0 0.0
      %5673 = vmatprep.subr.mxu0 0.0
      %5674 = vmatpush1.msra.mxu0 0.0
      %5675 = vmatprep.subr.mxu0 0.0
      %5676 = vmatpush1.msra.mxu0 0.0
      %5677 = vmatprep.subr.mxu0 0.0
      %5678 = vmatpush1.msra.mxu0 0.0
      %5679 = vmatprep.subr.mxu0 0.0
      %5680 = vmatpush1.msra.mxu0 0.0
      %5681 = vmatprep.subr.mxu0 0.0
      %5682 = vmatpush1.msra.mxu0 0.0
      %5683 = vmatprep.subr.mxu0 0.0
      %5684 = vmatpush1.msra.mxu0 0.0
      %5685 = vmatprep.subr.mxu0 0.0
      %5686 = vmatpush1.msra.mxu0 0.0
      %5687 = vmatprep.subr.mxu0 0.0
      %5688 = vmatpush1.msra.mxu0 0.0
      %5689 = vmatprep.subr.mxu0 0.0
      %5690 = vmatpush1.msra.mxu0 0.0
      %5691 = vmatprep.subr.mxu0 %v5445
      %5692 = vmatpush1.msra.mxu0 %v5444
      %5693 = vmatprep.subr.mxu0 %v5437
      %5694 = vmatpush1.msra.mxu0 %v5436
      %5695 = vmatprep.subr.mxu0 %v5429
      %5696 = vmatpush1.msra.mxu0 %v5428
      %5697 = vmatprep.subr.mxu0 %v5421
      %5698 = vmatpush1.msra.mxu0 %v5420
      %5699 = vmatprep.subr.mxu0 0.0
      %5700 = vmatpush2.msra.mxu0 0.0
      %5701 = vmatprep.subr.mxu0 0.0
      %5702 = vmatpush2.msra.mxu0 0.0
      %5703 = vmatprep.subr.mxu0 0.0
      %5704 = vmatpush2.msra.mxu0 0.0
      %5705 = vmatprep.subr.mxu0 0.0
      %5706 = vmatpush2.msra.mxu0 0.0
      %5707 = vmatprep.subr.mxu0 0.0
      %5708 = vmatpush2.msra.mxu0 0.0
      %5709 = vmatprep.subr.mxu0 0.0
      %5710 = vmatpush2.msra.mxu0 0.0
      %5711 = vmatprep.subr.mxu0 0.0
      %5712 = vmatpush2.msra.mxu0 0.0
      %5713 = vmatprep.subr.mxu0 0.0
      %5714 = vmatpush2.msra.mxu0 0.0
      %5715 = vmatprep.subr.mxu0 0.0
      %5716 = vmatpush2.msra.mxu0 0.0
      %5717 = vmatprep.subr.mxu0 0.0
      %5718 = vmatpush2.msra.mxu0 0.0
      %5719 = vmatprep.subr.mxu0 0.0
      %5720 = vmatpush2.msra.mxu0 0.0
      %5721 = vmatprep.subr.mxu0 0.0
      %5722 = vmatpush2.msra.mxu0 0.0
      %5723 = vmatprep.subr.mxu0 0.0
      %5724 = vmatpush2.msra.mxu0 0.0
      %5725 = vmatprep.subr.mxu0 0.0
      %5726 = vmatpush2.msra.mxu0 0.0
      %5727 = vmatprep.subr.mxu0 0.0
      %5728 = vmatpush2.msra.mxu0 0.0
      %5729 = vmatprep.subr.mxu0 0.0
      %5730 = vmatpush2.msra.mxu0 0.0
      %5731 = vmatprep.mubr.f32.mxu0 0.0
      %5732 = vmatmul.mubr.f32.gmra.mxu0 %v5478
      %v5733 = vpop.f32.mrf.mxu0
      %v5734 = vadd.f32 %v5459, %v5733
      %v5735 = vpop.f32.mrf.mxu0
      %v5736 = vadd.f32 %v5459, %v5735
      %5737 = vmatprep.mubr.f32.mxu0 0.0
      %5738 = vmatmul.mubr.f32.gmra.mxu0 %v5481
      %v5739 = vpop.f32.mrf.mxu0
      %v5740 = vadd.f32 %v5464, %v5739
      %v5741 = vpop.f32.mrf.mxu0
      %v5742 = vadd.f32 %v5464, %v5741
      %5743 = vmatprep.mubr.f32.mxu0 0.0
      %5744 = vmatmul.mubr.f32.gmra.mxu0 %v5484
      %v5745 = vpop.f32.mrf.mxu0
      %v5746 = vadd.f32 %v5469, %v5745
      %v5747 = vpop.f32.mrf.mxu0
      %v5748 = vadd.f32 %v5469, %v5747
      %5749 = vmatprep.mubr.f32.mxu0 0.0
      %5750 = vmatmul.mubr.f32.gmra.mxu0 %v5487
      %v5751 = vpop.f32.mrf.mxu0
      %v5752 = vadd.f32 %v5474, %v5751
      %v5753 = vpop.f32.mrf.mxu0
      %v5754 = vadd.f32 %v5474, %v5753
      %5755 = vdwg.mxu0
      %5756 = vmatprep.subr.mxu0 0.0
      %5757 = vmatpush1.msra.mxu0 0.0
      %5758 = vmatprep.subr.mxu0 0.0
      %5759 = vmatpush1.msra.mxu0 0.0
      %5760 = vmatprep.subr.mxu0 0.0
      %5761 = vmatpush1.msra.mxu0 0.0
      %5762 = vmatprep.subr.mxu0 0.0
      %5763 = vmatpush1.msra.mxu0 0.0
      %5764 = vmatprep.subr.mxu0 0.0
      %5765 = vmatpush1.msra.mxu0 0.0
      %5766 = vmatprep.subr.mxu0 0.0
      %5767 = vmatpush1.msra.mxu0 0.0
      %5768 = vmatprep.subr.mxu0 0.0
      %5769 = vmatpush1.msra.mxu0 0.0
      %5770 = vmatprep.subr.mxu0 0.0
      %5771 = vmatpush1.msra.mxu0 0.0
      %5772 = vmatprep.subr.mxu0 0.0
      %5773 = vmatpush1.msra.mxu0 0.0
      %5774 = vmatprep.subr.mxu0 0.0
      %5775 = vmatpush1.msra.mxu0 0.0
      %5776 = vmatprep.subr.mxu0 0.0
      %5777 = vmatpush1.msra.mxu0 0.0
      %5778 = vmatprep.subr.mxu0 0.0
      %5779 = vmatpush1.msra.mxu0 0.0
      %5780 = vmatprep.subr.mxu0 %v5447
      %5781 = vmatpush1.msra.mxu0 %v5446
      %5782 = vmatprep.subr.mxu0 %v5439
      %5783 = vmatpush1.msra.mxu0 %v5438
      %5784 = vmatprep.subr.mxu0 %v5431
      %5785 = vmatpush1.msra.mxu0 %v5430
      %5786 = vmatprep.subr.mxu0 %v5423
      %5787 = vmatpush1.msra.mxu0 %v5422
      %5788 = vmatprep.subr.mxu0 0.0
      %5789 = vmatpush2.msra.mxu0 0.0
      %5790 = vmatprep.subr.mxu0 0.0
      %5791 = vmatpush2.msra.mxu0 0.0
      %5792 = vmatprep.subr.mxu0 0.0
      %5793 = vmatpush2.msra.mxu0 0.0
      %5794 = vmatprep.subr.mxu0 0.0
      %5795 = vmatpush2.msra.mxu0 0.0
      %5796 = vmatprep.subr.mxu0 0.0
      %5797 = vmatpush2.msra.mxu0 0.0
      %5798 = vmatprep.subr.mxu0 0.0
      %5799 = vmatpush2.msra.mxu0 0.0
      %5800 = vmatprep.subr.mxu0 0.0
      %5801 = vmatpush2.msra.mxu0 0.0
      %5802 = vmatprep.subr.mxu0 0.0
      %5803 = vmatpush2.msra.mxu0 0.0
      %5804 = vmatprep.subr.mxu0 0.0
      %5805 = vmatpush2.msra.mxu0 0.0
      %5806 = vmatprep.subr.mxu0 0.0
      %5807 = vmatpush2.msra.mxu0 0.0
      %5808 = vmatprep.subr.mxu0 0.0
      %5809 = vmatpush2.msra.mxu0 0.0
      %5810 = vmatprep.subr.mxu0 0.0
      %5811 = vmatpush2.msra.mxu0 0.0
      %5812 = vmatprep.subr.mxu0 0.0
      %5813 = vmatpush2.msra.mxu0 0.0
      %5814 = vmatprep.subr.mxu0 0.0
      %5815 = vmatpush2.msra.mxu0 0.0
      %5816 = vmatprep.subr.mxu0 0.0
      %5817 = vmatpush2.msra.mxu0 0.0
      %5818 = vmatprep.subr.mxu0 0.0
      %5819 = vmatpush2.msra.mxu0 0.0
      %5820 = vmatprep.mubr.f32.mxu0 0.0
      %5821 = vmatmul.mubr.f32.gmra.mxu0 %v5478
      %v5822 = vpop.f32.mrf.mxu0
      %v5823 = vadd.f32 %v5459, %v5822
      %v5824 = vpop.f32.mrf.mxu0
      %v5825 = vadd.f32 %v5459, %v5824
      %5826 = vmatprep.mubr.f32.mxu0 0.0
      %5827 = vmatmul.mubr.f32.gmra.mxu0 %v5481
      %v5828 = vpop.f32.mrf.mxu0
      %v5829 = vadd.f32 %v5464, %v5828
      %v5830 = vpop.f32.mrf.mxu0
      %v5831 = vadd.f32 %v5464, %v5830
      %5832 = vmatprep.mubr.f32.mxu0 0.0
      %5833 = vmatmul.mubr.f32.gmra.mxu0 %v5484
      %v5834 = vpop.f32.mrf.mxu0
      %v5835 = vadd.f32 %v5469, %v5834
      %v5836 = vpop.f32.mrf.mxu0
      %v5837 = vadd.f32 %v5469, %v5836
      %5838 = vmatprep.mubr.f32.mxu0 0.0
      %5839 = vmatmul.mubr.f32.gmra.mxu0 %v5487
      %v5840 = vpop.f32.mrf.mxu0
      %v5841 = vadd.f32 %v5474, %v5840
      %v5842 = vpop.f32.mrf.mxu0
      %v5843 = vadd.f32 %v5474, %v5842
      %5844 = vdwg.mxu0
      %v5845 = vmax.f32 %v5556, 0.0
      %v5846 = vmax.f32 %v5558, 0.0
      %v5847 = vmax.f32 %v5645, 0.0
      %v5848 = vmax.f32 %v5647, 0.0
      %v5849 = vmax.f32 %v5734, 0.0
      %v5850 = vmax.f32 %v5736, 0.0
      %v5851 = vmax.f32 %v5823, 0.0
      %v5852 = vmax.f32 %v5825, 0.0
      %v5853 = vmax.f32 %v5562, 0.0
      %v5854 = vmax.f32 %v5564, 0.0
      %v5855 = vmax.f32 %v5651, 0.0
      %v5856 = vmax.f32 %v5653, 0.0
      %v5857 = vmax.f32 %v5740, 0.0
      %v5858 = vmax.f32 %v5742, 0.0
      %v5859 = vmax.f32 %v5829, 0.0
      %v5860 = vmax.f32 %v5831, 0.0
      %v5861 = vmax.f32 %v5568, 0.0
      %v5862 = vmax.f32 %v5570, 0.0
      %v5863 = vmax.f32 %v5657, 0.0
      %v5864 = vmax.f32 %v5659, 0.0
      %v5865 = vmax.f32 %v5746, 0.0
      %v5866 = vmax.f32 %v5748, 0.0
      %v5867 = vmax.f32 %v5835, 0.0
      %v5868 = vmax.f32 %v5837, 0.0
      %v5869 = vmax.f32 %v5574, 0.0
      %v5870 = vmax.f32 %v5576, 0.0
      %v5871 = vmax.f32 %v5663, 0.0
      %v5872 = vmax.f32 %v5665, 0.0
      %v5873 = vmax.f32 %v5752, 0.0
      %v5874 = vmax.f32 %v5754, 0.0
      %v5875 = vmax.f32 %v5841, 0.0
      %v5876 = vmax.f32 %v5843, 0.0
      %v5877 = vld [vmem:[%s7] sm:$0xff]
      %v5878 = vld [vmem:[%s7 + $0x8] sm:$0xff]
      %v5879 = vld [vmem:[%s7 + $0x10] sm:$0xff]
      %v5880 = vld [vmem:[%s7 + $0x18] sm:$0xff]
      %v5882 = vsel %vm5476, %v5877, 0
      %v5885 = vsel %vm5476, %v5878, 0
      %v5888 = vsel %vm5476, %v5879, 0
      %v5891 = vsel %vm5476, %v5880, 0
      %5893 = vmatprep.subr.mxu0 0.0
      %5894 = vmatpush1.msra.mxu0 0.0
      %5895 = vmatprep.subr.mxu0 0.0
      %5896 = vmatpush1.msra.mxu0 0.0
      %5897 = vmatprep.subr.mxu0 0.0
      %5898 = vmatpush1.msra.mxu0 0.0
      %5899 = vmatprep.subr.mxu0 0.0
      %5900 = vmatpush1.msra.mxu0 0.0
      %5901 = vmatprep.subr.mxu0 0.0
      %5902 = vmatpush1.msra.mxu0 0.0
      %5903 = vmatprep.subr.mxu0 0.0
      %5904 = vmatpush1.msra.mxu0 0.0
      %5905 = vmatprep.subr.mxu0 0.0
      %5906 = vmatpush1.msra.mxu0 0.0
      %5907 = vmatprep.subr.mxu0 0.0
      %5908 = vmatpush1.msra.mxu0 0.0
      %5909 = vmatprep.subr.mxu0 0.0
      %5910 = vmatpush1.msra.mxu0 0.0
      %5911 = vmatprep.subr.mxu0 0.0
      %5912 = vmatpush1.msra.mxu0 0.0
      %5913 = vmatprep.subr.mxu0 0.0
      %5914 = vmatpush1.msra.mxu0 0.0
      %5915 = vmatprep.subr.mxu0 0.0
      %5916 = vmatpush1.msra.mxu0 0.0
      %5917 = vmatprep.subr.mxu0 %v5870
      %5918 = vmatpush1.msra.mxu0 %v5869
      %5919 = vmatprep.subr.mxu0 %v5862
      %5920 = vmatpush1.msra.mxu0 %v5861
      %5921 = vmatprep.subr.mxu0 %v5854
      %5922 = vmatpush1.msra.mxu0 %v5853
      %5923 = vmatprep.subr.mxu0 %v5846
      %5924 = vmatpush1.msra.mxu0 %v5845
      %5925 = vmatprep.subr.mxu0 0.0
      %5926 = vmatpush2.msra.mxu0 0.0
      %5927 = vmatprep.subr.mxu0 0.0
      %5928 = vmatpush2.msra.mxu0 0.0
      %5929 = vmatprep.subr.mxu0 0.0
      %5930 = vmatpush2.msra.mxu0 0.0
      %5931 = vmatprep.subr.mxu0 0.0
      %5932 = vmatpush2.msra.mxu0 0.0
      %5933 = vmatprep.subr.mxu0 0.0
      %5934 = vmatpush2.msra.mxu0 0.0
      %5935 = vmatprep.subr.mxu0 0.0
      %5936 = vmatpush2.msra.mxu0 0.0
      %5937 = vmatprep.subr.mxu0 0.0
      %5938 = vmatpush2.msra.mxu0 0.0
      %5939 = vmatprep.subr.mxu0 0.0
      %5940 = vmatpush2.msra.mxu0 0.0
      %5941 = vmatprep.subr.mxu0 0.0
      %5942 = vmatpush2.msra.mxu0 0.0
      %5943 = vmatprep.subr.mxu0 0.0
      %5944 = vmatpush2.msra.mxu0 0.0
      %5945 = vmatprep.subr.mxu0 0.0
      %5946 = vmatpush2.msra.mxu0 0.0
      %5947 = vmatprep.subr.mxu0 0.0
      %5948 = vmatpush2.msra.mxu0 0.0
      %5949 = vmatprep.subr.mxu0 0.0
      %5950 = vmatpush2.msra.mxu0 0.0
      %5951 = vmatprep.subr.mxu0 0.0
      %5952 = vmatpush2.msra.mxu0 0.0
      %5953 = vmatprep.subr.mxu0 0.0
      %5954 = vmatpush2.msra.mxu0 0.0
      %5955 = vmatprep.subr.mxu0 0.0
      %5956 = vmatpush2.msra.mxu0 0.0
      %5957 = vmatprep.mubr.f32.mxu0 0.0
      %5958 = vmatmul.mubr.f32.gmra.mxu0 %v5882
      %v5959 = vpop.f32.mrf.mxu0
      %v5960 = vadd.f32 %v4999, %v5959
      %v5961 = vpop.f32.mrf.mxu0
      %v5962 = vadd.f32 %v5001, %v5961
      %5963 = vmatprep.mubr.f32.mxu0 0.0
      %5964 = vmatmul.mubr.f32.gmra.mxu0 %v5885
      %v5965 = vpop.f32.mrf.mxu0
      %v5966 = vadd.f32 %v5005, %v5965
      %v5967 = vpop.f32.mrf.mxu0
      %v5968 = vadd.f32 %v5007, %v5967
      %5969 = vmatprep.mubr.f32.mxu0 0.0
      %5970 = vmatmul.mubr.f32.gmra.mxu0 %v5888
      %v5971 = vpop.f32.mrf.mxu0
      %v5972 = vadd.f32 %v5011, %v5971
      %v5973 = vpop.f32.mrf.mxu0
      %v5974 = vadd.f32 %v5013, %v5973
      %5975 = vmatprep.mubr.f32.mxu0 0.0
      %5976 = vmatmul.mubr.f32.gmra.mxu0 %v5891
      %v5977 = vpop.f32.mrf.mxu0
      %v5978 = vadd.f32 %v5017, %v5977
      %v5979 = vpop.f32.mrf.mxu0
      %v5980 = vadd.f32 %v5019, %v5979
      %5981 = vdwg.mxu0
      %5982 = vmatprep.subr.mxu0 0.0
      %5983 = vmatpush1.msra.mxu0 0.0
      %5984 = vmatprep.subr.mxu0 0.0
      %5985 = vmatpush1.msra.mxu0 0.0
      %5986 = vmatprep.subr.mxu0 0.0
      %5987 = vmatpush1.msra.mxu0 0.0
      %5988 = vmatprep.subr.mxu0 0.0
      %5989 = vmatpush1.msra.mxu0 0.0
      %5990 = vmatprep.subr.mxu0 0.0
      %5991 = vmatpush1.msra.mxu0 0.0
      %5992 = vmatprep.subr.mxu0 0.0
      %5993 = vmatpush1.msra.mxu0 0.0
      %5994 = vmatprep.subr.mxu0 0.0
      %5995 = vmatpush1.msra.mxu0 0.0
      %5996 = vmatprep.subr.mxu0 0.0
      %5997 = vmatpush1.msra.mxu0 0.0
      %5998 = vmatprep.subr.mxu0 0.0
      %5999 = vmatpush1.msra.mxu0 0.0
      %6000 = vmatprep.subr.mxu0 0.0
      %6001 = vmatpush1.msra.mxu0 0.0
      %6002 = vmatprep.subr.mxu0 0.0
      %6003 = vmatpush1.msra.mxu0 0.0
      %6004 = vmatprep.subr.mxu0 0.0
      %6005 = vmatpush1.msra.mxu0 0.0
      %6006 = vmatprep.subr.mxu0 %v5872
      %6007 = vmatpush1.msra.mxu0 %v5871
      %6008 = vmatprep.subr.mxu0 %v5864
      %6009 = vmatpush1.msra.mxu0 %v5863
      %6010 = vmatprep.subr.mxu0 %v5856
      %6011 = vmatpush1.msra.mxu0 %v5855
      %6012 = vmatprep.subr.mxu0 %v5848
      %6013 = vmatpush1.msra.mxu0 %v5847
      %6014 = vmatprep.subr.mxu0 0.0
      %6015 = vmatpush2.msra.mxu0 0.0
      %6016 = vmatprep.subr.mxu0 0.0
      %6017 = vmatpush2.msra.mxu0 0.0
      %6018 = vmatprep.subr.mxu0 0.0
      %6019 = vmatpush2.msra.mxu0 0.0
      %6020 = vmatprep.subr.mxu0 0.0
      %6021 = vmatpush2.msra.mxu0 0.0
      %6022 = vmatprep.subr.mxu0 0.0
      %6023 = vmatpush2.msra.mxu0 0.0
      %6024 = vmatprep.subr.mxu0 0.0
      %6025 = vmatpush2.msra.mxu0 0.0
      %6026 = vmatprep.subr.mxu0 0.0
      %6027 = vmatpush2.msra.mxu0 0.0
      %6028 = vmatprep.subr.mxu0 0.0
      %6029 = vmatpush2.msra.mxu0 0.0
      %6030 = vmatprep.subr.mxu0 0.0
      %6031 = vmatpush2.msra.mxu0 0.0
      %6032 = vmatprep.subr.mxu0 0.0
      %6033 = vmatpush2.msra.mxu0 0.0
      %6034 = vmatprep.subr.mxu0 0.0
      %6035 = vmatpush2.msra.mxu0 0.0
      %6036 = vmatprep.subr.mxu0 0.0
      %6037 = vmatpush2.msra.mxu0 0.0
      %6038 = vmatprep.subr.mxu0 0.0
      %6039 = vmatpush2.msra.mxu0 0.0
      %6040 = vmatprep.subr.mxu0 0.0
      %6041 = vmatpush2.msra.mxu0 0.0
      %6042 = vmatprep.subr.mxu0 0.0
      %6043 = vmatpush2.msra.mxu0 0.0
      %6044 = vmatprep.subr.mxu0 0.0
      %6045 = vmatpush2.msra.mxu0 0.0
      %6046 = vmatprep.mubr.f32.mxu0 0.0
      %6047 = vmatmul.mubr.f32.gmra.mxu0 %v5882
      %v6048 = vpop.f32.mrf.mxu0
      %v6049 = vadd.f32 %v5112, %v6048
      %v6050 = vpop.f32.mrf.mxu0
      %v6051 = vadd.f32 %v5114, %v6050
      %6052 = vmatprep.mubr.f32.mxu0 0.0
      %6053 = vmatmul.mubr.f32.gmra.mxu0 %v5885
      %v6054 = vpop.f32.mrf.mxu0
      %v6055 = vadd.f32 %v5118, %v6054
      %v6056 = vpop.f32.mrf.mxu0
      %v6057 = vadd.f32 %v5120, %v6056
      %6058 = vmatprep.mubr.f32.mxu0 0.0
      %6059 = vmatmul.mubr.f32.gmra.mxu0 %v5888
      %v6060 = vpop.f32.mrf.mxu0
      %v6061 = vadd.f32 %v5124, %v6060
      %v6062 = vpop.f32.mrf.mxu0
      %v6063 = vadd.f32 %v5126, %v6062
      %6064 = vmatprep.mubr.f32.mxu0 0.0
      %6065 = vmatmul.mubr.f32.gmra.mxu0 %v5891
      %v6066 = vpop.f32.mrf.mxu0
      %v6067 = vadd.f32 %v5130, %v6066
      %v6068 = vpop.f32.mrf.mxu0
      %v6069 = vadd.f32 %v5132, %v6068
      %6070 = vdwg.mxu0
      %6071 = vmatprep.subr.mxu0 0.0
      %6072 = vmatpush1.msra.mxu0 0.0
      %6073 = vmatprep.subr.mxu0 0.0
      %6074 = vmatpush1.msra.mxu0 0.0
      %6075 = vmatprep.subr.mxu0 0.0
      %6076 = vmatpush1.msra.mxu0 0.0
      %6077 = vmatprep.subr.mxu0 0.0
      %6078 = vmatpush1.msra.mxu0 0.0
      %6079 = vmatprep.subr.mxu0 0.0
      %6080 = vmatpush1.msra.mxu0 0.0
      %6081 = vmatprep.subr.mxu0 0.0
      %6082 = vmatpush1.msra.mxu0 0.0
      %6083 = vmatprep.subr.mxu0 0.0
      %6084 = vmatpush1.msra.mxu0 0.0
      %6085 = vmatprep.subr.mxu0 0.0
      %6086 = vmatpush1.msra.mxu0 0.0
      %6087 = vmatprep.subr.mxu0 0.0
      %6088 = vmatpush1.msra.mxu0 0.0
      %6089 = vmatprep.subr.mxu0 0.0
      %6090 = vmatpush1.msra.mxu0 0.0
      %6091 = vmatprep.subr.mxu0 0.0
      %6092 = vmatpush1.msra.mxu0 0.0
      %6093 = vmatprep.subr.mxu0 0.0
      %6094 = vmatpush1.msra.mxu0 0.0
      %6095 = vmatprep.subr.mxu0 %v5874
      %6096 = vmatpush1.msra.mxu0 %v5873
      %6097 = vmatprep.subr.mxu0 %v5866
      %6098 = vmatpush1.msra.mxu0 %v5865
      %6099 = vmatprep.subr.mxu0 %v5858
      %6100 = vmatpush1.msra.mxu0 %v5857
      %6101 = vmatprep.subr.mxu0 %v5850
      %6102 = vmatpush1.msra.mxu0 %v5849
      %6103 = vmatprep.subr.mxu0 0.0
      %6104 = vmatpush2.msra.mxu0 0.0
      %6105 = vmatprep.subr.mxu0 0.0
      %6106 = vmatpush2.msra.mxu0 0.0
      %6107 = vmatprep.subr.mxu0 0.0
      %6108 = vmatpush2.msra.mxu0 0.0
      %6109 = vmatprep.subr.mxu0 0.0
      %6110 = vmatpush2.msra.mxu0 0.0
      %6111 = vmatprep.subr.mxu0 0.0
      %6112 = vmatpush2.msra.mxu0 0.0
      %6113 = vmatprep.subr.mxu0 0.0
      %6114 = vmatpush2.msra.mxu0 0.0
      %6115 = vmatprep.subr.mxu0 0.0
      %6116 = vmatpush2.msra.mxu0 0.0
      %6117 = vmatprep.subr.mxu0 0.0
      %6118 = vmatpush2.msra.mxu0 0.0
      %6119 = vmatprep.subr.mxu0 0.0
      %6120 = vmatpush2.msra.mxu0 0.0
      %6121 = vmatprep.subr.mxu0 0.0
      %6122 = vmatpush2.msra.mxu0 0.0
      %6123 = vmatprep.subr.mxu0 0.0
      %6124 = vmatpush2.msra.mxu0 0.0
      %6125 = vmatprep.subr.mxu0 0.0
      %6126 = vmatpush2.msra.mxu0 0.0
      %6127 = vmatprep.subr.mxu0 0.0
      %6128 = vmatpush2.msra.mxu0 0.0
      %6129 = vmatprep.subr.mxu0 0.0
      %6130 = vmatpush2.msra.mxu0 0.0
      %6131 = vmatprep.subr.mxu0 0.0
      %6132 = vmatpush2.msra.mxu0 0.0
      %6133 = vmatprep.subr.mxu0 0.0
      %6134 = vmatpush2.msra.mxu0 0.0
      %6135 = vmatprep.mubr.f32.mxu0 0.0
      %6136 = vmatmul.mubr.f32.gmra.mxu0 %v5882
      %v6137 = vpop.f32.mrf.mxu0
      %v6138 = vadd.f32 %v5225, %v6137
      %v6139 = vpop.f32.mrf.mxu0
      %v6140 = vadd.f32 %v5227, %v6139
      %6141 = vmatprep.mubr.f32.mxu0 0.0
      %6142 = vmatmul.mubr.f32.gmra.mxu0 %v5885
      %v6143 = vpop.f32.mrf.mxu0
      %v6144 = vadd.f32 %v5231, %v6143
      %v6145 = vpop.f32.mrf.mxu0
      %v6146 = vadd.f32 %v5233, %v6145
      %6147 = vmatprep.mubr.f32.mxu0 0.0
      %6148 = vmatmul.mubr.f32.gmra.mxu0 %v5888
      %v6149 = vpop.f32.mrf.mxu0
      %v6150 = vadd.f32 %v5237, %v6149
      %v6151 = vpop.f32.mrf.mxu0
      %v6152 = vadd.f32 %v5239, %v6151
      %6153 = vmatprep.mubr.f32.mxu0 0.0
      %6154 = vmatmul.mubr.f32.gmra.mxu0 %v5891
      %v6155 = vpop.f32.mrf.mxu0
      %v6156 = vadd.f32 %v5243, %v6155
      %v6157 = vpop.f32.mrf.mxu0
      %v6158 = vadd.f32 %v5245, %v6157
      %6159 = vdwg.mxu0
      %6160 = vmatprep.subr.mxu0 0.0
      %6161 = vmatpush1.msra.mxu0 0.0
      %6162 = vmatprep.subr.mxu0 0.0
      %6163 = vmatpush1.msra.mxu0 0.0
      %6164 = vmatprep.subr.mxu0 0.0
      %6165 = vmatpush1.msra.mxu0 0.0
      %6166 = vmatprep.subr.mxu0 0.0
      %6167 = vmatpush1.msra.mxu0 0.0
      %6168 = vmatprep.subr.mxu0 0.0
      %6169 = vmatpush1.msra.mxu0 0.0
      %6170 = vmatprep.subr.mxu0 0.0
      %6171 = vmatpush1.msra.mxu0 0.0
      %6172 = vmatprep.subr.mxu0 0.0
      %6173 = vmatpush1.msra.mxu0 0.0
      %6174 = vmatprep.subr.mxu0 0.0
      %6175 = vmatpush1.msra.mxu0 0.0
      %6176 = vmatprep.subr.mxu0 0.0
      %6177 = vmatpush1.msra.mxu0 0.0
      %6178 = vmatprep.subr.mxu0 0.0
      %6179 = vmatpush1.msra.mxu0 0.0
      %6180 = vmatprep.subr.mxu0 0.0
      %6181 = vmatpush1.msra.mxu0 0.0
      %6182 = vmatprep.subr.mxu0 0.0
      %6183 = vmatpush1.msra.mxu0 0.0
      %6184 = vmatprep.subr.mxu0 %v5876
      %6185 = vmatpush1.msra.mxu0 %v5875
      %6186 = vmatprep.subr.mxu0 %v5868
      %6187 = vmatpush1.msra.mxu0 %v5867
      %6188 = vmatprep.subr.mxu0 %v5860
      %6189 = vmatpush1.msra.mxu0 %v5859
      %6190 = vmatprep.subr.mxu0 %v5852
      %6191 = vmatpush1.msra.mxu0 %v5851
      %6192 = vmatprep.subr.mxu0 0.0
      %6193 = vmatpush2.msra.mxu0 0.0
      %6194 = vmatprep.subr.mxu0 0.0
      %6195 = vmatpush2.msra.mxu0 0.0
      %6196 = vmatprep.subr.mxu0 0.0
      %6197 = vmatpush2.msra.mxu0 0.0
      %6198 = vmatprep.subr.mxu0 0.0
      %6199 = vmatpush2.msra.mxu0 0.0
      %6200 = vmatprep.subr.mxu0 0.0
      %6201 = vmatpush2.msra.mxu0 0.0
      %6202 = vmatprep.subr.mxu0 0.0
      %6203 = vmatpush2.msra.mxu0 0.0
      %6204 = vmatprep.subr.mxu0 0.0
      %6205 = vmatpush2.msra.mxu0 0.0
      %6206 = vmatprep.subr.mxu0 0.0
      %6207 = vmatpush2.msra.mxu0 0.0
      %6208 = vmatprep.subr.mxu0 0.0
      %6209 = vmatpush2.msra.mxu0 0.0
      %6210 = vmatprep.subr.mxu0 0.0
      %6211 = vmatpush2.msra.mxu0 0.0
      %6212 = vmatprep.subr.mxu0 0.0
      %6213 = vmatpush2.msra.mxu0 0.0
      %6214 = vmatprep.subr.mxu0 0.0
      %6215 = vmatpush2.msra.mxu0 0.0
      %6216 = vmatprep.subr.mxu0 0.0
      %6217 = vmatpush2.msra.mxu0 0.0
      %6218 = vmatprep.subr.mxu0 0.0
      %6219 = vmatpush2.msra.mxu0 0.0
      %6220 = vmatprep.subr.mxu0 0.0
      %6221 = vmatpush2.msra.mxu0 0.0
      %6222 = vmatprep.subr.mxu0 0.0
      %6223 = vmatpush2.msra.mxu0 0.0
      %6224 = vmatprep.mubr.f32.mxu0 0.0
      %6225 = vmatmul.mubr.f32.gmra.mxu0 %v5882
      %v6226 = vpop.f32.mrf.mxu0
      %v6227 = vadd.f32 %v5338, %v6226
      %v6228 = vpop.f32.mrf.mxu0
      %v6229 = vadd.f32 %v5340, %v6228
      %6230 = vmatprep.mubr.f32.mxu0 0.0
      %6231 = vmatmul.mubr.f32.gmra.mxu0 %v5885
      %v6232 = vpop.f32.mrf.mxu0
      %v6233 = vadd.f32 %v5344, %v6232
      %v6234 = vpop.f32.mrf.mxu0
      %v6235 = vadd.f32 %v5346, %v6234
      %6236 = vmatprep.mubr.f32.mxu0 0.0
      %6237 = vmatmul.mubr.f32.gmra.mxu0 %v5888
      %v6238 = vpop.f32.mrf.mxu0
      %v6239 = vadd.f32 %v5350, %v6238
      %v6240 = vpop.f32.mrf.mxu0
      %v6241 = vadd.f32 %v5352, %v6240
      %6242 = vmatprep.mubr.f32.mxu0 0.0
      %6243 = vmatmul.mubr.f32.gmra.mxu0 %v5891
      %v6244 = vpop.f32.mrf.mxu0
      %v6245 = vadd.f32 %v5356, %v6244
      %v6246 = vpop.f32.mrf.mxu0
      %v6247 = vadd.f32 %v5358, %v6246
      %6248 = vdwg.mxu0
      %v6249 = vld [vmem:[%s8] sm:$0xff]
      %v6250 = vld [vmem:[%s8 + $0x8] sm:$0xff]
      %v6251 = vld [vmem:[%s8 + $0x10] sm:$0xff]
      %v6252 = vld [vmem:[%s8 + $0x18] sm:$0xff]
      %6254 = vset.pattern.permute.xlu0 0
      %6255 = vperm.xlu0 %6254, %v6249
      %v6256 = vpop.permute.xlu0 %6255
      %6259 = vset.pattern.permute.xlu0 0
      %6260 = vperm.xlu0 %6259, %v6250
      %v6261 = vpop.permute.xlu0 %6260
      %6264 = vset.pattern.permute.xlu0 0
      %6265 = vperm.xlu0 %6264, %v6251
      %v6266 = vpop.permute.xlu0 %6265
      %6269 = vset.pattern.permute.xlu0 0
      %6270 = vperm.xlu0 %6269, %v6252
      %v6271 = vpop.permute.xlu0 %6270
      %v6273 = vadd.f32 %v5960, %v6256
      %v6274 = vadd.f32 %v5962, %v6256
      %v6275 = vadd.f32 %v6049, %v6256
      %v6276 = vadd.f32 %v6051, %v6256
      %v6277 = vadd.f32 %v6138, %v6256
      %v6278 = vadd.f32 %v6140, %v6256
      %v6279 = vadd.f32 %v6227, %v6256
      %v6280 = vadd.f32 %v6229, %v6256
      %v6281 = vadd.f32 %v5966, %v6261
      %v6282 = vadd.f32 %v5968, %v6261
      %v6283 = vadd.f32 %v6055, %v6261
      %v6284 = vadd.f32 %v6057, %v6261
      %v6285 = vadd.f32 %v6144, %v6261
      %v6286 = vadd.f32 %v6146, %v6261
      %v6287 = vadd.f32 %v6233, %v6261
      %v6288 = vadd.f32 %v6235, %v6261
      %v6289 = vadd.f32 %v5972, %v6266
      %v6290 = vadd.f32 %v5974, %v6266
      %v6291 = vadd.f32 %v6061, %v6266
      %v6292 = vadd.f32 %v6063, %v6266
      %v6293 = vadd.f32 %v6150, %v6266
      %v6294 = vadd.f32 %v6152, %v6266
      %v6295 = vadd.f32 %v6239, %v6266
      %v6296 = vadd.f32 %v6241, %v6266
      %v6297 = vadd.f32 %v5978, %v6271
      %v6298 = vadd.f32 %v5980, %v6271
      %v6299 = vadd.f32 %v6067, %v6271
      %v6300 = vadd.f32 %v6069, %v6271
      %v6301 = vadd.f32 %v6156, %v6271
      %v6302 = vadd.f32 %v6158, %v6271
      %v6303 = vadd.f32 %v6245, %v6271
      %v6304 = vadd.f32 %v6247, %v6271
      %v6305 = vmax.f32 %v6273, 0.0
      %v6306 = vmax.f32 %v6274, 0.0
      %v6307 = vmax.f32 %v6275, 0.0
      %v6308 = vmax.f32 %v6276, 0.0
      %v6309 = vmax.f32 %v6277, 0.0
      %v6310 = vmax.f32 %v6278, 0.0
      %v6311 = vmax.f32 %v6279, 0.0
      %v6312 = vmax.f32 %v6280, 0.0
      %v6313 = vmax.f32 %v6281, 0.0
      %v6314 = vmax.f32 %v6282, 0.0
      %v6315 = vmax.f32 %v6283, 0.0
      %v6316 = vmax.f32 %v6284, 0.0
      %v6317 = vmax.f32 %v6285, 0.0
      %v6318 = vmax.f32 %v6286, 0.0
      %v6319 = vmax.f32 %v6287, 0.0
      %v6320 = vmax.f32 %v6288, 0.0
      %v6321 = vmax.f32 %v6289, 0.0
      %v6322 = vmax.f32 %v6290, 0.0
      %v6323 = vmax.f32 %v6291, 0.0
      %v6324 = vmax.f32 %v6292, 0.0
      %v6325 = vmax.f32 %v6293, 0.0
      %v6326 = vmax.f32 %v6294, 0.0
      %v6327 = vmax.f32 %v6295, 0.0
      %v6328 = vmax.f32 %v6296, 0.0
      %v6329 = vmax.f32 %v6297, 0.0
      %v6330 = vmax.f32 %v6298, 0.0
      %v6331 = vmax.f32 %v6299, 0.0
      %v6332 = vmax.f32 %v6300, 0.0
      %v6333 = vmax.f32 %v6301, 0.0
      %v6334 = vmax.f32 %v6302, 0.0
      %v6335 = vmax.f32 %v6303, 0.0
      %v6336 = vmax.f32 %v6304, 0.0
      %v6337 = vld [vmem:[%s9] sm:$0x7]
      %v6338 = vld [vmem:[%s10] sm:$0x7]
      %6340 = vset.pattern.permute.xlu0 0
      %6341 = vperm.xlu0 %6340, %v6338
      %v6342 = vpop.permute.xlu0 %6341
      %v6345 = vsel %vm5476, %v6337, 0
      %6347 = vmatprep.subr.mxu0 0.0
      %6348 = vmatpush1.msra.mxu0 0.0
      %6349 = vmatprep.subr.mxu0 0.0
      %6350 = vmatpush1.msra.mxu0 0.0
      %6351 = vmatprep.subr.mxu0 0.0
      %6352 = vmatpush1.msra.mxu0 0.0
      %6353 = vmatprep.subr.mxu0 0.0
      %6354 = vmatpush1.msra.mxu0 0.0
      %6355 = vmatprep.subr.mxu0 0.0
      %6356 = vmatpush1.msra.mxu0 0.0
      %6357 = vmatprep.subr.mxu0 0.0
      %6358 = vmatpush1.msra.mxu0 0.0
      %6359 = vmatprep.subr.mxu0 0.0
      %6360 = vmatpush1.msra.mxu0 0.0
      %6361 = vmatprep.subr.mxu0 0.0
      %6362 = vmatpush1.msra.mxu0 0.0
      %6363 = vmatprep.subr.mxu0 0.0
      %6364 = vmatpush1.msra.mxu0 0.0
      %6365 = vmatprep.subr.mxu0 0.0
      %6366 = vmatpush1.msra.mxu0 0.0
      %6367 = vmatprep.subr.mxu0 0.0
      %6368 = vmatpush1.msra.mxu0 0.0
      %6369 = vmatprep.subr.mxu0 0.0
      %6370 = vmatpush1.msra.mxu0 0.0
      %6371 = vmatprep.subr.mxu0 %v6330
      %6372 = vmatpush1.msra.mxu0 %v6329
      %6373 = vmatprep.subr.mxu0 %v6322
      %6374 = vmatpush1.msra.mxu0 %v6321
      %6375 = vmatprep.subr.mxu0 %v6314
      %6376 = vmatpush1.msra.mxu0 %v6313
      %6377 = vmatprep.subr.mxu0 %v6306
      %6378 = vmatpush1.msra.mxu0 %v6305
      %6379 = vmatprep.subr.mxu0 0.0
      %6380 = vmatpush2.msra.mxu0 0.0
      %6381 = vmatprep.subr.mxu0 0.0
      %6382 = vmatpush2.msra.mxu0 0.0
      %6383 = vmatprep.subr.mxu0 0.0
      %6384 = vmatpush2.msra.mxu0 0.0
      %6385 = vmatprep.subr.mxu0 0.0
      %6386 = vmatpush2.msra.mxu0 0.0
      %6387 = vmatprep.subr.mxu0 0.0
      %6388 = vmatpush2.msra.mxu0 0.0
      %6389 = vmatprep.subr.mxu0 0.0
      %6390 = vmatpush2.msra.mxu0 0.0
      %6391 = vmatprep.subr.mxu0 0.0
      %6392 = vmatpush2.msra.mxu0 0.0
      %6393 = vmatprep.subr.mxu0 0.0
      %6394 = vmatpush2.msra.mxu0 0.0
      %6395 = vmatprep.subr.mxu0 0.0
      %6396 = vmatpush2.msra.mxu0 0.0
      %6397 = vmatprep.subr.mxu0 0.0
      %6398 = vmatpush2.msra.mxu0 0.0
      %6399 = vmatprep.subr.mxu0 0.0
      %6400 = vmatpush2.msra.mxu0 0.0
      %6401 = vmatprep.subr.mxu0 0.0
      %6402 = vmatpush2.msra.mxu0 0.0
      %6403 = vmatprep.subr.mxu0 0.0
      %6404 = vmatpush2.msra.mxu0 0.0
      %6405 = vmatprep.subr.mxu0 0.0
      %6406 = vmatpush2.msra.mxu0 0.0
      %6407 = vmatprep.subr.mxu0 0.0
      %6408 = vmatpush2.msra.mxu0 0.0
      %6409 = vmatprep.subr.mxu0 0.0
      %6410 = vmatpush2.msra.mxu0 0.0
      %6411 = vmatprep.mubr.f32.mxu0 0.0
      %6412 = vmatmul.mubr.f32.gmra.mxu0 %v6345
      %v6413 = vpop.f32.mrf.mxu0
      %v6414 = vadd.f32 %v6342, %v6413
      %v6415 = vpop.f32.mrf.mxu0
      %v6416 = vadd.f32 %v6342, %v6415
      %6417 = vdwg.mxu0
      %6418 = vmatprep.subr.mxu0 0.0
      %6419 = vmatpush1.msra.mxu0 0.0
      %6420 = vmatprep.subr.mxu0 0.0
      %6421 = vmatpush1.msra.mxu0 0.0
      %6422 = vmatprep.subr.mxu0 0.0
      %6423 = vmatpush1.msra.mxu0 0.0
      %6424 = vmatprep.subr.mxu0 0.0
      %6425 = vmatpush1.msra.mxu0 0.0
      %6426 = vmatprep.subr.mxu0 0.0
      %6427 = vmatpush1.msra.mxu0 0.0
      %6428 = vmatprep.subr.mxu0 0.0
      %6429 = vmatpush1.msra.mxu0 0.0
      %6430 = vmatprep.subr.mxu0 0.0
      %6431 = vmatpush1.msra.mxu0 0.0
      %6432 = vmatprep.subr.mxu0 0.0
      %6433 = vmatpush1.msra.mxu0 0.0
      %6434 = vmatprep.subr.mxu0 0.0
      %6435 = vmatpush1.msra.mxu0 0.0
      %6436 = vmatprep.subr.mxu0 0.0
      %6437 = vmatpush1.msra.mxu0 0.0
      %6438 = vmatprep.subr.mxu0 0.0
      %6439 = vmatpush1.msra.mxu0 0.0
      %6440 = vmatprep.subr.mxu0 0.0
      %6441 = vmatpush1.msra.mxu0 0.0
      %6442 = vmatprep.subr.mxu0 %v6332
      %6443 = vmatpush1.msra.mxu0 %v6331
      %6444 = vmatprep.subr.mxu0 %v6324
      %6445 = vmatpush1.msra.mxu0 %v6323
      %6446 = vmatprep.subr.mxu0 %v6316
      %6447 = vmatpush1.msra.mxu0 %v6315
      %6448 = vmatprep.subr.mxu0 %v6308
      %6449 = vmatpush1.msra.mxu0 %v6307
      %6450 = vmatprep.subr.mxu0 0.0
      %6451 = vmatpush2.msra.mxu0 0.0
      %6452 = vmatprep.subr.mxu0 0.0
      %6453 = vmatpush2.msra.mxu0 0.0
      %6454 = vmatprep.subr.mxu0 0.0
      %6455 = vmatpush2.msra.mxu0 0.0
      %6456 = vmatprep.subr.mxu0 0.0
      %6457 = vmatpush2.msra.mxu0 0.0
      %6458 = vmatprep.subr.mxu0 0.0
      %6459 = vmatpush2.msra.mxu0 0.0
      %6460 = vmatprep.subr.mxu0 0.0
      %6461 = vmatpush2.msra.mxu0 0.0
      %6462 = vmatprep.subr.mxu0 0.0
      %6463 = vmatpush2.msra.mxu0 0.0
      %6464 = vmatprep.subr.mxu0 0.0
      %6465 = vmatpush2.msra.mxu0 0.0
      %6466 = vmatprep.subr.mxu0 0.0
      %6467 = vmatpush2.msra.mxu0 0.0
      %6468 = vmatprep.subr.mxu0 0.0
      %6469 = vmatpush2.msra.mxu0 0.0
      %6470 = vmatprep.subr.mxu0 0.0
      %6471 = vmatpush2.msra.mxu0 0.0
      %6472 = vmatprep.subr.mxu0 0.0
      %6473 = vmatpush2.msra.mxu0 0.0
      %6474 = vmatprep.subr.mxu0 0.0
      %6475 = vmatpush2.msra.mxu0 0.0
      %6476 = vmatprep.subr.mxu0 0.0
      %6477 = vmatpush2.msra.mxu0 0.0
      %6478 = vmatprep.subr.mxu0 0.0
      %6479 = vmatpush2.msra.mxu0 0.0
      %6480 = vmatprep.subr.mxu0 0.0
      %6481 = vmatpush2.msra.mxu0 0.0
      %6482 = vmatprep.mubr.f32.mxu0 0.0
      %6483 = vmatmul.mubr.f32.gmra.mxu0 %v6345
      %v6484 = vpop.f32.mrf.mxu0
      %v6485 = vadd.f32 %v6342, %v6484
      %v6486 = vpop.f32.mrf.mxu0
      %v6487 = vadd.f32 %v6342, %v6486
      %6488 = vdwg.mxu0
      %6489 = vmatprep.subr.mxu0 0.0
      %6490 = vmatpush1.msra.mxu0 0.0
      %6491 = vmatprep.subr.mxu0 0.0
      %6492 = vmatpush1.msra.mxu0 0.0
      %6493 = vmatprep.subr.mxu0 0.0
      %6494 = vmatpush1.msra.mxu0 0.0
      %6495 = vmatprep.subr.mxu0 0.0
      %6496 = vmatpush1.msra.mxu0 0.0
      %6497 = vmatprep.subr.mxu0 0.0
      %6498 = vmatpush1.msra.mxu0 0.0
      %6499 = vmatprep.subr.mxu0 0.0
      %6500 = vmatpush1.msra.mxu0 0.0
      %6501 = vmatprep.subr.mxu0 0.0
      %6502 = vmatpush1.msra.mxu0 0.0
      %6503 = vmatprep.subr.mxu0 0.0
      %6504 = vmatpush1.msra.mxu0 0.0
      %6505 = vmatprep.subr.mxu0 0.0
      %6506 = vmatpush1.msra.mxu0 0.0
      %6507 = vmatprep.subr.mxu0 0.0
      %6508 = vmatpush1.msra.mxu0 0.0
      %6509 = vmatprep.subr.mxu0 0.0
      %6510 = vmatpush1.msra.mxu0 0.0
      %6511 = vmatprep.subr.mxu0 0.0
      %6512 = vmatpush1.msra.mxu0 0.0
      %6513 = vmatprep.subr.mxu0 %v6334
      %6514 = vmatpush1.msra.mxu0 %v6333
      %6515 = vmatprep.subr.mxu0 %v6326
      %6516 = vmatpush1.msra.mxu0 %v6325
      %6517 = vmatprep.subr.mxu0 %v6318
      %6518 = vmatpush1.msra.mxu0 %v6317
      %6519 = vmatprep.subr.mxu0 %v6310
      %6520 = vmatpush1.msra.mxu0 %v6309
      %6521 = vmatprep.subr.mxu0 0.0
      %6522 = vmatpush2.msra.mxu0 0.0
      %6523 = vmatprep.subr.mxu0 0.0
      %6524 = vmatpush2.msra.mxu0 0.0
      %6525 = vmatprep.subr.mxu0 0.0
      %6526 = vmatpush2.msra.mxu0 0.0
      %6527 = vmatprep.subr.mxu0 0.0
      %6528 = vmatpush2.msra.mxu0 0.0
      %6529 = vmatprep.subr.mxu0 0.0
      %6530 = vmatpush2.msra.mxu0 0.0
      %6531 = vmatprep.subr.mxu0 0.0
      %6532 = vmatpush2.msra.mxu0 0.0
      %6533 = vmatprep.subr.mxu0 0.0
      %6534 = vmatpush2.msra.mxu0 0.0
      %6535 = vmatprep.subr.mxu0 0.0
      %6536 = vmatpush2.msra.mxu0 0.0
      %6537 = vmatprep.subr.mxu0 0.0
      %6538 = vmatpush2.msra.mxu0 0.0
      %6539 = vmatprep.subr.mxu0 0.0
      %6540 = vmatpush2.msra.mxu0 0.0
      %6541 = vmatprep.subr.mxu0 0.0
      %6542 = vmatpush2.msra.mxu0 0.0
      %6543 = vmatprep.subr.mxu0 0.0
      %6544 = vmatpush2.msra.mxu0 0.0
      %6545 = vmatprep.subr.mxu0 0.0
      %6546 = vmatpush2.msra.mxu0 0.0
      %6547 = vmatprep.subr.mxu0 0.0
      %6548 = vmatpush2.msra.mxu0 0.0
      %6549 = vmatprep.subr.mxu0 0.0
      %6550 = vmatpush2.msra.mxu0 0.0
      %6551 = vmatprep.subr.mxu0 0.0
      %6552 = vmatpush2.msra.mxu0 0.0
      %6553 = vmatprep.mubr.f32.mxu0 0.0
      %6554 = vmatmul.mubr.f32.gmra.mxu0 %v6345
      %v6555 = vpop.f32.mrf.mxu0
      %v6556 = vadd.f32 %v6342, %v6555
      %v6557 = vpop.f32.mrf.mxu0
      %v6558 = vadd.f32 %v6342, %v6557
      %6559 = vdwg.mxu0
      %6560 = vmatprep.subr.mxu0 0.0
      %6561 = vmatpush1.msra.mxu0 0.0
      %6562 = vmatprep.subr.mxu0 0.0
      %6563 = vmatpush1.msra.mxu0 0.0
      %6564 = vmatprep.subr.mxu0 0.0
      %6565 = vmatpush1.msra.mxu0 0.0
      %6566 = vmatprep.subr.mxu0 0.0
      %6567 = vmatpush1.msra.mxu0 0.0
      %6568 = vmatprep.subr.mxu0 0.0
      %6569 = vmatpush1.msra.mxu0 0.0
      %6570 = vmatprep.subr.mxu0 0.0
      %6571 = vmatpush1.msra.mxu0 0.0
      %6572 = vmatprep.subr.mxu0 0.0
      %6573 = vmatpush1.msra.mxu0 0.0
      %6574 = vmatprep.subr.mxu0 0.0
      %6575 = vmatpush1.msra.mxu0 0.0
      %6576 = vmatprep.subr.mxu0 0.0
      %6577 = vmatpush1.msra.mxu0 0.0
      %6578 = vmatprep.subr.mxu0 0.0
      %6579 = vmatpush1.msra.mxu0 0.0
      %6580 = vmatprep.subr.mxu0 0.0
      %6581 = vmatpush1.msra.mxu0 0.0
      %6582 = vmatprep.subr.mxu0 0.0
      %6583 = vmatpush1.msra.mxu0 0.0
      %6584 = vmatprep.subr.mxu0 %v6336
      %6585 = vmatpush1.msra.mxu0 %v6335
      %6586 = vmatprep.subr.mxu0 %v6328
      %6587 = vmatpush1.msra.mxu0 %v6327
      %6588 = vmatprep.subr.mxu0 %v6320
      %6589 = vmatpush1.msra.mxu0 %v6319
      %6590 = vmatprep.subr.mxu0 %v6312
      %6591 = vmatpush1.msra.mxu0 %v6311
      %6592 = vmatprep.subr.mxu0 0.0
      %6593 = vmatpush2.msra.mxu0 0.0
      %6594 = vmatprep.subr.mxu0 0.0
      %6595 = vmatpush2.msra.mxu0 0.0
      %6596 = vmatprep.subr.mxu0 0.0
      %6597 = vmatpush2.msra.mxu0 0.0
      %6598 = vmatprep.subr.mxu0 0.0
      %6599 = vmatpush2.msra.mxu0 0.0
      %6600 = vmatprep.subr.mxu0 0.0
      %6601 = vmatpush2.msra.mxu0 0.0
      %6602 = vmatprep.subr.mxu0 0.0
      %6603 = vmatpush2.msra.mxu0 0.0
      %6604 = vmatprep.subr.mxu0 0.0
      %6605 = vmatpush2.msra.mxu0 0.0
      %6606 = vmatprep.subr.mxu0 0.0
      %6607 = vmatpush2.msra.mxu0 0.0
      %6608 = vmatprep.subr.mxu0 0.0
      %6609 = vmatpush2.msra.mxu0 0.0
      %6610 = vmatprep.subr.mxu0 0.0
      %6611 = vmatpush2.msra.mxu0 0.0
      %6612 = vmatprep.subr.mxu0 0.0
      %6613 = vmatpush2.msra.mxu0 0.0
      %6614 = vmatprep.subr.mxu0 0.0
      %6615 = vmatpush2.msra.mxu0 0.0
      %6616 = vmatprep.subr.mxu0 0.0
      %6617 = vmatpush2.msra.mxu0 0.0
      %6618 = vmatprep.subr.mxu0 0.0
      %6619 = vmatpush2.msra.mxu0 0.0
      %6620 = vmatprep.subr.mxu0 0.0
      %6621 = vmatpush2.msra.mxu0 0.0
      %6622 = vmatprep.subr.mxu0 0.0
      %6623 = vmatpush2.msra.mxu0 0.0
      %6624 = vmatprep.mubr.f32.mxu0 0.0
      %6625 = vmatmul.mubr.f32.gmra.mxu0 %v6345
      %v6626 = vpop.f32.mrf.mxu0
      %v6627 = vadd.f32 %v6342, %v6626
      %v6628 = vpop.f32.mrf.mxu0
      %v6629 = vadd.f32 %v6342, %v6628
      %6630 = vdwg.mxu0
      %v6631 = vtanh.pop %v6414
      %v6632 = vtanh.pop %v6416
      %v6633 = vtanh.pop %v6485
      %v6634 = vtanh.pop %v6487
      %v6635 = vtanh.pop %v6556
      %v6636 = vtanh.pop %v6558
      %v6637 = vtanh.pop %v6627
      %v6638 = vtanh.pop %v6629
      %v6647 = vcombine.low %v6631, %v6632
      %v6648 = vcombine.low %v6633, %v6634
      %v6649 = vcombine.low %v6635, %v6636
      %v6650 = vcombine.low %v6637, %v6638
      %6655 = vst [vmem:[%s388] sm:$0x77] %v6647
      %6656 = vst [vmem:[%s388 + $0x8] sm:$0x77] %v6648
      %6657 = vst [vmem:[%s388 + $0x10] sm:$0x77] %v6649
      %6658 = vst [vmem:[%s388 + $0x18] sm:$0x77] %v6650
      %s6659 = smul.u32 8, %s22
      %p6660 = scmp.lt.s32.totalorder %s6659, 15
      %s6661 = scalar_select %p6660, %s6659, 15
      %s6662 = smul.addr %s6661, 4
      %s6663 = scalar_lea.vmem %s11, %s6662
      // Predicated region
      $region65: #{imlp_forward.1} parent=63 // pred_check
        %p6664 = pneg %p276
      $region66: #{imlp_forward.1} parent=63 // pred_check_branch
        %6666 = sbr.rel (%p6664) target = $region68
      $region67: #{imlp_forward.1} parent=63 // pred_region
        %s6667 = smul.u32 8, %s22
      $region68: #{imlp_forward.1} parent=63 // pred_fallthru
        _
    $region64: #{imlp_forward.1} parent=5 // pred_fallthru
      _
    %p6668 = scmp.le.s32.totalorder 2, %s17
    // Predicated region
    $region69: #{imlp_forward.1} parent=5 // pred_check
      %p6669 = pneg %p6668
    $region70: #{imlp_forward.1} parent=5 // pred_check_branch
      %6671 = sbr.rel (%p6669) target = $region72
    $region71: #{imlp_forward.1} parent=5 // pred_region
      %s6672 = ssub.s32 %s17, 2
      // Predicated region
      $region73: #{imlp_forward.1} parent=71 // pred_check
        %p6673 = pneg %p282
      $region74: #{imlp_forward.1} parent=71 // pred_check_branch
        %6675 = sbr.rel (%p6673) target = $region76
      $region75: #{imlp_forward.1} parent=71 // pred_region
        %s6676 = smul.u32 8, %s23
        %p6677 = scmp.lt.s32.totalorder %s6676, 15
        %s6678 = scalar_select %p6677, %s6676, 15
        %s6679 = smul.addr %s6678, 4
        %s6680 = scalar_lea.vmem %s11, %s6679
      $region76: #{imlp_forward.1} parent=71 // pred_fallthru
        _
    $region72: #{imlp_forward.1} parent=5 // pred_fallthru
      _
  $region6: #{imlp_forward.1} parent=0 // loop_footer
    %s21 = sadd.s32 1, %s17
  $region7: #{imlp_forward.1} parent=0 // loop_footer_branch
    %16 = sbr.rel target = $region3
  $region8: #{imlp_forward.1} parent=0 // loop_exit
    _

</llo_original>
